<compile_context>
chip_gen: v7x
topology: tpu7x:2x2x1
jax: 0.10.0
libtpu: 0.0.40
codegen_flags: <defaults>
</compile_context>

<pallas_src>
import math
import numpy as np

import jax
import jax.numpy as jnp
from jax import lax
from jax.experimental import pallas as pl
from jax.experimental.pallas import tpu as pltpu

FALSE_WEIGHT = 10.0
EPS = 1e-6
CENTER_VALUE = 2
KERNEL_SIZE = (3, 5, 5)
SIGMA = (1.0, 8.0, 8.0)
PAD = (1, 2, 2)


# ----------------------------------------------------------------------------- helpers
def gaussian_kernel_3d(kernel_size=KERNEL_SIZE, sigma=SIGMA):
    grids = np.meshgrid(*[np.arange(s, dtype=np.float64) for s in kernel_size],
                        indexing="ij")
    kern = np.ones(kernel_size, np.float64)
    for size, std, g in zip(kernel_size, sigma, grids):
        mean = (size - 1) / 2.0
        kern *= (1.0 / (std * math.sqrt(2.0 * math.pi))) * np.exp(
            -(((g - mean) / std) ** 2) / 2.0)
    kern /= kern.sum()
    return kern.astype(np.float32)


GAUSS_KERNEL = gaussian_kernel_3d()     # used by the pure-JAX reference


def _gauss1d(size, sigma):
    x = np.arange(size, dtype=np.float64)
    mean = (size - 1) / 2.0
    g = np.exp(-(((x - mean) / sigma) ** 2) / 2.0) / (sigma * math.sqrt(2.0 * math.pi))
    return g / g.sum()


def _axis_operator(length, ksize, sigma):
    """Composite (L, L) matrix: stride-1 conv @ nearest-2x-up @ stride-2 conv."""
    g = _gauss1d(ksize, sigma)
    p = (ksize - 1) // 2
    half = length // 2
    c1 = np.zeros((half, length), np.float64)       # stride-2 zero-padded conv
    for o in range(half):
        for t in range(ksize):
            j = 2 * o + t - p
            if 0 <= j < length:
                c1[o, j] += g[t]
    up = np.zeros((length, half), np.float64)       # nearest 2x upsample
    for i in range(length):
        up[i, i // 2] = 1.0
    c2 = np.zeros((length, length), np.float64)     # stride-1 zero-padded conv
    for o in range(length):
        for t in range(ksize):
            j = o + t - p
            if 0 <= j < length:
                c2[o, j] += g[t]
    return c2 @ up @ c1


# ----------------------------------------------------------------------------- kernel
def _make_kernel(C, D, H, W, TD, md_rows):
    V = D * H * W

    def kernel(mh_ref, mwt_ref, pred_ref, tgt_ref, stats_ref, c_keep, acc):
        k = pl.program_id(1)
        kv_last = pl.num_programs(1) - 1

        # ---- per-sample scalar accumulators live in SMEM; reset at first depth tile
        @pl.when(k == 0)
        def _init():
            for s in range(16):
                acc[s] = jnp.float32(0.0)

        t = tgt_ref[0]                                  # (TD, H, W) int32 labels
        light = jnp.logical_and(t > -1, t < 3)
        heavy = t > 2
        lf = light.astype(jnp.float32)
        hf = heavy.astype(jnp.float32)

        # effective class index (heavy voxels use fmod(target, 3)); invalid (-1)
        # voxels are masked out of every sum, clip keeps the select in range.
        t_eff = jnp.clip(jnp.where(heavy, t % 3, t), 0, C - 1)
        nlp = jnp.zeros(t.shape, jnp.float32)
        for c in range(C):
            nlp = nlp + jnp.where(t_eff == c, -pred_ref[c], 0.0)

        # center-channel probability: single HBM read, single exp; reused for Dice
        # and stashed into the resident (D, H, W) scratch for the smoothness pass.
        cp = jnp.exp(pred_ref[C - 1])                   # (TD, H, W)
        d0 = pl.multiple_of(k * TD, TD)
        c_keep[pl.ds(d0, TD)] = cp

        ct_l = jnp.where(jnp.logical_and(light, t == CENTER_VALUE), 1.0, 0.0)
        ct_h = jnp.where(jnp.logical_and(heavy, (t % 3) == CENTER_VALUE), 1.0, 0.0)

        acc[0] = acc[0] + jnp.sum(lf * nlp) + FALSE_WEIGHT * jnp.sum(hf * nlp)
        acc[1] = acc[1] + jnp.sum(lf)                   # n_light
        acc[2] = acc[2] + jnp.sum(hf)                   # n_heavy
        acc[3] = acc[3] + jnp.sum(cp * ct_l)            # light intersection
        acc[4] = acc[4] + jnp.sum(lf * cp * cp)         # light pred^2 sum
        acc[5] = acc[5] + jnp.sum(ct_l)                 # light target sum
        acc[6] = acc[6] + jnp.sum(cp * ct_h)            # heavy intersection
        acc[7] = acc[7] + jnp.sum(hf * cp * cp)         # heavy pred^2 sum
        acc[8] = acc[8] + jnp.sum(ct_h)                 # heavy target sum

        # ---- finalize once per sample (last depth tile)
        @pl.when(k == kv_last)
        def _finalize():
            n_l = acc[1]
            n_h = acc[2]
            wsum = n_l + FALSE_WEIGHT * n_h
            safe_w = jnp.maximum(wsum, 1.0)
            valid = jnp.where(wsum > 0.0, 1.0, 0.0)

            nll_i = jnp.where(wsum > 0.0, acc[0] / safe_w, 0.0)

            denom_l = jnp.maximum(acc[4] + acc[5], EPS)
            dice_l = (1.0 - 2.0 * acc[3] / denom_l) * n_l
            denom_h = jnp.maximum(acc[7] + acc[8], EPS)
            dice_h = (1.0 - 2.0 * acc[6] / denom_h) * n_h * FALSE_WEIGHT
            center_dice = jnp.where(wsum > 0.0, (dice_l + dice_h) / safe_w, 0.0)
            has_center = jnp.where(acc[5] + acc[8] > 0.0, 1.0, 0.0)

            # Smoothness: |c - (M_d (x) M_h (x) M_w) c|.mean(), applied as a narrow
            # banded scalar mix along D (trace-time constants) followed by two MXU
            # matmuls per depth slice (M_h @ slice @ M_w^T).  No pad scratch needed.
            mh = mh_ref[...]                            # (H, H)
            mwt = mwt_ref[...]                          # (W, W) == M_w^T
            abs_sum = jnp.float32(0.0)
            for d in range(D):
                mix = None
                for z, wgt in md_rows[d]:               # ~5 nonzero taps per row
                    term = wgt * c_keep[z]
                    mix = term if mix is None else mix + term
                sm = jnp.dot(mh, mix, preferred_element_type=jnp.float32)
                sm = jnp.dot(sm, mwt, preferred_element_type=jnp.float32)
                abs_sum = abs_sum + jnp.sum(jnp.abs(c_keep[d] - sm))
            smooth_i = abs_sum * (1.0 / float(V))

            rows = lax.broadcasted_iota(jnp.int32, (8, 128), 0)
            cols = lax.broadcasted_iota(jnp.int32, (8, 128), 1)

            def put(lane, val):
                return jnp.where(jnp.logical_and(rows == 0, cols == lane), val, 0.0)

            stats_ref[0] = (put(0, nll_i) + put(1, center_dice) + put(2, smooth_i)
                            + put(3, valid) + put(4, has_center))

    return kernel


# ----------------------------------------------------------------------------- wrapper
def segmentation_loss_pallas(prediction, target, last_center_loss=0.0, depth_tile=None):
    N, C, D, H, W = prediction.shape
    assert target.shape == (N, D, H, W)
    assert D % 2 == 0 and H % 2 == 0 and W % 2 == 0, "even spatial dims assumed"

    # Depth-slab tiling (reduction axis); keeps each double-buffered block well under
    # the per-generation VMEM budgets.  TODO(synk): very large H*W would additionally
    # need an H tile, omitted here.
    if depth_tile is None:
        budget = 8 * 1024 * 1024
        td = max(1, min(D, budget // max(1, C * H * W * 4)))
        while D % td:
            td -= 1
    else:
        td = int(depth_tile)
        assert D % td == 0
    kv = D // td

    # Precomputed per-axis composite operators for the smoothness pipeline.
    m_d = _axis_operator(D, KERNEL_SIZE[0], SIGMA[0])
    m_h = _axis_operator(H, KERNEL_SIZE[1], SIGMA[1])
    m_w = _axis_operator(W, KERNEL_SIZE[2], SIGMA[2])
    md_rows = tuple(
        tuple((z, float(m_d[d, z])) for z in range(D) if abs(m_d[d, z]) > 1e-12)
        for d in range(D))

    mh = jnp.asarray(m_h, jnp.float32)
    mwt = jnp.asarray(m_w.T, jnp.float32)
    pred2 = prediction.astype(jnp.float32).reshape(N * C, D, H, W)   # free reshape
    tgt = target.astype(jnp.int32)

    kernel = _make_kernel(C, D, H, W, td, md_rows)

    est = ((C * td + td) * H * W * 4) * 2 + (H * H + W * W) * 4 * 2 \
        + 8 * 128 * 4 * 2 + D * H * W * 4
    vmem_limit = max(int(est * 2), 16 * 1024 * 1024)

    stats = pl.pallas_call(
        kernel,
        out_shape=jax.ShapeDtypeStruct((N, 8, 128), jnp.float32),
        grid_spec=pltpu.PrefetchScalarGridSpec(
            num_scalar_prefetch=0,
            grid=(N, kv),
            in_specs=[
                pl.BlockSpec((H, H), lambda i, k: (0, 0)),                # M_h (resident)
                pl.BlockSpec((W, W), lambda i, k: (0, 0)),                # M_w^T (resident)
                pl.BlockSpec((C, td, H, W), lambda i, k: (i, k, 0, 0)),   # log-probs slab
                pl.BlockSpec((1, td, H, W), lambda i, k: (i, k, 0, 0)),   # label slab
            ],
            out_specs=pl.BlockSpec((1, 8, 128), lambda i, k: (i, 0, 0)),  # per-sample stats
            scratch_shapes=[
                pltpu.VMEM((D, H, W), jnp.float32),   # exp(center) for the whole sample
                pltpu.SMEM((16,), jnp.float32),       # scalar partial sums
            ],
        ),
        compiler_params=pltpu.CompilerParams(
            dimension_semantics=("parallel", "arbitrary"),
            vmem_limit_bytes=vmem_limit,
        ),
    )(mh, mwt, pred2, tgt)

    nll = stats[:, 0, 0]
    dice = stats[:, 0, 1]
    smooth = stats[:, 0, 2]
    valid = stats[:, 0, 3]
    has_center = stats[:, 0, 4]

    last_cl = jnp.asarray(last_center_loss, jnp.float32)
    center = jnp.where(has_center > 0, dice, last_cl)
    count = jnp.sum(valid)
    nll_loss = jnp.sum(valid * nll) / count
    center_loss = jnp.sum(valid * center) / count
    smooth_loss = jnp.sum(valid * smooth) / count
    return nll_loss * (1.0 / 7.0) + center_loss * (5.0 / 7.0) + smooth_loss * (1.0 / 7.0)


# ----------------------------------------------------------------------------- reference
def reference_loss(prediction, target, last_center_loss=0.0):
    """Pure-JAX reference mirroring the PyTorch forward (for validation)."""
    N, C, D, H, W = prediction.shape
    w = jnp.asarray(GAUSS_KERNEL)[None, None]
    dn = ("NCDHW", "OIDHW", "NCDHW")
    pad_cfg = [(PAD[0], PAD[0]), (PAD[1], PAD[1]), (PAD[2], PAD[2])]
    nll_t, center_t, smooth_t, count = 0.0, 0.0, 0.0, 0.0
    for i in range(N):
        t = target[i].reshape(-1).astype(jnp.int32)
        p = prediction[i].reshape(C, -1).astype(jnp.float32)
        valid = (jnp.max(t) != -1).astype(jnp.float32)
        light = (t > -1) & (t < 3)
        heavy = t > 2
        lf, hf = light.astype(jnp.float32), heavy.astype(jnp.float32)
        n_l, n_h = lf.sum(), hf.sum()
        t_eff = jnp.clip(jnp.where(heavy, t % 3, t), 0, C - 1)
        nlp = -jnp.take_along_axis(p, t_eff[None, :], axis=0)[0]
        wsum = n_l + FALSE_WEIGHT * n_h
        safe_w = jnp.maximum(wsum, 1.0)
        nll_i = jnp.where(wsum > 0,
                          (jnp.sum(lf * nlp) + FALSE_WEIGHT * jnp.sum(hf * nlp)) / safe_w, 0.0)

        cp = jnp.exp(p[-1])
        ct_l = (light & (t == CENTER_VALUE)).astype(jnp.float32)
        ct_h = (heavy & ((t % 3) == CENTER_VALUE)).astype(jnp.float32)
        cpl, cph = lf * cp, hf * cp
        dice_l = (1.0 - 2.0 * jnp.sum(cpl * ct_l) /
                  jnp.maximum(jnp.sum(cpl * cpl) + jnp.sum(ct_l), EPS)) * n_l
        dice_h = (1.0 - 2.0 * jnp.sum(cph * ct_h) /
                  jnp.maximum(jnp.sum(cph * cph) + jnp.sum(ct_h), EPS)) * n_h * FALSE_WEIGHT
        has_center = jnp.any(t == 2) | jnp.any(t == 5)
        center_i = jnp.where(has_center,
                             jnp.where(wsum > 0, (dice_l + dice_h) / safe_w, 0.0),
                             jnp.asarray(last_center_loss, jnp.float32))

        c = jnp.exp(prediction[i:i + 1, -1:].astype(jnp.float32))
        down = lax.conv_general_dilated(c, w, (2, 2, 2), pad_cfg, dimension_numbers=dn,
                                        precision=lax.Precision.HIGHEST)
        up = down
        for ax in (2, 3, 4):
            up = jnp.repeat(up, 2, axis=ax)      # nearest resize back to (D, H, W)
        sm = lax.conv_general_dilated(up, w, (1, 1, 1), pad_cfg, dimension_numbers=dn,
                                      precision=lax.Precision.HIGHEST)
        smooth_i = jnp.mean(jnp.abs(c - sm))

        nll_t += valid * nll_i
        center_t += valid * center_i
        smooth_t += valid * smooth_i
        count += valid
    return (nll_t / count) / 7.0 + (center_t / count) * (5.0 / 7.0) + (smooth_t / count) / 7.0


if __name__ == "__main__":
    key = jax.random.PRNGKey(0)
    k1, k2 = jax.random.split(key)
    N, C, D, H, W = 2, 3, 16, 16, 16
    logits = jax.random.normal(k1, (N, C, D, H, W), jnp.float32)
    prediction = jax.nn.log_softmax(logits, axis=1)          # NLLLoss expects log-probs
    target = jax.random.randint(k2, (N, D, H, W), 0, 6, dtype=jnp.int32)

    # depth_tile=8 -> grid (N, 2): exercises the multi-step depth-tile accumulation.
    loss = segmentation_loss_pallas(prediction, target, depth_tile=8)
    loss = jax.block_until_ready(loss)

    ref = reference_loss(prediction, target)
    if not np.allclose(np.asarray(loss), np.asarray(ref), rtol=2e-3, atol=3e-4):
        raise AssertionError(f"mismatch: pallas={float(loss)} ref={float(ref)}")
    print("KERNEL_OK")
</pallas_src>

<mosaic_0001>
module attributes {stable_mosaic.version = 11 : i64} {
  func.func @kernel(%arg0: i32, %arg1: i32, %arg2: memref<16x16xf32, #tpu.memory_space<vmem>>, %arg3: memref<16x16xf32, #tpu.memory_space<vmem>>, %arg4: memref<3x8x16x16xf32, #tpu.memory_space<vmem>>, %arg5: memref<1x8x16x16xi32, #tpu.memory_space<vmem>>, %arg6: memref<1x8x128xf32, #tpu.memory_space<vmem>>, %arg7: memref<16x16x16xf32, #tpu.memory_space<vmem>>, %arg8: memref<16xf32, #tpu.memory_space<smem>>) attributes {dimension_semantics = [#tpu.dimension_semantics<parallel>, #tpu.dimension_semantics<arbitrary>], iteration_bounds = array<i64: 2, 2>, scalar_prefetch = 0 : i64, scratch_operands = 2 : i64, tpu.core_type = #tpu.core_type<tc>, window_params = [{pipeline_mode = #tpu.pipeline_mode<synchronous>, transform_indices = @transform_0, window_bounds = array<i64: 16, 16>}, {pipeline_mode = #tpu.pipeline_mode<synchronous>, transform_indices = @transform_1, window_bounds = array<i64: 16, 16>}, {transform_indices = @transform_2, window_bounds = array<i64: 3, 8, 16, 16>}, {transform_indices = @transform_3, window_bounds = array<i64: 1, 8, 16, 16>}, {transform_indices = @transform_4, window_bounds = array<i64: 1, 8, 128>}]} {
    %c0_i32 = arith.constant 0 : i32
    %0 = arith.cmpi eq, %arg1, %c0_i32 : i32
    %1 = arith.extui %0 : i1 to i32
    %c0_i32_0 = arith.constant 0 : i32
    %2 = arith.cmpi ne, %1, %c0_i32_0 : i32
    scf.if %2 {
      %cst_73 = arith.constant 0.000000e+00 : f32
      %c0_74 = arith.constant 0 : index
      %180 = memref.load %arg8[%c0_74] : memref<16xf32, #tpu.memory_space<smem>>
      memref.store %cst_73, %arg8[%c0_74] : memref<16xf32, #tpu.memory_space<smem>>
      %cst_75 = arith.constant 0.000000e+00 : f32
      %c1_76 = arith.constant 1 : index
      %181 = memref.load %arg8[%c1_76] : memref<16xf32, #tpu.memory_space<smem>>
      memref.store %cst_75, %arg8[%c1_76] : memref<16xf32, #tpu.memory_space<smem>>
      %cst_77 = arith.constant 0.000000e+00 : f32
      %c2_78 = arith.constant 2 : index
      %182 = memref.load %arg8[%c2_78] : memref<16xf32, #tpu.memory_space<smem>>
      memref.store %cst_77, %arg8[%c2_78] : memref<16xf32, #tpu.memory_space<smem>>
      %cst_79 = arith.constant 0.000000e+00 : f32
      %c3_80 = arith.constant 3 : index
      %183 = memref.load %arg8[%c3_80] : memref<16xf32, #tpu.memory_space<smem>>
      memref.store %cst_79, %arg8[%c3_80] : memref<16xf32, #tpu.memory_space<smem>>
      %cst_81 = arith.constant 0.000000e+00 : f32
      %c4_82 = arith.constant 4 : index
      %184 = memref.load %arg8[%c4_82] : memref<16xf32, #tpu.memory_space<smem>>
      memref.store %cst_81, %arg8[%c4_82] : memref<16xf32, #tpu.memory_space<smem>>
      %cst_83 = arith.constant 0.000000e+00 : f32
      %c5_84 = arith.constant 5 : index
      %185 = memref.load %arg8[%c5_84] : memref<16xf32, #tpu.memory_space<smem>>
      memref.store %cst_83, %arg8[%c5_84] : memref<16xf32, #tpu.memory_space<smem>>
      %cst_85 = arith.constant 0.000000e+00 : f32
      %c6_86 = arith.constant 6 : index
      %186 = memref.load %arg8[%c6_86] : memref<16xf32, #tpu.memory_space<smem>>
      memref.store %cst_85, %arg8[%c6_86] : memref<16xf32, #tpu.memory_space<smem>>
      %cst_87 = arith.constant 0.000000e+00 : f32
      %c7_88 = arith.constant 7 : index
      %187 = memref.load %arg8[%c7_88] : memref<16xf32, #tpu.memory_space<smem>>
      memref.store %cst_87, %arg8[%c7_88] : memref<16xf32, #tpu.memory_space<smem>>
      %cst_89 = arith.constant 0.000000e+00 : f32
      %c8_90 = arith.constant 8 : index
      %188 = memref.load %arg8[%c8_90] : memref<16xf32, #tpu.memory_space<smem>>
      memref.store %cst_89, %arg8[%c8_90] : memref<16xf32, #tpu.memory_space<smem>>
      %cst_91 = arith.constant 0.000000e+00 : f32
      %c9 = arith.constant 9 : index
      %189 = memref.load %arg8[%c9] : memref<16xf32, #tpu.memory_space<smem>>
      memref.store %cst_91, %arg8[%c9] : memref<16xf32, #tpu.memory_space<smem>>
      %cst_92 = arith.constant 0.000000e+00 : f32
      %c10 = arith.constant 10 : index
      %190 = memref.load %arg8[%c10] : memref<16xf32, #tpu.memory_space<smem>>
      memref.store %cst_92, %arg8[%c10] : memref<16xf32, #tpu.memory_space<smem>>
      %cst_93 = arith.constant 0.000000e+00 : f32
      %c11 = arith.constant 11 : index
      %191 = memref.load %arg8[%c11] : memref<16xf32, #tpu.memory_space<smem>>
      memref.store %cst_93, %arg8[%c11] : memref<16xf32, #tpu.memory_space<smem>>
      %cst_94 = arith.constant 0.000000e+00 : f32
      %c12 = arith.constant 12 : index
      %192 = memref.load %arg8[%c12] : memref<16xf32, #tpu.memory_space<smem>>
      memref.store %cst_94, %arg8[%c12] : memref<16xf32, #tpu.memory_space<smem>>
      %cst_95 = arith.constant 0.000000e+00 : f32
      %c13 = arith.constant 13 : index
      %193 = memref.load %arg8[%c13] : memref<16xf32, #tpu.memory_space<smem>>
      memref.store %cst_95, %arg8[%c13] : memref<16xf32, #tpu.memory_space<smem>>
      %cst_96 = arith.constant 0.000000e+00 : f32
      %c14 = arith.constant 14 : index
      %194 = memref.load %arg8[%c14] : memref<16xf32, #tpu.memory_space<smem>>
      memref.store %cst_96, %arg8[%c14] : memref<16xf32, #tpu.memory_space<smem>>
      %cst_97 = arith.constant 0.000000e+00 : f32
      %c15 = arith.constant 15 : index
      %195 = memref.load %arg8[%c15] : memref<16xf32, #tpu.memory_space<smem>>
      memref.store %cst_97, %arg8[%c15] : memref<16xf32, #tpu.memory_space<smem>>
    } else {
    }
    %c0 = arith.constant 0 : index
    %c0_1 = arith.constant 0 : index
    %c0_2 = arith.constant 0 : index
    %c0_3 = arith.constant 0 : index
    %3 = vector.load %arg5[%c0, %c0_1, %c0_2, %c0_3] : memref<1x8x16x16xi32, #tpu.memory_space<vmem>>, vector<1x8x16x16xi32>
    %4 = vector.shape_cast %3 : vector<1x8x16x16xi32> to vector<8x16x16xi32>
    %c-1_i32 = arith.constant -1 : i32
    %5 = vector.broadcast %c-1_i32 : i32 to vector<8x16x16xi32>
    %6 = arith.cmpi sgt, %4, %5 : vector<8x16x16xi32>
    %c3_i32 = arith.constant 3 : i32
    %7 = vector.broadcast %c3_i32 : i32 to vector<8x16x16xi32>
    %8 = arith.cmpi slt, %4, %7 : vector<8x16x16xi32>
    %9 = arith.andi %6, %8 : vector<8x16x16xi1>
    %c2_i32 = arith.constant 2 : i32
    %10 = vector.broadcast %c2_i32 : i32 to vector<8x16x16xi32>
    %11 = arith.cmpi sgt, %4, %10 : vector<8x16x16xi32>
    %12 = arith.extui %9 : vector<8x16x16xi1> to vector<8x16x16xi32>
    %13 = arith.sitofp %12 : vector<8x16x16xi32> to vector<8x16x16xf32>
    %14 = arith.extui %11 : vector<8x16x16xi1> to vector<8x16x16xi32>
    %15 = arith.sitofp %14 : vector<8x16x16xi32> to vector<8x16x16xf32>
    %c3_i32_4 = arith.constant 3 : i32
    %c0_i32_5 = arith.constant 0 : i32
    %16 = arith.cmpi eq, %c3_i32_4, %c0_i32_5 : i32
    %c1_i32 = arith.constant 1 : i32
    %17 = arith.select %16, %c1_i32, %c3_i32_4 : i32
    %18 = vector.broadcast %17 : i32 to vector<8x16x16xi32>
    %19 = arith.remsi %4, %18 : vector<8x16x16xi32>
    %c0_i32_6 = arith.constant 0 : i32
    %20 = vector.broadcast %c0_i32_6 : i32 to vector<8x16x16xi32>
    %21 = arith.cmpi ne, %19, %20 : vector<8x16x16xi32>
    %c0_i32_7 = arith.constant 0 : i32
    %22 = vector.broadcast %c0_i32_7 : i32 to vector<8x16x16xi32>
    %23 = arith.cmpi slt, %19, %22 : vector<8x16x16xi32>
    %c0_i32_8 = arith.constant 0 : i32
    %24 = arith.cmpi slt, %17, %c0_i32_8 : i32
    %25 = vector.broadcast %24 : i1 to vector<8x16x16xi1>
    %26 = vector.broadcast %25 : vector<8x16x16xi1> to vector<8x16x16xi1>
    %27 = arith.xori %23, %26 : vector<8x16x16xi1>
    %28 = arith.andi %27, %21 : vector<8x16x16xi1>
    %29 = vector.broadcast %17 : i32 to vector<8x16x16xi32>
    %30 = arith.addi %19, %29 : vector<8x16x16xi32>
    %31 = arith.select %28, %30, %19 : vector<8x16x16xi1>, vector<8x16x16xi32>
    %32 = arith.select %11, %31, %4 : vector<8x16x16xi1>, vector<8x16x16xi32>
    %c0_i32_9 = arith.constant 0 : i32
    %c2_i32_10 = arith.constant 2 : i32
    %33 = vector.broadcast %c0_i32_9 : i32 to vector<8x16x16xi32>
    %34 = arith.maxsi %33, %32 : vector<8x16x16xi32>
    %35 = vector.broadcast %c2_i32_10 : i32 to vector<8x16x16xi32>
    %36 = arith.minsi %35, %34 : vector<8x16x16xi32>
    %cst = arith.constant 0.000000e+00 : f32
    %37 = vector.broadcast %cst : f32 to vector<8x16x16xf32>
    %c0_i32_11 = arith.constant 0 : i32
    %38 = vector.broadcast %c0_i32_11 : i32 to vector<8x16x16xi32>
    %39 = arith.cmpi eq, %36, %38 : vector<8x16x16xi32>
    %c0_12 = arith.constant 0 : index
    %c0_13 = arith.constant 0 : index
    %c0_14 = arith.constant 0 : index
    %c0_15 = arith.constant 0 : index
    %40 = vector.load %arg4[%c0_12, %c0_13, %c0_14, %c0_15] : memref<3x8x16x16xf32, #tpu.memory_space<vmem>>, vector<1x8x16x16xf32>
    %41 = vector.shape_cast %40 : vector<1x8x16x16xf32> to vector<8x16x16xf32>
    %cst_16 = arith.constant 0.000000e+00 : f32
    %42 = vector.broadcast %cst_16 : f32 to vector<8x16x16xf32>
    %43 = arith.subf %42, %41 : vector<8x16x16xf32>
    %cst_17 = arith.constant 0.000000e+00 : f32
    %44 = vector.broadcast %cst_17 : f32 to vector<8x16x16xf32>
    %45 = arith.select %39, %43, %44 : vector<8x16x16xi1>, vector<8x16x16xf32>
    %46 = arith.addf %37, %45 : vector<8x16x16xf32>
    %c1_i32_18 = arith.constant 1 : i32
    %47 = vector.broadcast %c1_i32_18 : i32 to vector<8x16x16xi32>
    %48 = arith.cmpi eq, %36, %47 : vector<8x16x16xi32>
    %c1 = arith.constant 1 : index
    %c0_19 = arith.constant 0 : index
    %c0_20 = arith.constant 0 : index
    %c0_21 = arith.constant 0 : index
    %49 = vector.load %arg4[%c1, %c0_19, %c0_20, %c0_21] : memref<3x8x16x16xf32, #tpu.memory_space<vmem>>, vector<1x8x16x16xf32>
    %50 = vector.shape_cast %49 : vector<1x8x16x16xf32> to vector<8x16x16xf32>
    %cst_22 = arith.constant 0.000000e+00 : f32
    %51 = vector.broadcast %cst_22 : f32 to vector<8x16x16xf32>
    %52 = arith.subf %51, %50 : vector<8x16x16xf32>
    %cst_23 = arith.constant 0.000000e+00 : f32
    %53 = vector.broadcast %cst_23 : f32 to vector<8x16x16xf32>
    %54 = arith.select %48, %52, %53 : vector<8x16x16xi1>, vector<8x16x16xf32>
    %55 = arith.addf %46, %54 : vector<8x16x16xf32>
    %c2_i32_24 = arith.constant 2 : i32
    %56 = vector.broadcast %c2_i32_24 : i32 to vector<8x16x16xi32>
    %57 = arith.cmpi eq, %36, %56 : vector<8x16x16xi32>
    %c2 = arith.constant 2 : index
    %c0_25 = arith.constant 0 : index
    %c0_26 = arith.constant 0 : index
    %c0_27 = arith.constant 0 : index
    %58 = vector.load %arg4[%c2, %c0_25, %c0_26, %c0_27] : memref<3x8x16x16xf32, #tpu.memory_space<vmem>>, vector<1x8x16x16xf32>
    %59 = vector.shape_cast %58 : vector<1x8x16x16xf32> to vector<8x16x16xf32>
    %cst_28 = arith.constant 0.000000e+00 : f32
    %60 = vector.broadcast %cst_28 : f32 to vector<8x16x16xf32>
    %61 = arith.subf %60, %59 : vector<8x16x16xf32>
    %cst_29 = arith.constant 0.000000e+00 : f32
    %62 = vector.broadcast %cst_29 : f32 to vector<8x16x16xf32>
    %63 = arith.select %57, %61, %62 : vector<8x16x16xi1>, vector<8x16x16xf32>
    %64 = arith.addf %55, %63 : vector<8x16x16xf32>
    %c2_30 = arith.constant 2 : index
    %c0_31 = arith.constant 0 : index
    %c0_32 = arith.constant 0 : index
    %c0_33 = arith.constant 0 : index
    %65 = vector.load %arg4[%c2_30, %c0_31, %c0_32, %c0_33] : memref<3x8x16x16xf32, #tpu.memory_space<vmem>>, vector<1x8x16x16xf32>
    %66 = vector.shape_cast %65 : vector<1x8x16x16xf32> to vector<8x16x16xf32>
    %67 = math.exp %66 : vector<8x16x16xf32>
    %c8_i32 = arith.constant 8 : i32
    %68 = arith.muli %arg1, %c8_i32 : i32
    %69 = tpu.assume_multiple %68, 8 : i32
    %70 = arith.index_cast %69 : i32 to index
    %c0_34 = arith.constant 0 : index
    %c0_35 = arith.constant 0 : index
    %71 = vector.load %arg7[%70, %c0_34, %c0_35] : memref<16x16x16xf32, #tpu.memory_space<vmem>>, vector<8x16x16xf32>
    tpu.vector_store %arg7[%70, %c0_34, %c0_35], %67 {strides = array<i32>} : memref<16x16x16xf32, #tpu.memory_space<vmem>>, vector<8x16x16xf32>,
    %c2_i32_36 = arith.constant 2 : i32
    %72 = vector.broadcast %c2_i32_36 : i32 to vector<8x16x16xi32>
    %73 = arith.cmpi eq, %4, %72 : vector<8x16x16xi32>
    %74 = arith.andi %9, %73 : vector<8x16x16xi1>
    %cst_37 = arith.constant 1.000000e+00 : f32
    %cst_38 = arith.constant 0.000000e+00 : f32
    %75 = vector.broadcast %cst_37 : f32 to vector<8x16x16xf32>
    %76 = vector.broadcast %cst_38 : f32 to vector<8x16x16xf32>
    %77 = arith.select %74, %75, %76 : vector<8x16x16xi1>, vector<8x16x16xf32>
    %c3_i32_39 = arith.constant 3 : i32
    %c0_i32_40 = arith.constant 0 : i32
    %78 = arith.cmpi eq, %c3_i32_39, %c0_i32_40 : i32
    %c1_i32_41 = arith.constant 1 : i32
    %79 = arith.select %78, %c1_i32_41, %c3_i32_39 : i32
    %80 = vector.broadcast %79 : i32 to vector<8x16x16xi32>
    %81 = arith.remsi %4, %80 : vector<8x16x16xi32>
    %c0_i32_42 = arith.constant 0 : i32
    %82 = vector.broadcast %c0_i32_42 : i32 to vector<8x16x16xi32>
    %83 = arith.cmpi ne, %81, %82 : vector<8x16x16xi32>
    %c0_i32_43 = arith.constant 0 : i32
    %84 = vector.broadcast %c0_i32_43 : i32 to vector<8x16x16xi32>
    %85 = arith.cmpi slt, %81, %84 : vector<8x16x16xi32>
    %c0_i32_44 = arith.constant 0 : i32
    %86 = arith.cmpi slt, %79, %c0_i32_44 : i32
    %87 = vector.broadcast %86 : i1 to vector<8x16x16xi1>
    %88 = vector.broadcast %87 : vector<8x16x16xi1> to vector<8x16x16xi1>
    %89 = arith.xori %85, %88 : vector<8x16x16xi1>
    %90 = arith.andi %89, %83 : vector<8x16x16xi1>
    %91 = vector.broadcast %79 : i32 to vector<8x16x16xi32>
    %92 = arith.addi %81, %91 : vector<8x16x16xi32>
    %93 = arith.select %90, %92, %81 : vector<8x16x16xi1>, vector<8x16x16xi32>
    %c2_i32_45 = arith.constant 2 : i32
    %94 = vector.broadcast %c2_i32_45 : i32 to vector<8x16x16xi32>
    %95 = arith.cmpi eq, %93, %94 : vector<8x16x16xi32>
    %96 = arith.andi %11, %95 : vector<8x16x16xi1>
    %cst_46 = arith.constant 1.000000e+00 : f32
    %cst_47 = arith.constant 0.000000e+00 : f32
    %97 = vector.broadcast %cst_46 : f32 to vector<8x16x16xf32>
    %98 = vector.broadcast %cst_47 : f32 to vector<8x16x16xf32>
    %99 = arith.select %96, %97, %98 : vector<8x16x16xi1>, vector<8x16x16xf32>
    %c0_48 = arith.constant 0 : index
    %100 = memref.load %arg8[%c0_48] : memref<16xf32, #tpu.memory_space<smem>>
    %101 = arith.mulf %13, %64 : vector<8x16x16xf32>
    %102 = vector.shape_cast %101 : vector<8x16x16xf32> to vector<1x8x16x16xf32>
    %cst_49 = arith.constant dense<0.000000e+00> : vector<1xf32>
    %103 = vector.multi_reduction <add>, %102, %cst_49 [1, 2, 3] : vector<1x8x16x16xf32> to vector<1xf32>
    %104 = vector.shape_cast %103 : vector<1xf32> to vector<1x1x1x1xf32>
    %105 = vector.extract %104[0, 0, 0, 0] : f32 from vector<1x1x1x1xf32>
    %106 = arith.addf %100, %105 : f32
    %107 = arith.mulf %15, %64 : vector<8x16x16xf32>
    %108 = vector.shape_cast %107 : vector<8x16x16xf32> to vector<1x8x16x16xf32>
    %cst_50 = arith.constant dense<0.000000e+00> : vector<1xf32>
    %109 = vector.multi_reduction <add>, %108, %cst_50 [1, 2, 3] : vector<1x8x16x16xf32> to vector<1xf32>
    %110 = vector.shape_cast %109 : vector<1xf32> to vector<1x1x1x1xf32>
    %111 = vector.extract %110[0, 0, 0, 0] : f32 from vector<1x1x1x1xf32>
    %cst_51 = arith.constant 1.000000e+01 : f32
    %112 = arith.mulf %cst_51, %111 : f32
    %113 = arith.addf %106, %112 : f32
    %c0_52 = arith.constant 0 : index
    %114 = memref.load %arg8[%c0_52] : memref<16xf32, #tpu.memory_space<smem>>
    memref.store %113, %arg8[%c0_52] : memref<16xf32, #tpu.memory_space<smem>>
    %c1_53 = arith.constant 1 : index
    %115 = memref.load %arg8[%c1_53] : memref<16xf32, #tpu.memory_space<smem>>
    %116 = vector.shape_cast %13 : vector<8x16x16xf32> to vector<1x8x16x16xf32>
    %cst_54 = arith.constant dense<0.000000e+00> : vector<1xf32>
    %117 = vector.multi_reduction <add>, %116, %cst_54 [1, 2, 3] : vector<1x8x16x16xf32> to vector<1xf32>
    %118 = vector.shape_cast %117 : vector<1xf32> to vector<1x1x1x1xf32>
    %119 = vector.extract %118[0, 0, 0, 0] : f32 from vector<1x1x1x1xf32>
    %120 = arith.addf %115, %119 : f32
    %c1_55 = arith.constant 1 : index
    %121 = memref.load %arg8[%c1_55] : memref<16xf32, #tpu.memory_space<smem>>
    memref.store %120, %arg8[%c1_55] : memref<16xf32, #tpu.memory_space<smem>>
    %c2_56 = arith.constant 2 : index
    %122 = memref.load %arg8[%c2_56] : memref<16xf32, #tpu.memory_space<smem>>
    %123 = vector.shape_cast %15 : vector<8x16x16xf32> to vector<1x8x16x16xf32>
    %cst_57 = arith.constant dense<0.000000e+00> : vector<1xf32>
    %124 = vector.multi_reduction <add>, %123, %cst_57 [1, 2, 3] : vector<1x8x16x16xf32> to vector<1xf32>
    %125 = vector.shape_cast %124 : vector<1xf32> to vector<1x1x1x1xf32>
    %126 = vector.extract %125[0, 0, 0, 0] : f32 from vector<1x1x1x1xf32>
    %127 = arith.addf %122, %126 : f32
    %c2_58 = arith.constant 2 : index
    %128 = memref.load %arg8[%c2_58] : memref<16xf32, #tpu.memory_space<smem>>
    memref.store %127, %arg8[%c2_58] : memref<16xf32, #tpu.memory_space<smem>>
    %c3 = arith.constant 3 : index
    %129 = memref.load %arg8[%c3] : memref<16xf32, #tpu.memory_space<smem>>
    %130 = arith.mulf %67, %77 : vector<8x16x16xf32>
    %131 = vector.shape_cast %130 : vector<8x16x16xf32> to vector<1x8x16x16xf32>
    %cst_59 = arith.constant dense<0.000000e+00> : vector<1xf32>
    %132 = vector.multi_reduction <add>, %131, %cst_59 [1, 2, 3] : vector<1x8x16x16xf32> to vector<1xf32>
    %133 = vector.shape_cast %132 : vector<1xf32> to vector<1x1x1x1xf32>
    %134 = vector.extract %133[0, 0, 0, 0] : f32 from vector<1x1x1x1xf32>
    %135 = arith.addf %129, %134 : f32
    %c3_60 = arith.constant 3 : index
    %136 = memref.load %arg8[%c3_60] : memref<16xf32, #tpu.memory_space<smem>>
    memref.store %135, %arg8[%c3_60] : memref<16xf32, #tpu.memory_space<smem>>
    %c4 = arith.constant 4 : index
    %137 = memref.load %arg8[%c4] : memref<16xf32, #tpu.memory_space<smem>>
    %138 = arith.mulf %13, %67 : vector<8x16x16xf32>
    %139 = arith.mulf %138, %67 : vector<8x16x16xf32>
    %140 = vector.shape_cast %139 : vector<8x16x16xf32> to vector<1x8x16x16xf32>
    %cst_61 = arith.constant dense<0.000000e+00> : vector<1xf32>
    %141 = vector.multi_reduction <add>, %140, %cst_61 [1, 2, 3] : vector<1x8x16x16xf32> to vector<1xf32>
    %142 = vector.shape_cast %141 : vector<1xf32> to vector<1x1x1x1xf32>
    %143 = vector.extract %142[0, 0, 0, 0] : f32 from vector<1x1x1x1xf32>
    %144 = arith.addf %137, %143 : f32
    %c4_62 = arith.constant 4 : index
    %145 = memref.load %arg8[%c4_62] : memref<16xf32, #tpu.memory_space<smem>>
    memref.store %144, %arg8[%c4_62] : memref<16xf32, #tpu.memory_space<smem>>
    %c5 = arith.constant 5 : index
    %146 = memref.load %arg8[%c5] : memref<16xf32, #tpu.memory_space<smem>>
    %147 = vector.shape_cast %77 : vector<8x16x16xf32> to vector<1x8x16x16xf32>
    %cst_63 = arith.constant dense<0.000000e+00> : vector<1xf32>
    %148 = vector.multi_reduction <add>, %147, %cst_63 [1, 2, 3] : vector<1x8x16x16xf32> to vector<1xf32>
    %149 = vector.shape_cast %148 : vector<1xf32> to vector<1x1x1x1xf32>
    %150 = vector.extract %149[0, 0, 0, 0] : f32 from vector<1x1x1x1xf32>
    %151 = arith.addf %146, %150 : f32
    %c5_64 = arith.constant 5 : index
    %152 = memref.load %arg8[%c5_64] : memref<16xf32, #tpu.memory_space<smem>>
    memref.store %151, %arg8[%c5_64] : memref<16xf32, #tpu.memory_space<smem>>
    %c6 = arith.constant 6 : index
    %153 = memref.load %arg8[%c6] : memref<16xf32, #tpu.memory_space<smem>>
    %154 = arith.mulf %67, %99 : vector<8x16x16xf32>
    %155 = vector.shape_cast %154 : vector<8x16x16xf32> to vector<1x8x16x16xf32>
    %cst_65 = arith.constant dense<0.000000e+00> : vector<1xf32>
    %156 = vector.multi_reduction <add>, %155, %cst_65 [1, 2, 3] : vector<1x8x16x16xf32> to vector<1xf32>
    %157 = vector.shape_cast %156 : vector<1xf32> to vector<1x1x1x1xf32>
    %158 = vector.extract %157[0, 0, 0, 0] : f32 from vector<1x1x1x1xf32>
    %159 = arith.addf %153, %158 : f32
    %c6_66 = arith.constant 6 : index
    %160 = memref.load %arg8[%c6_66] : memref<16xf32, #tpu.memory_space<smem>>
    memref.store %159, %arg8[%c6_66] : memref<16xf32, #tpu.memory_space<smem>>
    %c7 = arith.constant 7 : index
    %161 = memref.load %arg8[%c7] : memref<16xf32, #tpu.memory_space<smem>>
    %162 = arith.mulf %15, %67 : vector<8x16x16xf32>
    %163 = arith.mulf %162, %67 : vector<8x16x16xf32>
    %164 = vector.shape_cast %163 : vector<8x16x16xf32> to vector<1x8x16x16xf32>
    %cst_67 = arith.constant dense<0.000000e+00> : vector<1xf32>
    %165 = vector.multi_reduction <add>, %164, %cst_67 [1, 2, 3] : vector<1x8x16x16xf32> to vector<1xf32>
    %166 = vector.shape_cast %165 : vector<1xf32> to vector<1x1x1x1xf32>
    %167 = vector.extract %166[0, 0, 0, 0] : f32 from vector<1x1x1x1xf32>
    %168 = arith.addf %161, %167 : f32
    %c7_68 = arith.constant 7 : index
    %169 = memref.load %arg8[%c7_68] : memref<16xf32, #tpu.memory_space<smem>>
    memref.store %168, %arg8[%c7_68] : memref<16xf32, #tpu.memory_space<smem>>
    %c8 = arith.constant 8 : index
    %170 = memref.load %arg8[%c8] : memref<16xf32, #tpu.memory_space<smem>>
    %171 = vector.shape_cast %99 : vector<8x16x16xf32> to vector<1x8x16x16xf32>
    %cst_69 = arith.constant dense<0.000000e+00> : vector<1xf32>
    %172 = vector.multi_reduction <add>, %171, %cst_69 [1, 2, 3] : vector<1x8x16x16xf32> to vector<1xf32>
    %173 = vector.shape_cast %172 : vector<1xf32> to vector<1x1x1x1xf32>
    %174 = vector.extract %173[0, 0, 0, 0] : f32 from vector<1x1x1x1xf32>
    %175 = arith.addf %170, %174 : f32
    %c8_70 = arith.constant 8 : index
    %176 = memref.load %arg8[%c8_70] : memref<16xf32, #tpu.memory_space<smem>>
    memref.store %175, %arg8[%c8_70] : memref<16xf32, #tpu.memory_space<smem>>
    %c1_i32_71 = arith.constant 1 : i32
    %177 = arith.cmpi eq, %arg1, %c1_i32_71 : i32
    %178 = arith.extui %177 : i1 to i32
    %c0_i32_72 = arith.constant 0 : i32
    %179 = arith.cmpi ne, %178, %c0_i32_72 : i32
    scf.if %179 {
      %c1_73 = arith.constant 1 : index
      %180 = memref.load %arg8[%c1_73] : memref<16xf32, #tpu.memory_space<smem>>
      %c2_74 = arith.constant 2 : index
      %181 = memref.load %arg8[%c2_74] : memref<16xf32, #tpu.memory_space<smem>>
      %cst_75 = arith.constant 1.000000e+01 : f32
      %182 = arith.mulf %cst_75, %181 : f32
      %183 = arith.addf %180, %182 : f32
      %cst_76 = arith.constant 1.000000e+00 : f32
      %184 = arith.maximumf %183, %cst_76 : f32
      %cst_77 = arith.constant 0.000000e+00 : f32
      %185 = arith.cmpf ogt, %183, %cst_77 : f32
      %cst_78 = arith.constant 1.000000e+00 : f32
      %cst_79 = arith.constant 0.000000e+00 : f32
      %186 = arith.select %185, %cst_78, %cst_79 : f32
      %cst_80 = arith.constant 0.000000e+00 : f32
      %187 = arith.cmpf ogt, %183, %cst_80 : f32
      %c0_81 = arith.constant 0 : index
      %188 = memref.load %arg8[%c0_81] : memref<16xf32, #tpu.memory_space<smem>>
      %189 = arith.divf %188, %184 : f32
      %cst_82 = arith.constant 0.000000e+00 : f32
      %190 = arith.select %187, %189, %cst_82 : f32
      %c4_83 = arith.constant 4 : index
      %191 = memref.load %arg8[%c4_83] : memref<16xf32, #tpu.memory_space<smem>>
      %c5_84 = arith.constant 5 : index
      %192 = memref.load %arg8[%c5_84] : memref<16xf32, #tpu.memory_space<smem>>
      %193 = arith.addf %191, %192 : f32
      %cst_85 = arith.constant 9.99999997E-7 : f32
      %194 = arith.maximumf %193, %cst_85 : f32
      %c3_86 = arith.constant 3 : index
      %195 = memref.load %arg8[%c3_86] : memref<16xf32, #tpu.memory_space<smem>>
      %cst_87 = arith.constant 2.000000e+00 : f32
      %196 = arith.mulf %cst_87, %195 : f32
      %197 = arith.divf %196, %194 : f32
      %cst_88 = arith.constant 1.000000e+00 : f32
      %198 = arith.subf %cst_88, %197 : f32
      %199 = arith.mulf %198, %180 : f32
      %c7_89 = arith.constant 7 : index
      %200 = memref.load %arg8[%c7_89] : memref<16xf32, #tpu.memory_space<smem>>
      %c8_90 = arith.constant 8 : index
      %201 = memref.load %arg8[%c8_90] : memref<16xf32, #tpu.memory_space<smem>>
      %202 = arith.addf %200, %201 : f32
      %cst_91 = arith.constant 9.99999997E-7 : f32
      %203 = arith.maximumf %202, %cst_91 : f32
      %c6_92 = arith.constant 6 : index
      %204 = memref.load %arg8[%c6_92] : memref<16xf32, #tpu.memory_space<smem>>
      %cst_93 = arith.constant 2.000000e+00 : f32
      %205 = arith.mulf %cst_93, %204 : f32
      %206 = arith.divf %205, %203 : f32
      %cst_94 = arith.constant 1.000000e+00 : f32
      %207 = arith.subf %cst_94, %206 : f32
      %208 = arith.mulf %207, %181 : f32
      %cst_95 = arith.constant 1.000000e+01 : f32
      %209 = arith.mulf %208, %cst_95 : f32
      %cst_96 = arith.constant 0.000000e+00 : f32
      %210 = arith.cmpf ogt, %183, %cst_96 : f32
      %211 = arith.addf %199, %209 : f32
      %212 = arith.divf %211, %184 : f32
      %cst_97 = arith.constant 0.000000e+00 : f32
      %213 = arith.select %210, %212, %cst_97 : f32
      %c5_98 = arith.constant 5 : index
      %214 = memref.load %arg8[%c5_98] : memref<16xf32, #tpu.memory_space<smem>>
      %c8_99 = arith.constant 8 : index
      %215 = memref.load %arg8[%c8_99] : memref<16xf32, #tpu.memory_space<smem>>
      %216 = arith.addf %214, %215 : f32
      %cst_100 = arith.constant 0.000000e+00 : f32
      %217 = arith.cmpf ogt, %216, %cst_100 : f32
      %cst_101 = arith.constant 1.000000e+00 : f32
      %cst_102 = arith.constant 0.000000e+00 : f32
      %218 = arith.select %217, %cst_101, %cst_102 : f32
      %c0_103 = arith.constant 0 : index
      %c0_104 = arith.constant 0 : index
      %219 = vector.load %arg2[%c0_103, %c0_104] : memref<16x16xf32, #tpu.memory_space<vmem>>, vector<16x16xf32>
      %c0_105 = arith.constant 0 : index
      %c0_106 = arith.constant 0 : index
      %220 = vector.load %arg3[%c0_105, %c0_106] : memref<16x16xf32, #tpu.memory_space<vmem>>, vector<16x16xf32>
      %c0_107 = arith.constant 0 : index
      %c0_108 = arith.constant 0 : index
      %c0_109 = arith.constant 0 : index
      %221 = vector.load %arg7[%c0_107, %c0_108, %c0_109] : memref<16x16x16xf32, #tpu.memory_space<vmem>>, vector<1x16x16xf32>
      %222 = vector.shape_cast %221 : vector<1x16x16xf32> to vector<16x16xf32>
      %cst_110 = arith.constant 0.328021348 : f32
      %223 = vector.broadcast %cst_110 : f32 to vector<16x16xf32>
      %224 = arith.mulf %223, %222 : vector<16x16xf32>
      %c1_111 = arith.constant 1 : index
      %c0_112 = arith.constant 0 : index
      %c0_113 = arith.constant 0 : index
      %225 = vector.load %arg7[%c1_111, %c0_112, %c0_113] : memref<16x16x16xf32, #tpu.memory_space<vmem>>, vector<1x16x16xf32>
      %226 = vector.shape_cast %225 : vector<1x16x16xf32> to vector<16x16xf32>
      %cst_114 = arith.constant 0.198955014 : f32
      %227 = vector.broadcast %cst_114 : f32 to vector<16x16xf32>
      %228 = arith.mulf %227, %226 : vector<16x16xf32>
      %229 = arith.addf %224, %228 : vector<16x16xf32>
      %cst_115 = arith.constant dense<0.000000e+00> : vector<16x16xf32>
      %230 = tpu.matmul %219, %229, %cst_115 {dimension_numbers = #tpu.dot_dimension_numbers<[1], [0], [0], [1], [0, 0, 1, 1], [], []>} : vector<16x16xf32>, vector<16x16xf32>, vector<16x16xf32> -> vector<16x16xf32>
      %cst_116 = arith.constant dense<0.000000e+00> : vector<16x16xf32>
      %231 = tpu.matmul %230, %220, %cst_116 {dimension_numbers = #tpu.dot_dimension_numbers<[1], [0], [0], [1], [0, 0, 1, 1], [], []>} : vector<16x16xf32>, vector<16x16xf32>, vector<16x16xf32> -> vector<16x16xf32>
      %c0_117 = arith.constant 0 : index
      %c0_118 = arith.constant 0 : index
      %c0_119 = arith.constant 0 : index
      %232 = vector.load %arg7[%c0_117, %c0_118, %c0_119] : memref<16x16x16xf32, #tpu.memory_space<vmem>>, vector<1x16x16xf32>
      %233 = vector.shape_cast %232 : vector<1x16x16xf32> to vector<16x16xf32>
      %234 = arith.subf %233, %231 : vector<16x16xf32>
      %235 = math.absf %234 : vector<16x16xf32>
      %236 = vector.shape_cast %235 : vector<16x16xf32> to vector<1x16x16xf32>
      %cst_120 = arith.constant dense<0.000000e+00> : vector<1xf32>
      %237 = vector.multi_reduction <add>, %236, %cst_120 [1, 2] : vector<1x16x16xf32> to vector<1xf32>
      %238 = vector.shape_cast %237 : vector<1xf32> to vector<1x1x1xf32>
      %239 = vector.extract %238[0, 0, 0] : f32 from vector<1x1x1xf32>
      %cst_121 = arith.constant 0.000000e+00 : f32
      %240 = arith.addf %cst_121, %239 : f32
      %c0_122 = arith.constant 0 : index
      %c0_123 = arith.constant 0 : index
      %c0_124 = arith.constant 0 : index
      %241 = vector.load %arg7[%c0_122, %c0_123, %c0_124] : memref<16x16x16xf32, #tpu.memory_space<vmem>>, vector<1x16x16xf32>
      %242 = vector.shape_cast %241 : vector<1x16x16xf32> to vector<16x16xf32>
      %cst_125 = arith.constant 0.328021348 : f32
      %243 = vector.broadcast %cst_125 : f32 to vector<16x16xf32>
      %244 = arith.mulf %243, %242 : vector<16x16xf32>
      %c1_126 = arith.constant 1 : index
      %c0_127 = arith.constant 0 : index
      %c0_128 = arith.constant 0 : index
      %245 = vector.load %arg7[%c1_126, %c0_127, %c0_128] : memref<16x16x16xf32, #tpu.memory_space<vmem>>, vector<1x16x16xf32>
      %246 = vector.shape_cast %245 : vector<1x16x16xf32> to vector<16x16xf32>
      %cst_129 = arith.constant 0.274068624 : f32
      %247 = vector.broadcast %cst_129 : f32 to vector<16x16xf32>
      %248 = arith.mulf %247, %246 : vector<16x16xf32>
      %249 = arith.addf %244, %248 : vector<16x16xf32>
      %c2_130 = arith.constant 2 : index
      %c0_131 = arith.constant 0 : index
      %c0_132 = arith.constant 0 : index
      %250 = vector.load %arg7[%c2_130, %c0_131, %c0_132] : memref<16x16x16xf32, #tpu.memory_space<vmem>>, vector<1x16x16xf32>
      %251 = vector.shape_cast %250 : vector<1x16x16xf32> to vector<16x16xf32>
      %cst_133 = arith.constant 0.123841405 : f32
      %252 = vector.broadcast %cst_133 : f32 to vector<16x16xf32>
      %253 = arith.mulf %252, %251 : vector<16x16xf32>
      %254 = arith.addf %249, %253 : vector<16x16xf32>
      %c3_134 = arith.constant 3 : index
      %c0_135 = arith.constant 0 : index
      %c0_136 = arith.constant 0 : index
      %255 = vector.load %arg7[%c3_134, %c0_135, %c0_136] : memref<16x16x16xf32, #tpu.memory_space<vmem>>, vector<1x16x16xf32>
      %256 = vector.shape_cast %255 : vector<1x16x16xf32> to vector<16x16xf32>
      %cst_137 = arith.constant 0.0751136094 : f32
      %257 = vector.broadcast %cst_137 : f32 to vector<16x16xf32>
      %258 = arith.mulf %257, %256 : vector<16x16xf32>
      %259 = arith.addf %254, %258 : vector<16x16xf32>
      %cst_138 = arith.constant dense<0.000000e+00> : vector<16x16xf32>
      %260 = tpu.matmul %219, %259, %cst_138 {dimension_numbers = #tpu.dot_dimension_numbers<[1], [0], [0], [1], [0, 0, 1, 1], [], []>} : vector<16x16xf32>, vector<16x16xf32>, vector<16x16xf32> -> vector<16x16xf32>
      %cst_139 = arith.constant dense<0.000000e+00> : vector<16x16xf32>
      %261 = tpu.matmul %260, %220, %cst_139 {dimension_numbers = #tpu.dot_dimension_numbers<[1], [0], [0], [1], [0, 0, 1, 1], [], []>} : vector<16x16xf32>, vector<16x16xf32>, vector<16x16xf32> -> vector<16x16xf32>
      %c1_140 = arith.constant 1 : index
      %c0_141 = arith.constant 0 : index
      %c0_142 = arith.constant 0 : index
      %262 = vector.load %arg7[%c1_140, %c0_141, %c0_142] : memref<16x16x16xf32, #tpu.memory_space<vmem>>, vector<1x16x16xf32>
      %263 = vector.shape_cast %262 : vector<1x16x16xf32> to vector<16x16xf32>
      %264 = arith.subf %263, %261 : vector<16x16xf32>
      %265 = math.absf %264 : vector<16x16xf32>
      %266 = vector.shape_cast %265 : vector<16x16xf32> to vector<1x16x16xf32>
      %cst_143 = arith.constant dense<0.000000e+00> : vector<1xf32>
      %267 = vector.multi_reduction <add>, %266, %cst_143 [1, 2] : vector<1x16x16xf32> to vector<1xf32>
      %268 = vector.shape_cast %267 : vector<1xf32> to vector<1x1x1xf32>
      %269 = vector.extract %268[0, 0, 0] : f32 from vector<1x1x1xf32>
      %270 = arith.addf %240, %269 : f32
      %c0_144 = arith.constant 0 : index
      %c0_145 = arith.constant 0 : index
      %c0_146 = arith.constant 0 : index
      %271 = vector.load %arg7[%c0_144, %c0_145, %c0_146] : memref<16x16x16xf32, #tpu.memory_space<vmem>>, vector<1x16x16xf32>
      %272 = vector.shape_cast %271 : vector<1x16x16xf32> to vector<16x16xf32>
      %cst_147 = arith.constant 0.123841405 : f32
      %273 = vector.broadcast %cst_147 : f32 to vector<16x16xf32>
      %274 = arith.mulf %273, %272 : vector<16x16xf32>
      %c1_148 = arith.constant 1 : index
      %c0_149 = arith.constant 0 : index
      %c0_150 = arith.constant 0 : index
      %275 = vector.load %arg7[%c1_148, %c0_149, %c0_150] : memref<16x16x16xf32, #tpu.memory_space<vmem>>, vector<1x16x16xf32>
      %276 = vector.shape_cast %275 : vector<1x16x16xf32> to vector<16x16xf32>
      %cst_151 = arith.constant 0.274068624 : f32
      %277 = vector.broadcast %cst_151 : f32 to vector<16x16xf32>
      %278 = arith.mulf %277, %276 : vector<16x16xf32>
      %279 = arith.addf %274, %278 : vector<16x16xf32>
      %c2_152 = arith.constant 2 : index
      %c0_153 = arith.constant 0 : index
      %c0_154 = arith.constant 0 : index
      %280 = vector.load %arg7[%c2_152, %c0_153, %c0_154] : memref<16x16x16xf32, #tpu.memory_space<vmem>>, vector<1x16x16xf32>
      %281 = vector.shape_cast %280 : vector<1x16x16xf32> to vector<16x16xf32>
      %cst_155 = arith.constant 0.328021348 : f32
      %282 = vector.broadcast %cst_155 : f32 to vector<16x16xf32>
      %283 = arith.mulf %282, %281 : vector<16x16xf32>
      %284 = arith.addf %279, %283 : vector<16x16xf32>
      %c3_156 = arith.constant 3 : index
      %c0_157 = arith.constant 0 : index
      %c0_158 = arith.constant 0 : index
      %285 = vector.load %arg7[%c3_156, %c0_157, %c0_158] : memref<16x16x16xf32, #tpu.memory_space<vmem>>, vector<1x16x16xf32>
      %286 = vector.shape_cast %285 : vector<1x16x16xf32> to vector<16x16xf32>
      %cst_159 = arith.constant 0.198955014 : f32
      %287 = vector.broadcast %cst_159 : f32 to vector<16x16xf32>
      %288 = arith.mulf %287, %286 : vector<16x16xf32>
      %289 = arith.addf %284, %288 : vector<16x16xf32>
      %cst_160 = arith.constant dense<0.000000e+00> : vector<16x16xf32>
      %290 = tpu.matmul %219, %289, %cst_160 {dimension_numbers = #tpu.dot_dimension_numbers<[1], [0], [0], [1], [0, 0, 1, 1], [], []>} : vector<16x16xf32>, vector<16x16xf32>, vector<16x16xf32> -> vector<16x16xf32>
      %cst_161 = arith.constant dense<0.000000e+00> : vector<16x16xf32>
      %291 = tpu.matmul %290, %220, %cst_161 {dimension_numbers = #tpu.dot_dimension_numbers<[1], [0], [0], [1], [0, 0, 1, 1], [], []>} : vector<16x16xf32>, vector<16x16xf32>, vector<16x16xf32> -> vector<16x16xf32>
      %c2_162 = arith.constant 2 : index
      %c0_163 = arith.constant 0 : index
      %c0_164 = arith.constant 0 : index
      %292 = vector.load %arg7[%c2_162, %c0_163, %c0_164] : memref<16x16x16xf32, #tpu.memory_space<vmem>>, vector<1x16x16xf32>
      %293 = vector.shape_cast %292 : vector<1x16x16xf32> to vector<16x16xf32>
      %294 = arith.subf %293, %291 : vector<16x16xf32>
      %295 = math.absf %294 : vector<16x16xf32>
      %296 = vector.shape_cast %295 : vector<16x16xf32> to vector<1x16x16xf32>
      %cst_165 = arith.constant dense<0.000000e+00> : vector<1xf32>
      %297 = vector.multi_reduction <add>, %296, %cst_165 [1, 2] : vector<1x16x16xf32> to vector<1xf32>
      %298 = vector.shape_cast %297 : vector<1xf32> to vector<1x1x1xf32>
      %299 = vector.extract %298[0, 0, 0] : f32 from vector<1x1x1xf32>
      %300 = arith.addf %270, %299 : f32
      %c1_166 = arith.constant 1 : index
      %c0_167 = arith.constant 0 : index
      %c0_168 = arith.constant 0 : index
      %301 = vector.load %arg7[%c1_166, %c0_167, %c0_168] : memref<16x16x16xf32, #tpu.memory_space<vmem>>, vector<1x16x16xf32>
      %302 = vector.shape_cast %301 : vector<1x16x16xf32> to vector<16x16xf32>
      %cst_169 = arith.constant 0.198955014 : f32
      %303 = vector.broadcast %cst_169 : f32 to vector<16x16xf32>
      %304 = arith.mulf %303, %302 : vector<16x16xf32>
      %c2_170 = arith.constant 2 : index
      %c0_171 = arith.constant 0 : index
      %c0_172 = arith.constant 0 : index
      %305 = vector.load %arg7[%c2_170, %c0_171, %c0_172] : memref<16x16x16xf32, #tpu.memory_space<vmem>>, vector<1x16x16xf32>
      %306 = vector.shape_cast %305 : vector<1x16x16xf32> to vector<16x16xf32>
      %cst_173 = arith.constant 0.328021348 : f32
      %307 = vector.broadcast %cst_173 : f32 to vector<16x16xf32>
      %308 = arith.mulf %307, %306 : vector<16x16xf32>
      %309 = arith.addf %304, %308 : vector<16x16xf32>
      %c3_174 = arith.constant 3 : index
      %c0_175 = arith.constant 0 : index
      %c0_176 = arith.constant 0 : index
      %310 = vector.load %arg7[%c3_174, %c0_175, %c0_176] : memref<16x16x16xf32, #tpu.memory_space<vmem>>, vector<1x16x16xf32>
      %311 = vector.shape_cast %310 : vector<1x16x16xf32> to vector<16x16xf32>
      %cst_177 = arith.constant 0.274068624 : f32
      %312 = vector.broadcast %cst_177 : f32 to vector<16x16xf32>
      %313 = arith.mulf %312, %311 : vector<16x16xf32>
      %314 = arith.addf %309, %313 : vector<16x16xf32>
      %c4_178 = arith.constant 4 : index
      %c0_179 = arith.constant 0 : index
      %c0_180 = arith.constant 0 : index
      %315 = vector.load %arg7[%c4_178, %c0_179, %c0_180] : memref<16x16x16xf32, #tpu.memory_space<vmem>>, vector<1x16x16xf32>
      %316 = vector.shape_cast %315 : vector<1x16x16xf32> to vector<16x16xf32>
      %cst_181 = arith.constant 0.123841405 : f32
      %317 = vector.broadcast %cst_181 : f32 to vector<16x16xf32>
      %318 = arith.mulf %317, %316 : vector<16x16xf32>
      %319 = arith.addf %314, %318 : vector<16x16xf32>
      %c5_182 = arith.constant 5 : index
      %c0_183 = arith.constant 0 : index
      %c0_184 = arith.constant 0 : index
      %320 = vector.load %arg7[%c5_182, %c0_183, %c0_184] : memref<16x16x16xf32, #tpu.memory_space<vmem>>, vector<1x16x16xf32>
      %321 = vector.shape_cast %320 : vector<1x16x16xf32> to vector<16x16xf32>
      %cst_185 = arith.constant 0.0751136094 : f32
      %322 = vector.broadcast %cst_185 : f32 to vector<16x16xf32>
      %323 = arith.mulf %322, %321 : vector<16x16xf32>
      %324 = arith.addf %319, %323 : vector<16x16xf32>
      %cst_186 = arith.constant dense<0.000000e+00> : vector<16x16xf32>
      %325 = tpu.matmul %219, %324, %cst_186 {dimension_numbers = #tpu.dot_dimension_numbers<[1], [0], [0], [1], [0, 0, 1, 1], [], []>} : vector<16x16xf32>, vector<16x16xf32>, vector<16x16xf32> -> vector<16x16xf32>
      %cst_187 = arith.constant dense<0.000000e+00> : vector<16x16xf32>
      %326 = tpu.matmul %325, %220, %cst_187 {dimension_numbers = #tpu.dot_dimension_numbers<[1], [0], [0], [1], [0, 0, 1, 1], [], []>} : vector<16x16xf32>, vector<16x16xf32>, vector<16x16xf32> -> vector<16x16xf32>
      %c3_188 = arith.constant 3 : index
      %c0_189 = arith.constant 0 : index
      %c0_190 = arith.constant 0 : index
      %327 = vector.load %arg7[%c3_188, %c0_189, %c0_190] : memref<16x16x16xf32, #tpu.memory_space<vmem>>, vector<1x16x16xf32>
      %328 = vector.shape_cast %327 : vector<1x16x16xf32> to vector<16x16xf32>
      %329 = arith.subf %328, %326 : vector<16x16xf32>
      %330 = math.absf %329 : vector<16x16xf32>
      %331 = vector.shape_cast %330 : vector<16x16xf32> to vector<1x16x16xf32>
      %cst_191 = arith.constant dense<0.000000e+00> : vector<1xf32>
      %332 = vector.multi_reduction <add>, %331, %cst_191 [1, 2] : vector<1x16x16xf32> to vector<1xf32>
      %333 = vector.shape_cast %332 : vector<1xf32> to vector<1x1x1xf32>
      %334 = vector.extract %333[0, 0, 0] : f32 from vector<1x1x1xf32>
      %335 = arith.addf %300, %334 : f32
      %c1_192 = arith.constant 1 : index
      %c0_193 = arith.constant 0 : index
      %c0_194 = arith.constant 0 : index
      %336 = vector.load %arg7[%c1_192, %c0_193, %c0_194] : memref<16x16x16xf32, #tpu.memory_space<vmem>>, vector<1x16x16xf32>
      %337 = vector.shape_cast %336 : vector<1x16x16xf32> to vector<16x16xf32>
      %cst_195 = arith.constant 0.0751136094 : f32
      %338 = vector.broadcast %cst_195 : f32 to vector<16x16xf32>
      %339 = arith.mulf %338, %337 : vector<16x16xf32>
      %c2_196 = arith.constant 2 : index
      %c0_197 = arith.constant 0 : index
      %c0_198 = arith.constant 0 : index
      %340 = vector.load %arg7[%c2_196, %c0_197, %c0_198] : memref<16x16x16xf32, #tpu.memory_space<vmem>>, vector<1x16x16xf32>
      %341 = vector.shape_cast %340 : vector<1x16x16xf32> to vector<16x16xf32>
      %cst_199 = arith.constant 0.123841405 : f32
      %342 = vector.broadcast %cst_199 : f32 to vector<16x16xf32>
      %343 = arith.mulf %342, %341 : vector<16x16xf32>
      %344 = arith.addf %339, %343 : vector<16x16xf32>
      %c3_200 = arith.constant 3 : index
      %c0_201 = arith.constant 0 : index
      %c0_202 = arith.constant 0 : index
      %345 = vector.load %arg7[%c3_200, %c0_201, %c0_202] : memref<16x16x16xf32, #tpu.memory_space<vmem>>, vector<1x16x16xf32>
      %346 = vector.shape_cast %345 : vector<1x16x16xf32> to vector<16x16xf32>
      %cst_203 = arith.constant 0.274068624 : f32
      %347 = vector.broadcast %cst_203 : f32 to vector<16x16xf32>
      %348 = arith.mulf %347, %346 : vector<16x16xf32>
      %349 = arith.addf %344, %348 : vector<16x16xf32>
      %c4_204 = arith.constant 4 : index
      %c0_205 = arith.constant 0 : index
      %c0_206 = arith.constant 0 : index
      %350 = vector.load %arg7[%c4_204, %c0_205, %c0_206] : memref<16x16x16xf32, #tpu.memory_space<vmem>>, vector<1x16x16xf32>
      %351 = vector.shape_cast %350 : vector<1x16x16xf32> to vector<16x16xf32>
      %cst_207 = arith.constant 0.328021348 : f32
      %352 = vector.broadcast %cst_207 : f32 to vector<16x16xf32>
      %353 = arith.mulf %352, %351 : vector<16x16xf32>
      %354 = arith.addf %349, %353 : vector<16x16xf32>
      %c5_208 = arith.constant 5 : index
      %c0_209 = arith.constant 0 : index
      %c0_210 = arith.constant 0 : index
      %355 = vector.load %arg7[%c5_208, %c0_209, %c0_210] : memref<16x16x16xf32, #tpu.memory_space<vmem>>, vector<1x16x16xf32>
      %356 = vector.shape_cast %355 : vector<1x16x16xf32> to vector<16x16xf32>
      %cst_211 = arith.constant 0.198955014 : f32
      %357 = vector.broadcast %cst_211 : f32 to vector<16x16xf32>
      %358 = arith.mulf %357, %356 : vector<16x16xf32>
      %359 = arith.addf %354, %358 : vector<16x16xf32>
      %cst_212 = arith.constant dense<0.000000e+00> : vector<16x16xf32>
      %360 = tpu.matmul %219, %359, %cst_212 {dimension_numbers = #tpu.dot_dimension_numbers<[1], [0], [0], [1], [0, 0, 1, 1], [], []>} : vector<16x16xf32>, vector<16x16xf32>, vector<16x16xf32> -> vector<16x16xf32>
      %cst_213 = arith.constant dense<0.000000e+00> : vector<16x16xf32>
      %361 = tpu.matmul %360, %220, %cst_213 {dimension_numbers = #tpu.dot_dimension_numbers<[1], [0], [0], [1], [0, 0, 1, 1], [], []>} : vector<16x16xf32>, vector<16x16xf32>, vector<16x16xf32> -> vector<16x16xf32>
      %c4_214 = arith.constant 4 : index
      %c0_215 = arith.constant 0 : index
      %c0_216 = arith.constant 0 : index
      %362 = vector.load %arg7[%c4_214, %c0_215, %c0_216] : memref<16x16x16xf32, #tpu.memory_space<vmem>>, vector<1x16x16xf32>
      %363 = vector.shape_cast %362 : vector<1x16x16xf32> to vector<16x16xf32>
      %364 = arith.subf %363, %361 : vector<16x16xf32>
      %365 = math.absf %364 : vector<16x16xf32>
      %366 = vector.shape_cast %365 : vector<16x16xf32> to vector<1x16x16xf32>
      %cst_217 = arith.constant dense<0.000000e+00> : vector<1xf32>
      %367 = vector.multi_reduction <add>, %366, %cst_217 [1, 2] : vector<1x16x16xf32> to vector<1xf32>
      %368 = vector.shape_cast %367 : vector<1xf32> to vector<1x1x1xf32>
      %369 = vector.extract %368[0, 0, 0] : f32 from vector<1x1x1xf32>
      %370 = arith.addf %335, %369 : f32
      %c3_218 = arith.constant 3 : index
      %c0_219 = arith.constant 0 : index
      %c0_220 = arith.constant 0 : index
      %371 = vector.load %arg7[%c3_218, %c0_219, %c0_220] : memref<16x16x16xf32, #tpu.memory_space<vmem>>, vector<1x16x16xf32>
      %372 = vector.shape_cast %371 : vector<1x16x16xf32> to vector<16x16xf32>
      %cst_221 = arith.constant 0.198955014 : f32
      %373 = vector.broadcast %cst_221 : f32 to vector<16x16xf32>
      %374 = arith.mulf %373, %372 : vector<16x16xf32>
      %c4_222 = arith.constant 4 : index
      %c0_223 = arith.constant 0 : index
      %c0_224 = arith.constant 0 : index
      %375 = vector.load %arg7[%c4_222, %c0_223, %c0_224] : memref<16x16x16xf32, #tpu.memory_space<vmem>>, vector<1x16x16xf32>
      %376 = vector.shape_cast %375 : vector<1x16x16xf32> to vector<16x16xf32>
      %cst_225 = arith.constant 0.328021348 : f32
      %377 = vector.broadcast %cst_225 : f32 to vector<16x16xf32>
      %378 = arith.mulf %377, %376 : vector<16x16xf32>
      %379 = arith.addf %374, %378 : vector<16x16xf32>
      %c5_226 = arith.constant 5 : index
      %c0_227 = arith.constant 0 : index
      %c0_228 = arith.constant 0 : index
      %380 = vector.load %arg7[%c5_226, %c0_227, %c0_228] : memref<16x16x16xf32, #tpu.memory_space<vmem>>, vector<1x16x16xf32>
      %381 = vector.shape_cast %380 : vector<1x16x16xf32> to vector<16x16xf32>
      %cst_229 = arith.constant 0.274068624 : f32
      %382 = vector.broadcast %cst_229 : f32 to vector<16x16xf32>
      %383 = arith.mulf %382, %381 : vector<16x16xf32>
      %384 = arith.addf %379, %383 : vector<16x16xf32>
      %c6_230 = arith.constant 6 : index
      %c0_231 = arith.constant 0 : index
      %c0_232 = arith.constant 0 : index
      %385 = vector.load %arg7[%c6_230, %c0_231, %c0_232] : memref<16x16x16xf32, #tpu.memory_space<vmem>>, vector<1x16x16xf32>
      %386 = vector.shape_cast %385 : vector<1x16x16xf32> to vector<16x16xf32>
      %cst_233 = arith.constant 0.123841405 : f32
      %387 = vector.broadcast %cst_233 : f32 to vector<16x16xf32>
      %388 = arith.mulf %387, %386 : vector<16x16xf32>
      %389 = arith.addf %384, %388 : vector<16x16xf32>
      %c7_234 = arith.constant 7 : index
      %c0_235 = arith.constant 0 : index
      %c0_236 = arith.constant 0 : index
      %390 = vector.load %arg7[%c7_234, %c0_235, %c0_236] : memref<16x16x16xf32, #tpu.memory_space<vmem>>, vector<1x16x16xf32>
      %391 = vector.shape_cast %390 : vector<1x16x16xf32> to vector<16x16xf32>
      %cst_237 = arith.constant 0.0751136094 : f32
      %392 = vector.broadcast %cst_237 : f32 to vector<16x16xf32>
      %393 = arith.mulf %392, %391 : vector<16x16xf32>
      %394 = arith.addf %389, %393 : vector<16x16xf32>
      %cst_238 = arith.constant dense<0.000000e+00> : vector<16x16xf32>
      %395 = tpu.matmul %219, %394, %cst_238 {dimension_numbers = #tpu.dot_dimension_numbers<[1], [0], [0], [1], [0, 0, 1, 1], [], []>} : vector<16x16xf32>, vector<16x16xf32>, vector<16x16xf32> -> vector<16x16xf32>
      %cst_239 = arith.constant dense<0.000000e+00> : vector<16x16xf32>
      %396 = tpu.matmul %395, %220, %cst_239 {dimension_numbers = #tpu.dot_dimension_numbers<[1], [0], [0], [1], [0, 0, 1, 1], [], []>} : vector<16x16xf32>, vector<16x16xf32>, vector<16x16xf32> -> vector<16x16xf32>
      %c5_240 = arith.constant 5 : index
      %c0_241 = arith.constant 0 : index
      %c0_242 = arith.constant 0 : index
      %397 = vector.load %arg7[%c5_240, %c0_241, %c0_242] : memref<16x16x16xf32, #tpu.memory_space<vmem>>, vector<1x16x16xf32>
      %398 = vector.shape_cast %397 : vector<1x16x16xf32> to vector<16x16xf32>
      %399 = arith.subf %398, %396 : vector<16x16xf32>
      %400 = math.absf %399 : vector<16x16xf32>
      %401 = vector.shape_cast %400 : vector<16x16xf32> to vector<1x16x16xf32>
      %cst_243 = arith.constant dense<0.000000e+00> : vector<1xf32>
      %402 = vector.multi_reduction <add>, %401, %cst_243 [1, 2] : vector<1x16x16xf32> to vector<1xf32>
      %403 = vector.shape_cast %402 : vector<1xf32> to vector<1x1x1xf32>
      %404 = vector.extract %403[0, 0, 0] : f32 from vector<1x1x1xf32>
      %405 = arith.addf %370, %404 : f32
      %c3_244 = arith.constant 3 : index
      %c0_245 = arith.constant 0 : index
      %c0_246 = arith.constant 0 : index
      %406 = vector.load %arg7[%c3_244, %c0_245, %c0_246] : memref<16x16x16xf32, #tpu.memory_space<vmem>>, vector<1x16x16xf32>
      %407 = vector.shape_cast %406 : vector<1x16x16xf32> to vector<16x16xf32>
      %cst_247 = arith.constant 0.0751136094 : f32
      %408 = vector.broadcast %cst_247 : f32 to vector<16x16xf32>
      %409 = arith.mulf %408, %407 : vector<16x16xf32>
      %c4_248 = arith.constant 4 : index
      %c0_249 = arith.constant 0 : index
      %c0_250 = arith.constant 0 : index
      %410 = vector.load %arg7[%c4_248, %c0_249, %c0_250] : memref<16x16x16xf32, #tpu.memory_space<vmem>>, vector<1x16x16xf32>
      %411 = vector.shape_cast %410 : vector<1x16x16xf32> to vector<16x16xf32>
      %cst_251 = arith.constant 0.123841405 : f32
      %412 = vector.broadcast %cst_251 : f32 to vector<16x16xf32>
      %413 = arith.mulf %412, %411 : vector<16x16xf32>
      %414 = arith.addf %409, %413 : vector<16x16xf32>
      %c5_252 = arith.constant 5 : index
      %c0_253 = arith.constant 0 : index
      %c0_254 = arith.constant 0 : index
      %415 = vector.load %arg7[%c5_252, %c0_253, %c0_254] : memref<16x16x16xf32, #tpu.memory_space<vmem>>, vector<1x16x16xf32>
      %416 = vector.shape_cast %415 : vector<1x16x16xf32> to vector<16x16xf32>
      %cst_255 = arith.constant 0.274068624 : f32
      %417 = vector.broadcast %cst_255 : f32 to vector<16x16xf32>
      %418 = arith.mulf %417, %416 : vector<16x16xf32>
      %419 = arith.addf %414, %418 : vector<16x16xf32>
      %c6_256 = arith.constant 6 : index
      %c0_257 = arith.constant 0 : index
      %c0_258 = arith.constant 0 : index
      %420 = vector.load %arg7[%c6_256, %c0_257, %c0_258] : memref<16x16x16xf32, #tpu.memory_space<vmem>>, vector<1x16x16xf32>
      %421 = vector.shape_cast %420 : vector<1x16x16xf32> to vector<16x16xf32>
      %cst_259 = arith.constant 0.328021348 : f32
      %422 = vector.broadcast %cst_259 : f32 to vector<16x16xf32>
      %423 = arith.mulf %422, %421 : vector<16x16xf32>
      %424 = arith.addf %419, %423 : vector<16x16xf32>
      %c7_260 = arith.constant 7 : index
      %c0_261 = arith.constant 0 : index
      %c0_262 = arith.constant 0 : index
      %425 = vector.load %arg7[%c7_260, %c0_261, %c0_262] : memref<16x16x16xf32, #tpu.memory_space<vmem>>, vector<1x16x16xf32>
      %426 = vector.shape_cast %425 : vector<1x16x16xf32> to vector<16x16xf32>
      %cst_263 = arith.constant 0.198955014 : f32
      %427 = vector.broadcast %cst_263 : f32 to vector<16x16xf32>
      %428 = arith.mulf %427, %426 : vector<16x16xf32>
      %429 = arith.addf %424, %428 : vector<16x16xf32>
      %cst_264 = arith.constant dense<0.000000e+00> : vector<16x16xf32>
      %430 = tpu.matmul %219, %429, %cst_264 {dimension_numbers = #tpu.dot_dimension_numbers<[1], [0], [0], [1], [0, 0, 1, 1], [], []>} : vector<16x16xf32>, vector<16x16xf32>, vector<16x16xf32> -> vector<16x16xf32>
      %cst_265 = arith.constant dense<0.000000e+00> : vector<16x16xf32>
      %431 = tpu.matmul %430, %220, %cst_265 {dimension_numbers = #tpu.dot_dimension_numbers<[1], [0], [0], [1], [0, 0, 1, 1], [], []>} : vector<16x16xf32>, vector<16x16xf32>, vector<16x16xf32> -> vector<16x16xf32>
      %c6_266 = arith.constant 6 : index
      %c0_267 = arith.constant 0 : index
      %c0_268 = arith.constant 0 : index
      %432 = vector.load %arg7[%c6_266, %c0_267, %c0_268] : memref<16x16x16xf32, #tpu.memory_space<vmem>>, vector<1x16x16xf32>
      %433 = vector.shape_cast %432 : vector<1x16x16xf32> to vector<16x16xf32>
      %434 = arith.subf %433, %431 : vector<16x16xf32>
      %435 = math.absf %434 : vector<16x16xf32>
      %436 = vector.shape_cast %435 : vector<16x16xf32> to vector<1x16x16xf32>
      %cst_269 = arith.constant dense<0.000000e+00> : vector<1xf32>
      %437 = vector.multi_reduction <add>, %436, %cst_269 [1, 2] : vector<1x16x16xf32> to vector<1xf32>
      %438 = vector.shape_cast %437 : vector<1xf32> to vector<1x1x1xf32>
      %439 = vector.extract %438[0, 0, 0] : f32 from vector<1x1x1xf32>
      %440 = arith.addf %405, %439 : f32
      %c5_270 = arith.constant 5 : index
      %c0_271 = arith.constant 0 : index
      %c0_272 = arith.constant 0 : index
      %441 = vector.load %arg7[%c5_270, %c0_271, %c0_272] : memref<16x16x16xf32, #tpu.memory_space<vmem>>, vector<1x16x16xf32>
      %442 = vector.shape_cast %441 : vector<1x16x16xf32> to vector<16x16xf32>
      %cst_273 = arith.constant 0.198955014 : f32
      %443 = vector.broadcast %cst_273 : f32 to vector<16x16xf32>
      %444 = arith.mulf %443, %442 : vector<16x16xf32>
      %c6_274 = arith.constant 6 : index
      %c0_275 = arith.constant 0 : index
      %c0_276 = arith.constant 0 : index
      %445 = vector.load %arg7[%c6_274, %c0_275, %c0_276] : memref<16x16x16xf32, #tpu.memory_space<vmem>>, vector<1x16x16xf32>
      %446 = vector.shape_cast %445 : vector<1x16x16xf32> to vector<16x16xf32>
      %cst_277 = arith.constant 0.328021348 : f32
      %447 = vector.broadcast %cst_277 : f32 to vector<16x16xf32>
      %448 = arith.mulf %447, %446 : vector<16x16xf32>
      %449 = arith.addf %444, %448 : vector<16x16xf32>
      %c7_278 = arith.constant 7 : index
      %c0_279 = arith.constant 0 : index
      %c0_280 = arith.constant 0 : index
      %450 = vector.load %arg7[%c7_278, %c0_279, %c0_280] : memref<16x16x16xf32, #tpu.memory_space<vmem>>, vector<1x16x16xf32>
      %451 = vector.shape_cast %450 : vector<1x16x16xf32> to vector<16x16xf32>
      %cst_281 = arith.constant 0.274068624 : f32
      %452 = vector.broadcast %cst_281 : f32 to vector<16x16xf32>
      %453 = arith.mulf %452, %451 : vector<16x16xf32>
      %454 = arith.addf %449, %453 : vector<16x16xf32>
      %c8_282 = arith.constant 8 : index
      %c0_283 = arith.constant 0 : index
      %c0_284 = arith.constant 0 : index
      %455 = vector.load %arg7[%c8_282, %c0_283, %c0_284] : memref<16x16x16xf32, #tpu.memory_space<vmem>>, vector<1x16x16xf32>
      %456 = vector.shape_cast %455 : vector<1x16x16xf32> to vector<16x16xf32>
      %cst_285 = arith.constant 0.123841405 : f32
      %457 = vector.broadcast %cst_285 : f32 to vector<16x16xf32>
      %458 = arith.mulf %457, %456 : vector<16x16xf32>
      %459 = arith.addf %454, %458 : vector<16x16xf32>
      %c9 = arith.constant 9 : index
      %c0_286 = arith.constant 0 : index
      %c0_287 = arith.constant 0 : index
      %460 = vector.load %arg7[%c9, %c0_286, %c0_287] : memref<16x16x16xf32, #tpu.memory_space<vmem>>, vector<1x16x16xf32>
      %461 = vector.shape_cast %460 : vector<1x16x16xf32> to vector<16x16xf32>
      %cst_288 = arith.constant 0.0751136094 : f32
      %462 = vector.broadcast %cst_288 : f32 to vector<16x16xf32>
      %463 = arith.mulf %462, %461 : vector<16x16xf32>
      %464 = arith.addf %459, %463 : vector<16x16xf32>
      %cst_289 = arith.constant dense<0.000000e+00> : vector<16x16xf32>
      %465 = tpu.matmul %219, %464, %cst_289 {dimension_numbers = #tpu.dot_dimension_numbers<[1], [0], [0], [1], [0, 0, 1, 1], [], []>} : vector<16x16xf32>, vector<16x16xf32>, vector<16x16xf32> -> vector<16x16xf32>
      %cst_290 = arith.constant dense<0.000000e+00> : vector<16x16xf32>
      %466 = tpu.matmul %465, %220, %cst_290 {dimension_numbers = #tpu.dot_dimension_numbers<[1], [0], [0], [1], [0, 0, 1, 1], [], []>} : vector<16x16xf32>, vector<16x16xf32>, vector<16x16xf32> -> vector<16x16xf32>
      %c7_291 = arith.constant 7 : index
      %c0_292 = arith.constant 0 : index
      %c0_293 = arith.constant 0 : index
      %467 = vector.load %arg7[%c7_291, %c0_292, %c0_293] : memref<16x16x16xf32, #tpu.memory_space<vmem>>, vector<1x16x16xf32>
      %468 = vector.shape_cast %467 : vector<1x16x16xf32> to vector<16x16xf32>
      %469 = arith.subf %468, %466 : vector<16x16xf32>
      %470 = math.absf %469 : vector<16x16xf32>
      %471 = vector.shape_cast %470 : vector<16x16xf32> to vector<1x16x16xf32>
      %cst_294 = arith.constant dense<0.000000e+00> : vector<1xf32>
      %472 = vector.multi_reduction <add>, %471, %cst_294 [1, 2] : vector<1x16x16xf32> to vector<1xf32>
      %473 = vector.shape_cast %472 : vector<1xf32> to vector<1x1x1xf32>
      %474 = vector.extract %473[0, 0, 0] : f32 from vector<1x1x1xf32>
      %475 = arith.addf %440, %474 : f32
      %c5_295 = arith.constant 5 : index
      %c0_296 = arith.constant 0 : index
      %c0_297 = arith.constant 0 : index
      %476 = vector.load %arg7[%c5_295, %c0_296, %c0_297] : memref<16x16x16xf32, #tpu.memory_space<vmem>>, vector<1x16x16xf32>
      %477 = vector.shape_cast %476 : vector<1x16x16xf32> to vector<16x16xf32>
      %cst_298 = arith.constant 0.0751136094 : f32
      %478 = vector.broadcast %cst_298 : f32 to vector<16x16xf32>
      %479 = arith.mulf %478, %477 : vector<16x16xf32>
      %c6_299 = arith.constant 6 : index
      %c0_300 = arith.constant 0 : index
      %c0_301 = arith.constant 0 : index
      %480 = vector.load %arg7[%c6_299, %c0_300, %c0_301] : memref<16x16x16xf32, #tpu.memory_space<vmem>>, vector<1x16x16xf32>
      %481 = vector.shape_cast %480 : vector<1x16x16xf32> to vector<16x16xf32>
      %cst_302 = arith.constant 0.123841405 : f32
      %482 = vector.broadcast %cst_302 : f32 to vector<16x16xf32>
      %483 = arith.mulf %482, %481 : vector<16x16xf32>
      %484 = arith.addf %479, %483 : vector<16x16xf32>
      %c7_303 = arith.constant 7 : index
      %c0_304 = arith.constant 0 : index
      %c0_305 = arith.constant 0 : index
      %485 = vector.load %arg7[%c7_303, %c0_304, %c0_305] : memref<16x16x16xf32, #tpu.memory_space<vmem>>, vector<1x16x16xf32>
      %486 = vector.shape_cast %485 : vector<1x16x16xf32> to vector<16x16xf32>
      %cst_306 = arith.constant 0.274068624 : f32
      %487 = vector.broadcast %cst_306 : f32 to vector<16x16xf32>
      %488 = arith.mulf %487, %486 : vector<16x16xf32>
      %489 = arith.addf %484, %488 : vector<16x16xf32>
      %c8_307 = arith.constant 8 : index
      %c0_308 = arith.constant 0 : index
      %c0_309 = arith.constant 0 : index
      %490 = vector.load %arg7[%c8_307, %c0_308, %c0_309] : memref<16x16x16xf32, #tpu.memory_space<vmem>>, vector<1x16x16xf32>
      %491 = vector.shape_cast %490 : vector<1x16x16xf32> to vector<16x16xf32>
      %cst_310 = arith.constant 0.328021348 : f32
      %492 = vector.broadcast %cst_310 : f32 to vector<16x16xf32>
      %493 = arith.mulf %492, %491 : vector<16x16xf32>
      %494 = arith.addf %489, %493 : vector<16x16xf32>
      %c9_311 = arith.constant 9 : index
      %c0_312 = arith.constant 0 : index
      %c0_313 = arith.constant 0 : index
      %495 = vector.load %arg7[%c9_311, %c0_312, %c0_313] : memref<16x16x16xf32, #tpu.memory_space<vmem>>, vector<1x16x16xf32>
      %496 = vector.shape_cast %495 : vector<1x16x16xf32> to vector<16x16xf32>
      %cst_314 = arith.constant 0.198955014 : f32
      %497 = vector.broadcast %cst_314 : f32 to vector<16x16xf32>
      %498 = arith.mulf %497, %496 : vector<16x16xf32>
      %499 = arith.addf %494, %498 : vector<16x16xf32>
      %cst_315 = arith.constant dense<0.000000e+00> : vector<16x16xf32>
      %500 = tpu.matmul %219, %499, %cst_315 {dimension_numbers = #tpu.dot_dimension_numbers<[1], [0], [0], [1], [0, 0, 1, 1], [], []>} : vector<16x16xf32>, vector<16x16xf32>, vector<16x16xf32> -> vector<16x16xf32>
      %cst_316 = arith.constant dense<0.000000e+00> : vector<16x16xf32>
      %501 = tpu.matmul %500, %220, %cst_316 {dimension_numbers = #tpu.dot_dimension_numbers<[1], [0], [0], [1], [0, 0, 1, 1], [], []>} : vector<16x16xf32>, vector<16x16xf32>, vector<16x16xf32> -> vector<16x16xf32>
      %c8_317 = arith.constant 8 : index
      %c0_318 = arith.constant 0 : index
      %c0_319 = arith.constant 0 : index
      %502 = vector.load %arg7[%c8_317, %c0_318, %c0_319] : memref<16x16x16xf32, #tpu.memory_space<vmem>>, vector<1x16x16xf32>
      %503 = vector.shape_cast %502 : vector<1x16x16xf32> to vector<16x16xf32>
      %504 = arith.subf %503, %501 : vector<16x16xf32>
      %505 = math.absf %504 : vector<16x16xf32>
      %506 = vector.shape_cast %505 : vector<16x16xf32> to vector<1x16x16xf32>
      %cst_320 = arith.constant dense<0.000000e+00> : vector<1xf32>
      %507 = vector.multi_reduction <add>, %506, %cst_320 [1, 2] : vector<1x16x16xf32> to vector<1xf32>
      %508 = vector.shape_cast %507 : vector<1xf32> to vector<1x1x1xf32>
      %509 = vector.extract %508[0, 0, 0] : f32 from vector<1x1x1xf32>
      %510 = arith.addf %475, %509 : f32
      %c7_321 = arith.constant 7 : index
      %c0_322 = arith.constant 0 : index
      %c0_323 = arith.constant 0 : index
      %511 = vector.load %arg7[%c7_321, %c0_322, %c0_323] : memref<16x16x16xf32, #tpu.memory_space<vmem>>, vector<1x16x16xf32>
      %512 = vector.shape_cast %511 : vector<1x16x16xf32> to vector<16x16xf32>
      %cst_324 = arith.constant 0.198955014 : f32
      %513 = vector.broadcast %cst_324 : f32 to vector<16x16xf32>
      %514 = arith.mulf %513, %512 : vector<16x16xf32>
      %c8_325 = arith.constant 8 : index
      %c0_326 = arith.constant 0 : index
      %c0_327 = arith.constant 0 : index
      %515 = vector.load %arg7[%c8_325, %c0_326, %c0_327] : memref<16x16x16xf32, #tpu.memory_space<vmem>>, vector<1x16x16xf32>
      %516 = vector.shape_cast %515 : vector<1x16x16xf32> to vector<16x16xf32>
      %cst_328 = arith.constant 0.328021348 : f32
      %517 = vector.broadcast %cst_328 : f32 to vector<16x16xf32>
      %518 = arith.mulf %517, %516 : vector<16x16xf32>
      %519 = arith.addf %514, %518 : vector<16x16xf32>
      %c9_329 = arith.constant 9 : index
      %c0_330 = arith.constant 0 : index
      %c0_331 = arith.constant 0 : index
      %520 = vector.load %arg7[%c9_329, %c0_330, %c0_331] : memref<16x16x16xf32, #tpu.memory_space<vmem>>, vector<1x16x16xf32>
      %521 = vector.shape_cast %520 : vector<1x16x16xf32> to vector<16x16xf32>
      %cst_332 = arith.constant 0.274068624 : f32
      %522 = vector.broadcast %cst_332 : f32 to vector<16x16xf32>
      %523 = arith.mulf %522, %521 : vector<16x16xf32>
      %524 = arith.addf %519, %523 : vector<16x16xf32>
      %c10 = arith.constant 10 : index
      %c0_333 = arith.constant 0 : index
      %c0_334 = arith.constant 0 : index
      %525 = vector.load %arg7[%c10, %c0_333, %c0_334] : memref<16x16x16xf32, #tpu.memory_space<vmem>>, vector<1x16x16xf32>
      %526 = vector.shape_cast %525 : vector<1x16x16xf32> to vector<16x16xf32>
      %cst_335 = arith.constant 0.123841405 : f32
      %527 = vector.broadcast %cst_335 : f32 to vector<16x16xf32>
      %528 = arith.mulf %527, %526 : vector<16x16xf32>
      %529 = arith.addf %524, %528 : vector<16x16xf32>
      %c11 = arith.constant 11 : index
      %c0_336 = arith.constant 0 : index
      %c0_337 = arith.constant 0 : index
      %530 = vector.load %arg7[%c11, %c0_336, %c0_337] : memref<16x16x16xf32, #tpu.memory_space<vmem>>, vector<1x16x16xf32>
      %531 = vector.shape_cast %530 : vector<1x16x16xf32> to vector<16x16xf32>
      %cst_338 = arith.constant 0.0751136094 : f32
      %532 = vector.broadcast %cst_338 : f32 to vector<16x16xf32>
      %533 = arith.mulf %532, %531 : vector<16x16xf32>
      %534 = arith.addf %529, %533 : vector<16x16xf32>
      %cst_339 = arith.constant dense<0.000000e+00> : vector<16x16xf32>
      %535 = tpu.matmul %219, %534, %cst_339 {dimension_numbers = #tpu.dot_dimension_numbers<[1], [0], [0], [1], [0, 0, 1, 1], [], []>} : vector<16x16xf32>, vector<16x16xf32>, vector<16x16xf32> -> vector<16x16xf32>
      %cst_340 = arith.constant dense<0.000000e+00> : vector<16x16xf32>
      %536 = tpu.matmul %535, %220, %cst_340 {dimension_numbers = #tpu.dot_dimension_numbers<[1], [0], [0], [1], [0, 0, 1, 1], [], []>} : vector<16x16xf32>, vector<16x16xf32>, vector<16x16xf32> -> vector<16x16xf32>
      %c9_341 = arith.constant 9 : index
      %c0_342 = arith.constant 0 : index
      %c0_343 = arith.constant 0 : index
      %537 = vector.load %arg7[%c9_341, %c0_342, %c0_343] : memref<16x16x16xf32, #tpu.memory_space<vmem>>, vector<1x16x16xf32>
      %538 = vector.shape_cast %537 : vector<1x16x16xf32> to vector<16x16xf32>
      %539 = arith.subf %538, %536 : vector<16x16xf32>
      %540 = math.absf %539 : vector<16x16xf32>
      %541 = vector.shape_cast %540 : vector<16x16xf32> to vector<1x16x16xf32>
      %cst_344 = arith.constant dense<0.000000e+00> : vector<1xf32>
      %542 = vector.multi_reduction <add>, %541, %cst_344 [1, 2] : vector<1x16x16xf32> to vector<1xf32>
      %543 = vector.shape_cast %542 : vector<1xf32> to vector<1x1x1xf32>
      %544 = vector.extract %543[0, 0, 0] : f32 from vector<1x1x1xf32>
      %545 = arith.addf %510, %544 : f32
      %c7_345 = arith.constant 7 : index
      %c0_346 = arith.constant 0 : index
      %c0_347 = arith.constant 0 : index
      %546 = vector.load %arg7[%c7_345, %c0_346, %c0_347] : memref<16x16x16xf32, #tpu.memory_space<vmem>>, vector<1x16x16xf32>
      %547 = vector.shape_cast %546 : vector<1x16x16xf32> to vector<16x16xf32>
      %cst_348 = arith.constant 0.0751136094 : f32
      %548 = vector.broadcast %cst_348 : f32 to vector<16x16xf32>
      %549 = arith.mulf %548, %547 : vector<16x16xf32>
      %c8_349 = arith.constant 8 : index
      %c0_350 = arith.constant 0 : index
      %c0_351 = arith.constant 0 : index
      %550 = vector.load %arg7[%c8_349, %c0_350, %c0_351] : memref<16x16x16xf32, #tpu.memory_space<vmem>>, vector<1x16x16xf32>
      %551 = vector.shape_cast %550 : vector<1x16x16xf32> to vector<16x16xf32>
      %cst_352 = arith.constant 0.123841405 : f32
      %552 = vector.broadcast %cst_352 : f32 to vector<16x16xf32>
      %553 = arith.mulf %552, %551 : vector<16x16xf32>
      %554 = arith.addf %549, %553 : vector<16x16xf32>
      %c9_353 = arith.constant 9 : index
      %c0_354 = arith.constant 0 : index
      %c0_355 = arith.constant 0 : index
      %555 = vector.load %arg7[%c9_353, %c0_354, %c0_355] : memref<16x16x16xf32, #tpu.memory_space<vmem>>, vector<1x16x16xf32>
      %556 = vector.shape_cast %555 : vector<1x16x16xf32> to vector<16x16xf32>
      %cst_356 = arith.constant 0.274068624 : f32
      %557 = vector.broadcast %cst_356 : f32 to vector<16x16xf32>
      %558 = arith.mulf %557, %556 : vector<16x16xf32>
      %559 = arith.addf %554, %558 : vector<16x16xf32>
      %c10_357 = arith.constant 10 : index
      %c0_358 = arith.constant 0 : index
      %c0_359 = arith.constant 0 : index
      %560 = vector.load %arg7[%c10_357, %c0_358, %c0_359] : memref<16x16x16xf32, #tpu.memory_space<vmem>>, vector<1x16x16xf32>
      %561 = vector.shape_cast %560 : vector<1x16x16xf32> to vector<16x16xf32>
      %cst_360 = arith.constant 0.328021348 : f32
      %562 = vector.broadcast %cst_360 : f32 to vector<16x16xf32>
      %563 = arith.mulf %562, %561 : vector<16x16xf32>
      %564 = arith.addf %559, %563 : vector<16x16xf32>
      %c11_361 = arith.constant 11 : index
      %c0_362 = arith.constant 0 : index
      %c0_363 = arith.constant 0 : index
      %565 = vector.load %arg7[%c11_361, %c0_362, %c0_363] : memref<16x16x16xf32, #tpu.memory_space<vmem>>, vector<1x16x16xf32>
      %566 = vector.shape_cast %565 : vector<1x16x16xf32> to vector<16x16xf32>
      %cst_364 = arith.constant 0.198955014 : f32
      %567 = vector.broadcast %cst_364 : f32 to vector<16x16xf32>
      %568 = arith.mulf %567, %566 : vector<16x16xf32>
      %569 = arith.addf %564, %568 : vector<16x16xf32>
      %cst_365 = arith.constant dense<0.000000e+00> : vector<16x16xf32>
      %570 = tpu.matmul %219, %569, %cst_365 {dimension_numbers = #tpu.dot_dimension_numbers<[1], [0], [0], [1], [0, 0, 1, 1], [], []>} : vector<16x16xf32>, vector<16x16xf32>, vector<16x16xf32> -> vector<16x16xf32>
      %cst_366 = arith.constant dense<0.000000e+00> : vector<16x16xf32>
      %571 = tpu.matmul %570, %220, %cst_366 {dimension_numbers = #tpu.dot_dimension_numbers<[1], [0], [0], [1], [0, 0, 1, 1], [], []>} : vector<16x16xf32>, vector<16x16xf32>, vector<16x16xf32> -> vector<16x16xf32>
      %c10_367 = arith.constant 10 : index
      %c0_368 = arith.constant 0 : index
      %c0_369 = arith.constant 0 : index
      %572 = vector.load %arg7[%c10_367, %c0_368, %c0_369] : memref<16x16x16xf32, #tpu.memory_space<vmem>>, vector<1x16x16xf32>
      %573 = vector.shape_cast %572 : vector<1x16x16xf32> to vector<16x16xf32>
      %574 = arith.subf %573, %571 : vector<16x16xf32>
      %575 = math.absf %574 : vector<16x16xf32>
      %576 = vector.shape_cast %575 : vector<16x16xf32> to vector<1x16x16xf32>
      %cst_370 = arith.constant dense<0.000000e+00> : vector<1xf32>
      %577 = vector.multi_reduction <add>, %576, %cst_370 [1, 2] : vector<1x16x16xf32> to vector<1xf32>
      %578 = vector.shape_cast %577 : vector<1xf32> to vector<1x1x1xf32>
      %579 = vector.extract %578[0, 0, 0] : f32 from vector<1x1x1xf32>
      %580 = arith.addf %545, %579 : f32
      %c9_371 = arith.constant 9 : index
      %c0_372 = arith.constant 0 : index
      %c0_373 = arith.constant 0 : index
      %581 = vector.load %arg7[%c9_371, %c0_372, %c0_373] : memref<16x16x16xf32, #tpu.memory_space<vmem>>, vector<1x16x16xf32>
      %582 = vector.shape_cast %581 : vector<1x16x16xf32> to vector<16x16xf32>
      %cst_374 = arith.constant 0.198955014 : f32
      %583 = vector.broadcast %cst_374 : f32 to vector<16x16xf32>
      %584 = arith.mulf %583, %582 : vector<16x16xf32>
      %c10_375 = arith.constant 10 : index
      %c0_376 = arith.constant 0 : index
      %c0_377 = arith.constant 0 : index
      %585 = vector.load %arg7[%c10_375, %c0_376, %c0_377] : memref<16x16x16xf32, #tpu.memory_space<vmem>>, vector<1x16x16xf32>
      %586 = vector.shape_cast %585 : vector<1x16x16xf32> to vector<16x16xf32>
      %cst_378 = arith.constant 0.328021348 : f32
      %587 = vector.broadcast %cst_378 : f32 to vector<16x16xf32>
      %588 = arith.mulf %587, %586 : vector<16x16xf32>
      %589 = arith.addf %584, %588 : vector<16x16xf32>
      %c11_379 = arith.constant 11 : index
      %c0_380 = arith.constant 0 : index
      %c0_381 = arith.constant 0 : index
      %590 = vector.load %arg7[%c11_379, %c0_380, %c0_381] : memref<16x16x16xf32, #tpu.memory_space<vmem>>, vector<1x16x16xf32>
      %591 = vector.shape_cast %590 : vector<1x16x16xf32> to vector<16x16xf32>
      %cst_382 = arith.constant 0.274068624 : f32
      %592 = vector.broadcast %cst_382 : f32 to vector<16x16xf32>
      %593 = arith.mulf %592, %591 : vector<16x16xf32>
      %594 = arith.addf %589, %593 : vector<16x16xf32>
      %c12 = arith.constant 12 : index
      %c0_383 = arith.constant 0 : index
      %c0_384 = arith.constant 0 : index
      %595 = vector.load %arg7[%c12, %c0_383, %c0_384] : memref<16x16x16xf32, #tpu.memory_space<vmem>>, vector<1x16x16xf32>
      %596 = vector.shape_cast %595 : vector<1x16x16xf32> to vector<16x16xf32>
      %cst_385 = arith.constant 0.123841405 : f32
      %597 = vector.broadcast %cst_385 : f32 to vector<16x16xf32>
      %598 = arith.mulf %597, %596 : vector<16x16xf32>
      %599 = arith.addf %594, %598 : vector<16x16xf32>
      %c13 = arith.constant 13 : index
      %c0_386 = arith.constant 0 : index
      %c0_387 = arith.constant 0 : index
      %600 = vector.load %arg7[%c13, %c0_386, %c0_387] : memref<16x16x16xf32, #tpu.memory_space<vmem>>, vector<1x16x16xf32>
      %601 = vector.shape_cast %600 : vector<1x16x16xf32> to vector<16x16xf32>
      %cst_388 = arith.constant 0.0751136094 : f32
      %602 = vector.broadcast %cst_388 : f32 to vector<16x16xf32>
      %603 = arith.mulf %602, %601 : vector<16x16xf32>
      %604 = arith.addf %599, %603 : vector<16x16xf32>
      %cst_389 = arith.constant dense<0.000000e+00> : vector<16x16xf32>
      %605 = tpu.matmul %219, %604, %cst_389 {dimension_numbers = #tpu.dot_dimension_numbers<[1], [0], [0], [1], [0, 0, 1, 1], [], []>} : vector<16x16xf32>, vector<16x16xf32>, vector<16x16xf32> -> vector<16x16xf32>
      %cst_390 = arith.constant dense<0.000000e+00> : vector<16x16xf32>
      %606 = tpu.matmul %605, %220, %cst_390 {dimension_numbers = #tpu.dot_dimension_numbers<[1], [0], [0], [1], [0, 0, 1, 1], [], []>} : vector<16x16xf32>, vector<16x16xf32>, vector<16x16xf32> -> vector<16x16xf32>
      %c11_391 = arith.constant 11 : index
      %c0_392 = arith.constant 0 : index
      %c0_393 = arith.constant 0 : index
      %607 = vector.load %arg7[%c11_391, %c0_392, %c0_393] : memref<16x16x16xf32, #tpu.memory_space<vmem>>, vector<1x16x16xf32>
      %608 = vector.shape_cast %607 : vector<1x16x16xf32> to vector<16x16xf32>
      %609 = arith.subf %608, %606 : vector<16x16xf32>
      %610 = math.absf %609 : vector<16x16xf32>
      %611 = vector.shape_cast %610 : vector<16x16xf32> to vector<1x16x16xf32>
      %cst_394 = arith.constant dense<0.000000e+00> : vector<1xf32>
      %612 = vector.multi_reduction <add>, %611, %cst_394 [1, 2] : vector<1x16x16xf32> to vector<1xf32>
      %613 = vector.shape_cast %612 : vector<1xf32> to vector<1x1x1xf32>
      %614 = vector.extract %613[0, 0, 0] : f32 from vector<1x1x1xf32>
      %615 = arith.addf %580, %614 : f32
      %c9_395 = arith.constant 9 : index
      %c0_396 = arith.constant 0 : index
      %c0_397 = arith.constant 0 : index
      %616 = vector.load %arg7[%c9_395, %c0_396, %c0_397] : memref<16x16x16xf32, #tpu.memory_space<vmem>>, vector<1x16x16xf32>
      %617 = vector.shape_cast %616 : vector<1x16x16xf32> to vector<16x16xf32>
      %cst_398 = arith.constant 0.0751136094 : f32
      %618 = vector.broadcast %cst_398 : f32 to vector<16x16xf32>
      %619 = arith.mulf %618, %617 : vector<16x16xf32>
      %c10_399 = arith.constant 10 : index
      %c0_400 = arith.constant 0 : index
      %c0_401 = arith.constant 0 : index
      %620 = vector.load %arg7[%c10_399, %c0_400, %c0_401] : memref<16x16x16xf32, #tpu.memory_space<vmem>>, vector<1x16x16xf32>
      %621 = vector.shape_cast %620 : vector<1x16x16xf32> to vector<16x16xf32>
      %cst_402 = arith.constant 0.123841405 : f32
      %622 = vector.broadcast %cst_402 : f32 to vector<16x16xf32>
      %623 = arith.mulf %622, %621 : vector<16x16xf32>
      %624 = arith.addf %619, %623 : vector<16x16xf32>
      %c11_403 = arith.constant 11 : index
      %c0_404 = arith.constant 0 : index
      %c0_405 = arith.constant 0 : index
      %625 = vector.load %arg7[%c11_403, %c0_404, %c0_405] : memref<16x16x16xf32, #tpu.memory_space<vmem>>, vector<1x16x16xf32>
      %626 = vector.shape_cast %625 : vector<1x16x16xf32> to vector<16x16xf32>
      %cst_406 = arith.constant 0.274068624 : f32
      %627 = vector.broadcast %cst_406 : f32 to vector<16x16xf32>
      %628 = arith.mulf %627, %626 : vector<16x16xf32>
      %629 = arith.addf %624, %628 : vector<16x16xf32>
      %c12_407 = arith.constant 12 : index
      %c0_408 = arith.constant 0 : index
      %c0_409 = arith.constant 0 : index
      %630 = vector.load %arg7[%c12_407, %c0_408, %c0_409] : memref<16x16x16xf32, #tpu.memory_space<vmem>>, vector<1x16x16xf32>
      %631 = vector.shape_cast %630 : vector<1x16x16xf32> to vector<16x16xf32>
      %cst_410 = arith.constant 0.328021348 : f32
      %632 = vector.broadcast %cst_410 : f32 to vector<16x16xf32>
      %633 = arith.mulf %632, %631 : vector<16x16xf32>
      %634 = arith.addf %629, %633 : vector<16x16xf32>
      %c13_411 = arith.constant 13 : index
      %c0_412 = arith.constant 0 : index
      %c0_413 = arith.constant 0 : index
      %635 = vector.load %arg7[%c13_411, %c0_412, %c0_413] : memref<16x16x16xf32, #tpu.memory_space<vmem>>, vector<1x16x16xf32>
      %636 = vector.shape_cast %635 : vector<1x16x16xf32> to vector<16x16xf32>
      %cst_414 = arith.constant 0.198955014 : f32
      %637 = vector.broadcast %cst_414 : f32 to vector<16x16xf32>
      %638 = arith.mulf %637, %636 : vector<16x16xf32>
      %639 = arith.addf %634, %638 : vector<16x16xf32>
      %cst_415 = arith.constant dense<0.000000e+00> : vector<16x16xf32>
      %640 = tpu.matmul %219, %639, %cst_415 {dimension_numbers = #tpu.dot_dimension_numbers<[1], [0], [0], [1], [0, 0, 1, 1], [], []>} : vector<16x16xf32>, vector<16x16xf32>, vector<16x16xf32> -> vector<16x16xf32>
      %cst_416 = arith.constant dense<0.000000e+00> : vector<16x16xf32>
      %641 = tpu.matmul %640, %220, %cst_416 {dimension_numbers = #tpu.dot_dimension_numbers<[1], [0], [0], [1], [0, 0, 1, 1], [], []>} : vector<16x16xf32>, vector<16x16xf32>, vector<16x16xf32> -> vector<16x16xf32>
      %c12_417 = arith.constant 12 : index
      %c0_418 = arith.constant 0 : index
      %c0_419 = arith.constant 0 : index
      %642 = vector.load %arg7[%c12_417, %c0_418, %c0_419] : memref<16x16x16xf32, #tpu.memory_space<vmem>>, vector<1x16x16xf32>
      %643 = vector.shape_cast %642 : vector<1x16x16xf32> to vector<16x16xf32>
      %644 = arith.subf %643, %641 : vector<16x16xf32>
      %645 = math.absf %644 : vector<16x16xf32>
      %646 = vector.shape_cast %645 : vector<16x16xf32> to vector<1x16x16xf32>
      %cst_420 = arith.constant dense<0.000000e+00> : vector<1xf32>
      %647 = vector.multi_reduction <add>, %646, %cst_420 [1, 2] : vector<1x16x16xf32> to vector<1xf32>
      %648 = vector.shape_cast %647 : vector<1xf32> to vector<1x1x1xf32>
      %649 = vector.extract %648[0, 0, 0] : f32 from vector<1x1x1xf32>
      %650 = arith.addf %615, %649 : f32
      %c11_421 = arith.constant 11 : index
      %c0_422 = arith.constant 0 : index
      %c0_423 = arith.constant 0 : index
      %651 = vector.load %arg7[%c11_421, %c0_422, %c0_423] : memref<16x16x16xf32, #tpu.memory_space<vmem>>, vector<1x16x16xf32>
      %652 = vector.shape_cast %651 : vector<1x16x16xf32> to vector<16x16xf32>
      %cst_424 = arith.constant 0.198955014 : f32
      %653 = vector.broadcast %cst_424 : f32 to vector<16x16xf32>
      %654 = arith.mulf %653, %652 : vector<16x16xf32>
      %c12_425 = arith.constant 12 : index
      %c0_426 = arith.constant 0 : index
      %c0_427 = arith.constant 0 : index
      %655 = vector.load %arg7[%c12_425, %c0_426, %c0_427] : memref<16x16x16xf32, #tpu.memory_space<vmem>>, vector<1x16x16xf32>
      %656 = vector.shape_cast %655 : vector<1x16x16xf32> to vector<16x16xf32>
      %cst_428 = arith.constant 0.328021348 : f32
      %657 = vector.broadcast %cst_428 : f32 to vector<16x16xf32>
      %658 = arith.mulf %657, %656 : vector<16x16xf32>
      %659 = arith.addf %654, %658 : vector<16x16xf32>
      %c13_429 = arith.constant 13 : index
      %c0_430 = arith.constant 0 : index
      %c0_431 = arith.constant 0 : index
      %660 = vector.load %arg7[%c13_429, %c0_430, %c0_431] : memref<16x16x16xf32, #tpu.memory_space<vmem>>, vector<1x16x16xf32>
      %661 = vector.shape_cast %660 : vector<1x16x16xf32> to vector<16x16xf32>
      %cst_432 = arith.constant 0.274068624 : f32
      %662 = vector.broadcast %cst_432 : f32 to vector<16x16xf32>
      %663 = arith.mulf %662, %661 : vector<16x16xf32>
      %664 = arith.addf %659, %663 : vector<16x16xf32>
      %c14 = arith.constant 14 : index
      %c0_433 = arith.constant 0 : index
      %c0_434 = arith.constant 0 : index
      %665 = vector.load %arg7[%c14, %c0_433, %c0_434] : memref<16x16x16xf32, #tpu.memory_space<vmem>>, vector<1x16x16xf32>
      %666 = vector.shape_cast %665 : vector<1x16x16xf32> to vector<16x16xf32>
      %cst_435 = arith.constant 0.123841405 : f32
      %667 = vector.broadcast %cst_435 : f32 to vector<16x16xf32>
      %668 = arith.mulf %667, %666 : vector<16x16xf32>
      %669 = arith.addf %664, %668 : vector<16x16xf32>
      %c15 = arith.constant 15 : index
      %c0_436 = arith.constant 0 : index
      %c0_437 = arith.constant 0 : index
      %670 = vector.load %arg7[%c15, %c0_436, %c0_437] : memref<16x16x16xf32, #tpu.memory_space<vmem>>, vector<1x16x16xf32>
      %671 = vector.shape_cast %670 : vector<1x16x16xf32> to vector<16x16xf32>
      %cst_438 = arith.constant 0.0751136094 : f32
      %672 = vector.broadcast %cst_438 : f32 to vector<16x16xf32>
      %673 = arith.mulf %672, %671 : vector<16x16xf32>
      %674 = arith.addf %669, %673 : vector<16x16xf32>
      %cst_439 = arith.constant dense<0.000000e+00> : vector<16x16xf32>
      %675 = tpu.matmul %219, %674, %cst_439 {dimension_numbers = #tpu.dot_dimension_numbers<[1], [0], [0], [1], [0, 0, 1, 1], [], []>} : vector<16x16xf32>, vector<16x16xf32>, vector<16x16xf32> -> vector<16x16xf32>
      %cst_440 = arith.constant dense<0.000000e+00> : vector<16x16xf32>
      %676 = tpu.matmul %675, %220, %cst_440 {dimension_numbers = #tpu.dot_dimension_numbers<[1], [0], [0], [1], [0, 0, 1, 1], [], []>} : vector<16x16xf32>, vector<16x16xf32>, vector<16x16xf32> -> vector<16x16xf32>
      %c13_441 = arith.constant 13 : index
      %c0_442 = arith.constant 0 : index
      %c0_443 = arith.constant 0 : index
      %677 = vector.load %arg7[%c13_441, %c0_442, %c0_443] : memref<16x16x16xf32, #tpu.memory_space<vmem>>, vector<1x16x16xf32>
      %678 = vector.shape_cast %677 : vector<1x16x16xf32> to vector<16x16xf32>
      %679 = arith.subf %678, %676 : vector<16x16xf32>
      %680 = math.absf %679 : vector<16x16xf32>
      %681 = vector.shape_cast %680 : vector<16x16xf32> to vector<1x16x16xf32>
      %cst_444 = arith.constant dense<0.000000e+00> : vector<1xf32>
      %682 = vector.multi_reduction <add>, %681, %cst_444 [1, 2] : vector<1x16x16xf32> to vector<1xf32>
      %683 = vector.shape_cast %682 : vector<1xf32> to vector<1x1x1xf32>
      %684 = vector.extract %683[0, 0, 0] : f32 from vector<1x1x1xf32>
      %685 = arith.addf %650, %684 : f32
      %c11_445 = arith.constant 11 : index
      %c0_446 = arith.constant 0 : index
      %c0_447 = arith.constant 0 : index
      %686 = vector.load %arg7[%c11_445, %c0_446, %c0_447] : memref<16x16x16xf32, #tpu.memory_space<vmem>>, vector<1x16x16xf32>
      %687 = vector.shape_cast %686 : vector<1x16x16xf32> to vector<16x16xf32>
      %cst_448 = arith.constant 0.0751136094 : f32
      %688 = vector.broadcast %cst_448 : f32 to vector<16x16xf32>
      %689 = arith.mulf %688, %687 : vector<16x16xf32>
      %c12_449 = arith.constant 12 : index
      %c0_450 = arith.constant 0 : index
      %c0_451 = arith.constant 0 : index
      %690 = vector.load %arg7[%c12_449, %c0_450, %c0_451] : memref<16x16x16xf32, #tpu.memory_space<vmem>>, vector<1x16x16xf32>
      %691 = vector.shape_cast %690 : vector<1x16x16xf32> to vector<16x16xf32>
      %cst_452 = arith.constant 0.123841405 : f32
      %692 = vector.broadcast %cst_452 : f32 to vector<16x16xf32>
      %693 = arith.mulf %692, %691 : vector<16x16xf32>
      %694 = arith.addf %689, %693 : vector<16x16xf32>
      %c13_453 = arith.constant 13 : index
      %c0_454 = arith.constant 0 : index
      %c0_455 = arith.constant 0 : index
      %695 = vector.load %arg7[%c13_453, %c0_454, %c0_455] : memref<16x16x16xf32, #tpu.memory_space<vmem>>, vector<1x16x16xf32>
      %696 = vector.shape_cast %695 : vector<1x16x16xf32> to vector<16x16xf32>
      %cst_456 = arith.constant 0.274068624 : f32
      %697 = vector.broadcast %cst_456 : f32 to vector<16x16xf32>
      %698 = arith.mulf %697, %696 : vector<16x16xf32>
      %699 = arith.addf %694, %698 : vector<16x16xf32>
      %c14_457 = arith.constant 14 : index
      %c0_458 = arith.constant 0 : index
      %c0_459 = arith.constant 0 : index
      %700 = vector.load %arg7[%c14_457, %c0_458, %c0_459] : memref<16x16x16xf32, #tpu.memory_space<vmem>>, vector<1x16x16xf32>
      %701 = vector.shape_cast %700 : vector<1x16x16xf32> to vector<16x16xf32>
      %cst_460 = arith.constant 0.328021348 : f32
      %702 = vector.broadcast %cst_460 : f32 to vector<16x16xf32>
      %703 = arith.mulf %702, %701 : vector<16x16xf32>
      %704 = arith.addf %699, %703 : vector<16x16xf32>
      %c15_461 = arith.constant 15 : index
      %c0_462 = arith.constant 0 : index
      %c0_463 = arith.constant 0 : index
      %705 = vector.load %arg7[%c15_461, %c0_462, %c0_463] : memref<16x16x16xf32, #tpu.memory_space<vmem>>, vector<1x16x16xf32>
      %706 = vector.shape_cast %705 : vector<1x16x16xf32> to vector<16x16xf32>
      %cst_464 = arith.constant 0.198955014 : f32
      %707 = vector.broadcast %cst_464 : f32 to vector<16x16xf32>
      %708 = arith.mulf %707, %706 : vector<16x16xf32>
      %709 = arith.addf %704, %708 : vector<16x16xf32>
      %cst_465 = arith.constant dense<0.000000e+00> : vector<16x16xf32>
      %710 = tpu.matmul %219, %709, %cst_465 {dimension_numbers = #tpu.dot_dimension_numbers<[1], [0], [0], [1], [0, 0, 1, 1], [], []>} : vector<16x16xf32>, vector<16x16xf32>, vector<16x16xf32> -> vector<16x16xf32>
      %cst_466 = arith.constant dense<0.000000e+00> : vector<16x16xf32>
      %711 = tpu.matmul %710, %220, %cst_466 {dimension_numbers = #tpu.dot_dimension_numbers<[1], [0], [0], [1], [0, 0, 1, 1], [], []>} : vector<16x16xf32>, vector<16x16xf32>, vector<16x16xf32> -> vector<16x16xf32>
      %c14_467 = arith.constant 14 : index
      %c0_468 = arith.constant 0 : index
      %c0_469 = arith.constant 0 : index
      %712 = vector.load %arg7[%c14_467, %c0_468, %c0_469] : memref<16x16x16xf32, #tpu.memory_space<vmem>>, vector<1x16x16xf32>
      %713 = vector.shape_cast %712 : vector<1x16x16xf32> to vector<16x16xf32>
      %714 = arith.subf %713, %711 : vector<16x16xf32>
      %715 = math.absf %714 : vector<16x16xf32>
      %716 = vector.shape_cast %715 : vector<16x16xf32> to vector<1x16x16xf32>
      %cst_470 = arith.constant dense<0.000000e+00> : vector<1xf32>
      %717 = vector.multi_reduction <add>, %716, %cst_470 [1, 2] : vector<1x16x16xf32> to vector<1xf32>
      %718 = vector.shape_cast %717 : vector<1xf32> to vector<1x1x1xf32>
      %719 = vector.extract %718[0, 0, 0] : f32 from vector<1x1x1xf32>
      %720 = arith.addf %685, %719 : f32
      %c13_471 = arith.constant 13 : index
      %c0_472 = arith.constant 0 : index
      %c0_473 = arith.constant 0 : index
      %721 = vector.load %arg7[%c13_471, %c0_472, %c0_473] : memref<16x16x16xf32, #tpu.memory_space<vmem>>, vector<1x16x16xf32>
      %722 = vector.shape_cast %721 : vector<1x16x16xf32> to vector<16x16xf32>
      %cst_474 = arith.constant 0.198955014 : f32
      %723 = vector.broadcast %cst_474 : f32 to vector<16x16xf32>
      %724 = arith.mulf %723, %722 : vector<16x16xf32>
      %c14_475 = arith.constant 14 : index
      %c0_476 = arith.constant 0 : index
      %c0_477 = arith.constant 0 : index
      %725 = vector.load %arg7[%c14_475, %c0_476, %c0_477] : memref<16x16x16xf32, #tpu.memory_space<vmem>>, vector<1x16x16xf32>
      %726 = vector.shape_cast %725 : vector<1x16x16xf32> to vector<16x16xf32>
      %cst_478 = arith.constant 0.328021348 : f32
      %727 = vector.broadcast %cst_478 : f32 to vector<16x16xf32>
      %728 = arith.mulf %727, %726 : vector<16x16xf32>
      %729 = arith.addf %724, %728 : vector<16x16xf32>
      %c15_479 = arith.constant 15 : index
      %c0_480 = arith.constant 0 : index
      %c0_481 = arith.constant 0 : index
      %730 = vector.load %arg7[%c15_479, %c0_480, %c0_481] : memref<16x16x16xf32, #tpu.memory_space<vmem>>, vector<1x16x16xf32>
      %731 = vector.shape_cast %730 : vector<1x16x16xf32> to vector<16x16xf32>
      %cst_482 = arith.constant 0.198955014 : f32
      %732 = vector.broadcast %cst_482 : f32 to vector<16x16xf32>
      %733 = arith.mulf %732, %731 : vector<16x16xf32>
      %734 = arith.addf %729, %733 : vector<16x16xf32>
      %cst_483 = arith.constant dense<0.000000e+00> : vector<16x16xf32>
      %735 = tpu.matmul %219, %734, %cst_483 {dimension_numbers = #tpu.dot_dimension_numbers<[1], [0], [0], [1], [0, 0, 1, 1], [], []>} : vector<16x16xf32>, vector<16x16xf32>, vector<16x16xf32> -> vector<16x16xf32>
      %cst_484 = arith.constant dense<0.000000e+00> : vector<16x16xf32>
      %736 = tpu.matmul %735, %220, %cst_484 {dimension_numbers = #tpu.dot_dimension_numbers<[1], [0], [0], [1], [0, 0, 1, 1], [], []>} : vector<16x16xf32>, vector<16x16xf32>, vector<16x16xf32> -> vector<16x16xf32>
      %c15_485 = arith.constant 15 : index
      %c0_486 = arith.constant 0 : index
      %c0_487 = arith.constant 0 : index
      %737 = vector.load %arg7[%c15_485, %c0_486, %c0_487] : memref<16x16x16xf32, #tpu.memory_space<vmem>>, vector<1x16x16xf32>
      %738 = vector.shape_cast %737 : vector<1x16x16xf32> to vector<16x16xf32>
      %739 = arith.subf %738, %736 : vector<16x16xf32>
      %740 = math.absf %739 : vector<16x16xf32>
      %741 = vector.shape_cast %740 : vector<16x16xf32> to vector<1x16x16xf32>
      %cst_488 = arith.constant dense<0.000000e+00> : vector<1xf32>
      %742 = vector.multi_reduction <add>, %741, %cst_488 [1, 2] : vector<1x16x16xf32> to vector<1xf32>
      %743 = vector.shape_cast %742 : vector<1xf32> to vector<1x1x1xf32>
      %744 = vector.extract %743[0, 0, 0] : f32 from vector<1x1x1xf32>
      %745 = arith.addf %720, %744 : f32
      %cst_489 = arith.constant 2.44140625E-4 : f32
      %746 = arith.mulf %745, %cst_489 : f32
      %747 = tpu.iota {dimensions = array<i32: 0>} : vector<8x128xi32>
      %748 = tpu.iota {dimensions = array<i32: 1>} : vector<8x128xi32>
      %c0_i32_490 = arith.constant 0 : i32
      %749 = vector.broadcast %c0_i32_490 : i32 to vector<8x128xi32>
      %750 = arith.cmpi eq, %747, %749 : vector<8x128xi32>
      %c0_i32_491 = arith.constant 0 : i32
      %751 = vector.broadcast %c0_i32_491 : i32 to vector<8x128xi32>
      %752 = arith.cmpi eq, %748, %751 : vector<8x128xi32>
      %753 = arith.andi %750, %752 : vector<8x128xi1>
      %cst_492 = arith.constant 0.000000e+00 : f32
      %754 = vector.broadcast %190 : f32 to vector<8x128xf32>
      %755 = vector.broadcast %cst_492 : f32 to vector<8x128xf32>
      %756 = arith.select %753, %754, %755 : vector<8x128xi1>, vector<8x128xf32>
      %c0_i32_493 = arith.constant 0 : i32
      %757 = vector.broadcast %c0_i32_493 : i32 to vector<8x128xi32>
      %758 = arith.cmpi eq, %747, %757 : vector<8x128xi32>
      %c1_i32_494 = arith.constant 1 : i32
      %759 = vector.broadcast %c1_i32_494 : i32 to vector<8x128xi32>
      %760 = arith.cmpi eq, %748, %759 : vector<8x128xi32>
      %761 = arith.andi %758, %760 : vector<8x128xi1>
      %cst_495 = arith.constant 0.000000e+00 : f32
      %762 = vector.broadcast %213 : f32 to vector<8x128xf32>
      %763 = vector.broadcast %cst_495 : f32 to vector<8x128xf32>
      %764 = arith.select %761, %762, %763 : vector<8x128xi1>, vector<8x128xf32>
      %765 = arith.addf %756, %764 : vector<8x128xf32>
      %c0_i32_496 = arith.constant 0 : i32
      %766 = vector.broadcast %c0_i32_496 : i32 to vector<8x128xi32>
      %767 = arith.cmpi eq, %747, %766 : vector<8x128xi32>
      %c2_i32_497 = arith.constant 2 : i32
      %768 = vector.broadcast %c2_i32_497 : i32 to vector<8x128xi32>
      %769 = arith.cmpi eq, %748, %768 : vector<8x128xi32>
      %770 = arith.andi %767, %769 : vector<8x128xi1>
      %cst_498 = arith.constant 0.000000e+00 : f32
      %771 = vector.broadcast %746 : f32 to vector<8x128xf32>
      %772 = vector.broadcast %cst_498 : f32 to vector<8x128xf32>
      %773 = arith.select %770, %771, %772 : vector<8x128xi1>, vector<8x128xf32>
      %774 = arith.addf %765, %773 : vector<8x128xf32>
      %c0_i32_499 = arith.constant 0 : i32
      %775 = vector.broadcast %c0_i32_499 : i32 to vector<8x128xi32>
      %776 = arith.cmpi eq, %747, %775 : vector<8x128xi32>
      %c3_i32_500 = arith.constant 3 : i32
      %777 = vector.broadcast %c3_i32_500 : i32 to vector<8x128xi32>
      %778 = arith.cmpi eq, %748, %777 : vector<8x128xi32>
      %779 = arith.andi %776, %778 : vector<8x128xi1>
      %cst_501 = arith.constant 0.000000e+00 : f32
      %780 = vector.broadcast %186 : f32 to vector<8x128xf32>
      %781 = vector.broadcast %cst_501 : f32 to vector<8x128xf32>
      %782 = arith.select %779, %780, %781 : vector<8x128xi1>, vector<8x128xf32>
      %783 = arith.addf %774, %782 : vector<8x128xf32>
      %c0_i32_502 = arith.constant 0 : i32
      %784 = vector.broadcast %c0_i32_502 : i32 to vector<8x128xi32>
      %785 = arith.cmpi eq, %747, %784 : vector<8x128xi32>
      %c4_i32 = arith.constant 4 : i32
      %786 = vector.broadcast %c4_i32 : i32 to vector<8x128xi32>
      %787 = arith.cmpi eq, %748, %786 : vector<8x128xi32>
      %788 = arith.andi %785, %787 : vector<8x128xi1>
      %cst_503 = arith.constant 0.000000e+00 : f32
      %789 = vector.broadcast %218 : f32 to vector<8x128xf32>
      %790 = vector.broadcast %cst_503 : f32 to vector<8x128xf32>
      %791 = arith.select %788, %789, %790 : vector<8x128xi1>, vector<8x128xf32>
      %792 = arith.addf %783, %791 : vector<8x128xf32>
      %c0_504 = arith.constant 0 : index
      %c0_505 = arith.constant 0 : index
      %c0_506 = arith.constant 0 : index
      %793 = vector.load %arg6[%c0_504, %c0_505, %c0_506] : memref<1x8x128xf32, #tpu.memory_space<vmem>>, vector<1x8x128xf32>
      %794 = vector.shape_cast %793 : vector<1x8x128xf32> to vector<8x128xf32>
      %795 = vector.shape_cast %792 : vector<8x128xf32> to vector<1x8x128xf32>
      tpu.vector_store %arg6[%c0_504, %c0_505, %c0_506], %795 {strides = array<i32>} : memref<1x8x128xf32, #tpu.memory_space<vmem>>, vector<1x8x128xf32>,
    } else {
    }
    return
  }
  func.func @transform_0(%arg0: i32, %arg1: i32) -> (i32, i32) {
    %c0_i32 = arith.constant 0 : i32
    %c0_i32_0 = arith.constant 0 : i32
    %c0_i32_1 = arith.constant 0 : i32
    return %c0_i32, %c0_i32_0 : i32, i32
  }
  func.func @transform_1(%arg0: i32, %arg1: i32) -> (i32, i32) {
    %c0_i32 = arith.constant 0 : i32
    %c0_i32_0 = arith.constant 0 : i32
    %c0_i32_1 = arith.constant 0 : i32
    return %c0_i32, %c0_i32_0 : i32, i32
  }
  func.func @transform_2(%arg0: i32, %arg1: i32) -> (i32, i32, i32, i32) {
    %c0_i32 = arith.constant 0 : i32
    %c0_i32_0 = arith.constant 0 : i32
    %c0_i32_1 = arith.constant 0 : i32
    return %arg0, %arg1, %c0_i32, %c0_i32_0 : i32, i32, i32, i32
  }
  func.func @transform_3(%arg0: i32, %arg1: i32) -> (i32, i32, i32, i32) {
    %c0_i32 = arith.constant 0 : i32
    %c0_i32_0 = arith.constant 0 : i32
    %c0_i32_1 = arith.constant 0 : i32
    return %arg0, %arg1, %c0_i32, %c0_i32_0 : i32, i32, i32, i32
  }
  func.func @transform_4(%arg0: i32, %arg1: i32) -> (i32, i32, i32) {
    %c0_i32 = arith.constant 0 : i32
    %c0_i32_0 = arith.constant 0 : i32
    %c0_i32_1 = arith.constant 0 : i32
    return %arg0, %c0_i32, %c0_i32_0 : i32, i32, i32
  }
}

</mosaic_0001>

<llo_original>
// kernel: tpu_custom_call.1
$region0: #{tpu_custom_call.1}
  #allocation0 [shape = 'u32[]', space=smem, size = 0x4, offset = 0x4, fixed_abs, tag = 'smem constant byte address 0x4 - core index']
  #allocation1 [shape = 'u32[144,128]{1,0:T(1,128)}', space=vmem, size = 0x12000, scoped, tag = 'internal scratch']
  #allocation2 [shape = 'f32[16,16,16]{2,1,0:T(8,128)}', space=vmem, size = 0x20000, scoped, tag = 'scratch operand']
  #allocation3 [shape = 'f32[16]{0:T(128)}', space=smem, size = 0x200, scoped, tag = 'scratch operand']
  #allocation12 [shape = 's32[]', space=sflag, size = 0x4, offset = 0, fixed_abs, tag = 'sflag constant byte address 0x0 - dummy sync flag']
  %s0 = inlined_call_operand.hbm [shape: f32[16,16], index: 0, kind: input, shape index: {}]
  %s1 = inlined_call_operand.hbm [shape: f32[16,16], index: 1, kind: input, shape index: {}]
  %s2 = inlined_call_operand.hbm [shape: f32[6,16,16,16], index: 2, kind: input, shape index: {}]
  %s3 = inlined_call_operand.hbm [shape: s32[2,16,16,16], index: 3, kind: input, shape index: {}]
  %s4 = inlined_call_operand.hbm [shape: f32[2,8,128], index: 4, kind: output, shape index: {}]
  %s5 = sld [smem:[#allocation0]]
  $region73: #{tpu_custom_call.1} parent=0
    _
  %s7 = ssub.s32 1, %s5
  %s8 = scalar_select 0, %s7, %s5
  $region1: #{tpu_custom_call.1} parent=0
    #allocation4 [shape = 'u8[8192]{0}', space=vmem, size = 0x2000, scoped, tag = 'input window, operand 0, single buffered']
    #allocation5 [shape = 's32[2]{0}', space=sflag, size = 0x8, scoped, tag = 'scoped memory for tpu_custom_call.1']
    #allocation6 [shape = 's32[2]{0}', space=sflag, size = 0x8, scoped, tag = 'scoped memory for tpu_custom_call.1']
    #allocation7 [shape = 'u8[8192]{0}', space=vmem, size = 0x2000, scoped, tag = 'input window, operand 1, single buffered']
    #allocation8 [shape = 's32[1]{0}', space=sflag, size = 0x4, scoped, tag = 'scoped memory for tpu_custom_call.1']
    #allocation9 [shape = 'u8[393216]{0}', space=vmem, size = 0x60000, scoped, tag = 'input window, operand 2']
    #allocation10 [shape = 'u8[131072]{0}', space=vmem, size = 0x20000, scoped, tag = 'input window, operand 3']
    #allocation11 [shape = 'u8[8192]{0}', space=vmem, size = 0x2000, scoped, tag = 'output window, operand 0']
    %9 = vsyncpa [#allocation5], 0
    %10 = vsyncpa [#allocation8], 0
    %11 = vsyncpa [#allocation6], 0
    %s12 = scalar_lea.sflag [#allocation6], 1
    %13 = vsyncpa %s12, 0
    loop: start=0, step=1, limit=6
    $region2: #{tpu_custom_call.1} parent=1 // loop_pre_header
      _
    $region3: #{tpu_custom_call.1} parent=1 // loop_header
      %s15 = sphi 0, %s19
      %p16 = scmp.ge.s32.totalorder %s15, 6
      %s22 = sphi 0, %s34
      %s23 = sphi 0, %s30
      %s24 = sphi 0, %s22
      %s25 = sphi 0, %s23
      %s26 = sphi 0, %s24
      %s27 = sphi 0, %s25
      %s35 = sphi 0, %s35
      %s37 = sphi 0, %s35
      %s38 = sphi 0, %s37
      %s52 = sphi 0, %s38
      %s56 = sphi 0, %s56
      %s58 = sphi 0, %s56
      %s59 = sphi 0, %s58
      %s73 = sphi 0, %s59
      %s81 = sphi 0, %s83
      %s84 = sphi 0, %s81
      %s85 = sphi 0, %s84
      %s101 = sphi 0, %s85
      %s109 = sphi 0, %s111
      %s112 = sphi 0, %s109
      %s113 = sphi 0, %s112
      %s129 = sphi 0, %s113
      %s135 = sphi 0, %s137
      %s138 = sphi 0, %s135
      %s139 = sphi 0, %s138
      %s155 = sphi 0, %s139
    $region4: #{tpu_custom_call.1} parent=1 // loop_header_branch
      %18 = sbr.rel (%p16) target = $region8
    $region5: #{tpu_custom_call.1} parent=1 // loop_body
      %s20 = ssub.s32 %s15, 1
      %s21 = ssub.s32 %s15, 2
      %s28 = sadd.s32 1, %s23
      %p29 = scmp.ge.s32.totalorder %s28, 2
      %s30 = scalar_select %p29, 0, %s28
      %s31 = sadd.s32 1, %s22
      %s32 = scalar_select %p29, %s31, %s22
      %p33 = scmp.ge.s32.totalorder %s32, 2
      %s34 = scalar_select %p33, 0, %s32
      %s36 = sadd.s32 %s35, 1
      %p39 = scmp.eq.s32.totalorder %s15, 3
      %p40 = scmp.ne.s32.totalorder %s35, %s37
      %p41 = scmp.eq.s32.totalorder %s15, 0
      %p42 = por %p40, %p41
      %p43 = scmp.ne.s32.totalorder %s35, %s37
      %p44 = scmp.eq.s32.totalorder %s20, 3
      %p45 = por %p43, %p44
      %p46 = scmp.ne.s32.totalorder %s37, %s38
      %p47 = scmp.eq.s32.totalorder %s20, 0
      %p48 = por %p46, %p47
      %p49 = scmp.ne.s32.totalorder %s37, %s38
      %p50 = scmp.eq.s32.totalorder %s21, 3
      %p51 = por %p49, %p50
      %p53 = scmp.ne.s32.totalorder %s38, %s52
      %p54 = scmp.eq.s32.totalorder %s21, 0
      %p55 = por %p53, %p54
      %s57 = sadd.s32 %s56, 1
      %p60 = scmp.eq.s32.totalorder %s15, 3
      %p61 = scmp.ne.s32.totalorder %s56, %s58
      %p62 = scmp.eq.s32.totalorder %s15, 0
      %p63 = por %p61, %p62
      %p64 = scmp.ne.s32.totalorder %s56, %s58
      %p65 = scmp.eq.s32.totalorder %s20, 3
      %p66 = por %p64, %p65
      %p67 = scmp.ne.s32.totalorder %s58, %s59
      %p68 = scmp.eq.s32.totalorder %s20, 0
      %p69 = por %p67, %p68
      %p70 = scmp.ne.s32.totalorder %s58, %s59
      %p71 = scmp.eq.s32.totalorder %s21, 3
      %p72 = por %p70, %p71
      %p74 = scmp.ne.s32.totalorder %s59, %s73
      %p75 = scmp.eq.s32.totalorder %s21, 0
      %p76 = por %p74, %p75
      %s77 = ssub.s32 %s22, %s34
      %s78 = ssub.s32 %s23, %s30
      %s79 = sor.u32 %s77, %s78
      %p80 = scmp.eq.s32.totalorder %s79, 0
      %s82 = sadd.s32 %s81, 1
      %s83 = scalar_select %p80, %s81, %s82
      %p86 = pneg %p80
      %p87 = scmp.eq.s32.totalorder %s15, 3
      %p88 = por %p86, %p87
      %p89 = scmp.ne.s32.totalorder %s81, %s84
      %p90 = scmp.eq.s32.totalorder %s15, 0
      %p91 = por %p89, %p90
      %p92 = scmp.ne.s32.totalorder %s81, %s84
      %p93 = scmp.eq.s32.totalorder %s20, 3
      %p94 = por %p92, %p93
      %p95 = scmp.ne.s32.totalorder %s84, %s85
      %p96 = scmp.eq.s32.totalorder %s20, 0
      %p97 = por %p95, %p96
      %p98 = scmp.ne.s32.totalorder %s84, %s85
      %p99 = scmp.eq.s32.totalorder %s21, 3
      %p100 = por %p98, %p99
      %p102 = scmp.ne.s32.totalorder %s85, %s101
      %p103 = scmp.eq.s32.totalorder %s21, 0
      %p104 = por %p102, %p103
      %s105 = ssub.s32 %s22, %s34
      %s106 = ssub.s32 %s23, %s30
      %s107 = sor.u32 %s105, %s106
      %p108 = scmp.eq.s32.totalorder %s107, 0
      %s110 = sadd.s32 %s109, 1
      %s111 = scalar_select %p108, %s109, %s110
      %p114 = pneg %p108
      %p115 = scmp.eq.s32.totalorder %s15, 3
      %p116 = por %p114, %p115
      %p117 = scmp.ne.s32.totalorder %s109, %s112
      %p118 = scmp.eq.s32.totalorder %s15, 0
      %p119 = por %p117, %p118
      %p120 = scmp.ne.s32.totalorder %s109, %s112
      %p121 = scmp.eq.s32.totalorder %s20, 3
      %p122 = por %p120, %p121
      %p123 = scmp.ne.s32.totalorder %s112, %s113
      %p124 = scmp.eq.s32.totalorder %s20, 0
      %p125 = por %p123, %p124
      %p126 = scmp.ne.s32.totalorder %s112, %s113
      %p127 = scmp.eq.s32.totalorder %s21, 3
      %p128 = por %p126, %p127
      %p130 = scmp.ne.s32.totalorder %s113, %s129
      %p131 = scmp.eq.s32.totalorder %s21, 0
      %p132 = por %p130, %p131
      %s133 = ssub.s32 %s22, %s34
      %p134 = scmp.eq.s32.totalorder %s133, 0
      %s136 = sadd.s32 %s135, 1
      %s137 = scalar_select %p134, %s135, %s136
      %p140 = pneg %p134
      %p141 = scmp.eq.s32.totalorder %s15, 3
      %p142 = por %p140, %p141
      %p143 = scmp.ne.s32.totalorder %s135, %s138
      %p144 = scmp.eq.s32.totalorder %s15, 0
      %p145 = por %p143, %p144
      %p146 = scmp.ne.s32.totalorder %s135, %s138
      %p147 = scmp.eq.s32.totalorder %s20, 3
      %p148 = por %p146, %p147
      %p149 = scmp.ne.s32.totalorder %s138, %s139
      %p150 = scmp.eq.s32.totalorder %s20, 0
      %p151 = por %p149, %p150
      %p152 = scmp.ne.s32.totalorder %s138, %s139
      %p153 = scmp.eq.s32.totalorder %s21, 3
      %p154 = por %p152, %p153
      %p156 = scmp.ne.s32.totalorder %s139, %s155
      %p157 = scmp.eq.s32.totalorder %s21, 0
      %p158 = por %p156, %p157
      %p159 = scmp.le.s32.totalorder 1, %s15
      %p160 = scmp.lt.s32.totalorder %s15, 5
      %p161 = pnand %p159, %p160
      %p162 = pneg %p161
      // Predicated region
      $region9: #{tpu_custom_call.1} parent=5 // pred_check
        _
      $region10: #{tpu_custom_call.1} parent=5 // pred_check_branch
        %164 = sbr.rel (%p161) target = $region12
      $region11: #{tpu_custom_call.1} parent=5 // pred_region
        %s165 = ssub.s32 %s15, 1
        // Predicated region
        $region13: #{tpu_custom_call.1} parent=11 // pred_check
          %p166 = pneg %p48
        $region14: #{tpu_custom_call.1} parent=11 // pred_check_branch
          %168 = sbr.rel (%p166) target = $region16
        $region15: #{tpu_custom_call.1} parent=11 // pred_region
          %s170 = ssub.s32 256, 256
          %171 = vsyncadd [#allocation5], %s170
          %s172 = sshll.u32 [#allocation4], 4
          %s173 = int_to_ptr.vmem [resolvable:$true] %s172
          %178 = dma.hbm_to_vmem [thread:$0]  %s0, 256, %s173, [#allocation5], 128, 128, 8
        $region16: #{tpu_custom_call.1} parent=11 // pred_fallthru
          _
        // Predicated region
        $region17: #{tpu_custom_call.1} parent=11 // pred_check
          %p179 = pneg %p69
        $region18: #{tpu_custom_call.1} parent=11 // pred_check_branch
          %181 = sbr.rel (%p179) target = $region20
        $region19: #{tpu_custom_call.1} parent=11 // pred_region
          %s183 = ssub.s32 256, 256
          %184 = vsyncadd [#allocation8], %s183
          %s185 = sshll.u32 [#allocation7], 4
          %s186 = int_to_ptr.vmem [resolvable:$true] %s185
          %191 = dma.hbm_to_vmem [thread:$0]  %s1, 256, %s186, [#allocation8], 128, 128, 8
        $region20: #{tpu_custom_call.1} parent=11 // pred_fallthru
          _
      $region12: #{tpu_custom_call.1} parent=5 // pred_fallthru
        _
      %p192 = scmp.lt.s32.totalorder %s15, 4
      // Predicated region
      $region21: #{tpu_custom_call.1} parent=5 // pred_check
        %p193 = pneg %p192
      $region22: #{tpu_custom_call.1} parent=5 // pred_check_branch
        %195 = sbr.rel (%p193) target = $region24
      $region23: #{tpu_custom_call.1} parent=5 // pred_region
        // Predicated region
        $region25: #{tpu_custom_call.1} parent=23 // pred_check
          %p196 = pneg %p91
        $region26: #{tpu_custom_call.1} parent=23 // pred_check_branch
          %198 = sbr.rel (%p196) target = $region28
        $region27: #{tpu_custom_call.1} parent=23 // pred_region
          #allocation13 [shape = 'u32[6]{0}', space=smem, size = 0x18, scoped, tag = 'DMA stride descriptor']
          %s199 = sand.u32 %s15, 1
          %s200 = scalar_lea.sflag [#allocation5], %s199
          %s201 = sand.u32 %s81, 1
          %s202 = smul.addr %s201, 384
          %s203 = scalar_lea.vmem [#allocation9], %s202
          %s204 = smul.u32 3, %s22
          %s205 = smul.u32 8, %s23
          %s207 = ssub.s32 6144, 6144
          %208 = vsyncadd %s200, %s207
          %s209 = smul.addr %s205, 2
          %s210 = smul.addr %s204, 32
          %s211 = sadd.s32 %s209, %s210
          %s212 = smul.addr %s211, 128
          %s213 = scalar_lea.hbm %s2, %s212
          %s215 = sshll.u32 1, 14
          %s216 = sxor.u32 4294967295, %s215
          %s218 = sld [smem:[#allocation0]]
          %s219 = sadd.s32 2, %s218
          %s221 = sshll.u32 7, 26
          %s222 = sxor.u32 4294967295, %s221
          %s223 = sand.u32 0, %s222
          %s224 = sshll.u32 %s219, 26
          %s225 = sor.u32 %s223, %s224
          %s226 = sshll.u32 %s203, 4
          %s227 = int_to_ptr.vmem [resolvable:$true] %s226
          %233 = sst [smem:[#allocation13]] 4096
          %s234 = scalar_lea.smem [#allocation13], 1
          %235 = sst [smem:[%s234]] 2048
          %s236 = scalar_lea.smem [#allocation13], 2
          %237 = sst [smem:[%s236]] 16
          %s238 = scalar_lea.smem [#allocation13], 3
          %239 = sst [smem:[%s238]] 128
          %s240 = scalar_lea.smem [#allocation13], 4
          %241 = sst [smem:[%s240]] 128
          %s242 = scalar_lea.smem [#allocation13], 5
          %243 = sst [smem:[%s242]] 8
          %245 = dma.general %s213, 6144, %s227, %s200, [#allocation12], [#allocation13], %s225, 0
        $region28: #{tpu_custom_call.1} parent=23 // pred_fallthru
          _
        // Predicated region
        $region29: #{tpu_custom_call.1} parent=23 // pred_check
          %p246 = pneg %p119
        $region30: #{tpu_custom_call.1} parent=23 // pred_check_branch
          %248 = sbr.rel (%p246) target = $region32
        $region31: #{tpu_custom_call.1} parent=23 // pred_region
          %s249 = sand.u32 %s15, 1
          %s250 = scalar_lea.sflag [#allocation5], %s249
          %s251 = sand.u32 %s109, 1
          %s252 = smul.addr %s251, 128
          %s253 = scalar_lea.vmem [#allocation10], %s252
          %s254 = smul.u32 8, %s23
          %s256 = ssub.s32 2048, 2048
          %257 = vsyncadd %s250, %s256
          %s258 = smul.addr %s254, 2
          %s259 = smul.addr %s22, 32
          %s260 = sadd.s32 %s258, %s259
          %s261 = smul.addr %s260, 128
          %s262 = scalar_lea.hbm %s3, %s261
          %s263 = sshll.u32 %s253, 4
          %s264 = int_to_ptr.vmem [resolvable:$true] %s263
          %269 = dma.hbm_to_vmem [thread:$0]  %s262, 2048, %s264, %s250, 128, 128, 8
        $region32: #{tpu_custom_call.1} parent=23 // pred_fallthru
          _
      $region24: #{tpu_custom_call.1} parent=5 // pred_fallthru
        _
      %p270 = scmp.le.s32.totalorder 1, %s15
      %p271 = scmp.lt.s32.totalorder %s15, 5
      %p272 = pnand %p270, %p271
      %p273 = pneg %p272
      // Predicated region
      $region33: #{tpu_custom_call.1} parent=5 // pred_check
        _
      $region34: #{tpu_custom_call.1} parent=5 // pred_check_branch
        %275 = sbr.rel (%p272) target = $region36
      $region35: #{tpu_custom_call.1} parent=5 // pred_region
        %s276 = ssub.s32 %s15, 1
        // Predicated region
        $region37: #{tpu_custom_call.1} parent=35 // pred_check
          %p277 = pneg %p48
        $region38: #{tpu_custom_call.1} parent=35 // pred_check_branch
          %279 = sbr.rel (%p277) target = $region40
        $region39: #{tpu_custom_call.1} parent=35 // pred_region
          %280 = dma.done [#allocation5], 256
        $region40: #{tpu_custom_call.1} parent=35 // pred_fallthru
          _
        // Predicated region
        $region41: #{tpu_custom_call.1} parent=35 // pred_check
          %p281 = pneg %p69
        $region42: #{tpu_custom_call.1} parent=35 // pred_check_branch
          %283 = sbr.rel (%p281) target = $region44
        $region43: #{tpu_custom_call.1} parent=35 // pred_region
          %284 = dma.done [#allocation8], 256
        $region44: #{tpu_custom_call.1} parent=35 // pred_fallthru
          _
        %s285 = sand.u32 %s20, 1
        %s286 = scalar_lea.sflag [#allocation5], %s285
        %s287 = sand.u32 %s84, 1
        %s288 = smul.addr %s287, 384
        %s289 = scalar_lea.vmem [#allocation9], %s288
        // Predicated region
        $region45: #{tpu_custom_call.1} parent=35 // pred_check
          %p290 = pneg %p97
        $region46: #{tpu_custom_call.1} parent=35 // pred_check_branch
          %292 = sbr.rel (%p290) target = $region48
        $region47: #{tpu_custom_call.1} parent=35 // pred_region
          %293 = dma.done %s286, 6144
        $region48: #{tpu_custom_call.1} parent=35 // pred_fallthru
          _
        %s294 = sand.u32 %s20, 1
        %s295 = scalar_lea.sflag [#allocation5], %s294
        %s296 = sand.u32 %s112, 1
        %s297 = smul.addr %s296, 128
        %s298 = scalar_lea.vmem [#allocation10], %s297
        // Predicated region
        $region49: #{tpu_custom_call.1} parent=35 // pred_check
          %p299 = pneg %p125
        $region50: #{tpu_custom_call.1} parent=35 // pred_check_branch
          %301 = sbr.rel (%p299) target = $region52
        $region51: #{tpu_custom_call.1} parent=35 // pred_region
          %302 = dma.done %s295, 2048
        $region52: #{tpu_custom_call.1} parent=35 // pred_fallthru
          _
        %p303 = pneg %p48
        %p304 = pneg %p45
        %p305 = pneg %p69
        %p306 = pneg %p66
        %s307 = sand.u32 %s20, 1
        %s308 = scalar_lea.sflag [#allocation5], %s307
        %s309 = sand.u32 %s84, 1
        %s310 = smul.addr %s309, 384
        %s311 = scalar_lea.vmem [#allocation9], %s310
        %p312 = pneg %p97
        %p313 = pneg %p94
        %s314 = sand.u32 %s20, 1
        %s315 = scalar_lea.sflag [#allocation5], %s314
        %s316 = sand.u32 %s112, 1
        %s317 = smul.addr %s316, 128
        %s318 = scalar_lea.vmem [#allocation10], %s317
        %p319 = pneg %p125
        %p320 = pneg %p122
        %p321 = pneg %p151
        %p322 = pneg %p148
        %s323 = sand.u32 %s138, 1
        %s324 = scalar_lea.sflag [#allocation6], %s323
        %s325 = sand.u32 %s138, 1
        %s326 = smul.addr %s325, 8
        %s327 = scalar_lea.vmem [#allocation11], %s326
        %s328 = smul.u32 3, %s24
        %s329 = smul.u32 8, %s25
        %s330 = smul.u32 8, %s25
        %p331 = scmp.eq.s32.totalorder %s25, 0
        // Predicated region
        $region53: #{tpu_custom_call.1} parent=35 // pred_check
          %p332 = pneg %p331
        $region54: #{tpu_custom_call.1} parent=35 // pred_check_branch
          %334 = sbr.rel (%p332) target = $region56
        $region55: #{tpu_custom_call.1} parent=35 // pred_region
          %s335 = scalar_lea.smem [#allocation3], 0
          %336 = sst [smem:[%s335]] 0.0
          %s337 = scalar_lea.smem [#allocation3], 1
          %338 = sst [smem:[%s337]] 0.0
          %s339 = scalar_lea.smem [#allocation3], 2
          %340 = sst [smem:[%s339]] 0.0
          %s341 = scalar_lea.smem [#allocation3], 3
          %342 = sst [smem:[%s341]] 0.0
          %s343 = scalar_lea.smem [#allocation3], 4
          %344 = sst [smem:[%s343]] 0.0
          %s345 = scalar_lea.smem [#allocation3], 5
          %346 = sst [smem:[%s345]] 0.0
          %s347 = scalar_lea.smem [#allocation3], 6
          %348 = sst [smem:[%s347]] 0.0
          %s349 = scalar_lea.smem [#allocation3], 7
          %350 = sst [smem:[%s349]] 0.0
          %s351 = scalar_lea.smem [#allocation3], 8
          %352 = sst [smem:[%s351]] 0.0
          %s353 = scalar_lea.smem [#allocation3], 9
          %354 = sst [smem:[%s353]] 0.0
          %s355 = scalar_lea.smem [#allocation3], 10
          %356 = sst [smem:[%s355]] 0.0
          %s357 = scalar_lea.smem [#allocation3], 11
          %358 = sst [smem:[%s357]] 0.0
          %s359 = scalar_lea.smem [#allocation3], 12
          %360 = sst [smem:[%s359]] 0.0
          %s361 = scalar_lea.smem [#allocation3], 13
          %362 = sst [smem:[%s361]] 0.0
          %s363 = scalar_lea.smem [#allocation3], 14
          %364 = sst [smem:[%s363]] 0.0
          %s365 = scalar_lea.smem [#allocation3], 15
          %366 = sst [smem:[%s365]] 0.0
        $region56: #{tpu_custom_call.1} parent=35 // pred_fallthru
          _
        %v367 = vld [vmem:[%s298] sm:$0xff]
        %v368 = vld [vmem:[%s298 + $0x8] sm:$0xff]
        %v369 = vld [vmem:[%s298 + $0x10] sm:$0xff]
        %v370 = vld [vmem:[%s298 + $0x18] sm:$0xff]
        %v371 = vld [vmem:[%s298 + $0x20] sm:$0xff]
        %v372 = vld [vmem:[%s298 + $0x28] sm:$0xff]
        %v373 = vld [vmem:[%s298 + $0x30] sm:$0xff]
        %v374 = vld [vmem:[%s298 + $0x38] sm:$0xff]
        %v375 = vld [vmem:[%s298 + $0x40] sm:$0xff]
        %v376 = vld [vmem:[%s298 + $0x48] sm:$0xff]
        %v377 = vld [vmem:[%s298 + $0x50] sm:$0xff]
        %v378 = vld [vmem:[%s298 + $0x58] sm:$0xff]
        %v379 = vld [vmem:[%s298 + $0x60] sm:$0xff]
        %v380 = vld [vmem:[%s298 + $0x68] sm:$0xff]
        %v381 = vld [vmem:[%s298 + $0x70] sm:$0xff]
        %v382 = vld [vmem:[%s298 + $0x78] sm:$0xff]
        %vm383 = vcmp.gt.s32.totalorder %v367, 4294967295
        %vm384 = vcmp.gt.s32.totalorder %v368, 4294967295
        %vm385 = vcmp.gt.s32.totalorder %v369, 4294967295
        %vm386 = vcmp.gt.s32.totalorder %v370, 4294967295
        %vm387 = vcmp.gt.s32.totalorder %v371, 4294967295
        %vm388 = vcmp.gt.s32.totalorder %v372, 4294967295
        %vm389 = vcmp.gt.s32.totalorder %v373, 4294967295
        %vm390 = vcmp.gt.s32.totalorder %v374, 4294967295
        %vm391 = vcmp.gt.s32.totalorder %v375, 4294967295
        %vm392 = vcmp.gt.s32.totalorder %v376, 4294967295
        %vm393 = vcmp.gt.s32.totalorder %v377, 4294967295
        %vm394 = vcmp.gt.s32.totalorder %v378, 4294967295
        %vm395 = vcmp.gt.s32.totalorder %v379, 4294967295
        %vm396 = vcmp.gt.s32.totalorder %v380, 4294967295
        %vm397 = vcmp.gt.s32.totalorder %v381, 4294967295
        %vm398 = vcmp.gt.s32.totalorder %v382, 4294967295
        %vm399 = vcmp.lt.s32.totalorder %v367, 3
        %vm400 = vcmp.lt.s32.totalorder %v368, 3
        %vm401 = vcmp.lt.s32.totalorder %v369, 3
        %vm402 = vcmp.lt.s32.totalorder %v370, 3
        %vm403 = vcmp.lt.s32.totalorder %v371, 3
        %vm404 = vcmp.lt.s32.totalorder %v372, 3
        %vm405 = vcmp.lt.s32.totalorder %v373, 3
        %vm406 = vcmp.lt.s32.totalorder %v374, 3
        %vm407 = vcmp.lt.s32.totalorder %v375, 3
        %vm408 = vcmp.lt.s32.totalorder %v376, 3
        %vm409 = vcmp.lt.s32.totalorder %v377, 3
        %vm410 = vcmp.lt.s32.totalorder %v378, 3
        %vm411 = vcmp.lt.s32.totalorder %v379, 3
        %vm412 = vcmp.lt.s32.totalorder %v380, 3
        %vm413 = vcmp.lt.s32.totalorder %v381, 3
        %vm414 = vcmp.lt.s32.totalorder %v382, 3
        %vm415 = vmand %vm383, %vm399
        %vm416 = vmand %vm384, %vm400
        %vm417 = vmand %vm385, %vm401
        %vm418 = vmand %vm386, %vm402
        %vm419 = vmand %vm387, %vm403
        %vm420 = vmand %vm388, %vm404
        %vm421 = vmand %vm389, %vm405
        %vm422 = vmand %vm390, %vm406
        %vm423 = vmand %vm391, %vm407
        %vm424 = vmand %vm392, %vm408
        %vm425 = vmand %vm393, %vm409
        %vm426 = vmand %vm394, %vm410
        %vm427 = vmand %vm395, %vm411
        %vm428 = vmand %vm396, %vm412
        %vm429 = vmand %vm397, %vm413
        %vm430 = vmand %vm398, %vm414
        %vm431 = vcmp.gt.s32.totalorder %v367, 2
        %vm432 = vcmp.gt.s32.totalorder %v368, 2
        %vm433 = vcmp.gt.s32.totalorder %v369, 2
        %vm434 = vcmp.gt.s32.totalorder %v370, 2
        %vm435 = vcmp.gt.s32.totalorder %v371, 2
        %vm436 = vcmp.gt.s32.totalorder %v372, 2
        %vm437 = vcmp.gt.s32.totalorder %v373, 2
        %vm438 = vcmp.gt.s32.totalorder %v374, 2
        %vm439 = vcmp.gt.s32.totalorder %v375, 2
        %vm440 = vcmp.gt.s32.totalorder %v376, 2
        %vm441 = vcmp.gt.s32.totalorder %v377, 2
        %vm442 = vcmp.gt.s32.totalorder %v378, 2
        %vm443 = vcmp.gt.s32.totalorder %v379, 2
        %vm444 = vcmp.gt.s32.totalorder %v380, 2
        %vm445 = vcmp.gt.s32.totalorder %v381, 2
        %vm446 = vcmp.gt.s32.totalorder %v382, 2
        %v447 = vsel %vm415, 1, 0
        %v448 = vsel %vm416, 1, 0
        %v449 = vsel %vm417, 1, 0
        %v450 = vsel %vm418, 1, 0
        %v451 = vsel %vm419, 1, 0
        %v452 = vsel %vm420, 1, 0
        %v453 = vsel %vm421, 1, 0
        %v454 = vsel %vm422, 1, 0
        %v455 = vsel %vm423, 1, 0
        %v456 = vsel %vm424, 1, 0
        %v457 = vsel %vm425, 1, 0
        %v458 = vsel %vm426, 1, 0
        %v459 = vsel %vm427, 1, 0
        %v460 = vsel %vm428, 1, 0
        %v461 = vsel %vm429, 1, 0
        %v462 = vsel %vm430, 1, 0
        %v463 = vcvt.s32.f32 %v447
        %v464 = vcvt.s32.f32 %v448
        %v465 = vcvt.s32.f32 %v449
        %v466 = vcvt.s32.f32 %v450
        %v467 = vcvt.s32.f32 %v451
        %v468 = vcvt.s32.f32 %v452
        %v469 = vcvt.s32.f32 %v453
        %v470 = vcvt.s32.f32 %v454
        %v471 = vcvt.s32.f32 %v455
        %v472 = vcvt.s32.f32 %v456
        %v473 = vcvt.s32.f32 %v457
        %v474 = vcvt.s32.f32 %v458
        %v475 = vcvt.s32.f32 %v459
        %v476 = vcvt.s32.f32 %v460
        %v477 = vcvt.s32.f32 %v461
        %v478 = vcvt.s32.f32 %v462
        %v479 = vsel %vm431, 1, 0
        %v480 = vsel %vm432, 1, 0
        %v481 = vsel %vm433, 1, 0
        %v482 = vsel %vm434, 1, 0
        %v483 = vsel %vm435, 1, 0
        %v484 = vsel %vm436, 1, 0
        %v485 = vsel %vm437, 1, 0
        %v486 = vsel %vm438, 1, 0
        %v487 = vsel %vm439, 1, 0
        %v488 = vsel %vm440, 1, 0
        %v489 = vsel %vm441, 1, 0
        %v490 = vsel %vm442, 1, 0
        %v491 = vsel %vm443, 1, 0
        %v492 = vsel %vm444, 1, 0
        %v493 = vsel %vm445, 1, 0
        %v494 = vsel %vm446, 1, 0
        %v495 = vcvt.s32.f32 %v479
        %v496 = vcvt.s32.f32 %v480
        %v497 = vcvt.s32.f32 %v481
        %v498 = vcvt.s32.f32 %v482
        %v499 = vcvt.s32.f32 %v483
        %v500 = vcvt.s32.f32 %v484
        %v501 = vcvt.s32.f32 %v485
        %v502 = vcvt.s32.f32 %v486
        %v503 = vcvt.s32.f32 %v487
        %v504 = vcvt.s32.f32 %v488
        %v505 = vcvt.s32.f32 %v489
        %v506 = vcvt.s32.f32 %v490
        %v507 = vcvt.s32.f32 %v491
        %v508 = vcvt.s32.f32 %v492
        %v509 = vcvt.s32.f32 %v493
        %v510 = vcvt.s32.f32 %v494
        %vm511 = vcmp.lt.s32.totalorder %v367, 0
        %v512 = vsub.s32 0, %v367
        %v513 = vsel %vm511, %v512, %v367
        %v514 = vmul.u32.u64.compose %v513, 2863311531
        %v515 = vextract.low.u32 %v514
        %v516 = vextract.high.u32 %v514
        %v517 = vshrl.u32 %v516, 1
        %v518 = vmul.u32 %v517, 3
        %v519 = vsub.s32 %v513, %v518
        %v520 = vsub.s32 0, %v519
        %v521 = vsel %vm511, %v520, %v519
        %vm522 = vcmp.lt.s32.totalorder %v368, 0
        %v523 = vsub.s32 0, %v368
        %v524 = vsel %vm522, %v523, %v368
        %v525 = vmul.u32.u64.compose %v524, 2863311531
        %v526 = vextract.low.u32 %v525
        %v527 = vextract.high.u32 %v525
        %v528 = vshrl.u32 %v527, 1
        %v529 = vmul.u32 %v528, 3
        %v530 = vsub.s32 %v524, %v529
        %v531 = vsub.s32 0, %v530
        %v532 = vsel %vm522, %v531, %v530
        %vm533 = vcmp.lt.s32.totalorder %v369, 0
        %v534 = vsub.s32 0, %v369
        %v535 = vsel %vm533, %v534, %v369
        %v536 = vmul.u32.u64.compose %v535, 2863311531
        %v537 = vextract.low.u32 %v536
        %v538 = vextract.high.u32 %v536
        %v539 = vshrl.u32 %v538, 1
        %v540 = vmul.u32 %v539, 3
        %v541 = vsub.s32 %v535, %v540
        %v542 = vsub.s32 0, %v541
        %v543 = vsel %vm533, %v542, %v541
        %vm544 = vcmp.lt.s32.totalorder %v370, 0
        %v545 = vsub.s32 0, %v370
        %v546 = vsel %vm544, %v545, %v370
        %v547 = vmul.u32.u64.compose %v546, 2863311531
        %v548 = vextract.low.u32 %v547
        %v549 = vextract.high.u32 %v547
        %v550 = vshrl.u32 %v549, 1
        %v551 = vmul.u32 %v550, 3
        %v552 = vsub.s32 %v546, %v551
        %v553 = vsub.s32 0, %v552
        %v554 = vsel %vm544, %v553, %v552
        %vm555 = vcmp.lt.s32.totalorder %v371, 0
        %v556 = vsub.s32 0, %v371
        %v557 = vsel %vm555, %v556, %v371
        %v558 = vmul.u32.u64.compose %v557, 2863311531
        %v559 = vextract.low.u32 %v558
        %v560 = vextract.high.u32 %v558
        %v561 = vshrl.u32 %v560, 1
        %v562 = vmul.u32 %v561, 3
        %v563 = vsub.s32 %v557, %v562
        %v564 = vsub.s32 0, %v563
        %v565 = vsel %vm555, %v564, %v563
        %vm566 = vcmp.lt.s32.totalorder %v372, 0
        %v567 = vsub.s32 0, %v372
        %v568 = vsel %vm566, %v567, %v372
        %v569 = vmul.u32.u64.compose %v568, 2863311531
        %v570 = vextract.low.u32 %v569
        %v571 = vextract.high.u32 %v569
        %v572 = vshrl.u32 %v571, 1
        %v573 = vmul.u32 %v572, 3
        %v574 = vsub.s32 %v568, %v573
        %v575 = vsub.s32 0, %v574
        %v576 = vsel %vm566, %v575, %v574
        %vm577 = vcmp.lt.s32.totalorder %v373, 0
        %v578 = vsub.s32 0, %v373
        %v579 = vsel %vm577, %v578, %v373
        %v580 = vmul.u32.u64.compose %v579, 2863311531
        %v581 = vextract.low.u32 %v580
        %v582 = vextract.high.u32 %v580
        %v583 = vshrl.u32 %v582, 1
        %v584 = vmul.u32 %v583, 3
        %v585 = vsub.s32 %v579, %v584
        %v586 = vsub.s32 0, %v585
        %v587 = vsel %vm577, %v586, %v585
        %vm588 = vcmp.lt.s32.totalorder %v374, 0
        %v589 = vsub.s32 0, %v374
        %v590 = vsel %vm588, %v589, %v374
        %v591 = vmul.u32.u64.compose %v590, 2863311531
        %v592 = vextract.low.u32 %v591
        %v593 = vextract.high.u32 %v591
        %v594 = vshrl.u32 %v593, 1
        %v595 = vmul.u32 %v594, 3
        %v596 = vsub.s32 %v590, %v595
        %v597 = vsub.s32 0, %v596
        %v598 = vsel %vm588, %v597, %v596
        %vm599 = vcmp.lt.s32.totalorder %v375, 0
        %v600 = vsub.s32 0, %v375
        %v601 = vsel %vm599, %v600, %v375
        %v602 = vmul.u32.u64.compose %v601, 2863311531
        %v603 = vextract.low.u32 %v602
        %v604 = vextract.high.u32 %v602
        %v605 = vshrl.u32 %v604, 1
        %v606 = vmul.u32 %v605, 3
        %v607 = vsub.s32 %v601, %v606
        %v608 = vsub.s32 0, %v607
        %v609 = vsel %vm599, %v608, %v607
        %vm610 = vcmp.lt.s32.totalorder %v376, 0
        %v611 = vsub.s32 0, %v376
        %v612 = vsel %vm610, %v611, %v376
        %v613 = vmul.u32.u64.compose %v612, 2863311531
        %v614 = vextract.low.u32 %v613
        %v615 = vextract.high.u32 %v613
        %v616 = vshrl.u32 %v615, 1
        %v617 = vmul.u32 %v616, 3
        %v618 = vsub.s32 %v612, %v617
        %v619 = vsub.s32 0, %v618
        %v620 = vsel %vm610, %v619, %v618
        %vm621 = vcmp.lt.s32.totalorder %v377, 0
        %v622 = vsub.s32 0, %v377
        %v623 = vsel %vm621, %v622, %v377
        %v624 = vmul.u32.u64.compose %v623, 2863311531
        %v625 = vextract.low.u32 %v624
        %v626 = vextract.high.u32 %v624
        %v627 = vshrl.u32 %v626, 1
        %v628 = vmul.u32 %v627, 3
        %v629 = vsub.s32 %v623, %v628
        %v630 = vsub.s32 0, %v629
        %v631 = vsel %vm621, %v630, %v629
        %vm632 = vcmp.lt.s32.totalorder %v378, 0
        %v633 = vsub.s32 0, %v378
        %v634 = vsel %vm632, %v633, %v378
        %v635 = vmul.u32.u64.compose %v634, 2863311531
        %v636 = vextract.low.u32 %v635
        %v637 = vextract.high.u32 %v635
        %v638 = vshrl.u32 %v637, 1
        %v639 = vmul.u32 %v638, 3
        %v640 = vsub.s32 %v634, %v639
        %v641 = vsub.s32 0, %v640
        %v642 = vsel %vm632, %v641, %v640
        %vm643 = vcmp.lt.s32.totalorder %v379, 0
        %v644 = vsub.s32 0, %v379
        %v645 = vsel %vm643, %v644, %v379
        %v646 = vmul.u32.u64.compose %v645, 2863311531
        %v647 = vextract.low.u32 %v646
        %v648 = vextract.high.u32 %v646
        %v649 = vshrl.u32 %v648, 1
        %v650 = vmul.u32 %v649, 3
        %v651 = vsub.s32 %v645, %v650
        %v652 = vsub.s32 0, %v651
        %v653 = vsel %vm643, %v652, %v651
        %vm654 = vcmp.lt.s32.totalorder %v380, 0
        %v655 = vsub.s32 0, %v380
        %v656 = vsel %vm654, %v655, %v380
        %v657 = vmul.u32.u64.compose %v656, 2863311531
        %v658 = vextract.low.u32 %v657
        %v659 = vextract.high.u32 %v657
        %v660 = vshrl.u32 %v659, 1
        %v661 = vmul.u32 %v660, 3
        %v662 = vsub.s32 %v656, %v661
        %v663 = vsub.s32 0, %v662
        %v664 = vsel %vm654, %v663, %v662
        %vm665 = vcmp.lt.s32.totalorder %v381, 0
        %v666 = vsub.s32 0, %v381
        %v667 = vsel %vm665, %v666, %v381
        %v668 = vmul.u32.u64.compose %v667, 2863311531
        %v669 = vextract.low.u32 %v668
        %v670 = vextract.high.u32 %v668
        %v671 = vshrl.u32 %v670, 1
        %v672 = vmul.u32 %v671, 3
        %v673 = vsub.s32 %v667, %v672
        %v674 = vsub.s32 0, %v673
        %v675 = vsel %vm665, %v674, %v673
        %vm676 = vcmp.lt.s32.totalorder %v382, 0
        %v677 = vsub.s32 0, %v382
        %v678 = vsel %vm676, %v677, %v382
        %v679 = vmul.u32.u64.compose %v678, 2863311531
        %v680 = vextract.low.u32 %v679
        %v681 = vextract.high.u32 %v679
        %v682 = vshrl.u32 %v681, 1
        %v683 = vmul.u32 %v682, 3
        %v684 = vsub.s32 %v678, %v683
        %v685 = vsub.s32 0, %v684
        %v686 = vsel %vm676, %v685, %v684
        %vm687 = vcmp.ne.s32.totalorder %v521, 0
        %vm688 = vcmp.ne.s32.totalorder %v532, 0
        %vm689 = vcmp.ne.s32.totalorder %v543, 0
        %vm690 = vcmp.ne.s32.totalorder %v554, 0
        %vm691 = vcmp.ne.s32.totalorder %v565, 0
        %vm692 = vcmp.ne.s32.totalorder %v576, 0
        %vm693 = vcmp.ne.s32.totalorder %v587, 0
        %vm694 = vcmp.ne.s32.totalorder %v598, 0
        %vm695 = vcmp.ne.s32.totalorder %v609, 0
        %vm696 = vcmp.ne.s32.totalorder %v620, 0
        %vm697 = vcmp.ne.s32.totalorder %v631, 0
        %vm698 = vcmp.ne.s32.totalorder %v642, 0
        %vm699 = vcmp.ne.s32.totalorder %v653, 0
        %vm700 = vcmp.ne.s32.totalorder %v664, 0
        %vm701 = vcmp.ne.s32.totalorder %v675, 0
        %vm702 = vcmp.ne.s32.totalorder %v686, 0
        %vm703 = vcmp.lt.s32.totalorder %v521, 0
        %vm704 = vcmp.lt.s32.totalorder %v532, 0
        %vm705 = vcmp.lt.s32.totalorder %v543, 0
        %vm706 = vcmp.lt.s32.totalorder %v554, 0
        %vm707 = vcmp.lt.s32.totalorder %v565, 0
        %vm708 = vcmp.lt.s32.totalorder %v576, 0
        %vm709 = vcmp.lt.s32.totalorder %v587, 0
        %vm710 = vcmp.lt.s32.totalorder %v598, 0
        %vm711 = vcmp.lt.s32.totalorder %v609, 0
        %vm712 = vcmp.lt.s32.totalorder %v620, 0
        %vm713 = vcmp.lt.s32.totalorder %v631, 0
        %vm714 = vcmp.lt.s32.totalorder %v642, 0
        %vm715 = vcmp.lt.s32.totalorder %v653, 0
        %vm716 = vcmp.lt.s32.totalorder %v664, 0
        %vm717 = vcmp.lt.s32.totalorder %v675, 0
        %vm718 = vcmp.lt.s32.totalorder %v686, 0
        %vm719 = vmand %vm703, %vm687
        %vm720 = vmand %vm704, %vm688
        %vm721 = vmand %vm705, %vm689
        %vm722 = vmand %vm706, %vm690
        %vm723 = vmand %vm707, %vm691
        %vm724 = vmand %vm708, %vm692
        %vm725 = vmand %vm709, %vm693
        %vm726 = vmand %vm710, %vm694
        %vm727 = vmand %vm711, %vm695
        %vm728 = vmand %vm712, %vm696
        %vm729 = vmand %vm713, %vm697
        %vm730 = vmand %vm714, %vm698
        %vm731 = vmand %vm715, %vm699
        %vm732 = vmand %vm716, %vm700
        %vm733 = vmand %vm717, %vm701
        %vm734 = vmand %vm718, %vm702
        %v735 = vadd.s32 %v521, 3
        %v736 = vadd.s32 %v532, 3
        %v737 = vadd.s32 %v543, 3
        %v738 = vadd.s32 %v554, 3
        %v739 = vadd.s32 %v565, 3
        %v740 = vadd.s32 %v576, 3
        %v741 = vadd.s32 %v587, 3
        %v742 = vadd.s32 %v598, 3
        %v743 = vadd.s32 %v609, 3
        %v744 = vadd.s32 %v620, 3
        %v745 = vadd.s32 %v631, 3
        %v746 = vadd.s32 %v642, 3
        %v747 = vadd.s32 %v653, 3
        %v748 = vadd.s32 %v664, 3
        %v749 = vadd.s32 %v675, 3
        %v750 = vadd.s32 %v686, 3
        %v751 = vsel %vm719, %v735, %v521
        %v752 = vsel %vm720, %v736, %v532
        %v753 = vsel %vm721, %v737, %v543
        %v754 = vsel %vm722, %v738, %v554
        %v755 = vsel %vm723, %v739, %v565
        %v756 = vsel %vm724, %v740, %v576
        %v757 = vsel %vm725, %v741, %v587
        %v758 = vsel %vm726, %v742, %v598
        %v759 = vsel %vm727, %v743, %v609
        %v760 = vsel %vm728, %v744, %v620
        %v761 = vsel %vm729, %v745, %v631
        %v762 = vsel %vm730, %v746, %v642
        %v763 = vsel %vm731, %v747, %v653
        %v764 = vsel %vm732, %v748, %v664
        %v765 = vsel %vm733, %v749, %v675
        %v766 = vsel %vm734, %v750, %v686
        %v767 = vsel %vm431, %v751, %v367
        %v768 = vsel %vm432, %v752, %v368
        %v769 = vsel %vm433, %v753, %v369
        %v770 = vsel %vm434, %v754, %v370
        %v771 = vsel %vm435, %v755, %v371
        %v772 = vsel %vm436, %v756, %v372
        %v773 = vsel %vm437, %v757, %v373
        %v774 = vsel %vm438, %v758, %v374
        %v775 = vsel %vm439, %v759, %v375
        %v776 = vsel %vm440, %v760, %v376
        %v777 = vsel %vm441, %v761, %v377
        %v778 = vsel %vm442, %v762, %v378
        %v779 = vsel %vm443, %v763, %v379
        %v780 = vsel %vm444, %v764, %v380
        %v781 = vsel %vm445, %v765, %v381
        %v782 = vsel %vm446, %v766, %v382
        %vm783 = vcmp.gt.s32.totalorder %v767, 0
        %v784 = vsel %vm783, %v767, 0
        %vm785 = vcmp.gt.s32.totalorder %v768, 0
        %v786 = vsel %vm785, %v768, 0
        %vm787 = vcmp.gt.s32.totalorder %v769, 0
        %v788 = vsel %vm787, %v769, 0
        %vm789 = vcmp.gt.s32.totalorder %v770, 0
        %v790 = vsel %vm789, %v770, 0
        %vm791 = vcmp.gt.s32.totalorder %v771, 0
        %v792 = vsel %vm791, %v771, 0
        %vm793 = vcmp.gt.s32.totalorder %v772, 0
        %v794 = vsel %vm793, %v772, 0
        %vm795 = vcmp.gt.s32.totalorder %v773, 0
        %v796 = vsel %vm795, %v773, 0
        %vm797 = vcmp.gt.s32.totalorder %v774, 0
        %v798 = vsel %vm797, %v774, 0
        %vm799 = vcmp.gt.s32.totalorder %v775, 0
        %v800 = vsel %vm799, %v775, 0
        %vm801 = vcmp.gt.s32.totalorder %v776, 0
        %v802 = vsel %vm801, %v776, 0
        %vm803 = vcmp.gt.s32.totalorder %v777, 0
        %v804 = vsel %vm803, %v777, 0
        %vm805 = vcmp.gt.s32.totalorder %v778, 0
        %v806 = vsel %vm805, %v778, 0
        %vm807 = vcmp.gt.s32.totalorder %v779, 0
        %v808 = vsel %vm807, %v779, 0
        %vm809 = vcmp.gt.s32.totalorder %v780, 0
        %v810 = vsel %vm809, %v780, 0
        %vm811 = vcmp.gt.s32.totalorder %v781, 0
        %v812 = vsel %vm811, %v781, 0
        %vm813 = vcmp.gt.s32.totalorder %v782, 0
        %v814 = vsel %vm813, %v782, 0
        %vm815 = vcmp.lt.s32.totalorder %v784, 2
        %v816 = vsel %vm815, %v784, 2
        %vm817 = vcmp.lt.s32.totalorder %v786, 2
        %v818 = vsel %vm817, %v786, 2
        %vm819 = vcmp.lt.s32.totalorder %v788, 2
        %v820 = vsel %vm819, %v788, 2
        %vm821 = vcmp.lt.s32.totalorder %v790, 2
        %v822 = vsel %vm821, %v790, 2
        %vm823 = vcmp.lt.s32.totalorder %v792, 2
        %v824 = vsel %vm823, %v792, 2
        %vm825 = vcmp.lt.s32.totalorder %v794, 2
        %v826 = vsel %vm825, %v794, 2
        %vm827 = vcmp.lt.s32.totalorder %v796, 2
        %v828 = vsel %vm827, %v796, 2
        %vm829 = vcmp.lt.s32.totalorder %v798, 2
        %v830 = vsel %vm829, %v798, 2
        %vm831 = vcmp.lt.s32.totalorder %v800, 2
        %v832 = vsel %vm831, %v800, 2
        %vm833 = vcmp.lt.s32.totalorder %v802, 2
        %v834 = vsel %vm833, %v802, 2
        %vm835 = vcmp.lt.s32.totalorder %v804, 2
        %v836 = vsel %vm835, %v804, 2
        %vm837 = vcmp.lt.s32.totalorder %v806, 2
        %v838 = vsel %vm837, %v806, 2
        %vm839 = vcmp.lt.s32.totalorder %v808, 2
        %v840 = vsel %vm839, %v808, 2
        %vm841 = vcmp.lt.s32.totalorder %v810, 2
        %v842 = vsel %vm841, %v810, 2
        %vm843 = vcmp.lt.s32.totalorder %v812, 2
        %v844 = vsel %vm843, %v812, 2
        %vm845 = vcmp.lt.s32.totalorder %v814, 2
        %v846 = vsel %vm845, %v814, 2
        %vm847 = vcmp.eq.s32.totalorder %v816, 0
        %vm848 = vcmp.eq.s32.totalorder %v818, 0
        %vm849 = vcmp.eq.s32.totalorder %v820, 0
        %vm850 = vcmp.eq.s32.totalorder %v822, 0
        %vm851 = vcmp.eq.s32.totalorder %v824, 0
        %vm852 = vcmp.eq.s32.totalorder %v826, 0
        %vm853 = vcmp.eq.s32.totalorder %v828, 0
        %vm854 = vcmp.eq.s32.totalorder %v830, 0
        %vm855 = vcmp.eq.s32.totalorder %v832, 0
        %vm856 = vcmp.eq.s32.totalorder %v834, 0
        %vm857 = vcmp.eq.s32.totalorder %v836, 0
        %vm858 = vcmp.eq.s32.totalorder %v838, 0
        %vm859 = vcmp.eq.s32.totalorder %v840, 0
        %vm860 = vcmp.eq.s32.totalorder %v842, 0
        %vm861 = vcmp.eq.s32.totalorder %v844, 0
        %vm862 = vcmp.eq.s32.totalorder %v846, 0
        %v863 = vld [vmem:[%s289] sm:$0xff]
        %v864 = vld [vmem:[%s289 + $0x8] sm:$0xff]
        %v865 = vld [vmem:[%s289 + $0x10] sm:$0xff]
        %v866 = vld [vmem:[%s289 + $0x18] sm:$0xff]
        %v867 = vld [vmem:[%s289 + $0x20] sm:$0xff]
        %v868 = vld [vmem:[%s289 + $0x28] sm:$0xff]
        %v869 = vld [vmem:[%s289 + $0x30] sm:$0xff]
        %v870 = vld [vmem:[%s289 + $0x38] sm:$0xff]
        %v871 = vld [vmem:[%s289 + $0x40] sm:$0xff]
        %v872 = vld [vmem:[%s289 + $0x48] sm:$0xff]
        %v873 = vld [vmem:[%s289 + $0x50] sm:$0xff]
        %v874 = vld [vmem:[%s289 + $0x58] sm:$0xff]
        %v875 = vld [vmem:[%s289 + $0x60] sm:$0xff]
        %v876 = vld [vmem:[%s289 + $0x68] sm:$0xff]
        %v877 = vld [vmem:[%s289 + $0x70] sm:$0xff]
        %v878 = vld [vmem:[%s289 + $0x78] sm:$0xff]
        %v879 = vsub.f32 0.0, %v863
        %v880 = vsub.f32 0.0, %v864
        %v881 = vsub.f32 0.0, %v865
        %v882 = vsub.f32 0.0, %v866
        %v883 = vsub.f32 0.0, %v867
        %v884 = vsub.f32 0.0, %v868
        %v885 = vsub.f32 0.0, %v869
        %v886 = vsub.f32 0.0, %v870
        %v887 = vsub.f32 0.0, %v871
        %v888 = vsub.f32 0.0, %v872
        %v889 = vsub.f32 0.0, %v873
        %v890 = vsub.f32 0.0, %v874
        %v891 = vsub.f32 0.0, %v875
        %v892 = vsub.f32 0.0, %v876
        %v893 = vsub.f32 0.0, %v877
        %v894 = vsub.f32 0.0, %v878
        %v895 = vsel %vm847, %v879, 0.0
        %v896 = vsel %vm848, %v880, 0.0
        %v897 = vsel %vm849, %v881, 0.0
        %v898 = vsel %vm850, %v882, 0.0
        %v899 = vsel %vm851, %v883, 0.0
        %v900 = vsel %vm852, %v884, 0.0
        %v901 = vsel %vm853, %v885, 0.0
        %v902 = vsel %vm854, %v886, 0.0
        %v903 = vsel %vm855, %v887, 0.0
        %v904 = vsel %vm856, %v888, 0.0
        %v905 = vsel %vm857, %v889, 0.0
        %v906 = vsel %vm858, %v890, 0.0
        %v907 = vsel %vm859, %v891, 0.0
        %v908 = vsel %vm860, %v892, 0.0
        %v909 = vsel %vm861, %v893, 0.0
        %v910 = vsel %vm862, %v894, 0.0
        %v911 = vadd.f32 %v895, 0.0
        %v912 = vadd.f32 %v896, 0.0
        %v913 = vadd.f32 %v897, 0.0
        %v914 = vadd.f32 %v898, 0.0
        %v915 = vadd.f32 %v899, 0.0
        %v916 = vadd.f32 %v900, 0.0
        %v917 = vadd.f32 %v901, 0.0
        %v918 = vadd.f32 %v902, 0.0
        %v919 = vadd.f32 %v903, 0.0
        %v920 = vadd.f32 %v904, 0.0
        %v921 = vadd.f32 %v905, 0.0
        %v922 = vadd.f32 %v906, 0.0
        %v923 = vadd.f32 %v907, 0.0
        %v924 = vadd.f32 %v908, 0.0
        %v925 = vadd.f32 %v909, 0.0
        %v926 = vadd.f32 %v910, 0.0
        %vm927 = vcmp.eq.s32.totalorder %v816, 1
        %vm928 = vcmp.eq.s32.totalorder %v818, 1
        %vm929 = vcmp.eq.s32.totalorder %v820, 1
        %vm930 = vcmp.eq.s32.totalorder %v822, 1
        %vm931 = vcmp.eq.s32.totalorder %v824, 1
        %vm932 = vcmp.eq.s32.totalorder %v826, 1
        %vm933 = vcmp.eq.s32.totalorder %v828, 1
        %vm934 = vcmp.eq.s32.totalorder %v830, 1
        %vm935 = vcmp.eq.s32.totalorder %v832, 1
        %vm936 = vcmp.eq.s32.totalorder %v834, 1
        %vm937 = vcmp.eq.s32.totalorder %v836, 1
        %vm938 = vcmp.eq.s32.totalorder %v838, 1
        %vm939 = vcmp.eq.s32.totalorder %v840, 1
        %vm940 = vcmp.eq.s32.totalorder %v842, 1
        %vm941 = vcmp.eq.s32.totalorder %v844, 1
        %vm942 = vcmp.eq.s32.totalorder %v846, 1
        %s943 = scalar_lea.vmem %s289, 128 [#allocation9]
        %v944 = vld [vmem:[%s943] sm:$0xff]
        %v945 = vld [vmem:[%s943 + $0x8] sm:$0xff]
        %v946 = vld [vmem:[%s943 + $0x10] sm:$0xff]
        %v947 = vld [vmem:[%s943 + $0x18] sm:$0xff]
        %v948 = vld [vmem:[%s943 + $0x20] sm:$0xff]
        %v949 = vld [vmem:[%s943 + $0x28] sm:$0xff]
        %v950 = vld [vmem:[%s943 + $0x30] sm:$0xff]
        %v951 = vld [vmem:[%s943 + $0x38] sm:$0xff]
        %v952 = vld [vmem:[%s943 + $0x40] sm:$0xff]
        %v953 = vld [vmem:[%s943 + $0x48] sm:$0xff]
        %v954 = vld [vmem:[%s943 + $0x50] sm:$0xff]
        %v955 = vld [vmem:[%s943 + $0x58] sm:$0xff]
        %v956 = vld [vmem:[%s943 + $0x60] sm:$0xff]
        %v957 = vld [vmem:[%s943 + $0x68] sm:$0xff]
        %v958 = vld [vmem:[%s943 + $0x70] sm:$0xff]
        %v959 = vld [vmem:[%s943 + $0x78] sm:$0xff]
        %v960 = vsub.f32 0.0, %v944
        %v961 = vsub.f32 0.0, %v945
        %v962 = vsub.f32 0.0, %v946
        %v963 = vsub.f32 0.0, %v947
        %v964 = vsub.f32 0.0, %v948
        %v965 = vsub.f32 0.0, %v949
        %v966 = vsub.f32 0.0, %v950
        %v967 = vsub.f32 0.0, %v951
        %v968 = vsub.f32 0.0, %v952
        %v969 = vsub.f32 0.0, %v953
        %v970 = vsub.f32 0.0, %v954
        %v971 = vsub.f32 0.0, %v955
        %v972 = vsub.f32 0.0, %v956
        %v973 = vsub.f32 0.0, %v957
        %v974 = vsub.f32 0.0, %v958
        %v975 = vsub.f32 0.0, %v959
        %v976 = vsel %vm927, %v960, 0.0
        %v977 = vsel %vm928, %v961, 0.0
        %v978 = vsel %vm929, %v962, 0.0
        %v979 = vsel %vm930, %v963, 0.0
        %v980 = vsel %vm931, %v964, 0.0
        %v981 = vsel %vm932, %v965, 0.0
        %v982 = vsel %vm933, %v966, 0.0
        %v983 = vsel %vm934, %v967, 0.0
        %v984 = vsel %vm935, %v968, 0.0
        %v985 = vsel %vm936, %v969, 0.0
        %v986 = vsel %vm937, %v970, 0.0
        %v987 = vsel %vm938, %v971, 0.0
        %v988 = vsel %vm939, %v972, 0.0
        %v989 = vsel %vm940, %v973, 0.0
        %v990 = vsel %vm941, %v974, 0.0
        %v991 = vsel %vm942, %v975, 0.0
        %v992 = vadd.f32 %v911, %v976
        %v993 = vadd.f32 %v912, %v977
        %v994 = vadd.f32 %v913, %v978
        %v995 = vadd.f32 %v914, %v979
        %v996 = vadd.f32 %v915, %v980
        %v997 = vadd.f32 %v916, %v981
        %v998 = vadd.f32 %v917, %v982
        %v999 = vadd.f32 %v918, %v983
        %v1000 = vadd.f32 %v919, %v984
        %v1001 = vadd.f32 %v920, %v985
        %v1002 = vadd.f32 %v921, %v986
        %v1003 = vadd.f32 %v922, %v987
        %v1004 = vadd.f32 %v923, %v988
        %v1005 = vadd.f32 %v924, %v989
        %v1006 = vadd.f32 %v925, %v990
        %v1007 = vadd.f32 %v926, %v991
        %vm1008 = vcmp.eq.s32.totalorder %v816, 2
        %vm1009 = vcmp.eq.s32.totalorder %v818, 2
        %vm1010 = vcmp.eq.s32.totalorder %v820, 2
        %vm1011 = vcmp.eq.s32.totalorder %v822, 2
        %vm1012 = vcmp.eq.s32.totalorder %v824, 2
        %vm1013 = vcmp.eq.s32.totalorder %v826, 2
        %vm1014 = vcmp.eq.s32.totalorder %v828, 2
        %vm1015 = vcmp.eq.s32.totalorder %v830, 2
        %vm1016 = vcmp.eq.s32.totalorder %v832, 2
        %vm1017 = vcmp.eq.s32.totalorder %v834, 2
        %vm1018 = vcmp.eq.s32.totalorder %v836, 2
        %vm1019 = vcmp.eq.s32.totalorder %v838, 2
        %vm1020 = vcmp.eq.s32.totalorder %v840, 2
        %vm1021 = vcmp.eq.s32.totalorder %v842, 2
        %vm1022 = vcmp.eq.s32.totalorder %v844, 2
        %vm1023 = vcmp.eq.s32.totalorder %v846, 2
        %s1024 = scalar_lea.vmem %s289, 256 [#allocation9]
        %v1025 = vld [vmem:[%s1024] sm:$0xff]
        %v1026 = vld [vmem:[%s1024 + $0x8] sm:$0xff]
        %v1027 = vld [vmem:[%s1024 + $0x10] sm:$0xff]
        %v1028 = vld [vmem:[%s1024 + $0x18] sm:$0xff]
        %v1029 = vld [vmem:[%s1024 + $0x20] sm:$0xff]
        %v1030 = vld [vmem:[%s1024 + $0x28] sm:$0xff]
        %v1031 = vld [vmem:[%s1024 + $0x30] sm:$0xff]
        %v1032 = vld [vmem:[%s1024 + $0x38] sm:$0xff]
        %v1033 = vld [vmem:[%s1024 + $0x40] sm:$0xff]
        %v1034 = vld [vmem:[%s1024 + $0x48] sm:$0xff]
        %v1035 = vld [vmem:[%s1024 + $0x50] sm:$0xff]
        %v1036 = vld [vmem:[%s1024 + $0x58] sm:$0xff]
        %v1037 = vld [vmem:[%s1024 + $0x60] sm:$0xff]
        %v1038 = vld [vmem:[%s1024 + $0x68] sm:$0xff]
        %v1039 = vld [vmem:[%s1024 + $0x70] sm:$0xff]
        %v1040 = vld [vmem:[%s1024 + $0x78] sm:$0xff]
        %v1041 = vsub.f32 0.0, %v1025
        %v1042 = vsub.f32 0.0, %v1026
        %v1043 = vsub.f32 0.0, %v1027
        %v1044 = vsub.f32 0.0, %v1028
        %v1045 = vsub.f32 0.0, %v1029
        %v1046 = vsub.f32 0.0, %v1030
        %v1047 = vsub.f32 0.0, %v1031
        %v1048 = vsub.f32 0.0, %v1032
        %v1049 = vsub.f32 0.0, %v1033
        %v1050 = vsub.f32 0.0, %v1034
        %v1051 = vsub.f32 0.0, %v1035
        %v1052 = vsub.f32 0.0, %v1036
        %v1053 = vsub.f32 0.0, %v1037
        %v1054 = vsub.f32 0.0, %v1038
        %v1055 = vsub.f32 0.0, %v1039
        %v1056 = vsub.f32 0.0, %v1040
        %v1057 = vsel %vm1008, %v1041, 0.0
        %v1058 = vsel %vm1009, %v1042, 0.0
        %v1059 = vsel %vm1010, %v1043, 0.0
        %v1060 = vsel %vm1011, %v1044, 0.0
        %v1061 = vsel %vm1012, %v1045, 0.0
        %v1062 = vsel %vm1013, %v1046, 0.0
        %v1063 = vsel %vm1014, %v1047, 0.0
        %v1064 = vsel %vm1015, %v1048, 0.0
        %v1065 = vsel %vm1016, %v1049, 0.0
        %v1066 = vsel %vm1017, %v1050, 0.0
        %v1067 = vsel %vm1018, %v1051, 0.0
        %v1068 = vsel %vm1019, %v1052, 0.0
        %v1069 = vsel %vm1020, %v1053, 0.0
        %v1070 = vsel %vm1021, %v1054, 0.0
        %v1071 = vsel %vm1022, %v1055, 0.0
        %v1072 = vsel %vm1023, %v1056, 0.0
        %v1073 = vadd.f32 %v992, %v1057
        %v1074 = vadd.f32 %v993, %v1058
        %v1075 = vadd.f32 %v994, %v1059
        %v1076 = vadd.f32 %v995, %v1060
        %v1077 = vadd.f32 %v996, %v1061
        %v1078 = vadd.f32 %v997, %v1062
        %v1079 = vadd.f32 %v998, %v1063
        %v1080 = vadd.f32 %v999, %v1064
        %v1081 = vadd.f32 %v1000, %v1065
        %v1082 = vadd.f32 %v1001, %v1066
        %v1083 = vadd.f32 %v1002, %v1067
        %v1084 = vadd.f32 %v1003, %v1068
        %v1085 = vadd.f32 %v1004, %v1069
        %v1086 = vadd.f32 %v1005, %v1070
        %v1087 = vadd.f32 %v1006, %v1071
        %v1088 = vadd.f32 %v1007, %v1072
        %v1089 = vmul.f32 %v1025, 1.442695
        %v1090 = vpow.pop %v1089
        %v1091 = vmul.f32 %v1026, 1.442695
        %v1092 = vpow.pop %v1091
        %v1093 = vmul.f32 %v1027, 1.442695
        %v1094 = vpow.pop %v1093
        %v1095 = vmul.f32 %v1028, 1.442695
        %v1096 = vpow.pop %v1095
        %v1097 = vmul.f32 %v1029, 1.442695
        %v1098 = vpow.pop %v1097
        %v1099 = vmul.f32 %v1030, 1.442695
        %v1100 = vpow.pop %v1099
        %v1101 = vmul.f32 %v1031, 1.442695
        %v1102 = vpow.pop %v1101
        %v1103 = vmul.f32 %v1032, 1.442695
        %v1104 = vpow.pop %v1103
        %v1105 = vmul.f32 %v1033, 1.442695
        %v1106 = vpow.pop %v1105
        %v1107 = vmul.f32 %v1034, 1.442695
        %v1108 = vpow.pop %v1107
        %v1109 = vmul.f32 %v1035, 1.442695
        %v1110 = vpow.pop %v1109
        %v1111 = vmul.f32 %v1036, 1.442695
        %v1112 = vpow.pop %v1111
        %v1113 = vmul.f32 %v1037, 1.442695
        %v1114 = vpow.pop %v1113
        %v1115 = vmul.f32 %v1038, 1.442695
        %v1116 = vpow.pop %v1115
        %v1117 = vmul.f32 %v1039, 1.442695
        %v1118 = vpow.pop %v1117
        %v1119 = vmul.f32 %v1040, 1.442695
        %v1120 = vpow.pop %v1119
        %s1121 = smul.u32 %s25, 8
        %s1122 = smul.u32 %s1121, 16
        %s1123 = scalar_lea.vmem [#allocation2], %s1122
        %vm1124 = vcmask 130048
        %1125 = vst.msk [vmem:[%s1123] sm:$0xff] %vm1124, %v1090
        %1126 = vst.msk [vmem:[%s1123 + $0x8] sm:$0xff] %vm1124, %v1092
        %1127 = vst.msk [vmem:[%s1123 + $0x10] sm:$0xff] %vm1124, %v1094
        %1128 = vst.msk [vmem:[%s1123 + $0x18] sm:$0xff] %vm1124, %v1096
        %1129 = vst.msk [vmem:[%s1123 + $0x20] sm:$0xff] %vm1124, %v1098
        %1130 = vst.msk [vmem:[%s1123 + $0x28] sm:$0xff] %vm1124, %v1100
        %1131 = vst.msk [vmem:[%s1123 + $0x30] sm:$0xff] %vm1124, %v1102
        %1132 = vst.msk [vmem:[%s1123 + $0x38] sm:$0xff] %vm1124, %v1104
        %1133 = vst.msk [vmem:[%s1123 + $0x40] sm:$0xff] %vm1124, %v1106
        %1134 = vst.msk [vmem:[%s1123 + $0x48] sm:$0xff] %vm1124, %v1108
        %1135 = vst.msk [vmem:[%s1123 + $0x50] sm:$0xff] %vm1124, %v1110
        %1136 = vst.msk [vmem:[%s1123 + $0x58] sm:$0xff] %vm1124, %v1112
        %1137 = vst.msk [vmem:[%s1123 + $0x60] sm:$0xff] %vm1124, %v1114
        %1138 = vst.msk [vmem:[%s1123 + $0x68] sm:$0xff] %vm1124, %v1116
        %1139 = vst.msk [vmem:[%s1123 + $0x70] sm:$0xff] %vm1124, %v1118
        %1140 = vst.msk [vmem:[%s1123 + $0x78] sm:$0xff] %vm1124, %v1120
        %vm1141 = vcmp.eq.s32.totalorder %v367, 2
        %vm1142 = vcmp.eq.s32.totalorder %v368, 2
        %vm1143 = vcmp.eq.s32.totalorder %v369, 2
        %vm1144 = vcmp.eq.s32.totalorder %v370, 2
        %vm1145 = vcmp.eq.s32.totalorder %v371, 2
        %vm1146 = vcmp.eq.s32.totalorder %v372, 2
        %vm1147 = vcmp.eq.s32.totalorder %v373, 2
        %vm1148 = vcmp.eq.s32.totalorder %v374, 2
        %vm1149 = vcmp.eq.s32.totalorder %v375, 2
        %vm1150 = vcmp.eq.s32.totalorder %v376, 2
        %vm1151 = vcmp.eq.s32.totalorder %v377, 2
        %vm1152 = vcmp.eq.s32.totalorder %v378, 2
        %vm1153 = vcmp.eq.s32.totalorder %v379, 2
        %vm1154 = vcmp.eq.s32.totalorder %v380, 2
        %vm1155 = vcmp.eq.s32.totalorder %v381, 2
        %vm1156 = vcmp.eq.s32.totalorder %v382, 2
        %vm1157 = vmand %vm415, %vm1141
        %vm1158 = vmand %vm416, %vm1142
        %vm1159 = vmand %vm417, %vm1143
        %vm1160 = vmand %vm418, %vm1144
        %vm1161 = vmand %vm419, %vm1145
        %vm1162 = vmand %vm420, %vm1146
        %vm1163 = vmand %vm421, %vm1147
        %vm1164 = vmand %vm422, %vm1148
        %vm1165 = vmand %vm423, %vm1149
        %vm1166 = vmand %vm424, %vm1150
        %vm1167 = vmand %vm425, %vm1151
        %vm1168 = vmand %vm426, %vm1152
        %vm1169 = vmand %vm427, %vm1153
        %vm1170 = vmand %vm428, %vm1154
        %vm1171 = vmand %vm429, %vm1155
        %vm1172 = vmand %vm430, %vm1156
        %v1173 = vsel %vm1157, 1.0, 0.0
        %v1174 = vsel %vm1158, 1.0, 0.0
        %v1175 = vsel %vm1159, 1.0, 0.0
        %v1176 = vsel %vm1160, 1.0, 0.0
        %v1177 = vsel %vm1161, 1.0, 0.0
        %v1178 = vsel %vm1162, 1.0, 0.0
        %v1179 = vsel %vm1163, 1.0, 0.0
        %v1180 = vsel %vm1164, 1.0, 0.0
        %v1181 = vsel %vm1165, 1.0, 0.0
        %v1182 = vsel %vm1166, 1.0, 0.0
        %v1183 = vsel %vm1167, 1.0, 0.0
        %v1184 = vsel %vm1168, 1.0, 0.0
        %v1185 = vsel %vm1169, 1.0, 0.0
        %v1186 = vsel %vm1170, 1.0, 0.0
        %v1187 = vsel %vm1171, 1.0, 0.0
        %v1188 = vsel %vm1172, 1.0, 0.0
        %vm1189 = vcmp.eq.s32.totalorder %v751, 2
        %vm1190 = vcmp.eq.s32.totalorder %v752, 2
        %vm1191 = vcmp.eq.s32.totalorder %v753, 2
        %vm1192 = vcmp.eq.s32.totalorder %v754, 2
        %vm1193 = vcmp.eq.s32.totalorder %v755, 2
        %vm1194 = vcmp.eq.s32.totalorder %v756, 2
        %vm1195 = vcmp.eq.s32.totalorder %v757, 2
        %vm1196 = vcmp.eq.s32.totalorder %v758, 2
        %vm1197 = vcmp.eq.s32.totalorder %v759, 2
        %vm1198 = vcmp.eq.s32.totalorder %v760, 2
        %vm1199 = vcmp.eq.s32.totalorder %v761, 2
        %vm1200 = vcmp.eq.s32.totalorder %v762, 2
        %vm1201 = vcmp.eq.s32.totalorder %v763, 2
        %vm1202 = vcmp.eq.s32.totalorder %v764, 2
        %vm1203 = vcmp.eq.s32.totalorder %v765, 2
        %vm1204 = vcmp.eq.s32.totalorder %v766, 2
        %vm1205 = vmand %vm431, %vm1189
        %vm1206 = vmand %vm432, %vm1190
        %vm1207 = vmand %vm433, %vm1191
        %vm1208 = vmand %vm434, %vm1192
        %vm1209 = vmand %vm435, %vm1193
        %vm1210 = vmand %vm436, %vm1194
        %vm1211 = vmand %vm437, %vm1195
        %vm1212 = vmand %vm438, %vm1196
        %vm1213 = vmand %vm439, %vm1197
        %vm1214 = vmand %vm440, %vm1198
        %vm1215 = vmand %vm441, %vm1199
        %vm1216 = vmand %vm442, %vm1200
        %vm1217 = vmand %vm443, %vm1201
        %vm1218 = vmand %vm444, %vm1202
        %vm1219 = vmand %vm445, %vm1203
        %vm1220 = vmand %vm446, %vm1204
        %v1221 = vsel %vm1205, 1.0, 0.0
        %v1222 = vsel %vm1206, 1.0, 0.0
        %v1223 = vsel %vm1207, 1.0, 0.0
        %v1224 = vsel %vm1208, 1.0, 0.0
        %v1225 = vsel %vm1209, 1.0, 0.0
        %v1226 = vsel %vm1210, 1.0, 0.0
        %v1227 = vsel %vm1211, 1.0, 0.0
        %v1228 = vsel %vm1212, 1.0, 0.0
        %v1229 = vsel %vm1213, 1.0, 0.0
        %v1230 = vsel %vm1214, 1.0, 0.0
        %v1231 = vsel %vm1215, 1.0, 0.0
        %v1232 = vsel %vm1216, 1.0, 0.0
        %v1233 = vsel %vm1217, 1.0, 0.0
        %v1234 = vsel %vm1218, 1.0, 0.0
        %v1235 = vsel %vm1219, 1.0, 0.0
        %v1236 = vsel %vm1220, 1.0, 0.0
        %s1237 = sld [smem:[#allocation3]]
        %v1238 = vmul.f32 %v463, %v1073
        %v1239 = vmul.f32 %v464, %v1074
        %v1240 = vmul.f32 %v465, %v1075
        %v1241 = vmul.f32 %v466, %v1076
        %v1242 = vmul.f32 %v467, %v1077
        %v1243 = vmul.f32 %v468, %v1078
        %v1244 = vmul.f32 %v469, %v1079
        %v1245 = vmul.f32 %v470, %v1080
        %v1246 = vmul.f32 %v471, %v1081
        %v1247 = vmul.f32 %v472, %v1082
        %v1248 = vmul.f32 %v473, %v1083
        %v1249 = vmul.f32 %v474, %v1084
        %v1250 = vmul.f32 %v475, %v1085
        %v1251 = vmul.f32 %v476, %v1086
        %v1252 = vmul.f32 %v477, %v1087
        %v1253 = vmul.f32 %v478, %v1088
        %v1254 = vsel %vm1124, %v1238, 0.0
        %v1255 = vsel %vm1124, %v1239, 0.0
        %v1256 = vadd.f32 %v1254, %v1255
        %v1257 = vsel %vm1124, %v1240, 0.0
        %v1258 = vadd.f32 %v1256, %v1257
        %v1259 = vsel %vm1124, %v1241, 0.0
        %v1260 = vadd.f32 %v1258, %v1259
        %v1261 = vsel %vm1124, %v1242, 0.0
        %v1262 = vadd.f32 %v1260, %v1261
        %v1263 = vsel %vm1124, %v1243, 0.0
        %v1264 = vadd.f32 %v1262, %v1263
        %v1265 = vsel %vm1124, %v1244, 0.0
        %v1266 = vadd.f32 %v1264, %v1265
        %v1267 = vsel %vm1124, %v1245, 0.0
        %v1268 = vadd.f32 %v1266, %v1267
        %v1269 = vsel %vm1124, %v1246, 0.0
        %v1270 = vadd.f32 %v1268, %v1269
        %v1271 = vsel %vm1124, %v1247, 0.0
        %v1272 = vadd.f32 %v1270, %v1271
        %v1273 = vsel %vm1124, %v1248, 0.0
        %v1274 = vadd.f32 %v1272, %v1273
        %v1275 = vsel %vm1124, %v1249, 0.0
        %v1276 = vadd.f32 %v1274, %v1275
        %v1277 = vsel %vm1124, %v1250, 0.0
        %v1278 = vadd.f32 %v1276, %v1277
        %v1279 = vsel %vm1124, %v1251, 0.0
        %v1280 = vadd.f32 %v1278, %v1279
        %v1281 = vsel %vm1124, %v1252, 0.0
        %v1282 = vadd.f32 %v1280, %v1281
        %v1283 = vsel %vm1124, %v1253, 0.0
        %v1284 = vadd.f32 %v1282, %v1283
        %1285 = vadd.xlane.f32.xlu0 %v1284
        %v1286 = vpop.xlane.xlu0 %1285
        %v1287 = vrot.slane %v1286, 4
        %v1288 = vadd.f32 %v1286, %v1287
        %v1289 = vrot.slane %v1288, 2
        %v1290 = vadd.f32 %v1288, %v1289
        %v1291 = vrot.slane %v1290, 1
        %v1292 = vadd.f32 %v1290, %v1291
        %s1293 = vtos %v1292
        %s1294 = sadd.f32 %s1237, %s1293
        %v1295 = vmul.f32 %v495, %v1073
        %v1296 = vmul.f32 %v496, %v1074
        %v1297 = vmul.f32 %v497, %v1075
        %v1298 = vmul.f32 %v498, %v1076
        %v1299 = vmul.f32 %v499, %v1077
        %v1300 = vmul.f32 %v500, %v1078
        %v1301 = vmul.f32 %v501, %v1079
        %v1302 = vmul.f32 %v502, %v1080
        %v1303 = vmul.f32 %v503, %v1081
        %v1304 = vmul.f32 %v504, %v1082
        %v1305 = vmul.f32 %v505, %v1083
        %v1306 = vmul.f32 %v506, %v1084
        %v1307 = vmul.f32 %v507, %v1085
        %v1308 = vmul.f32 %v508, %v1086
        %v1309 = vmul.f32 %v509, %v1087
        %v1310 = vmul.f32 %v510, %v1088
        %v1311 = vsel %vm1124, %v1295, 0.0
        %v1312 = vsel %vm1124, %v1296, 0.0
        %v1313 = vadd.f32 %v1311, %v1312
        %v1314 = vsel %vm1124, %v1297, 0.0
        %v1315 = vadd.f32 %v1313, %v1314
        %v1316 = vsel %vm1124, %v1298, 0.0
        %v1317 = vadd.f32 %v1315, %v1316
        %v1318 = vsel %vm1124, %v1299, 0.0
        %v1319 = vadd.f32 %v1317, %v1318
        %v1320 = vsel %vm1124, %v1300, 0.0
        %v1321 = vadd.f32 %v1319, %v1320
        %v1322 = vsel %vm1124, %v1301, 0.0
        %v1323 = vadd.f32 %v1321, %v1322
        %v1324 = vsel %vm1124, %v1302, 0.0
        %v1325 = vadd.f32 %v1323, %v1324
        %v1326 = vsel %vm1124, %v1303, 0.0
        %v1327 = vadd.f32 %v1325, %v1326
        %v1328 = vsel %vm1124, %v1304, 0.0
        %v1329 = vadd.f32 %v1327, %v1328
        %v1330 = vsel %vm1124, %v1305, 0.0
        %v1331 = vadd.f32 %v1329, %v1330
        %v1332 = vsel %vm1124, %v1306, 0.0
        %v1333 = vadd.f32 %v1331, %v1332
        %v1334 = vsel %vm1124, %v1307, 0.0
        %v1335 = vadd.f32 %v1333, %v1334
        %v1336 = vsel %vm1124, %v1308, 0.0
        %v1337 = vadd.f32 %v1335, %v1336
        %v1338 = vsel %vm1124, %v1309, 0.0
        %v1339 = vadd.f32 %v1337, %v1338
        %v1340 = vsel %vm1124, %v1310, 0.0
        %v1341 = vadd.f32 %v1339, %v1340
        %1342 = vadd.xlane.f32.xlu0 %v1341
        %v1343 = vpop.xlane.xlu0 %1342
        %v1344 = vrot.slane %v1343, 4
        %v1345 = vadd.f32 %v1343, %v1344
        %v1346 = vrot.slane %v1345, 2
        %v1347 = vadd.f32 %v1345, %v1346
        %v1348 = vrot.slane %v1347, 1
        %v1349 = vadd.f32 %v1347, %v1348
        %s1350 = vtos %v1349
        %s1351 = smul.f32 %s1350, 10.0
        %s1352 = sadd.f32 %s1294, %s1351
        %s1353 = scalar_lea.smem [#allocation3], 0
        %1354 = sst [smem:[%s1353]] %s1352
        %s1355 = sld [smem:[#allocation3 + $0x1]]
        %v1356 = vsel %vm1124, %v463, 0.0
        %v1357 = vsel %vm1124, %v464, 0.0
        %v1358 = vadd.f32 %v1356, %v1357
        %v1359 = vsel %vm1124, %v465, 0.0
        %v1360 = vadd.f32 %v1358, %v1359
        %v1361 = vsel %vm1124, %v466, 0.0
        %v1362 = vadd.f32 %v1360, %v1361
        %v1363 = vsel %vm1124, %v467, 0.0
        %v1364 = vadd.f32 %v1362, %v1363
        %v1365 = vsel %vm1124, %v468, 0.0
        %v1366 = vadd.f32 %v1364, %v1365
        %v1367 = vsel %vm1124, %v469, 0.0
        %v1368 = vadd.f32 %v1366, %v1367
        %v1369 = vsel %vm1124, %v470, 0.0
        %v1370 = vadd.f32 %v1368, %v1369
        %v1371 = vsel %vm1124, %v471, 0.0
        %v1372 = vadd.f32 %v1370, %v1371
        %v1373 = vsel %vm1124, %v472, 0.0
        %v1374 = vadd.f32 %v1372, %v1373
        %v1375 = vsel %vm1124, %v473, 0.0
        %v1376 = vadd.f32 %v1374, %v1375
        %v1377 = vsel %vm1124, %v474, 0.0
        %v1378 = vadd.f32 %v1376, %v1377
        %v1379 = vsel %vm1124, %v475, 0.0
        %v1380 = vadd.f32 %v1378, %v1379
        %v1381 = vsel %vm1124, %v476, 0.0
        %v1382 = vadd.f32 %v1380, %v1381
        %v1383 = vsel %vm1124, %v477, 0.0
        %v1384 = vadd.f32 %v1382, %v1383
        %v1385 = vsel %vm1124, %v478, 0.0
        %v1386 = vadd.f32 %v1384, %v1385
        %1387 = vadd.xlane.f32.xlu0 %v1386
        %v1388 = vpop.xlane.xlu0 %1387
        %v1389 = vrot.slane %v1388, 4
        %v1390 = vadd.f32 %v1388, %v1389
        %v1391 = vrot.slane %v1390, 2
        %v1392 = vadd.f32 %v1390, %v1391
        %v1393 = vrot.slane %v1392, 1
        %v1394 = vadd.f32 %v1392, %v1393
        %s1395 = vtos %v1394
        %s1396 = sadd.f32 %s1355, %s1395
        %s1397 = scalar_lea.smem [#allocation3], 1
        %1398 = sst [smem:[%s1397]] %s1396
        %s1399 = sld [smem:[#allocation3 + $0x2]]
        %v1400 = vsel %vm1124, %v495, 0.0
        %v1401 = vsel %vm1124, %v496, 0.0
        %v1402 = vadd.f32 %v1400, %v1401
        %v1403 = vsel %vm1124, %v497, 0.0
        %v1404 = vadd.f32 %v1402, %v1403
        %v1405 = vsel %vm1124, %v498, 0.0
        %v1406 = vadd.f32 %v1404, %v1405
        %v1407 = vsel %vm1124, %v499, 0.0
        %v1408 = vadd.f32 %v1406, %v1407
        %v1409 = vsel %vm1124, %v500, 0.0
        %v1410 = vadd.f32 %v1408, %v1409
        %v1411 = vsel %vm1124, %v501, 0.0
        %v1412 = vadd.f32 %v1410, %v1411
        %v1413 = vsel %vm1124, %v502, 0.0
        %v1414 = vadd.f32 %v1412, %v1413
        %v1415 = vsel %vm1124, %v503, 0.0
        %v1416 = vadd.f32 %v1414, %v1415
        %v1417 = vsel %vm1124, %v504, 0.0
        %v1418 = vadd.f32 %v1416, %v1417
        %v1419 = vsel %vm1124, %v505, 0.0
        %v1420 = vadd.f32 %v1418, %v1419
        %v1421 = vsel %vm1124, %v506, 0.0
        %v1422 = vadd.f32 %v1420, %v1421
        %v1423 = vsel %vm1124, %v507, 0.0
        %v1424 = vadd.f32 %v1422, %v1423
        %v1425 = vsel %vm1124, %v508, 0.0
        %v1426 = vadd.f32 %v1424, %v1425
        %v1427 = vsel %vm1124, %v509, 0.0
        %v1428 = vadd.f32 %v1426, %v1427
        %v1429 = vsel %vm1124, %v510, 0.0
        %v1430 = vadd.f32 %v1428, %v1429
        %1431 = vadd.xlane.f32.xlu0 %v1430
        %v1432 = vpop.xlane.xlu0 %1431
        %v1433 = vrot.slane %v1432, 4
        %v1434 = vadd.f32 %v1432, %v1433
        %v1435 = vrot.slane %v1434, 2
        %v1436 = vadd.f32 %v1434, %v1435
        %v1437 = vrot.slane %v1436, 1
        %v1438 = vadd.f32 %v1436, %v1437
        %s1439 = vtos %v1438
        %s1440 = sadd.f32 %s1399, %s1439
        %s1441 = scalar_lea.smem [#allocation3], 2
        %1442 = sst [smem:[%s1441]] %s1440
        %s1443 = sld [smem:[#allocation3 + $0x3]]
        %v1444 = vmul.f32 %v1090, %v1173
        %v1445 = vmul.f32 %v1092, %v1174
        %v1446 = vmul.f32 %v1094, %v1175
        %v1447 = vmul.f32 %v1096, %v1176
        %v1448 = vmul.f32 %v1098, %v1177
        %v1449 = vmul.f32 %v1100, %v1178
        %v1450 = vmul.f32 %v1102, %v1179
        %v1451 = vmul.f32 %v1104, %v1180
        %v1452 = vmul.f32 %v1106, %v1181
        %v1453 = vmul.f32 %v1108, %v1182
        %v1454 = vmul.f32 %v1110, %v1183
        %v1455 = vmul.f32 %v1112, %v1184
        %v1456 = vmul.f32 %v1114, %v1185
        %v1457 = vmul.f32 %v1116, %v1186
        %v1458 = vmul.f32 %v1118, %v1187
        %v1459 = vmul.f32 %v1120, %v1188
        %v1460 = vsel %vm1124, %v1444, 0.0
        %v1461 = vsel %vm1124, %v1445, 0.0
        %v1462 = vadd.f32 %v1460, %v1461
        %v1463 = vsel %vm1124, %v1446, 0.0
        %v1464 = vadd.f32 %v1462, %v1463
        %v1465 = vsel %vm1124, %v1447, 0.0
        %v1466 = vadd.f32 %v1464, %v1465
        %v1467 = vsel %vm1124, %v1448, 0.0
        %v1468 = vadd.f32 %v1466, %v1467
        %v1469 = vsel %vm1124, %v1449, 0.0
        %v1470 = vadd.f32 %v1468, %v1469
        %v1471 = vsel %vm1124, %v1450, 0.0
        %v1472 = vadd.f32 %v1470, %v1471
        %v1473 = vsel %vm1124, %v1451, 0.0
        %v1474 = vadd.f32 %v1472, %v1473
        %v1475 = vsel %vm1124, %v1452, 0.0
        %v1476 = vadd.f32 %v1474, %v1475
        %v1477 = vsel %vm1124, %v1453, 0.0
        %v1478 = vadd.f32 %v1476, %v1477
        %v1479 = vsel %vm1124, %v1454, 0.0
        %v1480 = vadd.f32 %v1478, %v1479
        %v1481 = vsel %vm1124, %v1455, 0.0
        %v1482 = vadd.f32 %v1480, %v1481
        %v1483 = vsel %vm1124, %v1456, 0.0
        %v1484 = vadd.f32 %v1482, %v1483
        %v1485 = vsel %vm1124, %v1457, 0.0
        %v1486 = vadd.f32 %v1484, %v1485
        %v1487 = vsel %vm1124, %v1458, 0.0
        %v1488 = vadd.f32 %v1486, %v1487
        %v1489 = vsel %vm1124, %v1459, 0.0
        %v1490 = vadd.f32 %v1488, %v1489
        %1491 = vadd.xlane.f32.xlu0 %v1490
        %v1492 = vpop.xlane.xlu0 %1491
        %v1493 = vrot.slane %v1492, 4
        %v1494 = vadd.f32 %v1492, %v1493
        %v1495 = vrot.slane %v1494, 2
        %v1496 = vadd.f32 %v1494, %v1495
        %v1497 = vrot.slane %v1496, 1
        %v1498 = vadd.f32 %v1496, %v1497
        %s1499 = vtos %v1498
        %s1500 = sadd.f32 %s1443, %s1499
        %s1501 = scalar_lea.smem [#allocation3], 3
        %1502 = sst [smem:[%s1501]] %s1500
        %s1503 = sld [smem:[#allocation3 + $0x4]]
        %v1504 = vmul.f32 %v463, %v1090
        %v1505 = vmul.f32 %v464, %v1092
        %v1506 = vmul.f32 %v465, %v1094
        %v1507 = vmul.f32 %v466, %v1096
        %v1508 = vmul.f32 %v467, %v1098
        %v1509 = vmul.f32 %v468, %v1100
        %v1510 = vmul.f32 %v469, %v1102
        %v1511 = vmul.f32 %v470, %v1104
        %v1512 = vmul.f32 %v471, %v1106
        %v1513 = vmul.f32 %v472, %v1108
        %v1514 = vmul.f32 %v473, %v1110
        %v1515 = vmul.f32 %v474, %v1112
        %v1516 = vmul.f32 %v475, %v1114
        %v1517 = vmul.f32 %v476, %v1116
        %v1518 = vmul.f32 %v477, %v1118
        %v1519 = vmul.f32 %v478, %v1120
        %v1520 = vmul.f32 %v1504, %v1090
        %v1521 = vmul.f32 %v1505, %v1092
        %v1522 = vmul.f32 %v1506, %v1094
        %v1523 = vmul.f32 %v1507, %v1096
        %v1524 = vmul.f32 %v1508, %v1098
        %v1525 = vmul.f32 %v1509, %v1100
        %v1526 = vmul.f32 %v1510, %v1102
        %v1527 = vmul.f32 %v1511, %v1104
        %v1528 = vmul.f32 %v1512, %v1106
        %v1529 = vmul.f32 %v1513, %v1108
        %v1530 = vmul.f32 %v1514, %v1110
        %v1531 = vmul.f32 %v1515, %v1112
        %v1532 = vmul.f32 %v1516, %v1114
        %v1533 = vmul.f32 %v1517, %v1116
        %v1534 = vmul.f32 %v1518, %v1118
        %v1535 = vmul.f32 %v1519, %v1120
        %v1536 = vsel %vm1124, %v1520, 0.0
        %v1537 = vsel %vm1124, %v1521, 0.0
        %v1538 = vadd.f32 %v1536, %v1537
        %v1539 = vsel %vm1124, %v1522, 0.0
        %v1540 = vadd.f32 %v1538, %v1539
        %v1541 = vsel %vm1124, %v1523, 0.0
        %v1542 = vadd.f32 %v1540, %v1541
        %v1543 = vsel %vm1124, %v1524, 0.0
        %v1544 = vadd.f32 %v1542, %v1543
        %v1545 = vsel %vm1124, %v1525, 0.0
        %v1546 = vadd.f32 %v1544, %v1545
        %v1547 = vsel %vm1124, %v1526, 0.0
        %v1548 = vadd.f32 %v1546, %v1547
        %v1549 = vsel %vm1124, %v1527, 0.0
        %v1550 = vadd.f32 %v1548, %v1549
        %v1551 = vsel %vm1124, %v1528, 0.0
        %v1552 = vadd.f32 %v1550, %v1551
        %v1553 = vsel %vm1124, %v1529, 0.0
        %v1554 = vadd.f32 %v1552, %v1553
        %v1555 = vsel %vm1124, %v1530, 0.0
        %v1556 = vadd.f32 %v1554, %v1555
        %v1557 = vsel %vm1124, %v1531, 0.0
        %v1558 = vadd.f32 %v1556, %v1557
        %v1559 = vsel %vm1124, %v1532, 0.0
        %v1560 = vadd.f32 %v1558, %v1559
        %v1561 = vsel %vm1124, %v1533, 0.0
        %v1562 = vadd.f32 %v1560, %v1561
        %v1563 = vsel %vm1124, %v1534, 0.0
        %v1564 = vadd.f32 %v1562, %v1563
        %v1565 = vsel %vm1124, %v1535, 0.0
        %v1566 = vadd.f32 %v1564, %v1565
        %1567 = vadd.xlane.f32.xlu0 %v1566
        %v1568 = vpop.xlane.xlu0 %1567
        %v1569 = vrot.slane %v1568, 4
        %v1570 = vadd.f32 %v1568, %v1569
        %v1571 = vrot.slane %v1570, 2
        %v1572 = vadd.f32 %v1570, %v1571
        %v1573 = vrot.slane %v1572, 1
        %v1574 = vadd.f32 %v1572, %v1573
        %s1575 = vtos %v1574
        %s1576 = sadd.f32 %s1503, %s1575
        %s1577 = scalar_lea.smem [#allocation3], 4
        %1578 = sst [smem:[%s1577]] %s1576
        %s1579 = sld [smem:[#allocation3 + $0x5]]
        %v1580 = vsel %vm1124, %v1173, 0.0
        %v1581 = vsel %vm1124, %v1174, 0.0
        %v1582 = vadd.f32 %v1580, %v1581
        %v1583 = vsel %vm1124, %v1175, 0.0
        %v1584 = vadd.f32 %v1582, %v1583
        %v1585 = vsel %vm1124, %v1176, 0.0
        %v1586 = vadd.f32 %v1584, %v1585
        %v1587 = vsel %vm1124, %v1177, 0.0
        %v1588 = vadd.f32 %v1586, %v1587
        %v1589 = vsel %vm1124, %v1178, 0.0
        %v1590 = vadd.f32 %v1588, %v1589
        %v1591 = vsel %vm1124, %v1179, 0.0
        %v1592 = vadd.f32 %v1590, %v1591
        %v1593 = vsel %vm1124, %v1180, 0.0
        %v1594 = vadd.f32 %v1592, %v1593
        %v1595 = vsel %vm1124, %v1181, 0.0
        %v1596 = vadd.f32 %v1594, %v1595
        %v1597 = vsel %vm1124, %v1182, 0.0
        %v1598 = vadd.f32 %v1596, %v1597
        %v1599 = vsel %vm1124, %v1183, 0.0
        %v1600 = vadd.f32 %v1598, %v1599
        %v1601 = vsel %vm1124, %v1184, 0.0
        %v1602 = vadd.f32 %v1600, %v1601
        %v1603 = vsel %vm1124, %v1185, 0.0
        %v1604 = vadd.f32 %v1602, %v1603
        %v1605 = vsel %vm1124, %v1186, 0.0
        %v1606 = vadd.f32 %v1604, %v1605
        %v1607 = vsel %vm1124, %v1187, 0.0
        %v1608 = vadd.f32 %v1606, %v1607
        %v1609 = vsel %vm1124, %v1188, 0.0
        %v1610 = vadd.f32 %v1608, %v1609
        %1611 = vadd.xlane.f32.xlu0 %v1610
        %v1612 = vpop.xlane.xlu0 %1611
        %v1613 = vrot.slane %v1612, 4
        %v1614 = vadd.f32 %v1612, %v1613
        %v1615 = vrot.slane %v1614, 2
        %v1616 = vadd.f32 %v1614, %v1615
        %v1617 = vrot.slane %v1616, 1
        %v1618 = vadd.f32 %v1616, %v1617
        %s1619 = vtos %v1618
        %s1620 = sadd.f32 %s1579, %s1619
        %s1621 = scalar_lea.smem [#allocation3], 5
        %1622 = sst [smem:[%s1621]] %s1620
        %s1623 = sld [smem:[#allocation3 + $0x6]]
        %v1624 = vmul.f32 %v1090, %v1221
        %v1625 = vmul.f32 %v1092, %v1222
        %v1626 = vmul.f32 %v1094, %v1223
        %v1627 = vmul.f32 %v1096, %v1224
        %v1628 = vmul.f32 %v1098, %v1225
        %v1629 = vmul.f32 %v1100, %v1226
        %v1630 = vmul.f32 %v1102, %v1227
        %v1631 = vmul.f32 %v1104, %v1228
        %v1632 = vmul.f32 %v1106, %v1229
        %v1633 = vmul.f32 %v1108, %v1230
        %v1634 = vmul.f32 %v1110, %v1231
        %v1635 = vmul.f32 %v1112, %v1232
        %v1636 = vmul.f32 %v1114, %v1233
        %v1637 = vmul.f32 %v1116, %v1234
        %v1638 = vmul.f32 %v1118, %v1235
        %v1639 = vmul.f32 %v1120, %v1236
        %v1640 = vsel %vm1124, %v1624, 0.0
        %v1641 = vsel %vm1124, %v1625, 0.0
        %v1642 = vadd.f32 %v1640, %v1641
        %v1643 = vsel %vm1124, %v1626, 0.0
        %v1644 = vadd.f32 %v1642, %v1643
        %v1645 = vsel %vm1124, %v1627, 0.0
        %v1646 = vadd.f32 %v1644, %v1645
        %v1647 = vsel %vm1124, %v1628, 0.0
        %v1648 = vadd.f32 %v1646, %v1647
        %v1649 = vsel %vm1124, %v1629, 0.0
        %v1650 = vadd.f32 %v1648, %v1649
        %v1651 = vsel %vm1124, %v1630, 0.0
        %v1652 = vadd.f32 %v1650, %v1651
        %v1653 = vsel %vm1124, %v1631, 0.0
        %v1654 = vadd.f32 %v1652, %v1653
        %v1655 = vsel %vm1124, %v1632, 0.0
        %v1656 = vadd.f32 %v1654, %v1655
        %v1657 = vsel %vm1124, %v1633, 0.0
        %v1658 = vadd.f32 %v1656, %v1657
        %v1659 = vsel %vm1124, %v1634, 0.0
        %v1660 = vadd.f32 %v1658, %v1659
        %v1661 = vsel %vm1124, %v1635, 0.0
        %v1662 = vadd.f32 %v1660, %v1661
        %v1663 = vsel %vm1124, %v1636, 0.0
        %v1664 = vadd.f32 %v1662, %v1663
        %v1665 = vsel %vm1124, %v1637, 0.0
        %v1666 = vadd.f32 %v1664, %v1665
        %v1667 = vsel %vm1124, %v1638, 0.0
        %v1668 = vadd.f32 %v1666, %v1667
        %v1669 = vsel %vm1124, %v1639, 0.0
        %v1670 = vadd.f32 %v1668, %v1669
        %1671 = vadd.xlane.f32.xlu0 %v1670
        %v1672 = vpop.xlane.xlu0 %1671
        %v1673 = vrot.slane %v1672, 4
        %v1674 = vadd.f32 %v1672, %v1673
        %v1675 = vrot.slane %v1674, 2
        %v1676 = vadd.f32 %v1674, %v1675
        %v1677 = vrot.slane %v1676, 1
        %v1678 = vadd.f32 %v1676, %v1677
        %s1679 = vtos %v1678
        %s1680 = sadd.f32 %s1623, %s1679
        %s1681 = scalar_lea.smem [#allocation3], 6
        %1682 = sst [smem:[%s1681]] %s1680
        %s1683 = sld [smem:[#allocation3 + $0x7]]
        %v1684 = vmul.f32 %v495, %v1090
        %v1685 = vmul.f32 %v496, %v1092
        %v1686 = vmul.f32 %v497, %v1094
        %v1687 = vmul.f32 %v498, %v1096
        %v1688 = vmul.f32 %v499, %v1098
        %v1689 = vmul.f32 %v500, %v1100
        %v1690 = vmul.f32 %v501, %v1102
        %v1691 = vmul.f32 %v502, %v1104
        %v1692 = vmul.f32 %v503, %v1106
        %v1693 = vmul.f32 %v504, %v1108
        %v1694 = vmul.f32 %v505, %v1110
        %v1695 = vmul.f32 %v506, %v1112
        %v1696 = vmul.f32 %v507, %v1114
        %v1697 = vmul.f32 %v508, %v1116
        %v1698 = vmul.f32 %v509, %v1118
        %v1699 = vmul.f32 %v510, %v1120
        %v1700 = vmul.f32 %v1684, %v1090
        %v1701 = vmul.f32 %v1685, %v1092
        %v1702 = vmul.f32 %v1686, %v1094
        %v1703 = vmul.f32 %v1687, %v1096
        %v1704 = vmul.f32 %v1688, %v1098
        %v1705 = vmul.f32 %v1689, %v1100
        %v1706 = vmul.f32 %v1690, %v1102
        %v1707 = vmul.f32 %v1691, %v1104
        %v1708 = vmul.f32 %v1692, %v1106
        %v1709 = vmul.f32 %v1693, %v1108
        %v1710 = vmul.f32 %v1694, %v1110
        %v1711 = vmul.f32 %v1695, %v1112
        %v1712 = vmul.f32 %v1696, %v1114
        %v1713 = vmul.f32 %v1697, %v1116
        %v1714 = vmul.f32 %v1698, %v1118
        %v1715 = vmul.f32 %v1699, %v1120
        %v1716 = vsel %vm1124, %v1700, 0.0
        %v1717 = vsel %vm1124, %v1701, 0.0
        %v1718 = vadd.f32 %v1716, %v1717
        %v1719 = vsel %vm1124, %v1702, 0.0
        %v1720 = vadd.f32 %v1718, %v1719
        %v1721 = vsel %vm1124, %v1703, 0.0
        %v1722 = vadd.f32 %v1720, %v1721
        %v1723 = vsel %vm1124, %v1704, 0.0
        %v1724 = vadd.f32 %v1722, %v1723
        %v1725 = vsel %vm1124, %v1705, 0.0
        %v1726 = vadd.f32 %v1724, %v1725
        %v1727 = vsel %vm1124, %v1706, 0.0
        %v1728 = vadd.f32 %v1726, %v1727
        %v1729 = vsel %vm1124, %v1707, 0.0
        %v1730 = vadd.f32 %v1728, %v1729
        %v1731 = vsel %vm1124, %v1708, 0.0
        %v1732 = vadd.f32 %v1730, %v1731
        %v1733 = vsel %vm1124, %v1709, 0.0
        %v1734 = vadd.f32 %v1732, %v1733
        %v1735 = vsel %vm1124, %v1710, 0.0
        %v1736 = vadd.f32 %v1734, %v1735
        %v1737 = vsel %vm1124, %v1711, 0.0
        %v1738 = vadd.f32 %v1736, %v1737
        %v1739 = vsel %vm1124, %v1712, 0.0
        %v1740 = vadd.f32 %v1738, %v1739
        %v1741 = vsel %vm1124, %v1713, 0.0
        %v1742 = vadd.f32 %v1740, %v1741
        %v1743 = vsel %vm1124, %v1714, 0.0
        %v1744 = vadd.f32 %v1742, %v1743
        %v1745 = vsel %vm1124, %v1715, 0.0
        %v1746 = vadd.f32 %v1744, %v1745
        %1747 = vadd.xlane.f32.xlu0 %v1746
        %v1748 = vpop.xlane.xlu0 %1747
        %v1749 = vrot.slane %v1748, 4
        %v1750 = vadd.f32 %v1748, %v1749
        %v1751 = vrot.slane %v1750, 2
        %v1752 = vadd.f32 %v1750, %v1751
        %v1753 = vrot.slane %v1752, 1
        %v1754 = vadd.f32 %v1752, %v1753
        %s1755 = vtos %v1754
        %s1756 = sadd.f32 %s1683, %s1755
        %s1757 = scalar_lea.smem [#allocation3], 7
        %1758 = sst [smem:[%s1757]] %s1756
        %s1759 = sld [smem:[#allocation3 + $0x8]]
        %v1760 = vsel %vm1124, %v1221, 0.0
        %v1761 = vsel %vm1124, %v1222, 0.0
        %v1762 = vadd.f32 %v1760, %v1761
        %v1763 = vsel %vm1124, %v1223, 0.0
        %v1764 = vadd.f32 %v1762, %v1763
        %v1765 = vsel %vm1124, %v1224, 0.0
        %v1766 = vadd.f32 %v1764, %v1765
        %v1767 = vsel %vm1124, %v1225, 0.0
        %v1768 = vadd.f32 %v1766, %v1767
        %v1769 = vsel %vm1124, %v1226, 0.0
        %v1770 = vadd.f32 %v1768, %v1769
        %v1771 = vsel %vm1124, %v1227, 0.0
        %v1772 = vadd.f32 %v1770, %v1771
        %v1773 = vsel %vm1124, %v1228, 0.0
        %v1774 = vadd.f32 %v1772, %v1773
        %v1775 = vsel %vm1124, %v1229, 0.0
        %v1776 = vadd.f32 %v1774, %v1775
        %v1777 = vsel %vm1124, %v1230, 0.0
        %v1778 = vadd.f32 %v1776, %v1777
        %v1779 = vsel %vm1124, %v1231, 0.0
        %v1780 = vadd.f32 %v1778, %v1779
        %v1781 = vsel %vm1124, %v1232, 0.0
        %v1782 = vadd.f32 %v1780, %v1781
        %v1783 = vsel %vm1124, %v1233, 0.0
        %v1784 = vadd.f32 %v1782, %v1783
        %v1785 = vsel %vm1124, %v1234, 0.0
        %v1786 = vadd.f32 %v1784, %v1785
        %v1787 = vsel %vm1124, %v1235, 0.0
        %v1788 = vadd.f32 %v1786, %v1787
        %v1789 = vsel %vm1124, %v1236, 0.0
        %v1790 = vadd.f32 %v1788, %v1789
        %1791 = vadd.xlane.f32.xlu0 %v1790
        %v1792 = vpop.xlane.xlu0 %1791
        %v1793 = vrot.slane %v1792, 4
        %v1794 = vadd.f32 %v1792, %v1793
        %v1795 = vrot.slane %v1794, 2
        %v1796 = vadd.f32 %v1794, %v1795
        %v1797 = vrot.slane %v1796, 1
        %v1798 = vadd.f32 %v1796, %v1797
        %s1799 = vtos %v1798
        %s1800 = sadd.f32 %s1759, %s1799
        %s1801 = scalar_lea.smem [#allocation3], 8
        %1802 = sst [smem:[%s1801]] %s1800
        %p1803 = scmp.eq.s32.totalorder %s25, 1
        // Predicated region
        $region57: #{tpu_custom_call.1} parent=35 // pred_check
          %p1804 = pneg %p1803
        $region58: #{tpu_custom_call.1} parent=35 // pred_check_branch
          %1806 = sbr.rel (%p1804) target = $region60
        $region59: #{tpu_custom_call.1} parent=35 // pred_region
          %s1807 = sld [smem:[#allocation3 + $0x1]]
          %s1808 = sld [smem:[#allocation3 + $0x2]]
          %s1809 = smul.f32 %s1808, 10.0
          %s1810 = sadd.f32 %s1807, %s1809
          %s1811 = smax.f32 %s1810, 1.0
          %p1812 = scmp.gt.f32.partialorder %s1810, 0.0
          %s1813 = scalar_select %p1812, 1.0, 0.0
          %s1814 = sld [smem:[#allocation3]]
          %v1815 = vstv %s1811
          %v1816 = vrcp.pop %v1815
          %s1817 = vtos %v1816
          %s1818 = smul.f32 %s1814, %s1817
          %s1819 = scalar_select %p1812, %s1818, 0.0
          %s1820 = sld [smem:[#allocation3 + $0x4]]
          %s1821 = sld [smem:[#allocation3 + $0x5]]
          %s1822 = sadd.f32 %s1820, %s1821
          %s1823 = smax.f32 %s1822, 1e-06
          %s1824 = sld [smem:[#allocation3 + $0x3]]
          %s1825 = smul.f32 %s1824, 2.0
          %v1826 = vstv %s1823
          %v1827 = vrcp.pop %v1826
          %s1828 = vtos %v1827
          %s1829 = smul.f32 %s1825, %s1828
          %s1830 = ssub.f32 1.0, %s1829
          %s1831 = smul.f32 %s1830, %s1807
          %s1832 = sld [smem:[#allocation3 + $0x7]]
          %s1833 = sld [smem:[#allocation3 + $0x8]]
          %s1834 = sadd.f32 %s1832, %s1833
          %s1835 = smax.f32 %s1834, 1e-06
          %s1836 = sld [smem:[#allocation3 + $0x6]]
          %s1837 = smul.f32 %s1836, 2.0
          %v1838 = vstv %s1835
          %v1839 = vrcp.pop %v1838
          %s1840 = vtos %v1839
          %s1841 = smul.f32 %s1837, %s1840
          %s1842 = ssub.f32 1.0, %s1841
          %s1843 = smul.f32 %s1842, %s1808
          %s1844 = smul.f32 %s1843, 10.0
          %s1845 = sadd.f32 %s1831, %s1844
          %v1846 = vstv %s1811
          %v1847 = vrcp.pop %v1846
          %s1848 = vtos %v1847
          %s1849 = smul.f32 %s1845, %s1848
          %s1850 = scalar_select %p1812, %s1849, 0.0
          %s1851 = sadd.f32 %s1821, %s1833
          %p1852 = scmp.gt.f32.partialorder %s1851, 0.0
          %s1853 = scalar_select %p1852, 1.0, 0.0
          %v1854 = vld [vmem:[#allocation4] sm:$0xff]
          %v1855 = vld [vmem:[#allocation4 + $0x8] sm:$0xff]
          %v1856 = vld [vmem:[#allocation7] sm:$0xff]
          %v1857 = vld [vmem:[#allocation7 + $0x8] sm:$0xff]
          %v1858 = vld [vmem:[#allocation2] sm:$0xff]
          %v1859 = vld [vmem:[#allocation2 + $0x8] sm:$0xff]
          %v1860 = vmul.f32 %v1858, 0.32802135
          %v1861 = vmul.f32 %v1859, 0.32802135
          %s1862 = scalar_lea.vmem [#allocation2], 16
          %v1863 = vld [vmem:[%s1862] sm:$0xff]
          %v1864 = vld [vmem:[%s1862 + $0x8] sm:$0xff]
          %v1865 = vmul.f32 %v1863, 0.19895501
          %v1866 = vmul.f32 %v1864, 0.19895501
          %v1867 = vadd.f32 %v1860, %v1865
          %v1868 = vadd.f32 %v1861, %v1866
          %v1870 = vsel %vm1124, %v1854, 0
          %v1873 = vsel %vm1124, %v1855, 0
          %1875 = vmatprep.subr.mxu0 0.0
          %1876 = vmatpush1.msra.mxu0 %v1867
          %1877 = vmatprep.subr.mxu0 0.0
          %1878 = vmatpush1.msra.mxu0 %v1868
          %1879 = vmatprep.subr.mxu0 0.0
          %1880 = vmatpush1.msra.mxu0 0.0
          %1881 = vmatprep.subr.mxu0 0.0
          %1882 = vmatpush1.msra.mxu0 0.0
          %1883 = vmatprep.subr.mxu0 0.0
          %1884 = vmatpush1.msra.mxu0 0.0
          %1885 = vmatprep.subr.mxu0 0.0
          %1886 = vmatpush1.msra.mxu0 0.0
          %1887 = vmatprep.subr.mxu0 0.0
          %1888 = vmatpush1.msra.mxu0 0.0
          %1889 = vmatprep.subr.mxu0 0.0
          %1890 = vmatpush1.msra.mxu0 0.0
          %1891 = vmatprep.subr.mxu0 0.0
          %1892 = vmatpush1.msra.mxu0 0.0
          %1893 = vmatprep.subr.mxu0 0.0
          %1894 = vmatpush1.msra.mxu0 0.0
          %1895 = vmatprep.subr.mxu0 0.0
          %1896 = vmatpush1.msra.mxu0 0.0
          %1897 = vmatprep.subr.mxu0 0.0
          %1898 = vmatpush1.msra.mxu0 0.0
          %1899 = vmatprep.subr.mxu0 0.0
          %1900 = vmatpush1.msra.mxu0 0.0
          %1901 = vmatprep.subr.mxu0 0.0
          %1902 = vmatpush1.msra.mxu0 0.0
          %1903 = vmatprep.subr.mxu0 0.0
          %1904 = vmatpush1.msra.mxu0 0.0
          %1905 = vmatprep.subr.mxu0 0.0
          %1906 = vmatpush1.msra.mxu0 0.0
          %1907 = vmatprep.subr.mxu0 0.0
          %1908 = vmatpush1.msra.mxu0 0.0
          %1909 = vmatprep.subr.mxu0 0.0
          %1910 = vmatpush1.msra.mxu0 0.0
          %1911 = vmatprep.subr.mxu0 0.0
          %1912 = vmatpush1.msra.mxu0 0.0
          %1913 = vmatprep.subr.mxu0 0.0
          %1914 = vmatpush1.msra.mxu0 0.0
          %1915 = vmatprep.subr.mxu0 0.0
          %1916 = vmatpush1.msra.mxu0 0.0
          %1917 = vmatprep.subr.mxu0 0.0
          %1918 = vmatpush1.msra.mxu0 0.0
          %1919 = vmatprep.subr.mxu0 0.0
          %1920 = vmatpush1.msra.mxu0 0.0
          %1921 = vmatprep.subr.mxu0 0.0
          %1922 = vmatpush1.msra.mxu0 0.0
          %1923 = vmatprep.subr.mxu0 0.0
          %1924 = vmatpush1.msra.mxu0 0.0
          %1925 = vmatprep.subr.mxu0 0.0
          %1926 = vmatpush1.msra.mxu0 0.0
          %1927 = vmatprep.subr.mxu0 0.0
          %1928 = vmatpush1.msra.mxu0 0.0
          %1929 = vmatprep.subr.mxu0 0.0
          %1930 = vmatpush1.msra.mxu0 0.0
          %1931 = vmatprep.subr.mxu0 0.0
          %1932 = vmatpush1.msra.mxu0 0.0
          %1933 = vmatprep.subr.mxu0 0.0
          %1934 = vmatpush1.msra.mxu0 0.0
          %1935 = vmatprep.subr.mxu0 0.0
          %1936 = vmatpush1.msra.mxu0 0.0
          %1937 = vmatprep.subr.mxu0 0.0
          %1938 = vmatpush1.msra.mxu0 0.0
          %1939 = vmatprep.mubr.f32.mxu0 0.0
          %1940 = vmatmul.mubr.f32.gmra.mrb[0].mxu0 %v1870
          %v1941 = vpop.f32.mrb[0].mxu0
          %v1942 = vadd.f32 0.0, %v1941
          %v1943 = vpop.f32.mrb[0].mxu0
          %1944 = vmatprep.mubr.f32.mxu0 0.0
          %1945 = vmatmul.mubr.f32.gmra.mrb[0].mxu0 %v1873
          %v1946 = vpop.f32.mrb[0].mxu0
          %v1947 = vadd.f32 0.0, %v1946
          %v1948 = vpop.f32.mrb[0].mxu0
          %1949 = vdwg.mxu0
          %v1951 = vsel %vm1124, %v1942, 0
          %v1954 = vsel %vm1124, %v1947, 0
          %1956 = vmatprep.subr.mxu0 0.0
          %1957 = vmatpush1.msra.mxu0 %v1856
          %1958 = vmatprep.subr.mxu0 0.0
          %1959 = vmatpush1.msra.mxu0 %v1857
          %1960 = vmatprep.subr.mxu0 0.0
          %1961 = vmatpush1.msra.mxu0 0.0
          %1962 = vmatprep.subr.mxu0 0.0
          %1963 = vmatpush1.msra.mxu0 0.0
          %1964 = vmatprep.subr.mxu0 0.0
          %1965 = vmatpush1.msra.mxu0 0.0
          %1966 = vmatprep.subr.mxu0 0.0
          %1967 = vmatpush1.msra.mxu0 0.0
          %1968 = vmatprep.subr.mxu0 0.0
          %1969 = vmatpush1.msra.mxu0 0.0
          %1970 = vmatprep.subr.mxu0 0.0
          %1971 = vmatpush1.msra.mxu0 0.0
          %1972 = vmatprep.subr.mxu0 0.0
          %1973 = vmatpush1.msra.mxu0 0.0
          %1974 = vmatprep.subr.mxu0 0.0
          %1975 = vmatpush1.msra.mxu0 0.0
          %1976 = vmatprep.subr.mxu0 0.0
          %1977 = vmatpush1.msra.mxu0 0.0
          %1978 = vmatprep.subr.mxu0 0.0
          %1979 = vmatpush1.msra.mxu0 0.0
          %1980 = vmatprep.subr.mxu0 0.0
          %1981 = vmatpush1.msra.mxu0 0.0
          %1982 = vmatprep.subr.mxu0 0.0
          %1983 = vmatpush1.msra.mxu0 0.0
          %1984 = vmatprep.subr.mxu0 0.0
          %1985 = vmatpush1.msra.mxu0 0.0
          %1986 = vmatprep.subr.mxu0 0.0
          %1987 = vmatpush1.msra.mxu0 0.0
          %1988 = vmatprep.subr.mxu0 0.0
          %1989 = vmatpush1.msra.mxu0 0.0
          %1990 = vmatprep.subr.mxu0 0.0
          %1991 = vmatpush1.msra.mxu0 0.0
          %1992 = vmatprep.subr.mxu0 0.0
          %1993 = vmatpush1.msra.mxu0 0.0
          %1994 = vmatprep.subr.mxu0 0.0
          %1995 = vmatpush1.msra.mxu0 0.0
          %1996 = vmatprep.subr.mxu0 0.0
          %1997 = vmatpush1.msra.mxu0 0.0
          %1998 = vmatprep.subr.mxu0 0.0
          %1999 = vmatpush1.msra.mxu0 0.0
          %2000 = vmatprep.subr.mxu0 0.0
          %2001 = vmatpush1.msra.mxu0 0.0
          %2002 = vmatprep.subr.mxu0 0.0
          %2003 = vmatpush1.msra.mxu0 0.0
          %2004 = vmatprep.subr.mxu0 0.0
          %2005 = vmatpush1.msra.mxu0 0.0
          %2006 = vmatprep.subr.mxu0 0.0
          %2007 = vmatpush1.msra.mxu0 0.0
          %2008 = vmatprep.subr.mxu0 0.0
          %2009 = vmatpush1.msra.mxu0 0.0
          %2010 = vmatprep.subr.mxu0 0.0
          %2011 = vmatpush1.msra.mxu0 0.0
          %2012 = vmatprep.subr.mxu0 0.0
          %2013 = vmatpush1.msra.mxu0 0.0
          %2014 = vmatprep.subr.mxu0 0.0
          %2015 = vmatpush1.msra.mxu0 0.0
          %2016 = vmatprep.subr.mxu0 0.0
          %2017 = vmatpush1.msra.mxu0 0.0
          %2018 = vmatprep.subr.mxu0 0.0
          %2019 = vmatpush1.msra.mxu0 0.0
          %2020 = vmatprep.mubr.f32.mxu0 0.0
          %2021 = vmatmul.mubr.f32.gmra.mrb[0].mxu0 %v1951
          %v2022 = vpop.f32.mrb[0].mxu0
          %v2023 = vadd.f32 0.0, %v2022
          %v2024 = vpop.f32.mrb[0].mxu0
          %2025 = vmatprep.mubr.f32.mxu0 0.0
          %2026 = vmatmul.mubr.f32.gmra.mrb[0].mxu0 %v1954
          %v2027 = vpop.f32.mrb[0].mxu0
          %v2028 = vadd.f32 0.0, %v2027
          %v2029 = vpop.f32.mrb[0].mxu0
          %2030 = vdwg.mxu0
          %v2031 = vsub.f32 %v1858, %v2023
          %v2032 = vsub.f32 %v1859, %v2028
          %v2033 = vand.u32 2147483647, %v2031
          %v2034 = vand.u32 2147483647, %v2032
          %v2035 = vsel %vm1124, %v2033, 0.0
          %v2036 = vsel %vm1124, %v2034, 0.0
          %v2037 = vadd.f32 %v2035, %v2036
          %2038 = vadd.xlane.f32.xlu0 %v2037
          %v2039 = vpop.xlane.xlu0 %2038
          %v2040 = vrot.slane %v2039, 4
          %v2041 = vadd.f32 %v2039, %v2040
          %v2042 = vrot.slane %v2041, 2
          %v2043 = vadd.f32 %v2041, %v2042
          %v2044 = vrot.slane %v2043, 1
          %v2045 = vadd.f32 %v2043, %v2044
          %s2046 = vtos %v2045
          %s2047 = sadd.f32 %s2046, 0.0
          %v2048 = vmul.f32 %v1863, 0.27406862
          %v2049 = vmul.f32 %v1864, 0.27406862
          %v2050 = vadd.f32 %v1860, %v2048
          %v2051 = vadd.f32 %v1861, %v2049
          %s2052 = scalar_lea.vmem [#allocation2], 32
          %v2053 = vld [vmem:[%s2052] sm:$0xff]
          %v2054 = vld [vmem:[%s2052 + $0x8] sm:$0xff]
          %v2055 = vmul.f32 %v2053, 0.123841405
          %v2056 = vmul.f32 %v2054, 0.123841405
          %v2057 = vadd.f32 %v2050, %v2055
          %v2058 = vadd.f32 %v2051, %v2056
          %s2059 = scalar_lea.vmem [#allocation2], 48
          %v2060 = vld [vmem:[%s2059] sm:$0xff]
          %v2061 = vld [vmem:[%s2059 + $0x8] sm:$0xff]
          %v2062 = vmul.f32 %v2060, 0.07511361
          %v2063 = vmul.f32 %v2061, 0.07511361
          %v2064 = vadd.f32 %v2057, %v2062
          %v2065 = vadd.f32 %v2058, %v2063
          %2066 = vmatprep.subr.mxu0 0.0
          %2067 = vmatpush1.msra.mxu0 %v2064
          %2068 = vmatprep.subr.mxu0 0.0
          %2069 = vmatpush1.msra.mxu0 %v2065
          %2070 = vmatprep.subr.mxu0 0.0
          %2071 = vmatpush1.msra.mxu0 0.0
          %2072 = vmatprep.subr.mxu0 0.0
          %2073 = vmatpush1.msra.mxu0 0.0
          %2074 = vmatprep.subr.mxu0 0.0
          %2075 = vmatpush1.msra.mxu0 0.0
          %2076 = vmatprep.subr.mxu0 0.0
          %2077 = vmatpush1.msra.mxu0 0.0
          %2078 = vmatprep.subr.mxu0 0.0
          %2079 = vmatpush1.msra.mxu0 0.0
          %2080 = vmatprep.subr.mxu0 0.0
          %2081 = vmatpush1.msra.mxu0 0.0
          %2082 = vmatprep.subr.mxu0 0.0
          %2083 = vmatpush1.msra.mxu0 0.0
          %2084 = vmatprep.subr.mxu0 0.0
          %2085 = vmatpush1.msra.mxu0 0.0
          %2086 = vmatprep.subr.mxu0 0.0
          %2087 = vmatpush1.msra.mxu0 0.0
          %2088 = vmatprep.subr.mxu0 0.0
          %2089 = vmatpush1.msra.mxu0 0.0
          %2090 = vmatprep.subr.mxu0 0.0
          %2091 = vmatpush1.msra.mxu0 0.0
          %2092 = vmatprep.subr.mxu0 0.0
          %2093 = vmatpush1.msra.mxu0 0.0
          %2094 = vmatprep.subr.mxu0 0.0
          %2095 = vmatpush1.msra.mxu0 0.0
          %2096 = vmatprep.subr.mxu0 0.0
          %2097 = vmatpush1.msra.mxu0 0.0
          %2098 = vmatprep.subr.mxu0 0.0
          %2099 = vmatpush1.msra.mxu0 0.0
          %2100 = vmatprep.subr.mxu0 0.0
          %2101 = vmatpush1.msra.mxu0 0.0
          %2102 = vmatprep.subr.mxu0 0.0
          %2103 = vmatpush1.msra.mxu0 0.0
          %2104 = vmatprep.subr.mxu0 0.0
          %2105 = vmatpush1.msra.mxu0 0.0
          %2106 = vmatprep.subr.mxu0 0.0
          %2107 = vmatpush1.msra.mxu0 0.0
          %2108 = vmatprep.subr.mxu0 0.0
          %2109 = vmatpush1.msra.mxu0 0.0
          %2110 = vmatprep.subr.mxu0 0.0
          %2111 = vmatpush1.msra.mxu0 0.0
          %2112 = vmatprep.subr.mxu0 0.0
          %2113 = vmatpush1.msra.mxu0 0.0
          %2114 = vmatprep.subr.mxu0 0.0
          %2115 = vmatpush1.msra.mxu0 0.0
          %2116 = vmatprep.subr.mxu0 0.0
          %2117 = vmatpush1.msra.mxu0 0.0
          %2118 = vmatprep.subr.mxu0 0.0
          %2119 = vmatpush1.msra.mxu0 0.0
          %2120 = vmatprep.subr.mxu0 0.0
          %2121 = vmatpush1.msra.mxu0 0.0
          %2122 = vmatprep.subr.mxu0 0.0
          %2123 = vmatpush1.msra.mxu0 0.0
          %2124 = vmatprep.subr.mxu0 0.0
          %2125 = vmatpush1.msra.mxu0 0.0
          %2126 = vmatprep.subr.mxu0 0.0
          %2127 = vmatpush1.msra.mxu0 0.0
          %2128 = vmatprep.subr.mxu0 0.0
          %2129 = vmatpush1.msra.mxu0 0.0
          %2130 = vmatprep.mubr.f32.mxu0 0.0
          %2131 = vmatmul.mubr.f32.gmra.mrb[0].mxu0 %v1870
          %v2132 = vpop.f32.mrb[0].mxu0
          %v2133 = vadd.f32 0.0, %v2132
          %v2134 = vpop.f32.mrb[0].mxu0
          %2135 = vmatprep.mubr.f32.mxu0 0.0
          %2136 = vmatmul.mubr.f32.gmra.mrb[0].mxu0 %v1873
          %v2137 = vpop.f32.mrb[0].mxu0
          %v2138 = vadd.f32 0.0, %v2137
          %v2139 = vpop.f32.mrb[0].mxu0
          %2140 = vdwg.mxu0
          %v2142 = vsel %vm1124, %v2133, 0
          %v2145 = vsel %vm1124, %v2138, 0
          %2147 = vmatprep.subr.mxu0 0.0
          %2148 = vmatpush1.msra.mxu0 %v1856
          %2149 = vmatprep.subr.mxu0 0.0
          %2150 = vmatpush1.msra.mxu0 %v1857
          %2151 = vmatprep.subr.mxu0 0.0
          %2152 = vmatpush1.msra.mxu0 0.0
          %2153 = vmatprep.subr.mxu0 0.0
          %2154 = vmatpush1.msra.mxu0 0.0
          %2155 = vmatprep.subr.mxu0 0.0
          %2156 = vmatpush1.msra.mxu0 0.0
          %2157 = vmatprep.subr.mxu0 0.0
          %2158 = vmatpush1.msra.mxu0 0.0
          %2159 = vmatprep.subr.mxu0 0.0
          %2160 = vmatpush1.msra.mxu0 0.0
          %2161 = vmatprep.subr.mxu0 0.0
          %2162 = vmatpush1.msra.mxu0 0.0
          %2163 = vmatprep.subr.mxu0 0.0
          %2164 = vmatpush1.msra.mxu0 0.0
          %2165 = vmatprep.subr.mxu0 0.0
          %2166 = vmatpush1.msra.mxu0 0.0
          %2167 = vmatprep.subr.mxu0 0.0
          %2168 = vmatpush1.msra.mxu0 0.0
          %2169 = vmatprep.subr.mxu0 0.0
          %2170 = vmatpush1.msra.mxu0 0.0
          %2171 = vmatprep.subr.mxu0 0.0
          %2172 = vmatpush1.msra.mxu0 0.0
          %2173 = vmatprep.subr.mxu0 0.0
          %2174 = vmatpush1.msra.mxu0 0.0
          %2175 = vmatprep.subr.mxu0 0.0
          %2176 = vmatpush1.msra.mxu0 0.0
          %2177 = vmatprep.subr.mxu0 0.0
          %2178 = vmatpush1.msra.mxu0 0.0
          %2179 = vmatprep.subr.mxu0 0.0
          %2180 = vmatpush1.msra.mxu0 0.0
          %2181 = vmatprep.subr.mxu0 0.0
          %2182 = vmatpush1.msra.mxu0 0.0
          %2183 = vmatprep.subr.mxu0 0.0
          %2184 = vmatpush1.msra.mxu0 0.0
          %2185 = vmatprep.subr.mxu0 0.0
          %2186 = vmatpush1.msra.mxu0 0.0
          %2187 = vmatprep.subr.mxu0 0.0
          %2188 = vmatpush1.msra.mxu0 0.0
          %2189 = vmatprep.subr.mxu0 0.0
          %2190 = vmatpush1.msra.mxu0 0.0
          %2191 = vmatprep.subr.mxu0 0.0
          %2192 = vmatpush1.msra.mxu0 0.0
          %2193 = vmatprep.subr.mxu0 0.0
          %2194 = vmatpush1.msra.mxu0 0.0
          %2195 = vmatprep.subr.mxu0 0.0
          %2196 = vmatpush1.msra.mxu0 0.0
          %2197 = vmatprep.subr.mxu0 0.0
          %2198 = vmatpush1.msra.mxu0 0.0
          %2199 = vmatprep.subr.mxu0 0.0
          %2200 = vmatpush1.msra.mxu0 0.0
          %2201 = vmatprep.subr.mxu0 0.0
          %2202 = vmatpush1.msra.mxu0 0.0
          %2203 = vmatprep.subr.mxu0 0.0
          %2204 = vmatpush1.msra.mxu0 0.0
          %2205 = vmatprep.subr.mxu0 0.0
          %2206 = vmatpush1.msra.mxu0 0.0
          %2207 = vmatprep.subr.mxu0 0.0
          %2208 = vmatpush1.msra.mxu0 0.0
          %2209 = vmatprep.subr.mxu0 0.0
          %2210 = vmatpush1.msra.mxu0 0.0
          %2211 = vmatprep.mubr.f32.mxu0 0.0
          %2212 = vmatmul.mubr.f32.gmra.mrb[0].mxu0 %v2142
          %v2213 = vpop.f32.mrb[0].mxu0
          %v2214 = vadd.f32 0.0, %v2213
          %v2215 = vpop.f32.mrb[0].mxu0
          %2216 = vmatprep.mubr.f32.mxu0 0.0
          %2217 = vmatmul.mubr.f32.gmra.mrb[0].mxu0 %v2145
          %v2218 = vpop.f32.mrb[0].mxu0
          %v2219 = vadd.f32 0.0, %v2218
          %v2220 = vpop.f32.mrb[0].mxu0
          %2221 = vdwg.mxu0
          %v2222 = vsub.f32 %v1863, %v2214
          %v2223 = vsub.f32 %v1864, %v2219
          %v2224 = vand.u32 2147483647, %v2222
          %v2225 = vand.u32 2147483647, %v2223
          %v2226 = vsel %vm1124, %v2224, 0.0
          %v2227 = vsel %vm1124, %v2225, 0.0
          %v2228 = vadd.f32 %v2226, %v2227
          %2229 = vadd.xlane.f32.xlu0 %v2228
          %v2230 = vpop.xlane.xlu0 %2229
          %v2231 = vrot.slane %v2230, 4
          %v2232 = vadd.f32 %v2230, %v2231
          %v2233 = vrot.slane %v2232, 2
          %v2234 = vadd.f32 %v2232, %v2233
          %v2235 = vrot.slane %v2234, 1
          %v2236 = vadd.f32 %v2234, %v2235
          %s2237 = vtos %v2236
          %s2238 = sadd.f32 %s2047, %s2237
          %v2239 = vmul.f32 %v1858, 0.123841405
          %v2240 = vmul.f32 %v1859, 0.123841405
          %v2241 = vadd.f32 %v2239, %v2048
          %v2242 = vadd.f32 %v2240, %v2049
          %v2243 = vmul.f32 %v2053, 0.32802135
          %v2244 = vmul.f32 %v2054, 0.32802135
          %v2245 = vadd.f32 %v2241, %v2243
          %v2246 = vadd.f32 %v2242, %v2244
          %v2247 = vmul.f32 %v2060, 0.19895501
          %v2248 = vmul.f32 %v2061, 0.19895501
          %v2249 = vadd.f32 %v2245, %v2247
          %v2250 = vadd.f32 %v2246, %v2248
          %2251 = vmatprep.subr.mxu0 0.0
          %2252 = vmatpush1.msra.mxu0 %v2249
          %2253 = vmatprep.subr.mxu0 0.0
          %2254 = vmatpush1.msra.mxu0 %v2250
          %2255 = vmatprep.subr.mxu0 0.0
          %2256 = vmatpush1.msra.mxu0 0.0
          %2257 = vmatprep.subr.mxu0 0.0
          %2258 = vmatpush1.msra.mxu0 0.0
          %2259 = vmatprep.subr.mxu0 0.0
          %2260 = vmatpush1.msra.mxu0 0.0
          %2261 = vmatprep.subr.mxu0 0.0
          %2262 = vmatpush1.msra.mxu0 0.0
          %2263 = vmatprep.subr.mxu0 0.0
          %2264 = vmatpush1.msra.mxu0 0.0
          %2265 = vmatprep.subr.mxu0 0.0
          %2266 = vmatpush1.msra.mxu0 0.0
          %2267 = vmatprep.subr.mxu0 0.0
          %2268 = vmatpush1.msra.mxu0 0.0
          %2269 = vmatprep.subr.mxu0 0.0
          %2270 = vmatpush1.msra.mxu0 0.0
          %2271 = vmatprep.subr.mxu0 0.0
          %2272 = vmatpush1.msra.mxu0 0.0
          %2273 = vmatprep.subr.mxu0 0.0
          %2274 = vmatpush1.msra.mxu0 0.0
          %2275 = vmatprep.subr.mxu0 0.0
          %2276 = vmatpush1.msra.mxu0 0.0
          %2277 = vmatprep.subr.mxu0 0.0
          %2278 = vmatpush1.msra.mxu0 0.0
          %2279 = vmatprep.subr.mxu0 0.0
          %2280 = vmatpush1.msra.mxu0 0.0
          %2281 = vmatprep.subr.mxu0 0.0
          %2282 = vmatpush1.msra.mxu0 0.0
          %2283 = vmatprep.subr.mxu0 0.0
          %2284 = vmatpush1.msra.mxu0 0.0
          %2285 = vmatprep.subr.mxu0 0.0
          %2286 = vmatpush1.msra.mxu0 0.0
          %2287 = vmatprep.subr.mxu0 0.0
          %2288 = vmatpush1.msra.mxu0 0.0
          %2289 = vmatprep.subr.mxu0 0.0
          %2290 = vmatpush1.msra.mxu0 0.0
          %2291 = vmatprep.subr.mxu0 0.0
          %2292 = vmatpush1.msra.mxu0 0.0
          %2293 = vmatprep.subr.mxu0 0.0
          %2294 = vmatpush1.msra.mxu0 0.0
          %2295 = vmatprep.subr.mxu0 0.0
          %2296 = vmatpush1.msra.mxu0 0.0
          %2297 = vmatprep.subr.mxu0 0.0
          %2298 = vmatpush1.msra.mxu0 0.0
          %2299 = vmatprep.subr.mxu0 0.0
          %2300 = vmatpush1.msra.mxu0 0.0
          %2301 = vmatprep.subr.mxu0 0.0
          %2302 = vmatpush1.msra.mxu0 0.0
          %2303 = vmatprep.subr.mxu0 0.0
          %2304 = vmatpush1.msra.mxu0 0.0
          %2305 = vmatprep.subr.mxu0 0.0
          %2306 = vmatpush1.msra.mxu0 0.0
          %2307 = vmatprep.subr.mxu0 0.0
          %2308 = vmatpush1.msra.mxu0 0.0
          %2309 = vmatprep.subr.mxu0 0.0
          %2310 = vmatpush1.msra.mxu0 0.0
          %2311 = vmatprep.subr.mxu0 0.0
          %2312 = vmatpush1.msra.mxu0 0.0
          %2313 = vmatprep.subr.mxu0 0.0
          %2314 = vmatpush1.msra.mxu0 0.0
          %2315 = vmatprep.mubr.f32.mxu0 0.0
          %2316 = vmatmul.mubr.f32.gmra.mrb[0].mxu0 %v1870
          %v2317 = vpop.f32.mrb[0].mxu0
          %v2318 = vadd.f32 0.0, %v2317
          %v2319 = vpop.f32.mrb[0].mxu0
          %2320 = vmatprep.mubr.f32.mxu0 0.0
          %2321 = vmatmul.mubr.f32.gmra.mrb[0].mxu0 %v1873
          %v2322 = vpop.f32.mrb[0].mxu0
          %v2323 = vadd.f32 0.0, %v2322
          %v2324 = vpop.f32.mrb[0].mxu0
          %2325 = vdwg.mxu0
          %v2327 = vsel %vm1124, %v2318, 0
          %v2330 = vsel %vm1124, %v2323, 0
          %2332 = vmatprep.subr.mxu0 0.0
          %2333 = vmatpush1.msra.mxu0 %v1856
          %2334 = vmatprep.subr.mxu0 0.0
          %2335 = vmatpush1.msra.mxu0 %v1857
          %2336 = vmatprep.subr.mxu0 0.0
          %2337 = vmatpush1.msra.mxu0 0.0
          %2338 = vmatprep.subr.mxu0 0.0
          %2339 = vmatpush1.msra.mxu0 0.0
          %2340 = vmatprep.subr.mxu0 0.0
          %2341 = vmatpush1.msra.mxu0 0.0
          %2342 = vmatprep.subr.mxu0 0.0
          %2343 = vmatpush1.msra.mxu0 0.0
          %2344 = vmatprep.subr.mxu0 0.0
          %2345 = vmatpush1.msra.mxu0 0.0
          %2346 = vmatprep.subr.mxu0 0.0
          %2347 = vmatpush1.msra.mxu0 0.0
          %2348 = vmatprep.subr.mxu0 0.0
          %2349 = vmatpush1.msra.mxu0 0.0
          %2350 = vmatprep.subr.mxu0 0.0
          %2351 = vmatpush1.msra.mxu0 0.0
          %2352 = vmatprep.subr.mxu0 0.0
          %2353 = vmatpush1.msra.mxu0 0.0
          %2354 = vmatprep.subr.mxu0 0.0
          %2355 = vmatpush1.msra.mxu0 0.0
          %2356 = vmatprep.subr.mxu0 0.0
          %2357 = vmatpush1.msra.mxu0 0.0
          %2358 = vmatprep.subr.mxu0 0.0
          %2359 = vmatpush1.msra.mxu0 0.0
          %2360 = vmatprep.subr.mxu0 0.0
          %2361 = vmatpush1.msra.mxu0 0.0
          %2362 = vmatprep.subr.mxu0 0.0
          %2363 = vmatpush1.msra.mxu0 0.0
          %2364 = vmatprep.subr.mxu0 0.0
          %2365 = vmatpush1.msra.mxu0 0.0
          %2366 = vmatprep.subr.mxu0 0.0
          %2367 = vmatpush1.msra.mxu0 0.0
          %2368 = vmatprep.subr.mxu0 0.0
          %2369 = vmatpush1.msra.mxu0 0.0
          %2370 = vmatprep.subr.mxu0 0.0
          %2371 = vmatpush1.msra.mxu0 0.0
          %2372 = vmatprep.subr.mxu0 0.0
          %2373 = vmatpush1.msra.mxu0 0.0
          %2374 = vmatprep.subr.mxu0 0.0
          %2375 = vmatpush1.msra.mxu0 0.0
          %2376 = vmatprep.subr.mxu0 0.0
          %2377 = vmatpush1.msra.mxu0 0.0
          %2378 = vmatprep.subr.mxu0 0.0
          %2379 = vmatpush1.msra.mxu0 0.0
          %2380 = vmatprep.subr.mxu0 0.0
          %2381 = vmatpush1.msra.mxu0 0.0
          %2382 = vmatprep.subr.mxu0 0.0
          %2383 = vmatpush1.msra.mxu0 0.0
          %2384 = vmatprep.subr.mxu0 0.0
          %2385 = vmatpush1.msra.mxu0 0.0
          %2386 = vmatprep.subr.mxu0 0.0
          %2387 = vmatpush1.msra.mxu0 0.0
          %2388 = vmatprep.subr.mxu0 0.0
          %2389 = vmatpush1.msra.mxu0 0.0
          %2390 = vmatprep.subr.mxu0 0.0
          %2391 = vmatpush1.msra.mxu0 0.0
          %2392 = vmatprep.subr.mxu0 0.0
          %2393 = vmatpush1.msra.mxu0 0.0
          %2394 = vmatprep.subr.mxu0 0.0
          %2395 = vmatpush1.msra.mxu0 0.0
          %2396 = vmatprep.mubr.f32.mxu0 0.0
          %2397 = vmatmul.mubr.f32.gmra.mrb[0].mxu0 %v2327
          %v2398 = vpop.f32.mrb[0].mxu0
          %v2399 = vadd.f32 0.0, %v2398
          %v2400 = vpop.f32.mrb[0].mxu0
          %2401 = vmatprep.mubr.f32.mxu0 0.0
          %2402 = vmatmul.mubr.f32.gmra.mrb[0].mxu0 %v2330
          %v2403 = vpop.f32.mrb[0].mxu0
          %v2404 = vadd.f32 0.0, %v2403
          %v2405 = vpop.f32.mrb[0].mxu0
          %2406 = vdwg.mxu0
          %v2407 = vsub.f32 %v2053, %v2399
          %v2408 = vsub.f32 %v2054, %v2404
          %v2409 = vand.u32 2147483647, %v2407
          %v2410 = vand.u32 2147483647, %v2408
          %v2411 = vsel %vm1124, %v2409, 0.0
          %v2412 = vsel %vm1124, %v2410, 0.0
          %v2413 = vadd.f32 %v2411, %v2412
          %2414 = vadd.xlane.f32.xlu0 %v2413
          %v2415 = vpop.xlane.xlu0 %2414
          %v2416 = vrot.slane %v2415, 4
          %v2417 = vadd.f32 %v2415, %v2416
          %v2418 = vrot.slane %v2417, 2
          %v2419 = vadd.f32 %v2417, %v2418
          %v2420 = vrot.slane %v2419, 1
          %v2421 = vadd.f32 %v2419, %v2420
          %s2422 = vtos %v2421
          %s2423 = sadd.f32 %s2238, %s2422
          %v2424 = vadd.f32 %v1865, %v2243
          %v2425 = vadd.f32 %v1866, %v2244
          %v2426 = vmul.f32 %v2060, 0.27406862
          %v2427 = vmul.f32 %v2061, 0.27406862
          %v2428 = vadd.f32 %v2424, %v2426
          %v2429 = vadd.f32 %v2425, %v2427
          %s2430 = scalar_lea.vmem [#allocation2], 64
          %v2431 = vld [vmem:[%s2430] sm:$0xff]
          %v2432 = vld [vmem:[%s2430 + $0x8] sm:$0xff]
          %v2433 = vmul.f32 %v2431, 0.123841405
          %v2434 = vmul.f32 %v2432, 0.123841405
          %v2435 = vadd.f32 %v2428, %v2433
          %v2436 = vadd.f32 %v2429, %v2434
          %s2437 = scalar_lea.vmem [#allocation2], 80
          %v2438 = vld [vmem:[%s2437] sm:$0xff]
          %v2439 = vld [vmem:[%s2437 + $0x8] sm:$0xff]
          %v2440 = vmul.f32 %v2438, 0.07511361
          %v2441 = vmul.f32 %v2439, 0.07511361
          %v2442 = vadd.f32 %v2435, %v2440
          %v2443 = vadd.f32 %v2436, %v2441
          %2444 = vmatprep.subr.mxu0 0.0
          %2445 = vmatpush1.msra.mxu0 %v2442
          %2446 = vmatprep.subr.mxu0 0.0
          %2447 = vmatpush1.msra.mxu0 %v2443
          %2448 = vmatprep.subr.mxu0 0.0
          %2449 = vmatpush1.msra.mxu0 0.0
          %2450 = vmatprep.subr.mxu0 0.0
          %2451 = vmatpush1.msra.mxu0 0.0
          %2452 = vmatprep.subr.mxu0 0.0
          %2453 = vmatpush1.msra.mxu0 0.0
          %2454 = vmatprep.subr.mxu0 0.0
          %2455 = vmatpush1.msra.mxu0 0.0
          %2456 = vmatprep.subr.mxu0 0.0
          %2457 = vmatpush1.msra.mxu0 0.0
          %2458 = vmatprep.subr.mxu0 0.0
          %2459 = vmatpush1.msra.mxu0 0.0
          %2460 = vmatprep.subr.mxu0 0.0
          %2461 = vmatpush1.msra.mxu0 0.0
          %2462 = vmatprep.subr.mxu0 0.0
          %2463 = vmatpush1.msra.mxu0 0.0
          %2464 = vmatprep.subr.mxu0 0.0
          %2465 = vmatpush1.msra.mxu0 0.0
          %2466 = vmatprep.subr.mxu0 0.0
          %2467 = vmatpush1.msra.mxu0 0.0
          %2468 = vmatprep.subr.mxu0 0.0
          %2469 = vmatpush1.msra.mxu0 0.0
          %2470 = vmatprep.subr.mxu0 0.0
          %2471 = vmatpush1.msra.mxu0 0.0
          %2472 = vmatprep.subr.mxu0 0.0
          %2473 = vmatpush1.msra.mxu0 0.0
          %2474 = vmatprep.subr.mxu0 0.0
          %2475 = vmatpush1.msra.mxu0 0.0
          %2476 = vmatprep.subr.mxu0 0.0
          %2477 = vmatpush1.msra.mxu0 0.0
          %2478 = vmatprep.subr.mxu0 0.0
          %2479 = vmatpush1.msra.mxu0 0.0
          %2480 = vmatprep.subr.mxu0 0.0
          %2481 = vmatpush1.msra.mxu0 0.0
          %2482 = vmatprep.subr.mxu0 0.0
          %2483 = vmatpush1.msra.mxu0 0.0
          %2484 = vmatprep.subr.mxu0 0.0
          %2485 = vmatpush1.msra.mxu0 0.0
          %2486 = vmatprep.subr.mxu0 0.0
          %2487 = vmatpush1.msra.mxu0 0.0
          %2488 = vmatprep.subr.mxu0 0.0
          %2489 = vmatpush1.msra.mxu0 0.0
          %2490 = vmatprep.subr.mxu0 0.0
          %2491 = vmatpush1.msra.mxu0 0.0
          %2492 = vmatprep.subr.mxu0 0.0
          %2493 = vmatpush1.msra.mxu0 0.0
          %2494 = vmatprep.subr.mxu0 0.0
          %2495 = vmatpush1.msra.mxu0 0.0
          %2496 = vmatprep.subr.mxu0 0.0
          %2497 = vmatpush1.msra.mxu0 0.0
          %2498 = vmatprep.subr.mxu0 0.0
          %2499 = vmatpush1.msra.mxu0 0.0
          %2500 = vmatprep.subr.mxu0 0.0
          %2501 = vmatpush1.msra.mxu0 0.0
          %2502 = vmatprep.subr.mxu0 0.0
          %2503 = vmatpush1.msra.mxu0 0.0
          %2504 = vmatprep.subr.mxu0 0.0
          %2505 = vmatpush1.msra.mxu0 0.0
          %2506 = vmatprep.subr.mxu0 0.0
          %2507 = vmatpush1.msra.mxu0 0.0
          %2508 = vmatprep.mubr.f32.mxu0 0.0
          %2509 = vmatmul.mubr.f32.gmra.mrb[0].mxu0 %v1870
          %v2510 = vpop.f32.mrb[0].mxu0
          %v2511 = vadd.f32 0.0, %v2510
          %v2512 = vpop.f32.mrb[0].mxu0
          %2513 = vmatprep.mubr.f32.mxu0 0.0
          %2514 = vmatmul.mubr.f32.gmra.mrb[0].mxu0 %v1873
          %v2515 = vpop.f32.mrb[0].mxu0
          %v2516 = vadd.f32 0.0, %v2515
          %v2517 = vpop.f32.mrb[0].mxu0
          %2518 = vdwg.mxu0
          %v2520 = vsel %vm1124, %v2511, 0
          %v2523 = vsel %vm1124, %v2516, 0
          %2525 = vmatprep.subr.mxu0 0.0
          %2526 = vmatpush1.msra.mxu0 %v1856
          %2527 = vmatprep.subr.mxu0 0.0
          %2528 = vmatpush1.msra.mxu0 %v1857
          %2529 = vmatprep.subr.mxu0 0.0
          %2530 = vmatpush1.msra.mxu0 0.0
          %2531 = vmatprep.subr.mxu0 0.0
          %2532 = vmatpush1.msra.mxu0 0.0
          %2533 = vmatprep.subr.mxu0 0.0
          %2534 = vmatpush1.msra.mxu0 0.0
          %2535 = vmatprep.subr.mxu0 0.0
          %2536 = vmatpush1.msra.mxu0 0.0
          %2537 = vmatprep.subr.mxu0 0.0
          %2538 = vmatpush1.msra.mxu0 0.0
          %2539 = vmatprep.subr.mxu0 0.0
          %2540 = vmatpush1.msra.mxu0 0.0
          %2541 = vmatprep.subr.mxu0 0.0
          %2542 = vmatpush1.msra.mxu0 0.0
          %2543 = vmatprep.subr.mxu0 0.0
          %2544 = vmatpush1.msra.mxu0 0.0
          %2545 = vmatprep.subr.mxu0 0.0
          %2546 = vmatpush1.msra.mxu0 0.0
          %2547 = vmatprep.subr.mxu0 0.0
          %2548 = vmatpush1.msra.mxu0 0.0
          %2549 = vmatprep.subr.mxu0 0.0
          %2550 = vmatpush1.msra.mxu0 0.0
          %2551 = vmatprep.subr.mxu0 0.0
          %2552 = vmatpush1.msra.mxu0 0.0
          %2553 = vmatprep.subr.mxu0 0.0
          %2554 = vmatpush1.msra.mxu0 0.0
          %2555 = vmatprep.subr.mxu0 0.0
          %2556 = vmatpush1.msra.mxu0 0.0
          %2557 = vmatprep.subr.mxu0 0.0
          %2558 = vmatpush1.msra.mxu0 0.0
          %2559 = vmatprep.subr.mxu0 0.0
          %2560 = vmatpush1.msra.mxu0 0.0
          %2561 = vmatprep.subr.mxu0 0.0
          %2562 = vmatpush1.msra.mxu0 0.0
          %2563 = vmatprep.subr.mxu0 0.0
          %2564 = vmatpush1.msra.mxu0 0.0
          %2565 = vmatprep.subr.mxu0 0.0
          %2566 = vmatpush1.msra.mxu0 0.0
          %2567 = vmatprep.subr.mxu0 0.0
          %2568 = vmatpush1.msra.mxu0 0.0
          %2569 = vmatprep.subr.mxu0 0.0
          %2570 = vmatpush1.msra.mxu0 0.0
          %2571 = vmatprep.subr.mxu0 0.0
          %2572 = vmatpush1.msra.mxu0 0.0
          %2573 = vmatprep.subr.mxu0 0.0
          %2574 = vmatpush1.msra.mxu0 0.0
          %2575 = vmatprep.subr.mxu0 0.0
          %2576 = vmatpush1.msra.mxu0 0.0
          %2577 = vmatprep.subr.mxu0 0.0
          %2578 = vmatpush1.msra.mxu0 0.0
          %2579 = vmatprep.subr.mxu0 0.0
          %2580 = vmatpush1.msra.mxu0 0.0
          %2581 = vmatprep.subr.mxu0 0.0
          %2582 = vmatpush1.msra.mxu0 0.0
          %2583 = vmatprep.subr.mxu0 0.0
          %2584 = vmatpush1.msra.mxu0 0.0
          %2585 = vmatprep.subr.mxu0 0.0
          %2586 = vmatpush1.msra.mxu0 0.0
          %2587 = vmatprep.subr.mxu0 0.0
          %2588 = vmatpush1.msra.mxu0 0.0
          %2589 = vmatprep.mubr.f32.mxu0 0.0
          %2590 = vmatmul.mubr.f32.gmra.mrb[0].mxu0 %v2520
          %v2591 = vpop.f32.mrb[0].mxu0
          %v2592 = vadd.f32 0.0, %v2591
          %v2593 = vpop.f32.mrb[0].mxu0
          %2594 = vmatprep.mubr.f32.mxu0 0.0
          %2595 = vmatmul.mubr.f32.gmra.mrb[0].mxu0 %v2523
          %v2596 = vpop.f32.mrb[0].mxu0
          %v2597 = vadd.f32 0.0, %v2596
          %v2598 = vpop.f32.mrb[0].mxu0
          %2599 = vdwg.mxu0
          %v2600 = vsub.f32 %v2060, %v2592
          %v2601 = vsub.f32 %v2061, %v2597
          %v2602 = vand.u32 2147483647, %v2600
          %v2603 = vand.u32 2147483647, %v2601
          %v2604 = vsel %vm1124, %v2602, 0.0
          %v2605 = vsel %vm1124, %v2603, 0.0
          %v2606 = vadd.f32 %v2604, %v2605
          %2607 = vadd.xlane.f32.xlu0 %v2606
          %v2608 = vpop.xlane.xlu0 %2607
          %v2609 = vrot.slane %v2608, 4
          %v2610 = vadd.f32 %v2608, %v2609
          %v2611 = vrot.slane %v2610, 2
          %v2612 = vadd.f32 %v2610, %v2611
          %v2613 = vrot.slane %v2612, 1
          %v2614 = vadd.f32 %v2612, %v2613
          %s2615 = vtos %v2614
          %s2616 = sadd.f32 %s2423, %s2615
          %v2617 = vmul.f32 %v1863, 0.07511361
          %v2618 = vmul.f32 %v1864, 0.07511361
          %v2619 = vadd.f32 %v2617, %v2055
          %v2620 = vadd.f32 %v2618, %v2056
          %v2621 = vadd.f32 %v2619, %v2426
          %v2622 = vadd.f32 %v2620, %v2427
          %v2623 = vmul.f32 %v2431, 0.32802135
          %v2624 = vmul.f32 %v2432, 0.32802135
          %v2625 = vadd.f32 %v2621, %v2623
          %v2626 = vadd.f32 %v2622, %v2624
          %v2627 = vmul.f32 %v2438, 0.19895501
          %v2628 = vmul.f32 %v2439, 0.19895501
          %v2629 = vadd.f32 %v2625, %v2627
          %v2630 = vadd.f32 %v2626, %v2628
          %2631 = vmatprep.subr.mxu0 0.0
          %2632 = vmatpush1.msra.mxu0 %v2629
          %2633 = vmatprep.subr.mxu0 0.0
          %2634 = vmatpush1.msra.mxu0 %v2630
          %2635 = vmatprep.subr.mxu0 0.0
          %2636 = vmatpush1.msra.mxu0 0.0
          %2637 = vmatprep.subr.mxu0 0.0
          %2638 = vmatpush1.msra.mxu0 0.0
          %2639 = vmatprep.subr.mxu0 0.0
          %2640 = vmatpush1.msra.mxu0 0.0
          %2641 = vmatprep.subr.mxu0 0.0
          %2642 = vmatpush1.msra.mxu0 0.0
          %2643 = vmatprep.subr.mxu0 0.0
          %2644 = vmatpush1.msra.mxu0 0.0
          %2645 = vmatprep.subr.mxu0 0.0
          %2646 = vmatpush1.msra.mxu0 0.0
          %2647 = vmatprep.subr.mxu0 0.0
          %2648 = vmatpush1.msra.mxu0 0.0
          %2649 = vmatprep.subr.mxu0 0.0
          %2650 = vmatpush1.msra.mxu0 0.0
          %2651 = vmatprep.subr.mxu0 0.0
          %2652 = vmatpush1.msra.mxu0 0.0
          %2653 = vmatprep.subr.mxu0 0.0
          %2654 = vmatpush1.msra.mxu0 0.0
          %2655 = vmatprep.subr.mxu0 0.0
          %2656 = vmatpush1.msra.mxu0 0.0
          %2657 = vmatprep.subr.mxu0 0.0
          %2658 = vmatpush1.msra.mxu0 0.0
          %2659 = vmatprep.subr.mxu0 0.0
          %2660 = vmatpush1.msra.mxu0 0.0
          %2661 = vmatprep.subr.mxu0 0.0
          %2662 = vmatpush1.msra.mxu0 0.0
          %2663 = vmatprep.subr.mxu0 0.0
          %2664 = vmatpush1.msra.mxu0 0.0
          %2665 = vmatprep.subr.mxu0 0.0
          %2666 = vmatpush1.msra.mxu0 0.0
          %2667 = vmatprep.subr.mxu0 0.0
          %2668 = vmatpush1.msra.mxu0 0.0
          %2669 = vmatprep.subr.mxu0 0.0
          %2670 = vmatpush1.msra.mxu0 0.0
          %2671 = vmatprep.subr.mxu0 0.0
          %2672 = vmatpush1.msra.mxu0 0.0
          %2673 = vmatprep.subr.mxu0 0.0
          %2674 = vmatpush1.msra.mxu0 0.0
          %2675 = vmatprep.subr.mxu0 0.0
          %2676 = vmatpush1.msra.mxu0 0.0
          %2677 = vmatprep.subr.mxu0 0.0
          %2678 = vmatpush1.msra.mxu0 0.0
          %2679 = vmatprep.subr.mxu0 0.0
          %2680 = vmatpush1.msra.mxu0 0.0
          %2681 = vmatprep.subr.mxu0 0.0
          %2682 = vmatpush1.msra.mxu0 0.0
          %2683 = vmatprep.subr.mxu0 0.0
          %2684 = vmatpush1.msra.mxu0 0.0
          %2685 = vmatprep.subr.mxu0 0.0
          %2686 = vmatpush1.msra.mxu0 0.0
          %2687 = vmatprep.subr.mxu0 0.0
          %2688 = vmatpush1.msra.mxu0 0.0
          %2689 = vmatprep.subr.mxu0 0.0
          %2690 = vmatpush1.msra.mxu0 0.0
          %2691 = vmatprep.subr.mxu0 0.0
          %2692 = vmatpush1.msra.mxu0 0.0
          %2693 = vmatprep.subr.mxu0 0.0
          %2694 = vmatpush1.msra.mxu0 0.0
          %2695 = vmatprep.mubr.f32.mxu0 0.0
          %2696 = vmatmul.mubr.f32.gmra.mrb[0].mxu0 %v1870
          %v2697 = vpop.f32.mrb[0].mxu0
          %v2698 = vadd.f32 0.0, %v2697
          %v2699 = vpop.f32.mrb[0].mxu0
          %2700 = vmatprep.mubr.f32.mxu0 0.0
          %2701 = vmatmul.mubr.f32.gmra.mrb[0].mxu0 %v1873
          %v2702 = vpop.f32.mrb[0].mxu0
          %v2703 = vadd.f32 0.0, %v2702
          %v2704 = vpop.f32.mrb[0].mxu0
          %2705 = vdwg.mxu0
          %v2707 = vsel %vm1124, %v2698, 0
          %v2710 = vsel %vm1124, %v2703, 0
          %2712 = vmatprep.subr.mxu0 0.0
          %2713 = vmatpush1.msra.mxu0 %v1856
          %2714 = vmatprep.subr.mxu0 0.0
          %2715 = vmatpush1.msra.mxu0 %v1857
          %2716 = vmatprep.subr.mxu0 0.0
          %2717 = vmatpush1.msra.mxu0 0.0
          %2718 = vmatprep.subr.mxu0 0.0
          %2719 = vmatpush1.msra.mxu0 0.0
          %2720 = vmatprep.subr.mxu0 0.0
          %2721 = vmatpush1.msra.mxu0 0.0
          %2722 = vmatprep.subr.mxu0 0.0
          %2723 = vmatpush1.msra.mxu0 0.0
          %2724 = vmatprep.subr.mxu0 0.0
          %2725 = vmatpush1.msra.mxu0 0.0
          %2726 = vmatprep.subr.mxu0 0.0
          %2727 = vmatpush1.msra.mxu0 0.0
          %2728 = vmatprep.subr.mxu0 0.0
          %2729 = vmatpush1.msra.mxu0 0.0
          %2730 = vmatprep.subr.mxu0 0.0
          %2731 = vmatpush1.msra.mxu0 0.0
          %2732 = vmatprep.subr.mxu0 0.0
          %2733 = vmatpush1.msra.mxu0 0.0
          %2734 = vmatprep.subr.mxu0 0.0
          %2735 = vmatpush1.msra.mxu0 0.0
          %2736 = vmatprep.subr.mxu0 0.0
          %2737 = vmatpush1.msra.mxu0 0.0
          %2738 = vmatprep.subr.mxu0 0.0
          %2739 = vmatpush1.msra.mxu0 0.0
          %2740 = vmatprep.subr.mxu0 0.0
          %2741 = vmatpush1.msra.mxu0 0.0
          %2742 = vmatprep.subr.mxu0 0.0
          %2743 = vmatpush1.msra.mxu0 0.0
          %2744 = vmatprep.subr.mxu0 0.0
          %2745 = vmatpush1.msra.mxu0 0.0
          %2746 = vmatprep.subr.mxu0 0.0
          %2747 = vmatpush1.msra.mxu0 0.0
          %2748 = vmatprep.subr.mxu0 0.0
          %2749 = vmatpush1.msra.mxu0 0.0
          %2750 = vmatprep.subr.mxu0 0.0
          %2751 = vmatpush1.msra.mxu0 0.0
          %2752 = vmatprep.subr.mxu0 0.0
          %2753 = vmatpush1.msra.mxu0 0.0
          %2754 = vmatprep.subr.mxu0 0.0
          %2755 = vmatpush1.msra.mxu0 0.0
          %2756 = vmatprep.subr.mxu0 0.0
          %2757 = vmatpush1.msra.mxu0 0.0
          %2758 = vmatprep.subr.mxu0 0.0
          %2759 = vmatpush1.msra.mxu0 0.0
          %2760 = vmatprep.subr.mxu0 0.0
          %2761 = vmatpush1.msra.mxu0 0.0
          %2762 = vmatprep.subr.mxu0 0.0
          %2763 = vmatpush1.msra.mxu0 0.0
          %2764 = vmatprep.subr.mxu0 0.0
          %2765 = vmatpush1.msra.mxu0 0.0
          %2766 = vmatprep.subr.mxu0 0.0
          %2767 = vmatpush1.msra.mxu0 0.0
          %2768 = vmatprep.subr.mxu0 0.0
          %2769 = vmatpush1.msra.mxu0 0.0
          %2770 = vmatprep.subr.mxu0 0.0
          %2771 = vmatpush1.msra.mxu0 0.0
          %2772 = vmatprep.subr.mxu0 0.0
          %2773 = vmatpush1.msra.mxu0 0.0
          %2774 = vmatprep.subr.mxu0 0.0
          %2775 = vmatpush1.msra.mxu0 0.0
          %2776 = vmatprep.mubr.f32.mxu0 0.0
          %2777 = vmatmul.mubr.f32.gmra.mrb[0].mxu0 %v2707
          %v2778 = vpop.f32.mrb[0].mxu0
          %v2779 = vadd.f32 0.0, %v2778
          %v2780 = vpop.f32.mrb[0].mxu0
          %2781 = vmatprep.mubr.f32.mxu0 0.0
          %2782 = vmatmul.mubr.f32.gmra.mrb[0].mxu0 %v2710
          %v2783 = vpop.f32.mrb[0].mxu0
          %v2784 = vadd.f32 0.0, %v2783
          %v2785 = vpop.f32.mrb[0].mxu0
          %2786 = vdwg.mxu0
          %v2787 = vsub.f32 %v2431, %v2779
          %v2788 = vsub.f32 %v2432, %v2784
          %v2789 = vand.u32 2147483647, %v2787
          %v2790 = vand.u32 2147483647, %v2788
          %v2791 = vsel %vm1124, %v2789, 0.0
          %v2792 = vsel %vm1124, %v2790, 0.0
          %v2793 = vadd.f32 %v2791, %v2792
          %2794 = vadd.xlane.f32.xlu0 %v2793
          %v2795 = vpop.xlane.xlu0 %2794
          %v2796 = vrot.slane %v2795, 4
          %v2797 = vadd.f32 %v2795, %v2796
          %v2798 = vrot.slane %v2797, 2
          %v2799 = vadd.f32 %v2797, %v2798
          %v2800 = vrot.slane %v2799, 1
          %v2801 = vadd.f32 %v2799, %v2800
          %s2802 = vtos %v2801
          %s2803 = sadd.f32 %s2616, %s2802
          %v2804 = vadd.f32 %v2247, %v2623
          %v2805 = vadd.f32 %v2248, %v2624
          %v2806 = vmul.f32 %v2438, 0.27406862
          %v2807 = vmul.f32 %v2439, 0.27406862
          %v2808 = vadd.f32 %v2804, %v2806
          %v2809 = vadd.f32 %v2805, %v2807
          %s2810 = scalar_lea.vmem [#allocation2], 96
          %v2811 = vld [vmem:[%s2810] sm:$0xff]
          %v2812 = vld [vmem:[%s2810 + $0x8] sm:$0xff]
          %v2813 = vmul.f32 %v2811, 0.123841405
          %v2814 = vmul.f32 %v2812, 0.123841405
          %v2815 = vadd.f32 %v2808, %v2813
          %v2816 = vadd.f32 %v2809, %v2814
          %s2817 = scalar_lea.vmem [#allocation2], 112
          %v2818 = vld [vmem:[%s2817] sm:$0xff]
          %v2819 = vld [vmem:[%s2817 + $0x8] sm:$0xff]
          %v2820 = vmul.f32 %v2818, 0.07511361
          %v2821 = vmul.f32 %v2819, 0.07511361
          %v2822 = vadd.f32 %v2815, %v2820
          %v2823 = vadd.f32 %v2816, %v2821
          %2824 = vmatprep.subr.mxu0 0.0
          %2825 = vmatpush1.msra.mxu0 %v2822
          %2826 = vmatprep.subr.mxu0 0.0
          %2827 = vmatpush1.msra.mxu0 %v2823
          %2828 = vmatprep.subr.mxu0 0.0
          %2829 = vmatpush1.msra.mxu0 0.0
          %2830 = vmatprep.subr.mxu0 0.0
          %2831 = vmatpush1.msra.mxu0 0.0
          %2832 = vmatprep.subr.mxu0 0.0
          %2833 = vmatpush1.msra.mxu0 0.0
          %2834 = vmatprep.subr.mxu0 0.0
          %2835 = vmatpush1.msra.mxu0 0.0
          %2836 = vmatprep.subr.mxu0 0.0
          %2837 = vmatpush1.msra.mxu0 0.0
          %2838 = vmatprep.subr.mxu0 0.0
          %2839 = vmatpush1.msra.mxu0 0.0
          %2840 = vmatprep.subr.mxu0 0.0
          %2841 = vmatpush1.msra.mxu0 0.0
          %2842 = vmatprep.subr.mxu0 0.0
          %2843 = vmatpush1.msra.mxu0 0.0
          %2844 = vmatprep.subr.mxu0 0.0
          %2845 = vmatpush1.msra.mxu0 0.0
          %2846 = vmatprep.subr.mxu0 0.0
          %2847 = vmatpush1.msra.mxu0 0.0
          %2848 = vmatprep.subr.mxu0 0.0
          %2849 = vmatpush1.msra.mxu0 0.0
          %2850 = vmatprep.subr.mxu0 0.0
          %2851 = vmatpush1.msra.mxu0 0.0
          %2852 = vmatprep.subr.mxu0 0.0
          %2853 = vmatpush1.msra.mxu0 0.0
          %2854 = vmatprep.subr.mxu0 0.0
          %2855 = vmatpush1.msra.mxu0 0.0
          %2856 = vmatprep.subr.mxu0 0.0
          %2857 = vmatpush1.msra.mxu0 0.0
          %2858 = vmatprep.subr.mxu0 0.0
          %2859 = vmatpush1.msra.mxu0 0.0
          %2860 = vmatprep.subr.mxu0 0.0
          %2861 = vmatpush1.msra.mxu0 0.0
          %2862 = vmatprep.subr.mxu0 0.0
          %2863 = vmatpush1.msra.mxu0 0.0
          %2864 = vmatprep.subr.mxu0 0.0
          %2865 = vmatpush1.msra.mxu0 0.0
          %2866 = vmatprep.subr.mxu0 0.0
          %2867 = vmatpush1.msra.mxu0 0.0
          %2868 = vmatprep.subr.mxu0 0.0
          %2869 = vmatpush1.msra.mxu0 0.0
          %2870 = vmatprep.subr.mxu0 0.0
          %2871 = vmatpush1.msra.mxu0 0.0
          %2872 = vmatprep.subr.mxu0 0.0
          %2873 = vmatpush1.msra.mxu0 0.0
          %2874 = vmatprep.subr.mxu0 0.0
          %2875 = vmatpush1.msra.mxu0 0.0
          %2876 = vmatprep.subr.mxu0 0.0
          %2877 = vmatpush1.msra.mxu0 0.0
          %2878 = vmatprep.subr.mxu0 0.0
          %2879 = vmatpush1.msra.mxu0 0.0
          %2880 = vmatprep.subr.mxu0 0.0
          %2881 = vmatpush1.msra.mxu0 0.0
          %2882 = vmatprep.subr.mxu0 0.0
          %2883 = vmatpush1.msra.mxu0 0.0
          %2884 = vmatprep.subr.mxu0 0.0
          %2885 = vmatpush1.msra.mxu0 0.0
          %2886 = vmatprep.subr.mxu0 0.0
          %2887 = vmatpush1.msra.mxu0 0.0
          %2888 = vmatprep.mubr.f32.mxu0 0.0
          %2889 = vmatmul.mubr.f32.gmra.mrb[0].mxu0 %v1870
          %v2890 = vpop.f32.mrb[0].mxu0
          %v2891 = vadd.f32 0.0, %v2890
          %v2892 = vpop.f32.mrb[0].mxu0
          %2893 = vmatprep.mubr.f32.mxu0 0.0
          %2894 = vmatmul.mubr.f32.gmra.mrb[0].mxu0 %v1873
          %v2895 = vpop.f32.mrb[0].mxu0
          %v2896 = vadd.f32 0.0, %v2895
          %v2897 = vpop.f32.mrb[0].mxu0
          %2898 = vdwg.mxu0
          %v2900 = vsel %vm1124, %v2891, 0
          %v2903 = vsel %vm1124, %v2896, 0
          %2905 = vmatprep.subr.mxu0 0.0
          %2906 = vmatpush1.msra.mxu0 %v1856
          %2907 = vmatprep.subr.mxu0 0.0
          %2908 = vmatpush1.msra.mxu0 %v1857
          %2909 = vmatprep.subr.mxu0 0.0
          %2910 = vmatpush1.msra.mxu0 0.0
          %2911 = vmatprep.subr.mxu0 0.0
          %2912 = vmatpush1.msra.mxu0 0.0
          %2913 = vmatprep.subr.mxu0 0.0
          %2914 = vmatpush1.msra.mxu0 0.0
          %2915 = vmatprep.subr.mxu0 0.0
          %2916 = vmatpush1.msra.mxu0 0.0
          %2917 = vmatprep.subr.mxu0 0.0
          %2918 = vmatpush1.msra.mxu0 0.0
          %2919 = vmatprep.subr.mxu0 0.0
          %2920 = vmatpush1.msra.mxu0 0.0
          %2921 = vmatprep.subr.mxu0 0.0
          %2922 = vmatpush1.msra.mxu0 0.0
          %2923 = vmatprep.subr.mxu0 0.0
          %2924 = vmatpush1.msra.mxu0 0.0
          %2925 = vmatprep.subr.mxu0 0.0
          %2926 = vmatpush1.msra.mxu0 0.0
          %2927 = vmatprep.subr.mxu0 0.0
          %2928 = vmatpush1.msra.mxu0 0.0
          %2929 = vmatprep.subr.mxu0 0.0
          %2930 = vmatpush1.msra.mxu0 0.0
          %2931 = vmatprep.subr.mxu0 0.0
          %2932 = vmatpush1.msra.mxu0 0.0
          %2933 = vmatprep.subr.mxu0 0.0
          %2934 = vmatpush1.msra.mxu0 0.0
          %2935 = vmatprep.subr.mxu0 0.0
          %2936 = vmatpush1.msra.mxu0 0.0
          %2937 = vmatprep.subr.mxu0 0.0
          %2938 = vmatpush1.msra.mxu0 0.0
          %2939 = vmatprep.subr.mxu0 0.0
          %2940 = vmatpush1.msra.mxu0 0.0
          %2941 = vmatprep.subr.mxu0 0.0
          %2942 = vmatpush1.msra.mxu0 0.0
          %2943 = vmatprep.subr.mxu0 0.0
          %2944 = vmatpush1.msra.mxu0 0.0
          %2945 = vmatprep.subr.mxu0 0.0
          %2946 = vmatpush1.msra.mxu0 0.0
          %2947 = vmatprep.subr.mxu0 0.0
          %2948 = vmatpush1.msra.mxu0 0.0
          %2949 = vmatprep.subr.mxu0 0.0
          %2950 = vmatpush1.msra.mxu0 0.0
          %2951 = vmatprep.subr.mxu0 0.0
          %2952 = vmatpush1.msra.mxu0 0.0
          %2953 = vmatprep.subr.mxu0 0.0
          %2954 = vmatpush1.msra.mxu0 0.0
          %2955 = vmatprep.subr.mxu0 0.0
          %2956 = vmatpush1.msra.mxu0 0.0
          %2957 = vmatprep.subr.mxu0 0.0
          %2958 = vmatpush1.msra.mxu0 0.0
          %2959 = vmatprep.subr.mxu0 0.0
          %2960 = vmatpush1.msra.mxu0 0.0
          %2961 = vmatprep.subr.mxu0 0.0
          %2962 = vmatpush1.msra.mxu0 0.0
          %2963 = vmatprep.subr.mxu0 0.0
          %2964 = vmatpush1.msra.mxu0 0.0
          %2965 = vmatprep.subr.mxu0 0.0
          %2966 = vmatpush1.msra.mxu0 0.0
          %2967 = vmatprep.subr.mxu0 0.0
          %2968 = vmatpush1.msra.mxu0 0.0
          %2969 = vmatprep.mubr.f32.mxu0 0.0
          %2970 = vmatmul.mubr.f32.gmra.mrb[0].mxu0 %v2900
          %v2971 = vpop.f32.mrb[0].mxu0
          %v2972 = vadd.f32 0.0, %v2971
          %v2973 = vpop.f32.mrb[0].mxu0
          %2974 = vmatprep.mubr.f32.mxu0 0.0
          %2975 = vmatmul.mubr.f32.gmra.mrb[0].mxu0 %v2903
          %v2976 = vpop.f32.mrb[0].mxu0
          %v2977 = vadd.f32 0.0, %v2976
          %v2978 = vpop.f32.mrb[0].mxu0
          %2979 = vdwg.mxu0
          %v2980 = vsub.f32 %v2438, %v2972
          %v2981 = vsub.f32 %v2439, %v2977
          %v2982 = vand.u32 2147483647, %v2980
          %v2983 = vand.u32 2147483647, %v2981
          %v2984 = vsel %vm1124, %v2982, 0.0
          %v2985 = vsel %vm1124, %v2983, 0.0
          %v2986 = vadd.f32 %v2984, %v2985
          %2987 = vadd.xlane.f32.xlu0 %v2986
          %v2988 = vpop.xlane.xlu0 %2987
          %v2989 = vrot.slane %v2988, 4
          %v2990 = vadd.f32 %v2988, %v2989
          %v2991 = vrot.slane %v2990, 2
          %v2992 = vadd.f32 %v2990, %v2991
          %v2993 = vrot.slane %v2992, 1
          %v2994 = vadd.f32 %v2992, %v2993
          %s2995 = vtos %v2994
          %s2996 = sadd.f32 %s2803, %s2995
          %v2997 = vadd.f32 %v2062, %v2433
          %v2998 = vadd.f32 %v2063, %v2434
          %v2999 = vadd.f32 %v2997, %v2806
          %v3000 = vadd.f32 %v2998, %v2807
          %v3001 = vmul.f32 %v2811, 0.32802135
          %v3002 = vmul.f32 %v2812, 0.32802135
          %v3003 = vadd.f32 %v2999, %v3001
          %v3004 = vadd.f32 %v3000, %v3002
          %v3005 = vmul.f32 %v2818, 0.19895501
          %v3006 = vmul.f32 %v2819, 0.19895501
          %v3007 = vadd.f32 %v3003, %v3005
          %v3008 = vadd.f32 %v3004, %v3006
          %3009 = vmatprep.subr.mxu0 0.0
          %3010 = vmatpush1.msra.mxu0 %v3007
          %3011 = vmatprep.subr.mxu0 0.0
          %3012 = vmatpush1.msra.mxu0 %v3008
          %3013 = vmatprep.subr.mxu0 0.0
          %3014 = vmatpush1.msra.mxu0 0.0
          %3015 = vmatprep.subr.mxu0 0.0
          %3016 = vmatpush1.msra.mxu0 0.0
          %3017 = vmatprep.subr.mxu0 0.0
          %3018 = vmatpush1.msra.mxu0 0.0
          %3019 = vmatprep.subr.mxu0 0.0
          %3020 = vmatpush1.msra.mxu0 0.0
          %3021 = vmatprep.subr.mxu0 0.0
          %3022 = vmatpush1.msra.mxu0 0.0
          %3023 = vmatprep.subr.mxu0 0.0
          %3024 = vmatpush1.msra.mxu0 0.0
          %3025 = vmatprep.subr.mxu0 0.0
          %3026 = vmatpush1.msra.mxu0 0.0
          %3027 = vmatprep.subr.mxu0 0.0
          %3028 = vmatpush1.msra.mxu0 0.0
          %3029 = vmatprep.subr.mxu0 0.0
          %3030 = vmatpush1.msra.mxu0 0.0
          %3031 = vmatprep.subr.mxu0 0.0
          %3032 = vmatpush1.msra.mxu0 0.0
          %3033 = vmatprep.subr.mxu0 0.0
          %3034 = vmatpush1.msra.mxu0 0.0
          %3035 = vmatprep.subr.mxu0 0.0
          %3036 = vmatpush1.msra.mxu0 0.0
          %3037 = vmatprep.subr.mxu0 0.0
          %3038 = vmatpush1.msra.mxu0 0.0
          %3039 = vmatprep.subr.mxu0 0.0
          %3040 = vmatpush1.msra.mxu0 0.0
          %3041 = vmatprep.subr.mxu0 0.0
          %3042 = vmatpush1.msra.mxu0 0.0
          %3043 = vmatprep.subr.mxu0 0.0
          %3044 = vmatpush1.msra.mxu0 0.0
          %3045 = vmatprep.subr.mxu0 0.0
          %3046 = vmatpush1.msra.mxu0 0.0
          %3047 = vmatprep.subr.mxu0 0.0
          %3048 = vmatpush1.msra.mxu0 0.0
          %3049 = vmatprep.subr.mxu0 0.0
          %3050 = vmatpush1.msra.mxu0 0.0
          %3051 = vmatprep.subr.mxu0 0.0
          %3052 = vmatpush1.msra.mxu0 0.0
          %3053 = vmatprep.subr.mxu0 0.0
          %3054 = vmatpush1.msra.mxu0 0.0
          %3055 = vmatprep.subr.mxu0 0.0
          %3056 = vmatpush1.msra.mxu0 0.0
          %3057 = vmatprep.subr.mxu0 0.0
          %3058 = vmatpush1.msra.mxu0 0.0
          %3059 = vmatprep.subr.mxu0 0.0
          %3060 = vmatpush1.msra.mxu0 0.0
          %3061 = vmatprep.subr.mxu0 0.0
          %3062 = vmatpush1.msra.mxu0 0.0
          %3063 = vmatprep.subr.mxu0 0.0
          %3064 = vmatpush1.msra.mxu0 0.0
          %3065 = vmatprep.subr.mxu0 0.0
          %3066 = vmatpush1.msra.mxu0 0.0
          %3067 = vmatprep.subr.mxu0 0.0
          %3068 = vmatpush1.msra.mxu0 0.0
          %3069 = vmatprep.subr.mxu0 0.0
          %3070 = vmatpush1.msra.mxu0 0.0
          %3071 = vmatprep.subr.mxu0 0.0
          %3072 = vmatpush1.msra.mxu0 0.0
          %3073 = vmatprep.mubr.f32.mxu0 0.0
          %3074 = vmatmul.mubr.f32.gmra.mrb[0].mxu0 %v1870
          %v3075 = vpop.f32.mrb[0].mxu0
          %v3076 = vadd.f32 0.0, %v3075
          %v3077 = vpop.f32.mrb[0].mxu0
          %3078 = vmatprep.mubr.f32.mxu0 0.0
          %3079 = vmatmul.mubr.f32.gmra.mrb[0].mxu0 %v1873
          %v3080 = vpop.f32.mrb[0].mxu0
          %v3081 = vadd.f32 0.0, %v3080
          %v3082 = vpop.f32.mrb[0].mxu0
          %3083 = vdwg.mxu0
          %v3085 = vsel %vm1124, %v3076, 0
          %v3088 = vsel %vm1124, %v3081, 0
          %3090 = vmatprep.subr.mxu0 0.0
          %3091 = vmatpush1.msra.mxu0 %v1856
          %3092 = vmatprep.subr.mxu0 0.0
          %3093 = vmatpush1.msra.mxu0 %v1857
          %3094 = vmatprep.subr.mxu0 0.0
          %3095 = vmatpush1.msra.mxu0 0.0
          %3096 = vmatprep.subr.mxu0 0.0
          %3097 = vmatpush1.msra.mxu0 0.0
          %3098 = vmatprep.subr.mxu0 0.0
          %3099 = vmatpush1.msra.mxu0 0.0
          %3100 = vmatprep.subr.mxu0 0.0
          %3101 = vmatpush1.msra.mxu0 0.0
          %3102 = vmatprep.subr.mxu0 0.0
          %3103 = vmatpush1.msra.mxu0 0.0
          %3104 = vmatprep.subr.mxu0 0.0
          %3105 = vmatpush1.msra.mxu0 0.0
          %3106 = vmatprep.subr.mxu0 0.0
          %3107 = vmatpush1.msra.mxu0 0.0
          %3108 = vmatprep.subr.mxu0 0.0
          %3109 = vmatpush1.msra.mxu0 0.0
          %3110 = vmatprep.subr.mxu0 0.0
          %3111 = vmatpush1.msra.mxu0 0.0
          %3112 = vmatprep.subr.mxu0 0.0
          %3113 = vmatpush1.msra.mxu0 0.0
          %3114 = vmatprep.subr.mxu0 0.0
          %3115 = vmatpush1.msra.mxu0 0.0
          %3116 = vmatprep.subr.mxu0 0.0
          %3117 = vmatpush1.msra.mxu0 0.0
          %3118 = vmatprep.subr.mxu0 0.0
          %3119 = vmatpush1.msra.mxu0 0.0
          %3120 = vmatprep.subr.mxu0 0.0
          %3121 = vmatpush1.msra.mxu0 0.0
          %3122 = vmatprep.subr.mxu0 0.0
          %3123 = vmatpush1.msra.mxu0 0.0
          %3124 = vmatprep.subr.mxu0 0.0
          %3125 = vmatpush1.msra.mxu0 0.0
          %3126 = vmatprep.subr.mxu0 0.0
          %3127 = vmatpush1.msra.mxu0 0.0
          %3128 = vmatprep.subr.mxu0 0.0
          %3129 = vmatpush1.msra.mxu0 0.0
          %3130 = vmatprep.subr.mxu0 0.0
          %3131 = vmatpush1.msra.mxu0 0.0
          %3132 = vmatprep.subr.mxu0 0.0
          %3133 = vmatpush1.msra.mxu0 0.0
          %3134 = vmatprep.subr.mxu0 0.0
          %3135 = vmatpush1.msra.mxu0 0.0
          %3136 = vmatprep.subr.mxu0 0.0
          %3137 = vmatpush1.msra.mxu0 0.0
          %3138 = vmatprep.subr.mxu0 0.0
          %3139 = vmatpush1.msra.mxu0 0.0
          %3140 = vmatprep.subr.mxu0 0.0
          %3141 = vmatpush1.msra.mxu0 0.0
          %3142 = vmatprep.subr.mxu0 0.0
          %3143 = vmatpush1.msra.mxu0 0.0
          %3144 = vmatprep.subr.mxu0 0.0
          %3145 = vmatpush1.msra.mxu0 0.0
          %3146 = vmatprep.subr.mxu0 0.0
          %3147 = vmatpush1.msra.mxu0 0.0
          %3148 = vmatprep.subr.mxu0 0.0
          %3149 = vmatpush1.msra.mxu0 0.0
          %3150 = vmatprep.subr.mxu0 0.0
          %3151 = vmatpush1.msra.mxu0 0.0
          %3152 = vmatprep.subr.mxu0 0.0
          %3153 = vmatpush1.msra.mxu0 0.0
          %3154 = vmatprep.mubr.f32.mxu0 0.0
          %3155 = vmatmul.mubr.f32.gmra.mrb[0].mxu0 %v3085
          %v3156 = vpop.f32.mrb[0].mxu0
          %v3157 = vadd.f32 0.0, %v3156
          %v3158 = vpop.f32.mrb[0].mxu0
          %3159 = vmatprep.mubr.f32.mxu0 0.0
          %3160 = vmatmul.mubr.f32.gmra.mrb[0].mxu0 %v3088
          %v3161 = vpop.f32.mrb[0].mxu0
          %v3162 = vadd.f32 0.0, %v3161
          %v3163 = vpop.f32.mrb[0].mxu0
          %3164 = vdwg.mxu0
          %v3165 = vsub.f32 %v2811, %v3157
          %v3166 = vsub.f32 %v2812, %v3162
          %v3167 = vand.u32 2147483647, %v3165
          %v3168 = vand.u32 2147483647, %v3166
          %v3169 = vsel %vm1124, %v3167, 0.0
          %v3170 = vsel %vm1124, %v3168, 0.0
          %v3171 = vadd.f32 %v3169, %v3170
          %3172 = vadd.xlane.f32.xlu0 %v3171
          %v3173 = vpop.xlane.xlu0 %3172
          %v3174 = vrot.slane %v3173, 4
          %v3175 = vadd.f32 %v3173, %v3174
          %v3176 = vrot.slane %v3175, 2
          %v3177 = vadd.f32 %v3175, %v3176
          %v3178 = vrot.slane %v3177, 1
          %v3179 = vadd.f32 %v3177, %v3178
          %s3180 = vtos %v3179
          %s3181 = sadd.f32 %s2996, %s3180
          %v3182 = vadd.f32 %v2627, %v3001
          %v3183 = vadd.f32 %v2628, %v3002
          %v3184 = vmul.f32 %v2818, 0.27406862
          %v3185 = vmul.f32 %v2819, 0.27406862
          %v3186 = vadd.f32 %v3182, %v3184
          %v3187 = vadd.f32 %v3183, %v3185
          %s3188 = scalar_lea.vmem [#allocation2], 128
          %v3189 = vld [vmem:[%s3188] sm:$0xff]
          %v3190 = vld [vmem:[%s3188 + $0x8] sm:$0xff]
          %v3191 = vmul.f32 %v3189, 0.123841405
          %v3192 = vmul.f32 %v3190, 0.123841405
          %v3193 = vadd.f32 %v3186, %v3191
          %v3194 = vadd.f32 %v3187, %v3192
          %s3195 = scalar_lea.vmem [#allocation2], 144
          %v3196 = vld [vmem:[%s3195] sm:$0xff]
          %v3197 = vld [vmem:[%s3195 + $0x8] sm:$0xff]
          %v3198 = vmul.f32 %v3196, 0.07511361
          %v3199 = vmul.f32 %v3197, 0.07511361
          %v3200 = vadd.f32 %v3193, %v3198
          %v3201 = vadd.f32 %v3194, %v3199
          %3202 = vmatprep.subr.mxu0 0.0
          %3203 = vmatpush1.msra.mxu0 %v3200
          %3204 = vmatprep.subr.mxu0 0.0
          %3205 = vmatpush1.msra.mxu0 %v3201
          %3206 = vmatprep.subr.mxu0 0.0
          %3207 = vmatpush1.msra.mxu0 0.0
          %3208 = vmatprep.subr.mxu0 0.0
          %3209 = vmatpush1.msra.mxu0 0.0
          %3210 = vmatprep.subr.mxu0 0.0
          %3211 = vmatpush1.msra.mxu0 0.0
          %3212 = vmatprep.subr.mxu0 0.0
          %3213 = vmatpush1.msra.mxu0 0.0
          %3214 = vmatprep.subr.mxu0 0.0
          %3215 = vmatpush1.msra.mxu0 0.0
          %3216 = vmatprep.subr.mxu0 0.0
          %3217 = vmatpush1.msra.mxu0 0.0
          %3218 = vmatprep.subr.mxu0 0.0
          %3219 = vmatpush1.msra.mxu0 0.0
          %3220 = vmatprep.subr.mxu0 0.0
          %3221 = vmatpush1.msra.mxu0 0.0
          %3222 = vmatprep.subr.mxu0 0.0
          %3223 = vmatpush1.msra.mxu0 0.0
          %3224 = vmatprep.subr.mxu0 0.0
          %3225 = vmatpush1.msra.mxu0 0.0
          %3226 = vmatprep.subr.mxu0 0.0
          %3227 = vmatpush1.msra.mxu0 0.0
          %3228 = vmatprep.subr.mxu0 0.0
          %3229 = vmatpush1.msra.mxu0 0.0
          %3230 = vmatprep.subr.mxu0 0.0
          %3231 = vmatpush1.msra.mxu0 0.0
          %3232 = vmatprep.subr.mxu0 0.0
          %3233 = vmatpush1.msra.mxu0 0.0
          %3234 = vmatprep.subr.mxu0 0.0
          %3235 = vmatpush1.msra.mxu0 0.0
          %3236 = vmatprep.subr.mxu0 0.0
          %3237 = vmatpush1.msra.mxu0 0.0
          %3238 = vmatprep.subr.mxu0 0.0
          %3239 = vmatpush1.msra.mxu0 0.0
          %3240 = vmatprep.subr.mxu0 0.0
          %3241 = vmatpush1.msra.mxu0 0.0
          %3242 = vmatprep.subr.mxu0 0.0
          %3243 = vmatpush1.msra.mxu0 0.0
          %3244 = vmatprep.subr.mxu0 0.0
          %3245 = vmatpush1.msra.mxu0 0.0
          %3246 = vmatprep.subr.mxu0 0.0
          %3247 = vmatpush1.msra.mxu0 0.0
          %3248 = vmatprep.subr.mxu0 0.0
          %3249 = vmatpush1.msra.mxu0 0.0
          %3250 = vmatprep.subr.mxu0 0.0
          %3251 = vmatpush1.msra.mxu0 0.0
          %3252 = vmatprep.subr.mxu0 0.0
          %3253 = vmatpush1.msra.mxu0 0.0
          %3254 = vmatprep.subr.mxu0 0.0
          %3255 = vmatpush1.msra.mxu0 0.0
          %3256 = vmatprep.subr.mxu0 0.0
          %3257 = vmatpush1.msra.mxu0 0.0
          %3258 = vmatprep.subr.mxu0 0.0
          %3259 = vmatpush1.msra.mxu0 0.0
          %3260 = vmatprep.subr.mxu0 0.0
          %3261 = vmatpush1.msra.mxu0 0.0
          %3262 = vmatprep.subr.mxu0 0.0
          %3263 = vmatpush1.msra.mxu0 0.0
          %3264 = vmatprep.subr.mxu0 0.0
          %3265 = vmatpush1.msra.mxu0 0.0
          %3266 = vmatprep.mubr.f32.mxu0 0.0
          %3267 = vmatmul.mubr.f32.gmra.mrb[0].mxu0 %v1870
          %v3268 = vpop.f32.mrb[0].mxu0
          %v3269 = vadd.f32 0.0, %v3268
          %v3270 = vpop.f32.mrb[0].mxu0
          %3271 = vmatprep.mubr.f32.mxu0 0.0
          %3272 = vmatmul.mubr.f32.gmra.mrb[0].mxu0 %v1873
          %v3273 = vpop.f32.mrb[0].mxu0
          %v3274 = vadd.f32 0.0, %v3273
          %v3275 = vpop.f32.mrb[0].mxu0
          %3276 = vdwg.mxu0
          %v3278 = vsel %vm1124, %v3269, 0
          %v3281 = vsel %vm1124, %v3274, 0
          %3283 = vmatprep.subr.mxu0 0.0
          %3284 = vmatpush1.msra.mxu0 %v1856
          %3285 = vmatprep.subr.mxu0 0.0
          %3286 = vmatpush1.msra.mxu0 %v1857
          %3287 = vmatprep.subr.mxu0 0.0
          %3288 = vmatpush1.msra.mxu0 0.0
          %3289 = vmatprep.subr.mxu0 0.0
          %3290 = vmatpush1.msra.mxu0 0.0
          %3291 = vmatprep.subr.mxu0 0.0
          %3292 = vmatpush1.msra.mxu0 0.0
          %3293 = vmatprep.subr.mxu0 0.0
          %3294 = vmatpush1.msra.mxu0 0.0
          %3295 = vmatprep.subr.mxu0 0.0
          %3296 = vmatpush1.msra.mxu0 0.0
          %3297 = vmatprep.subr.mxu0 0.0
          %3298 = vmatpush1.msra.mxu0 0.0
          %3299 = vmatprep.subr.mxu0 0.0
          %3300 = vmatpush1.msra.mxu0 0.0
          %3301 = vmatprep.subr.mxu0 0.0
          %3302 = vmatpush1.msra.mxu0 0.0
          %3303 = vmatprep.subr.mxu0 0.0
          %3304 = vmatpush1.msra.mxu0 0.0
          %3305 = vmatprep.subr.mxu0 0.0
          %3306 = vmatpush1.msra.mxu0 0.0
          %3307 = vmatprep.subr.mxu0 0.0
          %3308 = vmatpush1.msra.mxu0 0.0
          %3309 = vmatprep.subr.mxu0 0.0
          %3310 = vmatpush1.msra.mxu0 0.0
          %3311 = vmatprep.subr.mxu0 0.0
          %3312 = vmatpush1.msra.mxu0 0.0
          %3313 = vmatprep.subr.mxu0 0.0
          %3314 = vmatpush1.msra.mxu0 0.0
          %3315 = vmatprep.subr.mxu0 0.0
          %3316 = vmatpush1.msra.mxu0 0.0
          %3317 = vmatprep.subr.mxu0 0.0
          %3318 = vmatpush1.msra.mxu0 0.0
          %3319 = vmatprep.subr.mxu0 0.0
          %3320 = vmatpush1.msra.mxu0 0.0
          %3321 = vmatprep.subr.mxu0 0.0
          %3322 = vmatpush1.msra.mxu0 0.0
          %3323 = vmatprep.subr.mxu0 0.0
          %3324 = vmatpush1.msra.mxu0 0.0
          %3325 = vmatprep.subr.mxu0 0.0
          %3326 = vmatpush1.msra.mxu0 0.0
          %3327 = vmatprep.subr.mxu0 0.0
          %3328 = vmatpush1.msra.mxu0 0.0
          %3329 = vmatprep.subr.mxu0 0.0
          %3330 = vmatpush1.msra.mxu0 0.0
          %3331 = vmatprep.subr.mxu0 0.0
          %3332 = vmatpush1.msra.mxu0 0.0
          %3333 = vmatprep.subr.mxu0 0.0
          %3334 = vmatpush1.msra.mxu0 0.0
          %3335 = vmatprep.subr.mxu0 0.0
          %3336 = vmatpush1.msra.mxu0 0.0
          %3337 = vmatprep.subr.mxu0 0.0
          %3338 = vmatpush1.msra.mxu0 0.0
          %3339 = vmatprep.subr.mxu0 0.0
          %3340 = vmatpush1.msra.mxu0 0.0
          %3341 = vmatprep.subr.mxu0 0.0
          %3342 = vmatpush1.msra.mxu0 0.0
          %3343 = vmatprep.subr.mxu0 0.0
          %3344 = vmatpush1.msra.mxu0 0.0
          %3345 = vmatprep.subr.mxu0 0.0
          %3346 = vmatpush1.msra.mxu0 0.0
          %3347 = vmatprep.mubr.f32.mxu0 0.0
          %3348 = vmatmul.mubr.f32.gmra.mrb[0].mxu0 %v3278
          %v3349 = vpop.f32.mrb[0].mxu0
          %v3350 = vadd.f32 0.0, %v3349
          %v3351 = vpop.f32.mrb[0].mxu0
          %3352 = vmatprep.mubr.f32.mxu0 0.0
          %3353 = vmatmul.mubr.f32.gmra.mrb[0].mxu0 %v3281
          %v3354 = vpop.f32.mrb[0].mxu0
          %v3355 = vadd.f32 0.0, %v3354
          %v3356 = vpop.f32.mrb[0].mxu0
          %3357 = vdwg.mxu0
          %v3358 = vsub.f32 %v2818, %v3350
          %v3359 = vsub.f32 %v2819, %v3355
          %v3360 = vand.u32 2147483647, %v3358
          %v3361 = vand.u32 2147483647, %v3359
          %v3362 = vsel %vm1124, %v3360, 0.0
          %v3363 = vsel %vm1124, %v3361, 0.0
          %v3364 = vadd.f32 %v3362, %v3363
          %3365 = vadd.xlane.f32.xlu0 %v3364
          %v3366 = vpop.xlane.xlu0 %3365
          %v3367 = vrot.slane %v3366, 4
          %v3368 = vadd.f32 %v3366, %v3367
          %v3369 = vrot.slane %v3368, 2
          %v3370 = vadd.f32 %v3368, %v3369
          %v3371 = vrot.slane %v3370, 1
          %v3372 = vadd.f32 %v3370, %v3371
          %s3373 = vtos %v3372
          %s3374 = sadd.f32 %s3181, %s3373
          %v3375 = vadd.f32 %v2440, %v2813
          %v3376 = vadd.f32 %v2441, %v2814
          %v3377 = vadd.f32 %v3375, %v3184
          %v3378 = vadd.f32 %v3376, %v3185
          %v3379 = vmul.f32 %v3189, 0.32802135
          %v3380 = vmul.f32 %v3190, 0.32802135
          %v3381 = vadd.f32 %v3377, %v3379
          %v3382 = vadd.f32 %v3378, %v3380
          %v3383 = vmul.f32 %v3196, 0.19895501
          %v3384 = vmul.f32 %v3197, 0.19895501
          %v3385 = vadd.f32 %v3381, %v3383
          %v3386 = vadd.f32 %v3382, %v3384
          %3387 = vmatprep.subr.mxu0 0.0
          %3388 = vmatpush1.msra.mxu0 %v3385
          %3389 = vmatprep.subr.mxu0 0.0
          %3390 = vmatpush1.msra.mxu0 %v3386
          %3391 = vmatprep.subr.mxu0 0.0
          %3392 = vmatpush1.msra.mxu0 0.0
          %3393 = vmatprep.subr.mxu0 0.0
          %3394 = vmatpush1.msra.mxu0 0.0
          %3395 = vmatprep.subr.mxu0 0.0
          %3396 = vmatpush1.msra.mxu0 0.0
          %3397 = vmatprep.subr.mxu0 0.0
          %3398 = vmatpush1.msra.mxu0 0.0
          %3399 = vmatprep.subr.mxu0 0.0
          %3400 = vmatpush1.msra.mxu0 0.0
          %3401 = vmatprep.subr.mxu0 0.0
          %3402 = vmatpush1.msra.mxu0 0.0
          %3403 = vmatprep.subr.mxu0 0.0
          %3404 = vmatpush1.msra.mxu0 0.0
          %3405 = vmatprep.subr.mxu0 0.0
          %3406 = vmatpush1.msra.mxu0 0.0
          %3407 = vmatprep.subr.mxu0 0.0
          %3408 = vmatpush1.msra.mxu0 0.0
          %3409 = vmatprep.subr.mxu0 0.0
          %3410 = vmatpush1.msra.mxu0 0.0
          %3411 = vmatprep.subr.mxu0 0.0
          %3412 = vmatpush1.msra.mxu0 0.0
          %3413 = vmatprep.subr.mxu0 0.0
          %3414 = vmatpush1.msra.mxu0 0.0
          %3415 = vmatprep.subr.mxu0 0.0
          %3416 = vmatpush1.msra.mxu0 0.0
          %3417 = vmatprep.subr.mxu0 0.0
          %3418 = vmatpush1.msra.mxu0 0.0
          %3419 = vmatprep.subr.mxu0 0.0
          %3420 = vmatpush1.msra.mxu0 0.0
          %3421 = vmatprep.subr.mxu0 0.0
          %3422 = vmatpush1.msra.mxu0 0.0
          %3423 = vmatprep.subr.mxu0 0.0
          %3424 = vmatpush1.msra.mxu0 0.0
          %3425 = vmatprep.subr.mxu0 0.0
          %3426 = vmatpush1.msra.mxu0 0.0
          %3427 = vmatprep.subr.mxu0 0.0
          %3428 = vmatpush1.msra.mxu0 0.0
          %3429 = vmatprep.subr.mxu0 0.0
          %3430 = vmatpush1.msra.mxu0 0.0
          %3431 = vmatprep.subr.mxu0 0.0
          %3432 = vmatpush1.msra.mxu0 0.0
          %3433 = vmatprep.subr.mxu0 0.0
          %3434 = vmatpush1.msra.mxu0 0.0
          %3435 = vmatprep.subr.mxu0 0.0
          %3436 = vmatpush1.msra.mxu0 0.0
          %3437 = vmatprep.subr.mxu0 0.0
          %3438 = vmatpush1.msra.mxu0 0.0
          %3439 = vmatprep.subr.mxu0 0.0
          %3440 = vmatpush1.msra.mxu0 0.0
          %3441 = vmatprep.subr.mxu0 0.0
          %3442 = vmatpush1.msra.mxu0 0.0
          %3443 = vmatprep.subr.mxu0 0.0
          %3444 = vmatpush1.msra.mxu0 0.0
          %3445 = vmatprep.subr.mxu0 0.0
          %3446 = vmatpush1.msra.mxu0 0.0
          %3447 = vmatprep.subr.mxu0 0.0
          %3448 = vmatpush1.msra.mxu0 0.0
          %3449 = vmatprep.subr.mxu0 0.0
          %3450 = vmatpush1.msra.mxu0 0.0
          %3451 = vmatprep.mubr.f32.mxu0 0.0
          %3452 = vmatmul.mubr.f32.gmra.mrb[0].mxu0 %v1870
          %v3453 = vpop.f32.mrb[0].mxu0
          %v3454 = vadd.f32 0.0, %v3453
          %v3455 = vpop.f32.mrb[0].mxu0
          %3456 = vmatprep.mubr.f32.mxu0 0.0
          %3457 = vmatmul.mubr.f32.gmra.mrb[0].mxu0 %v1873
          %v3458 = vpop.f32.mrb[0].mxu0
          %v3459 = vadd.f32 0.0, %v3458
          %v3460 = vpop.f32.mrb[0].mxu0
          %3461 = vdwg.mxu0
          %v3463 = vsel %vm1124, %v3454, 0
          %v3466 = vsel %vm1124, %v3459, 0
          %3468 = vmatprep.subr.mxu0 0.0
          %3469 = vmatpush1.msra.mxu0 %v1856
          %3470 = vmatprep.subr.mxu0 0.0
          %3471 = vmatpush1.msra.mxu0 %v1857
          %3472 = vmatprep.subr.mxu0 0.0
          %3473 = vmatpush1.msra.mxu0 0.0
          %3474 = vmatprep.subr.mxu0 0.0
          %3475 = vmatpush1.msra.mxu0 0.0
          %3476 = vmatprep.subr.mxu0 0.0
          %3477 = vmatpush1.msra.mxu0 0.0
          %3478 = vmatprep.subr.mxu0 0.0
          %3479 = vmatpush1.msra.mxu0 0.0
          %3480 = vmatprep.subr.mxu0 0.0
          %3481 = vmatpush1.msra.mxu0 0.0
          %3482 = vmatprep.subr.mxu0 0.0
          %3483 = vmatpush1.msra.mxu0 0.0
          %3484 = vmatprep.subr.mxu0 0.0
          %3485 = vmatpush1.msra.mxu0 0.0
          %3486 = vmatprep.subr.mxu0 0.0
          %3487 = vmatpush1.msra.mxu0 0.0
          %3488 = vmatprep.subr.mxu0 0.0
          %3489 = vmatpush1.msra.mxu0 0.0
          %3490 = vmatprep.subr.mxu0 0.0
          %3491 = vmatpush1.msra.mxu0 0.0
          %3492 = vmatprep.subr.mxu0 0.0
          %3493 = vmatpush1.msra.mxu0 0.0
          %3494 = vmatprep.subr.mxu0 0.0
          %3495 = vmatpush1.msra.mxu0 0.0
          %3496 = vmatprep.subr.mxu0 0.0
          %3497 = vmatpush1.msra.mxu0 0.0
          %3498 = vmatprep.subr.mxu0 0.0
          %3499 = vmatpush1.msra.mxu0 0.0
          %3500 = vmatprep.subr.mxu0 0.0
          %3501 = vmatpush1.msra.mxu0 0.0
          %3502 = vmatprep.subr.mxu0 0.0
          %3503 = vmatpush1.msra.mxu0 0.0
          %3504 = vmatprep.subr.mxu0 0.0
          %3505 = vmatpush1.msra.mxu0 0.0
          %3506 = vmatprep.subr.mxu0 0.0
          %3507 = vmatpush1.msra.mxu0 0.0
          %3508 = vmatprep.subr.mxu0 0.0
          %3509 = vmatpush1.msra.mxu0 0.0
          %3510 = vmatprep.subr.mxu0 0.0
          %3511 = vmatpush1.msra.mxu0 0.0
          %3512 = vmatprep.subr.mxu0 0.0
          %3513 = vmatpush1.msra.mxu0 0.0
          %3514 = vmatprep.subr.mxu0 0.0
          %3515 = vmatpush1.msra.mxu0 0.0
          %3516 = vmatprep.subr.mxu0 0.0
          %3517 = vmatpush1.msra.mxu0 0.0
          %3518 = vmatprep.subr.mxu0 0.0
          %3519 = vmatpush1.msra.mxu0 0.0
          %3520 = vmatprep.subr.mxu0 0.0
          %3521 = vmatpush1.msra.mxu0 0.0
          %3522 = vmatprep.subr.mxu0 0.0
          %3523 = vmatpush1.msra.mxu0 0.0
          %3524 = vmatprep.subr.mxu0 0.0
          %3525 = vmatpush1.msra.mxu0 0.0
          %3526 = vmatprep.subr.mxu0 0.0
          %3527 = vmatpush1.msra.mxu0 0.0
          %3528 = vmatprep.subr.mxu0 0.0
          %3529 = vmatpush1.msra.mxu0 0.0
          %3530 = vmatprep.subr.mxu0 0.0
          %3531 = vmatpush1.msra.mxu0 0.0
          %3532 = vmatprep.mubr.f32.mxu0 0.0
          %3533 = vmatmul.mubr.f32.gmra.mrb[0].mxu0 %v3463
          %v3534 = vpop.f32.mrb[0].mxu0
          %v3535 = vadd.f32 0.0, %v3534
          %v3536 = vpop.f32.mrb[0].mxu0
          %3537 = vmatprep.mubr.f32.mxu0 0.0
          %3538 = vmatmul.mubr.f32.gmra.mrb[0].mxu0 %v3466
          %v3539 = vpop.f32.mrb[0].mxu0
          %v3540 = vadd.f32 0.0, %v3539
          %v3541 = vpop.f32.mrb[0].mxu0
          %3542 = vdwg.mxu0
          %v3543 = vsub.f32 %v3189, %v3535
          %v3544 = vsub.f32 %v3190, %v3540
          %v3545 = vand.u32 2147483647, %v3543
          %v3546 = vand.u32 2147483647, %v3544
          %v3547 = vsel %vm1124, %v3545, 0.0
          %v3548 = vsel %vm1124, %v3546, 0.0
          %v3549 = vadd.f32 %v3547, %v3548
          %3550 = vadd.xlane.f32.xlu0 %v3549
          %v3551 = vpop.xlane.xlu0 %3550
          %v3552 = vrot.slane %v3551, 4
          %v3553 = vadd.f32 %v3551, %v3552
          %v3554 = vrot.slane %v3553, 2
          %v3555 = vadd.f32 %v3553, %v3554
          %v3556 = vrot.slane %v3555, 1
          %v3557 = vadd.f32 %v3555, %v3556
          %s3558 = vtos %v3557
          %s3559 = sadd.f32 %s3374, %s3558
          %v3560 = vadd.f32 %v3005, %v3379
          %v3561 = vadd.f32 %v3006, %v3380
          %v3562 = vmul.f32 %v3196, 0.27406862
          %v3563 = vmul.f32 %v3197, 0.27406862
          %v3564 = vadd.f32 %v3560, %v3562
          %v3565 = vadd.f32 %v3561, %v3563
          %s3566 = scalar_lea.vmem [#allocation2], 160
          %v3567 = vld [vmem:[%s3566] sm:$0xff]
          %v3568 = vld [vmem:[%s3566 + $0x8] sm:$0xff]
          %v3569 = vmul.f32 %v3567, 0.123841405
          %v3570 = vmul.f32 %v3568, 0.123841405
          %v3571 = vadd.f32 %v3564, %v3569
          %v3572 = vadd.f32 %v3565, %v3570
          %s3573 = scalar_lea.vmem [#allocation2], 176
          %v3574 = vld [vmem:[%s3573] sm:$0xff]
          %v3575 = vld [vmem:[%s3573 + $0x8] sm:$0xff]
          %v3576 = vmul.f32 %v3574, 0.07511361
          %v3577 = vmul.f32 %v3575, 0.07511361
          %v3578 = vadd.f32 %v3571, %v3576
          %v3579 = vadd.f32 %v3572, %v3577
          %3580 = vmatprep.subr.mxu0 0.0
          %3581 = vmatpush1.msra.mxu0 %v3578
          %3582 = vmatprep.subr.mxu0 0.0
          %3583 = vmatpush1.msra.mxu0 %v3579
          %3584 = vmatprep.subr.mxu0 0.0
          %3585 = vmatpush1.msra.mxu0 0.0
          %3586 = vmatprep.subr.mxu0 0.0
          %3587 = vmatpush1.msra.mxu0 0.0
          %3588 = vmatprep.subr.mxu0 0.0
          %3589 = vmatpush1.msra.mxu0 0.0
          %3590 = vmatprep.subr.mxu0 0.0
          %3591 = vmatpush1.msra.mxu0 0.0
          %3592 = vmatprep.subr.mxu0 0.0
          %3593 = vmatpush1.msra.mxu0 0.0
          %3594 = vmatprep.subr.mxu0 0.0
          %3595 = vmatpush1.msra.mxu0 0.0
          %3596 = vmatprep.subr.mxu0 0.0
          %3597 = vmatpush1.msra.mxu0 0.0
          %3598 = vmatprep.subr.mxu0 0.0
          %3599 = vmatpush1.msra.mxu0 0.0
          %3600 = vmatprep.subr.mxu0 0.0
          %3601 = vmatpush1.msra.mxu0 0.0
          %3602 = vmatprep.subr.mxu0 0.0
          %3603 = vmatpush1.msra.mxu0 0.0
          %3604 = vmatprep.subr.mxu0 0.0
          %3605 = vmatpush1.msra.mxu0 0.0
          %3606 = vmatprep.subr.mxu0 0.0
          %3607 = vmatpush1.msra.mxu0 0.0
          %3608 = vmatprep.subr.mxu0 0.0
          %3609 = vmatpush1.msra.mxu0 0.0
          %3610 = vmatprep.subr.mxu0 0.0
          %3611 = vmatpush1.msra.mxu0 0.0
          %3612 = vmatprep.subr.mxu0 0.0
          %3613 = vmatpush1.msra.mxu0 0.0
          %3614 = vmatprep.subr.mxu0 0.0
          %3615 = vmatpush1.msra.mxu0 0.0
          %3616 = vmatprep.subr.mxu0 0.0
          %3617 = vmatpush1.msra.mxu0 0.0
          %3618 = vmatprep.subr.mxu0 0.0
          %3619 = vmatpush1.msra.mxu0 0.0
          %3620 = vmatprep.subr.mxu0 0.0
          %3621 = vmatpush1.msra.mxu0 0.0
          %3622 = vmatprep.subr.mxu0 0.0
          %3623 = vmatpush1.msra.mxu0 0.0
          %3624 = vmatprep.subr.mxu0 0.0
          %3625 = vmatpush1.msra.mxu0 0.0
          %3626 = vmatprep.subr.mxu0 0.0
          %3627 = vmatpush1.msra.mxu0 0.0
          %3628 = vmatprep.subr.mxu0 0.0
          %3629 = vmatpush1.msra.mxu0 0.0
          %3630 = vmatprep.subr.mxu0 0.0
          %3631 = vmatpush1.msra.mxu0 0.0
          %3632 = vmatprep.subr.mxu0 0.0
          %3633 = vmatpush1.msra.mxu0 0.0
          %3634 = vmatprep.subr.mxu0 0.0
          %3635 = vmatpush1.msra.mxu0 0.0
          %3636 = vmatprep.subr.mxu0 0.0
          %3637 = vmatpush1.msra.mxu0 0.0
          %3638 = vmatprep.subr.mxu0 0.0
          %3639 = vmatpush1.msra.mxu0 0.0
          %3640 = vmatprep.subr.mxu0 0.0
          %3641 = vmatpush1.msra.mxu0 0.0
          %3642 = vmatprep.subr.mxu0 0.0
          %3643 = vmatpush1.msra.mxu0 0.0
          %3644 = vmatprep.mubr.f32.mxu0 0.0
          %3645 = vmatmul.mubr.f32.gmra.mrb[0].mxu0 %v1870
          %v3646 = vpop.f32.mrb[0].mxu0
          %v3647 = vadd.f32 0.0, %v3646
          %v3648 = vpop.f32.mrb[0].mxu0
          %3649 = vmatprep.mubr.f32.mxu0 0.0
          %3650 = vmatmul.mubr.f32.gmra.mrb[0].mxu0 %v1873
          %v3651 = vpop.f32.mrb[0].mxu0
          %v3652 = vadd.f32 0.0, %v3651
          %v3653 = vpop.f32.mrb[0].mxu0
          %3654 = vdwg.mxu0
          %v3656 = vsel %vm1124, %v3647, 0
          %v3659 = vsel %vm1124, %v3652, 0
          %3661 = vmatprep.subr.mxu0 0.0
          %3662 = vmatpush1.msra.mxu0 %v1856
          %3663 = vmatprep.subr.mxu0 0.0
          %3664 = vmatpush1.msra.mxu0 %v1857
          %3665 = vmatprep.subr.mxu0 0.0
          %3666 = vmatpush1.msra.mxu0 0.0
          %3667 = vmatprep.subr.mxu0 0.0
          %3668 = vmatpush1.msra.mxu0 0.0
          %3669 = vmatprep.subr.mxu0 0.0
          %3670 = vmatpush1.msra.mxu0 0.0
          %3671 = vmatprep.subr.mxu0 0.0
          %3672 = vmatpush1.msra.mxu0 0.0
          %3673 = vmatprep.subr.mxu0 0.0
          %3674 = vmatpush1.msra.mxu0 0.0
          %3675 = vmatprep.subr.mxu0 0.0
          %3676 = vmatpush1.msra.mxu0 0.0
          %3677 = vmatprep.subr.mxu0 0.0
          %3678 = vmatpush1.msra.mxu0 0.0
          %3679 = vmatprep.subr.mxu0 0.0
          %3680 = vmatpush1.msra.mxu0 0.0
          %3681 = vmatprep.subr.mxu0 0.0
          %3682 = vmatpush1.msra.mxu0 0.0
          %3683 = vmatprep.subr.mxu0 0.0
          %3684 = vmatpush1.msra.mxu0 0.0
          %3685 = vmatprep.subr.mxu0 0.0
          %3686 = vmatpush1.msra.mxu0 0.0
          %3687 = vmatprep.subr.mxu0 0.0
          %3688 = vmatpush1.msra.mxu0 0.0
          %3689 = vmatprep.subr.mxu0 0.0
          %3690 = vmatpush1.msra.mxu0 0.0
          %3691 = vmatprep.subr.mxu0 0.0
          %3692 = vmatpush1.msra.mxu0 0.0
          %3693 = vmatprep.subr.mxu0 0.0
          %3694 = vmatpush1.msra.mxu0 0.0
          %3695 = vmatprep.subr.mxu0 0.0
          %3696 = vmatpush1.msra.mxu0 0.0
          %3697 = vmatprep.subr.mxu0 0.0
          %3698 = vmatpush1.msra.mxu0 0.0
          %3699 = vmatprep.subr.mxu0 0.0
          %3700 = vmatpush1.msra.mxu0 0.0
          %3701 = vmatprep.subr.mxu0 0.0
          %3702 = vmatpush1.msra.mxu0 0.0
          %3703 = vmatprep.subr.mxu0 0.0
          %3704 = vmatpush1.msra.mxu0 0.0
          %3705 = vmatprep.subr.mxu0 0.0
          %3706 = vmatpush1.msra.mxu0 0.0
          %3707 = vmatprep.subr.mxu0 0.0
          %3708 = vmatpush1.msra.mxu0 0.0
          %3709 = vmatprep.subr.mxu0 0.0
          %3710 = vmatpush1.msra.mxu0 0.0
          %3711 = vmatprep.subr.mxu0 0.0
          %3712 = vmatpush1.msra.mxu0 0.0
          %3713 = vmatprep.subr.mxu0 0.0
          %3714 = vmatpush1.msra.mxu0 0.0
          %3715 = vmatprep.subr.mxu0 0.0
          %3716 = vmatpush1.msra.mxu0 0.0
          %3717 = vmatprep.subr.mxu0 0.0
          %3718 = vmatpush1.msra.mxu0 0.0
          %3719 = vmatprep.subr.mxu0 0.0
          %3720 = vmatpush1.msra.mxu0 0.0
          %3721 = vmatprep.subr.mxu0 0.0
          %3722 = vmatpush1.msra.mxu0 0.0
          %3723 = vmatprep.subr.mxu0 0.0
          %3724 = vmatpush1.msra.mxu0 0.0
          %3725 = vmatprep.mubr.f32.mxu0 0.0
          %3726 = vmatmul.mubr.f32.gmra.mrb[0].mxu0 %v3656
          %v3727 = vpop.f32.mrb[0].mxu0
          %v3728 = vadd.f32 0.0, %v3727
          %v3729 = vpop.f32.mrb[0].mxu0
          %3730 = vmatprep.mubr.f32.mxu0 0.0
          %3731 = vmatmul.mubr.f32.gmra.mrb[0].mxu0 %v3659
          %v3732 = vpop.f32.mrb[0].mxu0
          %v3733 = vadd.f32 0.0, %v3732
          %v3734 = vpop.f32.mrb[0].mxu0
          %3735 = vdwg.mxu0
          %v3736 = vsub.f32 %v3196, %v3728
          %v3737 = vsub.f32 %v3197, %v3733
          %v3738 = vand.u32 2147483647, %v3736
          %v3739 = vand.u32 2147483647, %v3737
          %v3740 = vsel %vm1124, %v3738, 0.0
          %v3741 = vsel %vm1124, %v3739, 0.0
          %v3742 = vadd.f32 %v3740, %v3741
          %3743 = vadd.xlane.f32.xlu0 %v3742
          %v3744 = vpop.xlane.xlu0 %3743
          %v3745 = vrot.slane %v3744, 4
          %v3746 = vadd.f32 %v3744, %v3745
          %v3747 = vrot.slane %v3746, 2
          %v3748 = vadd.f32 %v3746, %v3747
          %v3749 = vrot.slane %v3748, 1
          %v3750 = vadd.f32 %v3748, %v3749
          %s3751 = vtos %v3750
          %s3752 = sadd.f32 %s3559, %s3751
          %v3753 = vadd.f32 %v2820, %v3191
          %v3754 = vadd.f32 %v2821, %v3192
          %v3755 = vadd.f32 %v3753, %v3562
          %v3756 = vadd.f32 %v3754, %v3563
          %v3757 = vmul.f32 %v3567, 0.32802135
          %v3758 = vmul.f32 %v3568, 0.32802135
          %v3759 = vadd.f32 %v3755, %v3757
          %v3760 = vadd.f32 %v3756, %v3758
          %v3761 = vmul.f32 %v3574, 0.19895501
          %v3762 = vmul.f32 %v3575, 0.19895501
          %v3763 = vadd.f32 %v3759, %v3761
          %v3764 = vadd.f32 %v3760, %v3762
          %3765 = vmatprep.subr.mxu0 0.0
          %3766 = vmatpush1.msra.mxu0 %v3763
          %3767 = vmatprep.subr.mxu0 0.0
          %3768 = vmatpush1.msra.mxu0 %v3764
          %3769 = vmatprep.subr.mxu0 0.0
          %3770 = vmatpush1.msra.mxu0 0.0
          %3771 = vmatprep.subr.mxu0 0.0
          %3772 = vmatpush1.msra.mxu0 0.0
          %3773 = vmatprep.subr.mxu0 0.0
          %3774 = vmatpush1.msra.mxu0 0.0
          %3775 = vmatprep.subr.mxu0 0.0
          %3776 = vmatpush1.msra.mxu0 0.0
          %3777 = vmatprep.subr.mxu0 0.0
          %3778 = vmatpush1.msra.mxu0 0.0
          %3779 = vmatprep.subr.mxu0 0.0
          %3780 = vmatpush1.msra.mxu0 0.0
          %3781 = vmatprep.subr.mxu0 0.0
          %3782 = vmatpush1.msra.mxu0 0.0
          %3783 = vmatprep.subr.mxu0 0.0
          %3784 = vmatpush1.msra.mxu0 0.0
          %3785 = vmatprep.subr.mxu0 0.0
          %3786 = vmatpush1.msra.mxu0 0.0
          %3787 = vmatprep.subr.mxu0 0.0
          %3788 = vmatpush1.msra.mxu0 0.0
          %3789 = vmatprep.subr.mxu0 0.0
          %3790 = vmatpush1.msra.mxu0 0.0
          %3791 = vmatprep.subr.mxu0 0.0
          %3792 = vmatpush1.msra.mxu0 0.0
          %3793 = vmatprep.subr.mxu0 0.0
          %3794 = vmatpush1.msra.mxu0 0.0
          %3795 = vmatprep.subr.mxu0 0.0
          %3796 = vmatpush1.msra.mxu0 0.0
          %3797 = vmatprep.subr.mxu0 0.0
          %3798 = vmatpush1.msra.mxu0 0.0
          %3799 = vmatprep.subr.mxu0 0.0
          %3800 = vmatpush1.msra.mxu0 0.0
          %3801 = vmatprep.subr.mxu0 0.0
          %3802 = vmatpush1.msra.mxu0 0.0
          %3803 = vmatprep.subr.mxu0 0.0
          %3804 = vmatpush1.msra.mxu0 0.0
          %3805 = vmatprep.subr.mxu0 0.0
          %3806 = vmatpush1.msra.mxu0 0.0
          %3807 = vmatprep.subr.mxu0 0.0
          %3808 = vmatpush1.msra.mxu0 0.0
          %3809 = vmatprep.subr.mxu0 0.0
          %3810 = vmatpush1.msra.mxu0 0.0
          %3811 = vmatprep.subr.mxu0 0.0
          %3812 = vmatpush1.msra.mxu0 0.0
          %3813 = vmatprep.subr.mxu0 0.0
          %3814 = vmatpush1.msra.mxu0 0.0
          %3815 = vmatprep.subr.mxu0 0.0
          %3816 = vmatpush1.msra.mxu0 0.0
          %3817 = vmatprep.subr.mxu0 0.0
          %3818 = vmatpush1.msra.mxu0 0.0
          %3819 = vmatprep.subr.mxu0 0.0
          %3820 = vmatpush1.msra.mxu0 0.0
          %3821 = vmatprep.subr.mxu0 0.0
          %3822 = vmatpush1.msra.mxu0 0.0
          %3823 = vmatprep.subr.mxu0 0.0
          %3824 = vmatpush1.msra.mxu0 0.0
          %3825 = vmatprep.subr.mxu0 0.0
          %3826 = vmatpush1.msra.mxu0 0.0
          %3827 = vmatprep.subr.mxu0 0.0
          %3828 = vmatpush1.msra.mxu0 0.0
          %3829 = vmatprep.mubr.f32.mxu0 0.0
          %3830 = vmatmul.mubr.f32.gmra.mrb[0].mxu0 %v1870
          %v3831 = vpop.f32.mrb[0].mxu0
          %v3832 = vadd.f32 0.0, %v3831
          %v3833 = vpop.f32.mrb[0].mxu0
          %3834 = vmatprep.mubr.f32.mxu0 0.0
          %3835 = vmatmul.mubr.f32.gmra.mrb[0].mxu0 %v1873
          %v3836 = vpop.f32.mrb[0].mxu0
          %v3837 = vadd.f32 0.0, %v3836
          %v3838 = vpop.f32.mrb[0].mxu0
          %3839 = vdwg.mxu0
          %v3841 = vsel %vm1124, %v3832, 0
          %v3844 = vsel %vm1124, %v3837, 0
          %3846 = vmatprep.subr.mxu0 0.0
          %3847 = vmatpush1.msra.mxu0 %v1856
          %3848 = vmatprep.subr.mxu0 0.0
          %3849 = vmatpush1.msra.mxu0 %v1857
          %3850 = vmatprep.subr.mxu0 0.0
          %3851 = vmatpush1.msra.mxu0 0.0
          %3852 = vmatprep.subr.mxu0 0.0
          %3853 = vmatpush1.msra.mxu0 0.0
          %3854 = vmatprep.subr.mxu0 0.0
          %3855 = vmatpush1.msra.mxu0 0.0
          %3856 = vmatprep.subr.mxu0 0.0
          %3857 = vmatpush1.msra.mxu0 0.0
          %3858 = vmatprep.subr.mxu0 0.0
          %3859 = vmatpush1.msra.mxu0 0.0
          %3860 = vmatprep.subr.mxu0 0.0
          %3861 = vmatpush1.msra.mxu0 0.0
          %3862 = vmatprep.subr.mxu0 0.0
          %3863 = vmatpush1.msra.mxu0 0.0
          %3864 = vmatprep.subr.mxu0 0.0
          %3865 = vmatpush1.msra.mxu0 0.0
          %3866 = vmatprep.subr.mxu0 0.0
          %3867 = vmatpush1.msra.mxu0 0.0
          %3868 = vmatprep.subr.mxu0 0.0
          %3869 = vmatpush1.msra.mxu0 0.0
          %3870 = vmatprep.subr.mxu0 0.0
          %3871 = vmatpush1.msra.mxu0 0.0
          %3872 = vmatprep.subr.mxu0 0.0
          %3873 = vmatpush1.msra.mxu0 0.0
          %3874 = vmatprep.subr.mxu0 0.0
          %3875 = vmatpush1.msra.mxu0 0.0
          %3876 = vmatprep.subr.mxu0 0.0
          %3877 = vmatpush1.msra.mxu0 0.0
          %3878 = vmatprep.subr.mxu0 0.0
          %3879 = vmatpush1.msra.mxu0 0.0
          %3880 = vmatprep.subr.mxu0 0.0
          %3881 = vmatpush1.msra.mxu0 0.0
          %3882 = vmatprep.subr.mxu0 0.0
          %3883 = vmatpush1.msra.mxu0 0.0
          %3884 = vmatprep.subr.mxu0 0.0
          %3885 = vmatpush1.msra.mxu0 0.0
          %3886 = vmatprep.subr.mxu0 0.0
          %3887 = vmatpush1.msra.mxu0 0.0
          %3888 = vmatprep.subr.mxu0 0.0
          %3889 = vmatpush1.msra.mxu0 0.0
          %3890 = vmatprep.subr.mxu0 0.0
          %3891 = vmatpush1.msra.mxu0 0.0
          %3892 = vmatprep.subr.mxu0 0.0
          %3893 = vmatpush1.msra.mxu0 0.0
          %3894 = vmatprep.subr.mxu0 0.0
          %3895 = vmatpush1.msra.mxu0 0.0
          %3896 = vmatprep.subr.mxu0 0.0
          %3897 = vmatpush1.msra.mxu0 0.0
          %3898 = vmatprep.subr.mxu0 0.0
          %3899 = vmatpush1.msra.mxu0 0.0
          %3900 = vmatprep.subr.mxu0 0.0
          %3901 = vmatpush1.msra.mxu0 0.0
          %3902 = vmatprep.subr.mxu0 0.0
          %3903 = vmatpush1.msra.mxu0 0.0
          %3904 = vmatprep.subr.mxu0 0.0
          %3905 = vmatpush1.msra.mxu0 0.0
          %3906 = vmatprep.subr.mxu0 0.0
          %3907 = vmatpush1.msra.mxu0 0.0
          %3908 = vmatprep.subr.mxu0 0.0
          %3909 = vmatpush1.msra.mxu0 0.0
          %3910 = vmatprep.mubr.f32.mxu0 0.0
          %3911 = vmatmul.mubr.f32.gmra.mrb[0].mxu0 %v3841
          %v3912 = vpop.f32.mrb[0].mxu0
          %v3913 = vadd.f32 0.0, %v3912
          %v3914 = vpop.f32.mrb[0].mxu0
          %3915 = vmatprep.mubr.f32.mxu0 0.0
          %3916 = vmatmul.mubr.f32.gmra.mrb[0].mxu0 %v3844
          %v3917 = vpop.f32.mrb[0].mxu0
          %v3918 = vadd.f32 0.0, %v3917
          %v3919 = vpop.f32.mrb[0].mxu0
          %3920 = vdwg.mxu0
          %v3921 = vsub.f32 %v3567, %v3913
          %v3922 = vsub.f32 %v3568, %v3918
          %v3923 = vand.u32 2147483647, %v3921
          %v3924 = vand.u32 2147483647, %v3922
          %v3925 = vsel %vm1124, %v3923, 0.0
          %v3926 = vsel %vm1124, %v3924, 0.0
          %v3927 = vadd.f32 %v3925, %v3926
          %3928 = vadd.xlane.f32.xlu0 %v3927
          %v3929 = vpop.xlane.xlu0 %3928
          %v3930 = vrot.slane %v3929, 4
          %v3931 = vadd.f32 %v3929, %v3930
          %v3932 = vrot.slane %v3931, 2
          %v3933 = vadd.f32 %v3931, %v3932
          %v3934 = vrot.slane %v3933, 1
          %v3935 = vadd.f32 %v3933, %v3934
          %s3936 = vtos %v3935
          %s3937 = sadd.f32 %s3752, %s3936
          %v3938 = vadd.f32 %v3383, %v3757
          %v3939 = vadd.f32 %v3384, %v3758
          %v3940 = vmul.f32 %v3574, 0.27406862
          %v3941 = vmul.f32 %v3575, 0.27406862
          %v3942 = vadd.f32 %v3938, %v3940
          %v3943 = vadd.f32 %v3939, %v3941
          %s3944 = scalar_lea.vmem [#allocation2], 192
          %v3945 = vld [vmem:[%s3944] sm:$0xff]
          %v3946 = vld [vmem:[%s3944 + $0x8] sm:$0xff]
          %v3947 = vmul.f32 %v3945, 0.123841405
          %v3948 = vmul.f32 %v3946, 0.123841405
          %v3949 = vadd.f32 %v3942, %v3947
          %v3950 = vadd.f32 %v3943, %v3948
          %s3951 = scalar_lea.vmem [#allocation2], 208
          %v3952 = vld [vmem:[%s3951] sm:$0xff]
          %v3953 = vld [vmem:[%s3951 + $0x8] sm:$0xff]
          %v3954 = vmul.f32 %v3952, 0.07511361
          %v3955 = vmul.f32 %v3953, 0.07511361
          %v3956 = vadd.f32 %v3949, %v3954
          %v3957 = vadd.f32 %v3950, %v3955
          %3958 = vmatprep.subr.mxu0 0.0
          %3959 = vmatpush1.msra.mxu0 %v3956
          %3960 = vmatprep.subr.mxu0 0.0
          %3961 = vmatpush1.msra.mxu0 %v3957
          %3962 = vmatprep.subr.mxu0 0.0
          %3963 = vmatpush1.msra.mxu0 0.0
          %3964 = vmatprep.subr.mxu0 0.0
          %3965 = vmatpush1.msra.mxu0 0.0
          %3966 = vmatprep.subr.mxu0 0.0
          %3967 = vmatpush1.msra.mxu0 0.0
          %3968 = vmatprep.subr.mxu0 0.0
          %3969 = vmatpush1.msra.mxu0 0.0
          %3970 = vmatprep.subr.mxu0 0.0
          %3971 = vmatpush1.msra.mxu0 0.0
          %3972 = vmatprep.subr.mxu0 0.0
          %3973 = vmatpush1.msra.mxu0 0.0
          %3974 = vmatprep.subr.mxu0 0.0
          %3975 = vmatpush1.msra.mxu0 0.0
          %3976 = vmatprep.subr.mxu0 0.0
          %3977 = vmatpush1.msra.mxu0 0.0
          %3978 = vmatprep.subr.mxu0 0.0
          %3979 = vmatpush1.msra.mxu0 0.0
          %3980 = vmatprep.subr.mxu0 0.0
          %3981 = vmatpush1.msra.mxu0 0.0
          %3982 = vmatprep.subr.mxu0 0.0
          %3983 = vmatpush1.msra.mxu0 0.0
          %3984 = vmatprep.subr.mxu0 0.0
          %3985 = vmatpush1.msra.mxu0 0.0
          %3986 = vmatprep.subr.mxu0 0.0
          %3987 = vmatpush1.msra.mxu0 0.0
          %3988 = vmatprep.subr.mxu0 0.0
          %3989 = vmatpush1.msra.mxu0 0.0
          %3990 = vmatprep.subr.mxu0 0.0
          %3991 = vmatpush1.msra.mxu0 0.0
          %3992 = vmatprep.subr.mxu0 0.0
          %3993 = vmatpush1.msra.mxu0 0.0
          %3994 = vmatprep.subr.mxu0 0.0
          %3995 = vmatpush1.msra.mxu0 0.0
          %3996 = vmatprep.subr.mxu0 0.0
          %3997 = vmatpush1.msra.mxu0 0.0
          %3998 = vmatprep.subr.mxu0 0.0
          %3999 = vmatpush1.msra.mxu0 0.0
          %4000 = vmatprep.subr.mxu0 0.0
          %4001 = vmatpush1.msra.mxu0 0.0
          %4002 = vmatprep.subr.mxu0 0.0
          %4003 = vmatpush1.msra.mxu0 0.0
          %4004 = vmatprep.subr.mxu0 0.0
          %4005 = vmatpush1.msra.mxu0 0.0
          %4006 = vmatprep.subr.mxu0 0.0
          %4007 = vmatpush1.msra.mxu0 0.0
          %4008 = vmatprep.subr.mxu0 0.0
          %4009 = vmatpush1.msra.mxu0 0.0
          %4010 = vmatprep.subr.mxu0 0.0
          %4011 = vmatpush1.msra.mxu0 0.0
          %4012 = vmatprep.subr.mxu0 0.0
          %4013 = vmatpush1.msra.mxu0 0.0
          %4014 = vmatprep.subr.mxu0 0.0
          %4015 = vmatpush1.msra.mxu0 0.0
          %4016 = vmatprep.subr.mxu0 0.0
          %4017 = vmatpush1.msra.mxu0 0.0
          %4018 = vmatprep.subr.mxu0 0.0
          %4019 = vmatpush1.msra.mxu0 0.0
          %4020 = vmatprep.subr.mxu0 0.0
          %4021 = vmatpush1.msra.mxu0 0.0
          %4022 = vmatprep.mubr.f32.mxu0 0.0
          %4023 = vmatmul.mubr.f32.gmra.mrb[0].mxu0 %v1870
          %v4024 = vpop.f32.mrb[0].mxu0
          %v4025 = vadd.f32 0.0, %v4024
          %v4026 = vpop.f32.mrb[0].mxu0
          %4027 = vmatprep.mubr.f32.mxu0 0.0
          %4028 = vmatmul.mubr.f32.gmra.mrb[0].mxu0 %v1873
          %v4029 = vpop.f32.mrb[0].mxu0
          %v4030 = vadd.f32 0.0, %v4029
          %v4031 = vpop.f32.mrb[0].mxu0
          %4032 = vdwg.mxu0
          %v4034 = vsel %vm1124, %v4025, 0
          %v4037 = vsel %vm1124, %v4030, 0
          %4039 = vmatprep.subr.mxu0 0.0
          %4040 = vmatpush1.msra.mxu0 %v1856
          %4041 = vmatprep.subr.mxu0 0.0
          %4042 = vmatpush1.msra.mxu0 %v1857
          %4043 = vmatprep.subr.mxu0 0.0
          %4044 = vmatpush1.msra.mxu0 0.0
          %4045 = vmatprep.subr.mxu0 0.0
          %4046 = vmatpush1.msra.mxu0 0.0
          %4047 = vmatprep.subr.mxu0 0.0
          %4048 = vmatpush1.msra.mxu0 0.0
          %4049 = vmatprep.subr.mxu0 0.0
          %4050 = vmatpush1.msra.mxu0 0.0
          %4051 = vmatprep.subr.mxu0 0.0
          %4052 = vmatpush1.msra.mxu0 0.0
          %4053 = vmatprep.subr.mxu0 0.0
          %4054 = vmatpush1.msra.mxu0 0.0
          %4055 = vmatprep.subr.mxu0 0.0
          %4056 = vmatpush1.msra.mxu0 0.0
          %4057 = vmatprep.subr.mxu0 0.0
          %4058 = vmatpush1.msra.mxu0 0.0
          %4059 = vmatprep.subr.mxu0 0.0
          %4060 = vmatpush1.msra.mxu0 0.0
          %4061 = vmatprep.subr.mxu0 0.0
          %4062 = vmatpush1.msra.mxu0 0.0
          %4063 = vmatprep.subr.mxu0 0.0
          %4064 = vmatpush1.msra.mxu0 0.0
          %4065 = vmatprep.subr.mxu0 0.0
          %4066 = vmatpush1.msra.mxu0 0.0
          %4067 = vmatprep.subr.mxu0 0.0
          %4068 = vmatpush1.msra.mxu0 0.0
          %4069 = vmatprep.subr.mxu0 0.0
          %4070 = vmatpush1.msra.mxu0 0.0
          %4071 = vmatprep.subr.mxu0 0.0
          %4072 = vmatpush1.msra.mxu0 0.0
          %4073 = vmatprep.subr.mxu0 0.0
          %4074 = vmatpush1.msra.mxu0 0.0
          %4075 = vmatprep.subr.mxu0 0.0
          %4076 = vmatpush1.msra.mxu0 0.0
          %4077 = vmatprep.subr.mxu0 0.0
          %4078 = vmatpush1.msra.mxu0 0.0
          %4079 = vmatprep.subr.mxu0 0.0
          %4080 = vmatpush1.msra.mxu0 0.0
          %4081 = vmatprep.subr.mxu0 0.0
          %4082 = vmatpush1.msra.mxu0 0.0
          %4083 = vmatprep.subr.mxu0 0.0
          %4084 = vmatpush1.msra.mxu0 0.0
          %4085 = vmatprep.subr.mxu0 0.0
          %4086 = vmatpush1.msra.mxu0 0.0
          %4087 = vmatprep.subr.mxu0 0.0
          %4088 = vmatpush1.msra.mxu0 0.0
          %4089 = vmatprep.subr.mxu0 0.0
          %4090 = vmatpush1.msra.mxu0 0.0
          %4091 = vmatprep.subr.mxu0 0.0
          %4092 = vmatpush1.msra.mxu0 0.0
          %4093 = vmatprep.subr.mxu0 0.0
          %4094 = vmatpush1.msra.mxu0 0.0
          %4095 = vmatprep.subr.mxu0 0.0
          %4096 = vmatpush1.msra.mxu0 0.0
          %4097 = vmatprep.subr.mxu0 0.0
          %4098 = vmatpush1.msra.mxu0 0.0
          %4099 = vmatprep.subr.mxu0 0.0
          %4100 = vmatpush1.msra.mxu0 0.0
          %4101 = vmatprep.subr.mxu0 0.0
          %4102 = vmatpush1.msra.mxu0 0.0
          %4103 = vmatprep.mubr.f32.mxu0 0.0
          %4104 = vmatmul.mubr.f32.gmra.mrb[0].mxu0 %v4034
          %v4105 = vpop.f32.mrb[0].mxu0
          %v4106 = vadd.f32 0.0, %v4105
          %v4107 = vpop.f32.mrb[0].mxu0
          %4108 = vmatprep.mubr.f32.mxu0 0.0
          %4109 = vmatmul.mubr.f32.gmra.mrb[0].mxu0 %v4037
          %v4110 = vpop.f32.mrb[0].mxu0
          %v4111 = vadd.f32 0.0, %v4110
          %v4112 = vpop.f32.mrb[0].mxu0
          %4113 = vdwg.mxu0
          %v4114 = vsub.f32 %v3574, %v4106
          %v4115 = vsub.f32 %v3575, %v4111
          %v4116 = vand.u32 2147483647, %v4114
          %v4117 = vand.u32 2147483647, %v4115
          %v4118 = vsel %vm1124, %v4116, 0.0
          %v4119 = vsel %vm1124, %v4117, 0.0
          %v4120 = vadd.f32 %v4118, %v4119
          %4121 = vadd.xlane.f32.xlu0 %v4120
          %v4122 = vpop.xlane.xlu0 %4121
          %v4123 = vrot.slane %v4122, 4
          %v4124 = vadd.f32 %v4122, %v4123
          %v4125 = vrot.slane %v4124, 2
          %v4126 = vadd.f32 %v4124, %v4125
          %v4127 = vrot.slane %v4126, 1
          %v4128 = vadd.f32 %v4126, %v4127
          %s4129 = vtos %v4128
          %s4130 = sadd.f32 %s3937, %s4129
          %v4131 = vadd.f32 %v3198, %v3569
          %v4132 = vadd.f32 %v3199, %v3570
          %v4133 = vadd.f32 %v4131, %v3940
          %v4134 = vadd.f32 %v4132, %v3941
          %v4135 = vmul.f32 %v3945, 0.32802135
          %v4136 = vmul.f32 %v3946, 0.32802135
          %v4137 = vadd.f32 %v4133, %v4135
          %v4138 = vadd.f32 %v4134, %v4136
          %v4139 = vmul.f32 %v3952, 0.19895501
          %v4140 = vmul.f32 %v3953, 0.19895501
          %v4141 = vadd.f32 %v4137, %v4139
          %v4142 = vadd.f32 %v4138, %v4140
          %4143 = vmatprep.subr.mxu0 0.0
          %4144 = vmatpush1.msra.mxu0 %v4141
          %4145 = vmatprep.subr.mxu0 0.0
          %4146 = vmatpush1.msra.mxu0 %v4142
          %4147 = vmatprep.subr.mxu0 0.0
          %4148 = vmatpush1.msra.mxu0 0.0
          %4149 = vmatprep.subr.mxu0 0.0
          %4150 = vmatpush1.msra.mxu0 0.0
          %4151 = vmatprep.subr.mxu0 0.0
          %4152 = vmatpush1.msra.mxu0 0.0
          %4153 = vmatprep.subr.mxu0 0.0
          %4154 = vmatpush1.msra.mxu0 0.0
          %4155 = vmatprep.subr.mxu0 0.0
          %4156 = vmatpush1.msra.mxu0 0.0
          %4157 = vmatprep.subr.mxu0 0.0
          %4158 = vmatpush1.msra.mxu0 0.0
          %4159 = vmatprep.subr.mxu0 0.0
          %4160 = vmatpush1.msra.mxu0 0.0
          %4161 = vmatprep.subr.mxu0 0.0
          %4162 = vmatpush1.msra.mxu0 0.0
          %4163 = vmatprep.subr.mxu0 0.0
          %4164 = vmatpush1.msra.mxu0 0.0
          %4165 = vmatprep.subr.mxu0 0.0
          %4166 = vmatpush1.msra.mxu0 0.0
          %4167 = vmatprep.subr.mxu0 0.0
          %4168 = vmatpush1.msra.mxu0 0.0
          %4169 = vmatprep.subr.mxu0 0.0
          %4170 = vmatpush1.msra.mxu0 0.0
          %4171 = vmatprep.subr.mxu0 0.0
          %4172 = vmatpush1.msra.mxu0 0.0
          %4173 = vmatprep.subr.mxu0 0.0
          %4174 = vmatpush1.msra.mxu0 0.0
          %4175 = vmatprep.subr.mxu0 0.0
          %4176 = vmatpush1.msra.mxu0 0.0
          %4177 = vmatprep.subr.mxu0 0.0
          %4178 = vmatpush1.msra.mxu0 0.0
          %4179 = vmatprep.subr.mxu0 0.0
          %4180 = vmatpush1.msra.mxu0 0.0
          %4181 = vmatprep.subr.mxu0 0.0
          %4182 = vmatpush1.msra.mxu0 0.0
          %4183 = vmatprep.subr.mxu0 0.0
          %4184 = vmatpush1.msra.mxu0 0.0
          %4185 = vmatprep.subr.mxu0 0.0
          %4186 = vmatpush1.msra.mxu0 0.0
          %4187 = vmatprep.subr.mxu0 0.0
          %4188 = vmatpush1.msra.mxu0 0.0
          %4189 = vmatprep.subr.mxu0 0.0
          %4190 = vmatpush1.msra.mxu0 0.0
          %4191 = vmatprep.subr.mxu0 0.0
          %4192 = vmatpush1.msra.mxu0 0.0
          %4193 = vmatprep.subr.mxu0 0.0
          %4194 = vmatpush1.msra.mxu0 0.0
          %4195 = vmatprep.subr.mxu0 0.0
          %4196 = vmatpush1.msra.mxu0 0.0
          %4197 = vmatprep.subr.mxu0 0.0
          %4198 = vmatpush1.msra.mxu0 0.0
          %4199 = vmatprep.subr.mxu0 0.0
          %4200 = vmatpush1.msra.mxu0 0.0
          %4201 = vmatprep.subr.mxu0 0.0
          %4202 = vmatpush1.msra.mxu0 0.0
          %4203 = vmatprep.subr.mxu0 0.0
          %4204 = vmatpush1.msra.mxu0 0.0
          %4205 = vmatprep.subr.mxu0 0.0
          %4206 = vmatpush1.msra.mxu0 0.0
          %4207 = vmatprep.mubr.f32.mxu0 0.0
          %4208 = vmatmul.mubr.f32.gmra.mrb[0].mxu0 %v1870
          %v4209 = vpop.f32.mrb[0].mxu0
          %v4210 = vadd.f32 0.0, %v4209
          %v4211 = vpop.f32.mrb[0].mxu0
          %4212 = vmatprep.mubr.f32.mxu0 0.0
          %4213 = vmatmul.mubr.f32.gmra.mrb[0].mxu0 %v1873
          %v4214 = vpop.f32.mrb[0].mxu0
          %v4215 = vadd.f32 0.0, %v4214
          %v4216 = vpop.f32.mrb[0].mxu0
          %4217 = vdwg.mxu0
          %v4219 = vsel %vm1124, %v4210, 0
          %v4222 = vsel %vm1124, %v4215, 0
          %4224 = vmatprep.subr.mxu0 0.0
          %4225 = vmatpush1.msra.mxu0 %v1856
          %4226 = vmatprep.subr.mxu0 0.0
          %4227 = vmatpush1.msra.mxu0 %v1857
          %4228 = vmatprep.subr.mxu0 0.0
          %4229 = vmatpush1.msra.mxu0 0.0
          %4230 = vmatprep.subr.mxu0 0.0
          %4231 = vmatpush1.msra.mxu0 0.0
          %4232 = vmatprep.subr.mxu0 0.0
          %4233 = vmatpush1.msra.mxu0 0.0
          %4234 = vmatprep.subr.mxu0 0.0
          %4235 = vmatpush1.msra.mxu0 0.0
          %4236 = vmatprep.subr.mxu0 0.0
          %4237 = vmatpush1.msra.mxu0 0.0
          %4238 = vmatprep.subr.mxu0 0.0
          %4239 = vmatpush1.msra.mxu0 0.0
          %4240 = vmatprep.subr.mxu0 0.0
          %4241 = vmatpush1.msra.mxu0 0.0
          %4242 = vmatprep.subr.mxu0 0.0
          %4243 = vmatpush1.msra.mxu0 0.0
          %4244 = vmatprep.subr.mxu0 0.0
          %4245 = vmatpush1.msra.mxu0 0.0
          %4246 = vmatprep.subr.mxu0 0.0
          %4247 = vmatpush1.msra.mxu0 0.0
          %4248 = vmatprep.subr.mxu0 0.0
          %4249 = vmatpush1.msra.mxu0 0.0
          %4250 = vmatprep.subr.mxu0 0.0
          %4251 = vmatpush1.msra.mxu0 0.0
          %4252 = vmatprep.subr.mxu0 0.0
          %4253 = vmatpush1.msra.mxu0 0.0
          %4254 = vmatprep.subr.mxu0 0.0
          %4255 = vmatpush1.msra.mxu0 0.0
          %4256 = vmatprep.subr.mxu0 0.0
          %4257 = vmatpush1.msra.mxu0 0.0
          %4258 = vmatprep.subr.mxu0 0.0
          %4259 = vmatpush1.msra.mxu0 0.0
          %4260 = vmatprep.subr.mxu0 0.0
          %4261 = vmatpush1.msra.mxu0 0.0
          %4262 = vmatprep.subr.mxu0 0.0
          %4263 = vmatpush1.msra.mxu0 0.0
          %4264 = vmatprep.subr.mxu0 0.0
          %4265 = vmatpush1.msra.mxu0 0.0
          %4266 = vmatprep.subr.mxu0 0.0
          %4267 = vmatpush1.msra.mxu0 0.0
          %4268 = vmatprep.subr.mxu0 0.0
          %4269 = vmatpush1.msra.mxu0 0.0
          %4270 = vmatprep.subr.mxu0 0.0
          %4271 = vmatpush1.msra.mxu0 0.0
          %4272 = vmatprep.subr.mxu0 0.0
          %4273 = vmatpush1.msra.mxu0 0.0
          %4274 = vmatprep.subr.mxu0 0.0
          %4275 = vmatpush1.msra.mxu0 0.0
          %4276 = vmatprep.subr.mxu0 0.0
          %4277 = vmatpush1.msra.mxu0 0.0
          %4278 = vmatprep.subr.mxu0 0.0
          %4279 = vmatpush1.msra.mxu0 0.0
          %4280 = vmatprep.subr.mxu0 0.0
          %4281 = vmatpush1.msra.mxu0 0.0
          %4282 = vmatprep.subr.mxu0 0.0
          %4283 = vmatpush1.msra.mxu0 0.0
          %4284 = vmatprep.subr.mxu0 0.0
          %4285 = vmatpush1.msra.mxu0 0.0
          %4286 = vmatprep.subr.mxu0 0.0
          %4287 = vmatpush1.msra.mxu0 0.0
          %4288 = vmatprep.mubr.f32.mxu0 0.0
          %4289 = vmatmul.mubr.f32.gmra.mrb[0].mxu0 %v4219
          %v4290 = vpop.f32.mrb[0].mxu0
          %v4291 = vadd.f32 0.0, %v4290
          %v4292 = vpop.f32.mrb[0].mxu0
          %4293 = vmatprep.mubr.f32.mxu0 0.0
          %4294 = vmatmul.mubr.f32.gmra.mrb[0].mxu0 %v4222
          %v4295 = vpop.f32.mrb[0].mxu0
          %v4296 = vadd.f32 0.0, %v4295
          %v4297 = vpop.f32.mrb[0].mxu0
          %4298 = vdwg.mxu0
          %v4299 = vsub.f32 %v3945, %v4291
          %v4300 = vsub.f32 %v3946, %v4296
          %v4301 = vand.u32 2147483647, %v4299
          %v4302 = vand.u32 2147483647, %v4300
          %v4303 = vsel %vm1124, %v4301, 0.0
          %v4304 = vsel %vm1124, %v4302, 0.0
          %v4305 = vadd.f32 %v4303, %v4304
          %4306 = vadd.xlane.f32.xlu0 %v4305
          %v4307 = vpop.xlane.xlu0 %4306
          %v4308 = vrot.slane %v4307, 4
          %v4309 = vadd.f32 %v4307, %v4308
          %v4310 = vrot.slane %v4309, 2
          %v4311 = vadd.f32 %v4309, %v4310
          %v4312 = vrot.slane %v4311, 1
          %v4313 = vadd.f32 %v4311, %v4312
          %s4314 = vtos %v4313
          %s4315 = sadd.f32 %s4130, %s4314
          %v4316 = vadd.f32 %v3761, %v4135
          %v4317 = vadd.f32 %v3762, %v4136
          %v4318 = vmul.f32 %v3952, 0.27406862
          %v4319 = vmul.f32 %v3953, 0.27406862
          %v4320 = vadd.f32 %v4316, %v4318
          %v4321 = vadd.f32 %v4317, %v4319
          %s4322 = scalar_lea.vmem [#allocation2], 224
          %v4323 = vld [vmem:[%s4322] sm:$0xff]
          %v4324 = vld [vmem:[%s4322 + $0x8] sm:$0xff]
          %v4325 = vmul.f32 %v4323, 0.123841405
          %v4326 = vmul.f32 %v4324, 0.123841405
          %v4327 = vadd.f32 %v4320, %v4325
          %v4328 = vadd.f32 %v4321, %v4326
          %s4329 = scalar_lea.vmem [#allocation2], 240
          %v4330 = vld [vmem:[%s4329] sm:$0xff]
          %v4331 = vld [vmem:[%s4329 + $0x8] sm:$0xff]
          %v4332 = vmul.f32 %v4330, 0.07511361
          %v4333 = vmul.f32 %v4331, 0.07511361
          %v4334 = vadd.f32 %v4327, %v4332
          %v4335 = vadd.f32 %v4328, %v4333
          %4336 = vmatprep.subr.mxu0 0.0
          %4337 = vmatpush1.msra.mxu0 %v4334
          %4338 = vmatprep.subr.mxu0 0.0
          %4339 = vmatpush1.msra.mxu0 %v4335
          %4340 = vmatprep.subr.mxu0 0.0
          %4341 = vmatpush1.msra.mxu0 0.0
          %4342 = vmatprep.subr.mxu0 0.0
          %4343 = vmatpush1.msra.mxu0 0.0
          %4344 = vmatprep.subr.mxu0 0.0
          %4345 = vmatpush1.msra.mxu0 0.0
          %4346 = vmatprep.subr.mxu0 0.0
          %4347 = vmatpush1.msra.mxu0 0.0
          %4348 = vmatprep.subr.mxu0 0.0
          %4349 = vmatpush1.msra.mxu0 0.0
          %4350 = vmatprep.subr.mxu0 0.0
          %4351 = vmatpush1.msra.mxu0 0.0
          %4352 = vmatprep.subr.mxu0 0.0
          %4353 = vmatpush1.msra.mxu0 0.0
          %4354 = vmatprep.subr.mxu0 0.0
          %4355 = vmatpush1.msra.mxu0 0.0
          %4356 = vmatprep.subr.mxu0 0.0
          %4357 = vmatpush1.msra.mxu0 0.0
          %4358 = vmatprep.subr.mxu0 0.0
          %4359 = vmatpush1.msra.mxu0 0.0
          %4360 = vmatprep.subr.mxu0 0.0
          %4361 = vmatpush1.msra.mxu0 0.0
          %4362 = vmatprep.subr.mxu0 0.0
          %4363 = vmatpush1.msra.mxu0 0.0
          %4364 = vmatprep.subr.mxu0 0.0
          %4365 = vmatpush1.msra.mxu0 0.0
          %4366 = vmatprep.subr.mxu0 0.0
          %4367 = vmatpush1.msra.mxu0 0.0
          %4368 = vmatprep.subr.mxu0 0.0
          %4369 = vmatpush1.msra.mxu0 0.0
          %4370 = vmatprep.subr.mxu0 0.0
          %4371 = vmatpush1.msra.mxu0 0.0
          %4372 = vmatprep.subr.mxu0 0.0
          %4373 = vmatpush1.msra.mxu0 0.0
          %4374 = vmatprep.subr.mxu0 0.0
          %4375 = vmatpush1.msra.mxu0 0.0
          %4376 = vmatprep.subr.mxu0 0.0
          %4377 = vmatpush1.msra.mxu0 0.0
          %4378 = vmatprep.subr.mxu0 0.0
          %4379 = vmatpush1.msra.mxu0 0.0
          %4380 = vmatprep.subr.mxu0 0.0
          %4381 = vmatpush1.msra.mxu0 0.0
          %4382 = vmatprep.subr.mxu0 0.0
          %4383 = vmatpush1.msra.mxu0 0.0
          %4384 = vmatprep.subr.mxu0 0.0
          %4385 = vmatpush1.msra.mxu0 0.0
          %4386 = vmatprep.subr.mxu0 0.0
          %4387 = vmatpush1.msra.mxu0 0.0
          %4388 = vmatprep.subr.mxu0 0.0
          %4389 = vmatpush1.msra.mxu0 0.0
          %4390 = vmatprep.subr.mxu0 0.0
          %4391 = vmatpush1.msra.mxu0 0.0
          %4392 = vmatprep.subr.mxu0 0.0
          %4393 = vmatpush1.msra.mxu0 0.0
          %4394 = vmatprep.subr.mxu0 0.0
          %4395 = vmatpush1.msra.mxu0 0.0
          %4396 = vmatprep.subr.mxu0 0.0
          %4397 = vmatpush1.msra.mxu0 0.0
          %4398 = vmatprep.subr.mxu0 0.0
          %4399 = vmatpush1.msra.mxu0 0.0
          %4400 = vmatprep.mubr.f32.mxu0 0.0
          %4401 = vmatmul.mubr.f32.gmra.mrb[0].mxu0 %v1870
          %v4402 = vpop.f32.mrb[0].mxu0
          %v4403 = vadd.f32 0.0, %v4402
          %v4404 = vpop.f32.mrb[0].mxu0
          %4405 = vmatprep.mubr.f32.mxu0 0.0
          %4406 = vmatmul.mubr.f32.gmra.mrb[0].mxu0 %v1873
          %v4407 = vpop.f32.mrb[0].mxu0
          %v4408 = vadd.f32 0.0, %v4407
          %v4409 = vpop.f32.mrb[0].mxu0
          %4410 = vdwg.mxu0
          %v4412 = vsel %vm1124, %v4403, 0
          %v4415 = vsel %vm1124, %v4408, 0
          %4417 = vmatprep.subr.mxu0 0.0
          %4418 = vmatpush1.msra.mxu0 %v1856
          %4419 = vmatprep.subr.mxu0 0.0
          %4420 = vmatpush1.msra.mxu0 %v1857
          %4421 = vmatprep.subr.mxu0 0.0
          %4422 = vmatpush1.msra.mxu0 0.0
          %4423 = vmatprep.subr.mxu0 0.0
          %4424 = vmatpush1.msra.mxu0 0.0
          %4425 = vmatprep.subr.mxu0 0.0
          %4426 = vmatpush1.msra.mxu0 0.0
          %4427 = vmatprep.subr.mxu0 0.0
          %4428 = vmatpush1.msra.mxu0 0.0
          %4429 = vmatprep.subr.mxu0 0.0
          %4430 = vmatpush1.msra.mxu0 0.0
          %4431 = vmatprep.subr.mxu0 0.0
          %4432 = vmatpush1.msra.mxu0 0.0
          %4433 = vmatprep.subr.mxu0 0.0
          %4434 = vmatpush1.msra.mxu0 0.0
          %4435 = vmatprep.subr.mxu0 0.0
          %4436 = vmatpush1.msra.mxu0 0.0
          %4437 = vmatprep.subr.mxu0 0.0
          %4438 = vmatpush1.msra.mxu0 0.0
          %4439 = vmatprep.subr.mxu0 0.0
          %4440 = vmatpush1.msra.mxu0 0.0
          %4441 = vmatprep.subr.mxu0 0.0
          %4442 = vmatpush1.msra.mxu0 0.0
          %4443 = vmatprep.subr.mxu0 0.0
          %4444 = vmatpush1.msra.mxu0 0.0
          %4445 = vmatprep.subr.mxu0 0.0
          %4446 = vmatpush1.msra.mxu0 0.0
          %4447 = vmatprep.subr.mxu0 0.0
          %4448 = vmatpush1.msra.mxu0 0.0
          %4449 = vmatprep.subr.mxu0 0.0
          %4450 = vmatpush1.msra.mxu0 0.0
          %4451 = vmatprep.subr.mxu0 0.0
          %4452 = vmatpush1.msra.mxu0 0.0
          %4453 = vmatprep.subr.mxu0 0.0
          %4454 = vmatpush1.msra.mxu0 0.0
          %4455 = vmatprep.subr.mxu0 0.0
          %4456 = vmatpush1.msra.mxu0 0.0
          %4457 = vmatprep.subr.mxu0 0.0
          %4458 = vmatpush1.msra.mxu0 0.0
          %4459 = vmatprep.subr.mxu0 0.0
          %4460 = vmatpush1.msra.mxu0 0.0
          %4461 = vmatprep.subr.mxu0 0.0
          %4462 = vmatpush1.msra.mxu0 0.0
          %4463 = vmatprep.subr.mxu0 0.0
          %4464 = vmatpush1.msra.mxu0 0.0
          %4465 = vmatprep.subr.mxu0 0.0
          %4466 = vmatpush1.msra.mxu0 0.0
          %4467 = vmatprep.subr.mxu0 0.0
          %4468 = vmatpush1.msra.mxu0 0.0
          %4469 = vmatprep.subr.mxu0 0.0
          %4470 = vmatpush1.msra.mxu0 0.0
          %4471 = vmatprep.subr.mxu0 0.0
          %4472 = vmatpush1.msra.mxu0 0.0
          %4473 = vmatprep.subr.mxu0 0.0
          %4474 = vmatpush1.msra.mxu0 0.0
          %4475 = vmatprep.subr.mxu0 0.0
          %4476 = vmatpush1.msra.mxu0 0.0
          %4477 = vmatprep.subr.mxu0 0.0
          %4478 = vmatpush1.msra.mxu0 0.0
          %4479 = vmatprep.subr.mxu0 0.0
          %4480 = vmatpush1.msra.mxu0 0.0
          %4481 = vmatprep.mubr.f32.mxu0 0.0
          %4482 = vmatmul.mubr.f32.gmra.mrb[0].mxu0 %v4412
          %v4483 = vpop.f32.mrb[0].mxu0
          %v4484 = vadd.f32 0.0, %v4483
          %v4485 = vpop.f32.mrb[0].mxu0
          %4486 = vmatprep.mubr.f32.mxu0 0.0
          %4487 = vmatmul.mubr.f32.gmra.mrb[0].mxu0 %v4415
          %v4488 = vpop.f32.mrb[0].mxu0
          %v4489 = vadd.f32 0.0, %v4488
          %v4490 = vpop.f32.mrb[0].mxu0
          %4491 = vdwg.mxu0
          %v4492 = vsub.f32 %v3952, %v4484
          %v4493 = vsub.f32 %v3953, %v4489
          %v4494 = vand.u32 2147483647, %v4492
          %v4495 = vand.u32 2147483647, %v4493
          %v4496 = vsel %vm1124, %v4494, 0.0
          %v4497 = vsel %vm1124, %v4495, 0.0
          %v4498 = vadd.f32 %v4496, %v4497
          %4499 = vadd.xlane.f32.xlu0 %v4498
          %v4500 = vpop.xlane.xlu0 %4499
          %v4501 = vrot.slane %v4500, 4
          %v4502 = vadd.f32 %v4500, %v4501
          %v4503 = vrot.slane %v4502, 2
          %v4504 = vadd.f32 %v4502, %v4503
          %v4505 = vrot.slane %v4504, 1
          %v4506 = vadd.f32 %v4504, %v4505
          %s4507 = vtos %v4506
          %s4508 = sadd.f32 %s4315, %s4507
          %v4509 = vadd.f32 %v3576, %v3947
          %v4510 = vadd.f32 %v3577, %v3948
          %v4511 = vadd.f32 %v4509, %v4318
          %v4512 = vadd.f32 %v4510, %v4319
          %v4513 = vmul.f32 %v4323, 0.32802135
          %v4514 = vmul.f32 %v4324, 0.32802135
          %v4515 = vadd.f32 %v4511, %v4513
          %v4516 = vadd.f32 %v4512, %v4514
          %v4517 = vmul.f32 %v4330, 0.19895501
          %v4518 = vmul.f32 %v4331, 0.19895501
          %v4519 = vadd.f32 %v4515, %v4517
          %v4520 = vadd.f32 %v4516, %v4518
          %4521 = vmatprep.subr.mxu0 0.0
          %4522 = vmatpush1.msra.mxu0 %v4519
          %4523 = vmatprep.subr.mxu0 0.0
          %4524 = vmatpush1.msra.mxu0 %v4520
          %4525 = vmatprep.subr.mxu0 0.0
          %4526 = vmatpush1.msra.mxu0 0.0
          %4527 = vmatprep.subr.mxu0 0.0
          %4528 = vmatpush1.msra.mxu0 0.0
          %4529 = vmatprep.subr.mxu0 0.0
          %4530 = vmatpush1.msra.mxu0 0.0
          %4531 = vmatprep.subr.mxu0 0.0
          %4532 = vmatpush1.msra.mxu0 0.0
          %4533 = vmatprep.subr.mxu0 0.0
          %4534 = vmatpush1.msra.mxu0 0.0
          %4535 = vmatprep.subr.mxu0 0.0
          %4536 = vmatpush1.msra.mxu0 0.0
          %4537 = vmatprep.subr.mxu0 0.0
          %4538 = vmatpush1.msra.mxu0 0.0
          %4539 = vmatprep.subr.mxu0 0.0
          %4540 = vmatpush1.msra.mxu0 0.0
          %4541 = vmatprep.subr.mxu0 0.0
          %4542 = vmatpush1.msra.mxu0 0.0
          %4543 = vmatprep.subr.mxu0 0.0
          %4544 = vmatpush1.msra.mxu0 0.0
          %4545 = vmatprep.subr.mxu0 0.0
          %4546 = vmatpush1.msra.mxu0 0.0
          %4547 = vmatprep.subr.mxu0 0.0
          %4548 = vmatpush1.msra.mxu0 0.0
          %4549 = vmatprep.subr.mxu0 0.0
          %4550 = vmatpush1.msra.mxu0 0.0
          %4551 = vmatprep.subr.mxu0 0.0
          %4552 = vmatpush1.msra.mxu0 0.0
          %4553 = vmatprep.subr.mxu0 0.0
          %4554 = vmatpush1.msra.mxu0 0.0
          %4555 = vmatprep.subr.mxu0 0.0
          %4556 = vmatpush1.msra.mxu0 0.0
          %4557 = vmatprep.subr.mxu0 0.0
          %4558 = vmatpush1.msra.mxu0 0.0
          %4559 = vmatprep.subr.mxu0 0.0
          %4560 = vmatpush1.msra.mxu0 0.0
          %4561 = vmatprep.subr.mxu0 0.0
          %4562 = vmatpush1.msra.mxu0 0.0
          %4563 = vmatprep.subr.mxu0 0.0
          %4564 = vmatpush1.msra.mxu0 0.0
          %4565 = vmatprep.subr.mxu0 0.0
          %4566 = vmatpush1.msra.mxu0 0.0
          %4567 = vmatprep.subr.mxu0 0.0
          %4568 = vmatpush1.msra.mxu0 0.0
          %4569 = vmatprep.subr.mxu0 0.0
          %4570 = vmatpush1.msra.mxu0 0.0
          %4571 = vmatprep.subr.mxu0 0.0
          %4572 = vmatpush1.msra.mxu0 0.0
          %4573 = vmatprep.subr.mxu0 0.0
          %4574 = vmatpush1.msra.mxu0 0.0
          %4575 = vmatprep.subr.mxu0 0.0
          %4576 = vmatpush1.msra.mxu0 0.0
          %4577 = vmatprep.subr.mxu0 0.0
          %4578 = vmatpush1.msra.mxu0 0.0
          %4579 = vmatprep.subr.mxu0 0.0
          %4580 = vmatpush1.msra.mxu0 0.0
          %4581 = vmatprep.subr.mxu0 0.0
          %4582 = vmatpush1.msra.mxu0 0.0
          %4583 = vmatprep.subr.mxu0 0.0
          %4584 = vmatpush1.msra.mxu0 0.0
          %4585 = vmatprep.mubr.f32.mxu0 0.0
          %4586 = vmatmul.mubr.f32.gmra.mrb[0].mxu0 %v1870
          %v4587 = vpop.f32.mrb[0].mxu0
          %v4588 = vadd.f32 0.0, %v4587
          %v4589 = vpop.f32.mrb[0].mxu0
          %4590 = vmatprep.mubr.f32.mxu0 0.0
          %4591 = vmatmul.mubr.f32.gmra.mrb[0].mxu0 %v1873
          %v4592 = vpop.f32.mrb[0].mxu0
          %v4593 = vadd.f32 0.0, %v4592
          %v4594 = vpop.f32.mrb[0].mxu0
          %4595 = vdwg.mxu0
          %v4597 = vsel %vm1124, %v4588, 0
          %v4600 = vsel %vm1124, %v4593, 0
          %4602 = vmatprep.subr.mxu0 0.0
          %4603 = vmatpush1.msra.mxu0 %v1856
          %4604 = vmatprep.subr.mxu0 0.0
          %4605 = vmatpush1.msra.mxu0 %v1857
          %4606 = vmatprep.subr.mxu0 0.0
          %4607 = vmatpush1.msra.mxu0 0.0
          %4608 = vmatprep.subr.mxu0 0.0
          %4609 = vmatpush1.msra.mxu0 0.0
          %4610 = vmatprep.subr.mxu0 0.0
          %4611 = vmatpush1.msra.mxu0 0.0
          %4612 = vmatprep.subr.mxu0 0.0
          %4613 = vmatpush1.msra.mxu0 0.0
          %4614 = vmatprep.subr.mxu0 0.0
          %4615 = vmatpush1.msra.mxu0 0.0
          %4616 = vmatprep.subr.mxu0 0.0
          %4617 = vmatpush1.msra.mxu0 0.0
          %4618 = vmatprep.subr.mxu0 0.0
          %4619 = vmatpush1.msra.mxu0 0.0
          %4620 = vmatprep.subr.mxu0 0.0
          %4621 = vmatpush1.msra.mxu0 0.0
          %4622 = vmatprep.subr.mxu0 0.0
          %4623 = vmatpush1.msra.mxu0 0.0
          %4624 = vmatprep.subr.mxu0 0.0
          %4625 = vmatpush1.msra.mxu0 0.0
          %4626 = vmatprep.subr.mxu0 0.0
          %4627 = vmatpush1.msra.mxu0 0.0
          %4628 = vmatprep.subr.mxu0 0.0
          %4629 = vmatpush1.msra.mxu0 0.0
          %4630 = vmatprep.subr.mxu0 0.0
          %4631 = vmatpush1.msra.mxu0 0.0
          %4632 = vmatprep.subr.mxu0 0.0
          %4633 = vmatpush1.msra.mxu0 0.0
          %4634 = vmatprep.subr.mxu0 0.0
          %4635 = vmatpush1.msra.mxu0 0.0
          %4636 = vmatprep.subr.mxu0 0.0
          %4637 = vmatpush1.msra.mxu0 0.0
          %4638 = vmatprep.subr.mxu0 0.0
          %4639 = vmatpush1.msra.mxu0 0.0
          %4640 = vmatprep.subr.mxu0 0.0
          %4641 = vmatpush1.msra.mxu0 0.0
          %4642 = vmatprep.subr.mxu0 0.0
          %4643 = vmatpush1.msra.mxu0 0.0
          %4644 = vmatprep.subr.mxu0 0.0
          %4645 = vmatpush1.msra.mxu0 0.0
          %4646 = vmatprep.subr.mxu0 0.0
          %4647 = vmatpush1.msra.mxu0 0.0
          %4648 = vmatprep.subr.mxu0 0.0
          %4649 = vmatpush1.msra.mxu0 0.0
          %4650 = vmatprep.subr.mxu0 0.0
          %4651 = vmatpush1.msra.mxu0 0.0
          %4652 = vmatprep.subr.mxu0 0.0
          %4653 = vmatpush1.msra.mxu0 0.0
          %4654 = vmatprep.subr.mxu0 0.0
          %4655 = vmatpush1.msra.mxu0 0.0
          %4656 = vmatprep.subr.mxu0 0.0
          %4657 = vmatpush1.msra.mxu0 0.0
          %4658 = vmatprep.subr.mxu0 0.0
          %4659 = vmatpush1.msra.mxu0 0.0
          %4660 = vmatprep.subr.mxu0 0.0
          %4661 = vmatpush1.msra.mxu0 0.0
          %4662 = vmatprep.subr.mxu0 0.0
          %4663 = vmatpush1.msra.mxu0 0.0
          %4664 = vmatprep.subr.mxu0 0.0
          %4665 = vmatpush1.msra.mxu0 0.0
          %4666 = vmatprep.mubr.f32.mxu0 0.0
          %4667 = vmatmul.mubr.f32.gmra.mrb[0].mxu0 %v4597
          %v4668 = vpop.f32.mrb[0].mxu0
          %v4669 = vadd.f32 0.0, %v4668
          %v4670 = vpop.f32.mrb[0].mxu0
          %4671 = vmatprep.mubr.f32.mxu0 0.0
          %4672 = vmatmul.mubr.f32.gmra.mrb[0].mxu0 %v4600
          %v4673 = vpop.f32.mrb[0].mxu0
          %v4674 = vadd.f32 0.0, %v4673
          %v4675 = vpop.f32.mrb[0].mxu0
          %4676 = vdwg.mxu0
          %v4677 = vsub.f32 %v4323, %v4669
          %v4678 = vsub.f32 %v4324, %v4674
          %v4679 = vand.u32 2147483647, %v4677
          %v4680 = vand.u32 2147483647, %v4678
          %v4681 = vsel %vm1124, %v4679, 0.0
          %v4682 = vsel %vm1124, %v4680, 0.0
          %v4683 = vadd.f32 %v4681, %v4682
          %4684 = vadd.xlane.f32.xlu0 %v4683
          %v4685 = vpop.xlane.xlu0 %4684
          %v4686 = vrot.slane %v4685, 4
          %v4687 = vadd.f32 %v4685, %v4686
          %v4688 = vrot.slane %v4687, 2
          %v4689 = vadd.f32 %v4687, %v4688
          %v4690 = vrot.slane %v4689, 1
          %v4691 = vadd.f32 %v4689, %v4690
          %s4692 = vtos %v4691
          %s4693 = sadd.f32 %s4508, %s4692
          %v4694 = vadd.f32 %v4139, %v4513
          %v4695 = vadd.f32 %v4140, %v4514
          %v4696 = vadd.f32 %v4694, %v4517
          %v4697 = vadd.f32 %v4695, %v4518
          %4698 = vmatprep.subr.mxu0 0.0
          %4699 = vmatpush1.msra.mxu0 %v4696
          %4700 = vmatprep.subr.mxu0 0.0
          %4701 = vmatpush1.msra.mxu0 %v4697
          %4702 = vmatprep.subr.mxu0 0.0
          %4703 = vmatpush1.msra.mxu0 0.0
          %4704 = vmatprep.subr.mxu0 0.0
          %4705 = vmatpush1.msra.mxu0 0.0
          %4706 = vmatprep.subr.mxu0 0.0
          %4707 = vmatpush1.msra.mxu0 0.0
          %4708 = vmatprep.subr.mxu0 0.0
          %4709 = vmatpush1.msra.mxu0 0.0
          %4710 = vmatprep.subr.mxu0 0.0
          %4711 = vmatpush1.msra.mxu0 0.0
          %4712 = vmatprep.subr.mxu0 0.0
          %4713 = vmatpush1.msra.mxu0 0.0
          %4714 = vmatprep.subr.mxu0 0.0
          %4715 = vmatpush1.msra.mxu0 0.0
          %4716 = vmatprep.subr.mxu0 0.0
          %4717 = vmatpush1.msra.mxu0 0.0
          %4718 = vmatprep.subr.mxu0 0.0
          %4719 = vmatpush1.msra.mxu0 0.0
          %4720 = vmatprep.subr.mxu0 0.0
          %4721 = vmatpush1.msra.mxu0 0.0
          %4722 = vmatprep.subr.mxu0 0.0
          %4723 = vmatpush1.msra.mxu0 0.0
          %4724 = vmatprep.subr.mxu0 0.0
          %4725 = vmatpush1.msra.mxu0 0.0
          %4726 = vmatprep.subr.mxu0 0.0
          %4727 = vmatpush1.msra.mxu0 0.0
          %4728 = vmatprep.subr.mxu0 0.0
          %4729 = vmatpush1.msra.mxu0 0.0
          %4730 = vmatprep.subr.mxu0 0.0
          %4731 = vmatpush1.msra.mxu0 0.0
          %4732 = vmatprep.subr.mxu0 0.0
          %4733 = vmatpush1.msra.mxu0 0.0
          %4734 = vmatprep.subr.mxu0 0.0
          %4735 = vmatpush1.msra.mxu0 0.0
          %4736 = vmatprep.subr.mxu0 0.0
          %4737 = vmatpush1.msra.mxu0 0.0
          %4738 = vmatprep.subr.mxu0 0.0
          %4739 = vmatpush1.msra.mxu0 0.0
          %4740 = vmatprep.subr.mxu0 0.0
          %4741 = vmatpush1.msra.mxu0 0.0
          %4742 = vmatprep.subr.mxu0 0.0
          %4743 = vmatpush1.msra.mxu0 0.0
          %4744 = vmatprep.subr.mxu0 0.0
          %4745 = vmatpush1.msra.mxu0 0.0
          %4746 = vmatprep.subr.mxu0 0.0
          %4747 = vmatpush1.msra.mxu0 0.0
          %4748 = vmatprep.subr.mxu0 0.0
          %4749 = vmatpush1.msra.mxu0 0.0
          %4750 = vmatprep.subr.mxu0 0.0
          %4751 = vmatpush1.msra.mxu0 0.0
          %4752 = vmatprep.subr.mxu0 0.0
          %4753 = vmatpush1.msra.mxu0 0.0
          %4754 = vmatprep.subr.mxu0 0.0
          %4755 = vmatpush1.msra.mxu0 0.0
          %4756 = vmatprep.subr.mxu0 0.0
          %4757 = vmatpush1.msra.mxu0 0.0
          %4758 = vmatprep.subr.mxu0 0.0
          %4759 = vmatpush1.msra.mxu0 0.0
          %4760 = vmatprep.subr.mxu0 0.0
          %4761 = vmatpush1.msra.mxu0 0.0
          %4762 = vmatprep.mubr.f32.mxu0 0.0
          %4763 = vmatmul.mubr.f32.gmra.mrb[0].mxu0 %v1870
          %v4764 = vpop.f32.mrb[0].mxu0
          %v4765 = vadd.f32 0.0, %v4764
          %v4766 = vpop.f32.mrb[0].mxu0
          %4767 = vmatprep.mubr.f32.mxu0 0.0
          %4768 = vmatmul.mubr.f32.gmra.mrb[0].mxu0 %v1873
          %v4769 = vpop.f32.mrb[0].mxu0
          %v4770 = vadd.f32 0.0, %v4769
          %v4771 = vpop.f32.mrb[0].mxu0
          %4772 = vdwg.mxu0
          %v4774 = vsel %vm1124, %v4765, 0
          %v4777 = vsel %vm1124, %v4770, 0
          %4779 = vmatprep.subr.mxu0 0.0
          %4780 = vmatpush1.msra.mxu0 %v1856
          %4781 = vmatprep.subr.mxu0 0.0
          %4782 = vmatpush1.msra.mxu0 %v1857
          %4783 = vmatprep.subr.mxu0 0.0
          %4784 = vmatpush1.msra.mxu0 0.0
          %4785 = vmatprep.subr.mxu0 0.0
          %4786 = vmatpush1.msra.mxu0 0.0
          %4787 = vmatprep.subr.mxu0 0.0
          %4788 = vmatpush1.msra.mxu0 0.0
          %4789 = vmatprep.subr.mxu0 0.0
          %4790 = vmatpush1.msra.mxu0 0.0
          %4791 = vmatprep.subr.mxu0 0.0
          %4792 = vmatpush1.msra.mxu0 0.0
          %4793 = vmatprep.subr.mxu0 0.0
          %4794 = vmatpush1.msra.mxu0 0.0
          %4795 = vmatprep.subr.mxu0 0.0
          %4796 = vmatpush1.msra.mxu0 0.0
          %4797 = vmatprep.subr.mxu0 0.0
          %4798 = vmatpush1.msra.mxu0 0.0
          %4799 = vmatprep.subr.mxu0 0.0
          %4800 = vmatpush1.msra.mxu0 0.0
          %4801 = vmatprep.subr.mxu0 0.0
          %4802 = vmatpush1.msra.mxu0 0.0
          %4803 = vmatprep.subr.mxu0 0.0
          %4804 = vmatpush1.msra.mxu0 0.0
          %4805 = vmatprep.subr.mxu0 0.0
          %4806 = vmatpush1.msra.mxu0 0.0
          %4807 = vmatprep.subr.mxu0 0.0
          %4808 = vmatpush1.msra.mxu0 0.0
          %4809 = vmatprep.subr.mxu0 0.0
          %4810 = vmatpush1.msra.mxu0 0.0
          %4811 = vmatprep.subr.mxu0 0.0
          %4812 = vmatpush1.msra.mxu0 0.0
          %4813 = vmatprep.subr.mxu0 0.0
          %4814 = vmatpush1.msra.mxu0 0.0
          %4815 = vmatprep.subr.mxu0 0.0
          %4816 = vmatpush1.msra.mxu0 0.0
          %4817 = vmatprep.subr.mxu0 0.0
          %4818 = vmatpush1.msra.mxu0 0.0
          %4819 = vmatprep.subr.mxu0 0.0
          %4820 = vmatpush1.msra.mxu0 0.0
          %4821 = vmatprep.subr.mxu0 0.0
          %4822 = vmatpush1.msra.mxu0 0.0
          %4823 = vmatprep.subr.mxu0 0.0
          %4824 = vmatpush1.msra.mxu0 0.0
          %4825 = vmatprep.subr.mxu0 0.0
          %4826 = vmatpush1.msra.mxu0 0.0
          %4827 = vmatprep.subr.mxu0 0.0
          %4828 = vmatpush1.msra.mxu0 0.0
          %4829 = vmatprep.subr.mxu0 0.0
          %4830 = vmatpush1.msra.mxu0 0.0
          %4831 = vmatprep.subr.mxu0 0.0
          %4832 = vmatpush1.msra.mxu0 0.0
          %4833 = vmatprep.subr.mxu0 0.0
          %4834 = vmatpush1.msra.mxu0 0.0
          %4835 = vmatprep.subr.mxu0 0.0
          %4836 = vmatpush1.msra.mxu0 0.0
          %4837 = vmatprep.subr.mxu0 0.0
          %4838 = vmatpush1.msra.mxu0 0.0
          %4839 = vmatprep.subr.mxu0 0.0
          %4840 = vmatpush1.msra.mxu0 0.0
          %4841 = vmatprep.subr.mxu0 0.0
          %4842 = vmatpush1.msra.mxu0 0.0
          %4843 = vmatprep.mubr.f32.mxu0 0.0
          %4844 = vmatmul.mubr.f32.gmra.mrb[0].mxu0 %v4774
          %v4845 = vpop.f32.mrb[0].mxu0
          %v4846 = vadd.f32 0.0, %v4845
          %v4847 = vpop.f32.mrb[0].mxu0
          %4848 = vmatprep.mubr.f32.mxu0 0.0
          %4849 = vmatmul.mubr.f32.gmra.mrb[0].mxu0 %v4777
          %v4850 = vpop.f32.mrb[0].mxu0
          %v4851 = vadd.f32 0.0, %v4850
          %v4852 = vpop.f32.mrb[0].mxu0
          %4853 = vdwg.mxu0
          %v4854 = vsub.f32 %v4330, %v4846
          %v4855 = vsub.f32 %v4331, %v4851
          %v4856 = vand.u32 2147483647, %v4854
          %v4857 = vand.u32 2147483647, %v4855
          %v4858 = vsel %vm1124, %v4856, 0.0
          %v4859 = vsel %vm1124, %v4857, 0.0
          %v4860 = vadd.f32 %v4858, %v4859
          %4861 = vadd.xlane.f32.xlu0 %v4860
          %v4862 = vpop.xlane.xlu0 %4861
          %v4863 = vrot.slane %v4862, 4
          %v4864 = vadd.f32 %v4862, %v4863
          %v4865 = vrot.slane %v4864, 2
          %v4866 = vadd.f32 %v4864, %v4865
          %v4867 = vrot.slane %v4866, 1
          %v4868 = vadd.f32 %v4866, %v4867
          %s4869 = vtos %v4868
          %s4870 = sadd.f32 %s4693, %s4869
          %s4871 = smul.f32 %s4870, 0.00024414063
          %v4872 = vlaneseq
          %v4873 = vshrl.u32 %v4872, 7
          %v4874 = vlaneseq
          %v4875 = vand.u32 %v4874, 127
          %vm4876 = vcmp.eq.s32.totalorder %v4873, 0
          %vm4877 = vcmp.eq.s32.totalorder %v4875, 0
          %vm4878 = vmand %vm4876, %vm4877
          %v4879 = vstv %s1819
          %v4880 = vsel %vm4878, %v4879, 0.0
          %vm4881 = vcmp.eq.s32.totalorder %v4875, 1
          %vm4882 = vmand %vm4876, %vm4881
          %v4883 = vstv %s1850
          %v4884 = vsel %vm4882, %v4883, 0.0
          %v4885 = vadd.f32 %v4880, %v4884
          %vm4886 = vcmp.eq.s32.totalorder %v4875, 2
          %vm4887 = vmand %vm4876, %vm4886
          %v4888 = vstv %s4871
          %v4889 = vsel %vm4887, %v4888, 0.0
          %v4890 = vadd.f32 %v4885, %v4889
          %vm4891 = vcmp.eq.s32.totalorder %v4875, 3
          %vm4892 = vmand %vm4876, %vm4891
          %v4893 = vstv %s1813
          %v4894 = vsel %vm4892, %v4893, 0.0
          %v4895 = vadd.f32 %v4890, %v4894
          %vm4896 = vcmp.eq.s32.totalorder %v4875, 4
          %vm4897 = vmand %vm4876, %vm4896
          %v4898 = vstv %s1853
          %v4899 = vsel %vm4897, %v4898, 0.0
          %v4900 = vadd.f32 %v4895, %v4899
          %4901 = vst [vmem:[%s327] sm:$0xff] %v4900
        $region60: #{tpu_custom_call.1} parent=35 // pred_fallthru
          _
        %s4902 = sand.u32 %s138, 1
        %s4903 = scalar_lea.sflag [#allocation6], %s4902
        %s4904 = sand.u32 %s138, 1
        %s4905 = smul.addr %s4904, 8
        %s4906 = scalar_lea.vmem [#allocation11], %s4905
        // Predicated region
        $region61: #{tpu_custom_call.1} parent=35 // pred_check
          %p4907 = pneg %p148
        $region62: #{tpu_custom_call.1} parent=35 // pred_check_branch
          %4909 = sbr.rel (%p4907) target = $region64
        $region63: #{tpu_custom_call.1} parent=35 // pred_region
          %s4911 = ssub.s32 128, 128
          %4912 = vsyncadd %s4903, %s4911
          %s4913 = smul.addr %s24, 128
          %s4914 = scalar_lea.hbm %s4, %s4913
          %s4916 = sshll.u32 %s4906, 4
          %s4917 = int_to_ptr.vmem [resolvable:$true] %s4916
          %4919 = dma.vmem_to_hbm [thread:$0]  %s4917, 128, %s4914, %s4903
        $region64: #{tpu_custom_call.1} parent=35 // pred_fallthru
          _
      $region36: #{tpu_custom_call.1} parent=5 // pred_fallthru
        _
      %p4920 = scmp.le.s32.totalorder 2, %s15
      // Predicated region
      $region65: #{tpu_custom_call.1} parent=5 // pred_check
        %p4921 = pneg %p4920
      $region66: #{tpu_custom_call.1} parent=5 // pred_check_branch
        %4923 = sbr.rel (%p4921) target = $region68
      $region67: #{tpu_custom_call.1} parent=5 // pred_region
        %s4924 = ssub.s32 %s15, 2
        // Predicated region
        $region69: #{tpu_custom_call.1} parent=67 // pred_check
          %p4925 = pneg %p154
        $region70: #{tpu_custom_call.1} parent=67 // pred_check_branch
          %4927 = sbr.rel (%p4925) target = $region72
        $region71: #{tpu_custom_call.1} parent=67 // pred_region
          %s4928 = sand.u32 %s139, 1
          %s4929 = scalar_lea.sflag [#allocation6], %s4928
          %s4930 = sand.u32 %s139, 1
          %s4931 = smul.addr %s4930, 8
          %s4932 = scalar_lea.vmem [#allocation11], %s4931
          %4933 = dma.done %s4929, 128
        $region72: #{tpu_custom_call.1} parent=67 // pred_fallthru
          _
      $region68: #{tpu_custom_call.1} parent=5 // pred_fallthru
        _
    $region6: #{tpu_custom_call.1} parent=1 // loop_footer
      %s19 = sadd.s32 1, %s15
    $region7: #{tpu_custom_call.1} parent=1 // loop_footer_branch
      %14 = sbr.rel target = $region3
    $region8: #{tpu_custom_call.1} parent=1 // loop_exit
      _
    %4934 = vsyncpa [#allocation5], 1
    %s4935 = scalar_lea.sflag [#allocation5], 1
    %4936 = vsyncpa %s4935, 1
    %4937 = vsyncpa [#allocation8], 1
    %4938 = vsyncpa [#allocation6], 1
    %s4939 = scalar_lea.sflag [#allocation6], 1
    %4940 = vsyncpa %s4939, 1

</llo_original>
